<compile_context>
chip_gen: v7x
topology: tpu7x:2x2x1
jax: 0.10.0
libtpu: 0.0.40
codegen_flags: <defaults>
</compile_context>

<pallas_src>
import jax
import jax.numpy as jnp
from jax.experimental import pallas as pl
from jax.experimental.pallas import tpu as pltpu

F32 = jnp.float32
_POOL_W = 161  # nn.AdaptiveAvgPool2d((1, 161)) hard-coded in the module


# -----------------------------------------------------------------------------
# In-kernel building blocks
# -----------------------------------------------------------------------------
def _elu(y):
    # exact nn.ELU(alpha=1): y if y > 0 else exp(y) - 1 ; exp runs on the EUP.
    return jnp.where(y > 0, y, jnp.exp(jnp.minimum(y, 0.0)) - 1.0)


def _conv1d_dilated_elu(x, w, b, dil):
    """Length-preserving dilated Conv1d (k=3, padding=dilation) + ELU.

    x: [L, Cin]  (L on sublanes, channels on lanes)
    w: [3*Cin, Cout]  row blocks ordered (tap -dil, tap 0, tap +dil) x Cin
       (must stay in sync with the packing in _init_conv1d / any weight import)
    b: [1, Cout]

    Pad once, take three static slices, accumulate three K=Cin MXU dots in f32.
    """
    L, Cin = x.shape
    Cout = w.shape[1]
    zpad = jnp.zeros((dil, Cin), F32)
    xp = jnp.concatenate([zpad, x, zpad], axis=0)            # [L + 2*dil, Cin]
    acc = jnp.zeros((L, Cout), F32)
    for k in range(3):                                       # static unroll
        tap = xp[k * dil:k * dil + L, :]                     # x[l + (k-1)*dil]
        acc = acc + jnp.dot(tap, w[k * Cin:(k + 1) * Cin, :],
                            preferred_element_type=F32)
    return _elu(acc + b)


def _skip_att_kernel(de_ref, en_ref, g_ref, w1_ref, b1_ref, w2_ref, b2_ref,
                     w3_ref, b3_ref, out_ref, dflat_ref):
    # Grid = (batch n, H-tile h).  The per-batch attention vector is computed
    # once at h == 0, cached in VMEM scratch, and reused for every H tile of
    # this batch element ("arbitrary" h axis makes the scratch carry legal).
    @pl.when(pl.program_id(1) == 0)
    def _compute_scale():
        # AdaptiveAvgPool2d((1, 161)) with de width == 161 -> mean over H.
        d = jnp.mean(de_ref[...].astype(F32), axis=0)               # [W, C]
        d = _conv1d_dilated_elu(d, w1_ref[...], b1_ref[...], 2)      # [W, 16]
        d = _conv1d_dilated_elu(d, w2_ref[...], b2_ref[...], 4)      # [W, 16]
        d = _conv1d_dilated_elu(d, w3_ref[...], b3_ref[...], 8)      # [W, C]
        # Flatten [W, C] -> [1, W*C]  (out[0, w*C+c] = d[w, c]) without an
        # in-kernel sublane->lane shape cast:
        #   Z[w, j]    = d[w, j % C]           (one MXU dot with replication G)
        #   sel[w, j]  = (w*C <= j < w*C + C)  (block-diagonal iota mask)
        #   dflat[j]   = sum_w sel * Z         (XLU sublane reduce)
        W, C = d.shape
        WC = W * C
        z = jnp.dot(d, g_ref[...], preferred_element_type=F32)      # [W, W*C]
        lane = jax.lax.broadcasted_iota(jnp.int32, (W, WC), 1)
        row = jax.lax.broadcasted_iota(jnp.int32, (W, WC), 0)
        sel = jnp.logical_and(lane >= row * C, lane < row * C + C)
        dflat_ref[...] = jnp.sum(jnp.where(sel, z, 0.0), axis=0, keepdims=True)

    # de.unsqueeze(dim=2) * en, on the lane-dense [TH, W*C] view of en.
    # Elementwise math in f32 (portable to v5e); I/O stays in en.dtype.
    out_ref[...] = (en_ref[...].astype(F32) * dflat_ref[...]).astype(out_ref.dtype)
    # NOTE: the module's nn.Sigmoid is never applied in forward() (dead code).


# -----------------------------------------------------------------------------
# Wrapper
# -----------------------------------------------------------------------------
def skip_att(en, de, params, *, h_tile=128):
    """en: [N, H, 161, C], de: [N, Hd, 161, C]  (NHWC; C innermost).

    params = (w1, b1, w2, b2, w3, b3) with wk: [3*Cin_k, Cout_k], bk: [1, Cout_k].
    Returns [N, H, 161, C] with dtype == en.dtype.
    """
    N, H, W, C = en.shape
    Nd, Hd, Wd, Cd = de.shape
    assert N == Nd and C == Cd, "batch / channel mismatch between en and de"
    # TODO(synk): general AdaptiveAvgPool2d((1,161)) W-binning for de widths
    # != 161 is not implemented; with W == 161 it reduces to a mean over H.
    assert W == _POOL_W and Wd == _POOL_W, "skip_att requires width == 161"
    w1, b1, w2, b2, w3, b3 = params

    WC = W * C
    TH = min(H, h_tile)          # H tile: bounds VMEM, overlaps read/writeback
    HT = pl.cdiv(H, TH)

    # Lane-dense view of the dominant en/out traffic (free reshape: C innermost).
    en_flat = en.reshape(N, H, WC)

    # Replication matrix G[c, j] = (j % C == c); built host-side so the kernel
    # needs no vector integer div/mod.  Tiny (C x W*C) and VMEM-resident.
    j = jnp.arange(WC, dtype=jnp.int32)
    g = (j[None, :] % C == jnp.arange(C, dtype=jnp.int32)[:, None]).astype(F32)

    out_flat = pl.pallas_call(
        _skip_att_kernel,
        out_shape=jax.ShapeDtypeStruct((N, H, WC), en.dtype),
        grid=(N, HT),
        in_specs=[
            # de: whole decoder block per batch element, constant in h so it is
            # only re-DMA'd when n changes (VMEM-resident across H tiles).
            pl.BlockSpec((None, Hd, W, C), lambda n, h: (n, 0, 0, 0)),
            # en: lane-dense [TH, W*C] tiles.
            pl.BlockSpec((None, TH, WC), lambda n, h: (n, h, 0)),
            # small resident constants
            pl.BlockSpec((C, WC), lambda n, h: (0, 0)),
            pl.BlockSpec(w1.shape, lambda n, h: (0, 0)),
            pl.BlockSpec(b1.shape, lambda n, h: (0, 0)),
            pl.BlockSpec(w2.shape, lambda n, h: (0, 0)),
            pl.BlockSpec(b2.shape, lambda n, h: (0, 0)),
            pl.BlockSpec(w3.shape, lambda n, h: (0, 0)),
            pl.BlockSpec(b3.shape, lambda n, h: (0, 0)),
        ],
        out_specs=pl.BlockSpec((None, TH, WC), lambda n, h: (n, h, 0)),
        scratch_shapes=[pltpu.VMEM((1, WC), F32)],   # cached attention vector
        compiler_params=pltpu.CompilerParams(
            # n "parallel" (v7x megacore shards batch); h must be "arbitrary"
            # because the scratch-cached attention vector carries across tiles.
            dimension_semantics=("parallel", "arbitrary"),
            vmem_limit_bytes=32 * 1024 * 1024,
        ),
    )(de, en_flat, g, w1, b1, w2, b2, w3, b3)
    return out_flat.reshape(N, H, W, C)


# -----------------------------------------------------------------------------
# Deterministic synthetic parameters (the module defines its own Conv1d weights)
# -----------------------------------------------------------------------------
def _init_conv1d(key, Cin, Cout):
    kw, kb = jax.random.split(key)
    # [3, Cin, Cout] (tap, in-channel, out-channel), taps fused into K = 3*Cin.
    w = jax.random.normal(kw, (3, Cin, Cout), F32) / jnp.sqrt(3.0 * Cin)
    b = 0.05 * jax.random.normal(kb, (1, Cout), F32)
    return w.reshape(3 * Cin, Cout), b


def init_skip_att_params(key, in_c):
    k1, k2, k3 = jax.random.split(key, 3)
    w1, b1 = _init_conv1d(k1, in_c, 16)   # Conv1d(in_c -> 16, dil=2, pad=2)
    w2, b2 = _init_conv1d(k2, 16, 16)     # Conv1d(16   -> 16, dil=4, pad=4)
    w3, b3 = _init_conv1d(k3, 16, in_c)   # Conv1d(16 -> in_c, dil=8, pad=8)
    return (w1, b1, w2, b2, w3, b3)


# -----------------------------------------------------------------------------
# Pure-JAX reference (same math, no Pallas) for a correctness check
# -----------------------------------------------------------------------------
def skip_att_ref(en, de, params):
    w1, b1, w2, b2, w3, b3 = params
    d = jnp.mean(de.astype(F32), axis=1)                      # [N, W, C]

    def layer(x, w, b, dil):
        Nb, L, Cin = x.shape
        z = jnp.zeros((Nb, dil, Cin), F32)
        x_m = jnp.concatenate([z, x[:, :L - dil]], axis=1)
        x_p = jnp.concatenate([x[:, dil:], z], axis=1)
        xk = jnp.concatenate([x_m, x, x_p], axis=2)            # [N, L, 3*Cin]
        y = jnp.einsum('nlk,kc->nlc', xk, w,
                       precision=jax.lax.Precision.HIGHEST) + b[None]
        return jnp.where(y > 0, y, jnp.exp(jnp.minimum(y, 0.0)) - 1.0)

    d = layer(d, w1, b1, 2)
    d = layer(d, w2, b2, 4)
    d = layer(d, w3, b3, 8)
    return en.astype(F32) * d[:, None, :, :]


# -----------------------------------------------------------------------------
if __name__ == "__main__":
    key = jax.random.PRNGKey(0)
    N, H, Hd, W, C = 2, 16, 8, 161, 16   # W=161 required by AdaptiveAvgPool2d((1,161))
    ken, kde, kp = jax.random.split(key, 3)
    en = jax.random.normal(ken, (N, H, W, C), F32)
    de = jax.random.normal(kde, (N, Hd, W, C), F32)
    params = init_skip_att_params(kp, C)

    fwd = jax.jit(skip_att, static_argnames=("h_tile",))

    # f32 run with H tiling (grid=(2,2)) so the cached-scale / multi-tile path
    # is exercised.
    out = jax.block_until_ready(fwd(en, de, params, h_tile=8))
    assert out.shape == (N, H, W, C), out.shape
    assert out.dtype == en.dtype
    assert bool(jnp.isfinite(out).all())

    ref = jax.block_until_ready(jax.jit(skip_att_ref)(en, de, params))
    err = float(jnp.max(jnp.abs(out - ref)))
    assert err < 1e-2, f"f32 mismatch vs reference: max abs err = {err}"

    # bf16 I/O run: output dtype follows en.dtype; math stays f32 in-kernel.
    en_bf = en.astype(jnp.bfloat16)
    de_bf = de.astype(jnp.bfloat16)
    out_bf = jax.block_until_ready(fwd(en_bf, de_bf, params))
    assert out_bf.shape == (N, H, W, C)
    assert out_bf.dtype == jnp.bfloat16
    assert bool(jnp.isfinite(out_bf.astype(F32)).all())
    ref_bf = jax.block_until_ready(jax.jit(skip_att_ref)(en_bf, de_bf, params))
    err_bf = float(jnp.max(jnp.abs(out_bf.astype(F32) - ref_bf)))
    assert err_bf < 0.25, f"bf16 mismatch vs reference: max abs err = {err_bf}"

    print("KERNEL_OK")
</pallas_src>

<mosaic_0001>
module attributes {stable_mosaic.version = 11 : i64} {
  func.func @_skip_att_kernel(%arg0: i32, %arg1: i32, %arg2: memref<1x8x161x16xf32, #tpu.memory_space<vmem>>, %arg3: memref<1x8x2576xf32, #tpu.memory_space<vmem>>, %arg4: memref<16x2576xf32, #tpu.memory_space<vmem>>, %arg5: memref<48x16xf32, #tpu.memory_space<vmem>>, %arg6: memref<1x16xf32, #tpu.memory_space<vmem>>, %arg7: memref<48x16xf32, #tpu.memory_space<vmem>>, %arg8: memref<1x16xf32, #tpu.memory_space<vmem>>, %arg9: memref<48x16xf32, #tpu.memory_space<vmem>>, %arg10: memref<1x16xf32, #tpu.memory_space<vmem>>, %arg11: memref<1x8x2576xf32, #tpu.memory_space<vmem>>, %arg12: memref<1x2576xf32, #tpu.memory_space<vmem>>) attributes {dimension_semantics = [#tpu.dimension_semantics<parallel>, #tpu.dimension_semantics<arbitrary>], iteration_bounds = array<i64: 2, 2>, scalar_prefetch = 0 : i64, scratch_operands = 1 : i64, tpu.core_type = #tpu.core_type<tc>, window_params = [{transform_indices = @transform_0, window_bounds = array<i64: 1, 8, 161, 16>}, {transform_indices = @transform_1, window_bounds = array<i64: 1, 8, 2576>}, {pipeline_mode = #tpu.pipeline_mode<synchronous>, transform_indices = @transform_2, window_bounds = array<i64: 16, 2576>}, {pipeline_mode = #tpu.pipeline_mode<synchronous>, transform_indices = @transform_3, window_bounds = array<i64: 48, 16>}, {pipeline_mode = #tpu.pipeline_mode<synchronous>, transform_indices = @transform_4, window_bounds = array<i64: 1, 16>}, {pipeline_mode = #tpu.pipeline_mode<synchronous>, transform_indices = @transform_5, window_bounds = array<i64: 48, 16>}, {pipeline_mode = #tpu.pipeline_mode<synchronous>, transform_indices = @transform_6, window_bounds = array<i64: 1, 16>}, {pipeline_mode = #tpu.pipeline_mode<synchronous>, transform_indices = @transform_7, window_bounds = array<i64: 48, 16>}, {pipeline_mode = #tpu.pipeline_mode<synchronous>, transform_indices = @transform_8, window_bounds = array<i64: 1, 16>}, {transform_indices = @transform_9, window_bounds = array<i64: 1, 8, 2576>}]} {
    %c0_i32 = arith.constant 0 : i32
    %0 = arith.cmpi eq, %arg1, %c0_i32 : i32
    %1 = arith.extui %0 : i1 to i32
    %c0_i32_0 = arith.constant 0 : i32
    %2 = arith.cmpi ne, %1, %c0_i32_0 : i32
    scf.if %2 {
      %c0_8 = arith.constant 0 : index
      %c0_9 = arith.constant 0 : index
      %c0_10 = arith.constant 0 : index
      %c0_11 = arith.constant 0 : index
      %11 = vector.load %arg2[%c0_8, %c0_9, %c0_10, %c0_11] : memref<1x8x161x16xf32, #tpu.memory_space<vmem>>, vector<1x8x161x16xf32>
      %12 = vector.shape_cast %11 : vector<1x8x161x16xf32> to vector<8x161x16xf32>
      %cst = arith.constant dense<0.000000e+00> : vector<161x16xf32>
      %13 = vector.multi_reduction <add>, %12, %cst [0] : vector<8x161x16xf32> to vector<161x16xf32>
      %cst_12 = arith.constant 8.000000e+00 : f32
      %14 = vector.broadcast %cst_12 : f32 to vector<161x16xf32>
      %15 = arith.divf %13, %14 : vector<161x16xf32>
      %c0_13 = arith.constant 0 : index
      %c0_14 = arith.constant 0 : index
      %16 = vector.load %arg5[%c0_13, %c0_14] : memref<48x16xf32, #tpu.memory_space<vmem>>, vector<48x16xf32>
      %c0_15 = arith.constant 0 : index
      %c0_16 = arith.constant 0 : index
      %17 = vector.load %arg6[%c0_15, %c0_16] : memref<1x16xf32, #tpu.memory_space<vmem>>, vector<1x16xf32>
      %cst_17 = arith.constant 0.000000e+00 : f32
      %18 = vector.broadcast %cst_17 : f32 to vector<2x16xf32>
      %19 = tpu.concatenate %18, %15, %18 in 0 : vector<2x16xf32>, vector<161x16xf32>, vector<2x16xf32> -> vector<165x16xf32>
      %cst_18 = arith.constant 0.000000e+00 : f32
      %20 = vector.broadcast %cst_18 : f32 to vector<161x16xf32>
      %21 = vector.extract_strided_slice %19 {offsets = [0, 0], sizes = [161, 16], strides = [1, 1]} : vector<165x16xf32> to vector<161x16xf32>
      %22 = vector.extract_strided_slice %16 {offsets = [0, 0], sizes = [16, 16], strides = [1, 1]} : vector<48x16xf32> to vector<16x16xf32>
      %cst_19 = arith.constant dense<0.000000e+00> : vector<161x16xf32>
      %23 = tpu.matmul %21, %22, %cst_19 {dimension_numbers = #tpu.dot_dimension_numbers<[1], [0], [0], [1], [0, 0, 1, 1], [], []>} : vector<161x16xf32>, vector<16x16xf32>, vector<161x16xf32> -> vector<161x16xf32>
      %24 = arith.addf %20, %23 : vector<161x16xf32>
      %25 = vector.extract_strided_slice %19 {offsets = [2, 0], sizes = [161, 16], strides = [1, 1]} : vector<165x16xf32> to vector<161x16xf32>
      %26 = vector.extract_strided_slice %16 {offsets = [16, 0], sizes = [16, 16], strides = [1, 1]} : vector<48x16xf32> to vector<16x16xf32>
      %cst_20 = arith.constant dense<0.000000e+00> : vector<161x16xf32>
      %27 = tpu.matmul %25, %26, %cst_20 {dimension_numbers = #tpu.dot_dimension_numbers<[1], [0], [0], [1], [0, 0, 1, 1], [], []>} : vector<161x16xf32>, vector<16x16xf32>, vector<161x16xf32> -> vector<161x16xf32>
      %28 = arith.addf %24, %27 : vector<161x16xf32>
      %29 = vector.extract_strided_slice %19 {offsets = [4, 0], sizes = [161, 16], strides = [1, 1]} : vector<165x16xf32> to vector<161x16xf32>
      %30 = vector.extract_strided_slice %16 {offsets = [32, 0], sizes = [16, 16], strides = [1, 1]} : vector<48x16xf32> to vector<16x16xf32>
      %cst_21 = arith.constant dense<0.000000e+00> : vector<161x16xf32>
      %31 = tpu.matmul %29, %30, %cst_21 {dimension_numbers = #tpu.dot_dimension_numbers<[1], [0], [0], [1], [0, 0, 1, 1], [], []>} : vector<161x16xf32>, vector<16x16xf32>, vector<161x16xf32> -> vector<161x16xf32>
      %32 = arith.addf %28, %31 : vector<161x16xf32>
      %33 = vector.broadcast %17 : vector<1x16xf32> to vector<161x16xf32>
      %34 = arith.addf %32, %33 : vector<161x16xf32>
      %cst_22 = arith.constant 0.000000e+00 : f32
      %35 = vector.broadcast %cst_22 : f32 to vector<161x16xf32>
      %36 = arith.cmpf ogt, %34, %35 : vector<161x16xf32>
      %cst_23 = arith.constant 0.000000e+00 : f32
      %37 = vector.broadcast %cst_23 : f32 to vector<161x16xf32>
      %38 = arith.minimumf %34, %37 : vector<161x16xf32>
      %39 = math.exp %38 : vector<161x16xf32>
      %cst_24 = arith.constant 1.000000e+00 : f32
      %40 = vector.broadcast %cst_24 : f32 to vector<161x16xf32>
      %41 = arith.subf %39, %40 : vector<161x16xf32>
      %42 = arith.select %36, %34, %41 : vector<161x16xi1>, vector<161x16xf32>
      %c0_25 = arith.constant 0 : index
      %c0_26 = arith.constant 0 : index
      %43 = vector.load %arg7[%c0_25, %c0_26] : memref<48x16xf32, #tpu.memory_space<vmem>>, vector<48x16xf32>
      %c0_27 = arith.constant 0 : index
      %c0_28 = arith.constant 0 : index
      %44 = vector.load %arg8[%c0_27, %c0_28] : memref<1x16xf32, #tpu.memory_space<vmem>>, vector<1x16xf32>
      %cst_29 = arith.constant 0.000000e+00 : f32
      %45 = vector.broadcast %cst_29 : f32 to vector<4x16xf32>
      %46 = tpu.concatenate %45, %42, %45 in 0 : vector<4x16xf32>, vector<161x16xf32>, vector<4x16xf32> -> vector<169x16xf32>
      %cst_30 = arith.constant 0.000000e+00 : f32
      %47 = vector.broadcast %cst_30 : f32 to vector<161x16xf32>
      %48 = vector.extract_strided_slice %46 {offsets = [0, 0], sizes = [161, 16], strides = [1, 1]} : vector<169x16xf32> to vector<161x16xf32>
      %49 = vector.extract_strided_slice %43 {offsets = [0, 0], sizes = [16, 16], strides = [1, 1]} : vector<48x16xf32> to vector<16x16xf32>
      %cst_31 = arith.constant dense<0.000000e+00> : vector<161x16xf32>
      %50 = tpu.matmul %48, %49, %cst_31 {dimension_numbers = #tpu.dot_dimension_numbers<[1], [0], [0], [1], [0, 0, 1, 1], [], []>} : vector<161x16xf32>, vector<16x16xf32>, vector<161x16xf32> -> vector<161x16xf32>
      %51 = arith.addf %47, %50 : vector<161x16xf32>
      %52 = vector.extract_strided_slice %46 {offsets = [4, 0], sizes = [161, 16], strides = [1, 1]} : vector<169x16xf32> to vector<161x16xf32>
      %53 = vector.extract_strided_slice %43 {offsets = [16, 0], sizes = [16, 16], strides = [1, 1]} : vector<48x16xf32> to vector<16x16xf32>
      %cst_32 = arith.constant dense<0.000000e+00> : vector<161x16xf32>
      %54 = tpu.matmul %52, %53, %cst_32 {dimension_numbers = #tpu.dot_dimension_numbers<[1], [0], [0], [1], [0, 0, 1, 1], [], []>} : vector<161x16xf32>, vector<16x16xf32>, vector<161x16xf32> -> vector<161x16xf32>
      %55 = arith.addf %51, %54 : vector<161x16xf32>
      %56 = vector.extract_strided_slice %46 {offsets = [8, 0], sizes = [161, 16], strides = [1, 1]} : vector<169x16xf32> to vector<161x16xf32>
      %57 = vector.extract_strided_slice %43 {offsets = [32, 0], sizes = [16, 16], strides = [1, 1]} : vector<48x16xf32> to vector<16x16xf32>
      %cst_33 = arith.constant dense<0.000000e+00> : vector<161x16xf32>
      %58 = tpu.matmul %56, %57, %cst_33 {dimension_numbers = #tpu.dot_dimension_numbers<[1], [0], [0], [1], [0, 0, 1, 1], [], []>} : vector<161x16xf32>, vector<16x16xf32>, vector<161x16xf32> -> vector<161x16xf32>
      %59 = arith.addf %55, %58 : vector<161x16xf32>
      %60 = vector.broadcast %44 : vector<1x16xf32> to vector<161x16xf32>
      %61 = arith.addf %59, %60 : vector<161x16xf32>
      %cst_34 = arith.constant 0.000000e+00 : f32
      %62 = vector.broadcast %cst_34 : f32 to vector<161x16xf32>
      %63 = arith.cmpf ogt, %61, %62 : vector<161x16xf32>
      %cst_35 = arith.constant 0.000000e+00 : f32
      %64 = vector.broadcast %cst_35 : f32 to vector<161x16xf32>
      %65 = arith.minimumf %61, %64 : vector<161x16xf32>
      %66 = math.exp %65 : vector<161x16xf32>
      %cst_36 = arith.constant 1.000000e+00 : f32
      %67 = vector.broadcast %cst_36 : f32 to vector<161x16xf32>
      %68 = arith.subf %66, %67 : vector<161x16xf32>
      %69 = arith.select %63, %61, %68 : vector<161x16xi1>, vector<161x16xf32>
      %c0_37 = arith.constant 0 : index
      %c0_38 = arith.constant 0 : index
      %70 = vector.load %arg9[%c0_37, %c0_38] : memref<48x16xf32, #tpu.memory_space<vmem>>, vector<48x16xf32>
      %c0_39 = arith.constant 0 : index
      %c0_40 = arith.constant 0 : index
      %71 = vector.load %arg10[%c0_39, %c0_40] : memref<1x16xf32, #tpu.memory_space<vmem>>, vector<1x16xf32>
      %cst_41 = arith.constant 0.000000e+00 : f32
      %72 = vector.broadcast %cst_41 : f32 to vector<8x16xf32>
      %73 = tpu.concatenate %72, %69, %72 in 0 : vector<8x16xf32>, vector<161x16xf32>, vector<8x16xf32> -> vector<177x16xf32>
      %cst_42 = arith.constant 0.000000e+00 : f32
      %74 = vector.broadcast %cst_42 : f32 to vector<161x16xf32>
      %75 = vector.extract_strided_slice %73 {offsets = [0, 0], sizes = [161, 16], strides = [1, 1]} : vector<177x16xf32> to vector<161x16xf32>
      %76 = vector.extract_strided_slice %70 {offsets = [0, 0], sizes = [16, 16], strides = [1, 1]} : vector<48x16xf32> to vector<16x16xf32>
      %cst_43 = arith.constant dense<0.000000e+00> : vector<161x16xf32>
      %77 = tpu.matmul %75, %76, %cst_43 {dimension_numbers = #tpu.dot_dimension_numbers<[1], [0], [0], [1], [0, 0, 1, 1], [], []>} : vector<161x16xf32>, vector<16x16xf32>, vector<161x16xf32> -> vector<161x16xf32>
      %78 = arith.addf %74, %77 : vector<161x16xf32>
      %79 = vector.extract_strided_slice %73 {offsets = [8, 0], sizes = [161, 16], strides = [1, 1]} : vector<177x16xf32> to vector<161x16xf32>
      %80 = vector.extract_strided_slice %70 {offsets = [16, 0], sizes = [16, 16], strides = [1, 1]} : vector<48x16xf32> to vector<16x16xf32>
      %cst_44 = arith.constant dense<0.000000e+00> : vector<161x16xf32>
      %81 = tpu.matmul %79, %80, %cst_44 {dimension_numbers = #tpu.dot_dimension_numbers<[1], [0], [0], [1], [0, 0, 1, 1], [], []>} : vector<161x16xf32>, vector<16x16xf32>, vector<161x16xf32> -> vector<161x16xf32>
      %82 = arith.addf %78, %81 : vector<161x16xf32>
      %83 = vector.extract_strided_slice %73 {offsets = [16, 0], sizes = [161, 16], strides = [1, 1]} : vector<177x16xf32> to vector<161x16xf32>
      %84 = vector.extract_strided_slice %70 {offsets = [32, 0], sizes = [16, 16], strides = [1, 1]} : vector<48x16xf32> to vector<16x16xf32>
      %cst_45 = arith.constant dense<0.000000e+00> : vector<161x16xf32>
      %85 = tpu.matmul %83, %84, %cst_45 {dimension_numbers = #tpu.dot_dimension_numbers<[1], [0], [0], [1], [0, 0, 1, 1], [], []>} : vector<161x16xf32>, vector<16x16xf32>, vector<161x16xf32> -> vector<161x16xf32>
      %86 = arith.addf %82, %85 : vector<161x16xf32>
      %87 = vector.broadcast %71 : vector<1x16xf32> to vector<161x16xf32>
      %88 = arith.addf %86, %87 : vector<161x16xf32>
      %cst_46 = arith.constant 0.000000e+00 : f32
      %89 = vector.broadcast %cst_46 : f32 to vector<161x16xf32>
      %90 = arith.cmpf ogt, %88, %89 : vector<161x16xf32>
      %cst_47 = arith.constant 0.000000e+00 : f32
      %91 = vector.broadcast %cst_47 : f32 to vector<161x16xf32>
      %92 = arith.minimumf %88, %91 : vector<161x16xf32>
      %93 = math.exp %92 : vector<161x16xf32>
      %cst_48 = arith.constant 1.000000e+00 : f32
      %94 = vector.broadcast %cst_48 : f32 to vector<161x16xf32>
      %95 = arith.subf %93, %94 : vector<161x16xf32>
      %96 = arith.select %90, %88, %95 : vector<161x16xi1>, vector<161x16xf32>
      %c0_49 = arith.constant 0 : index
      %c0_50 = arith.constant 0 : index
      %97 = vector.load %arg4[%c0_49, %c0_50] : memref<16x2576xf32, #tpu.memory_space<vmem>>, vector<16x2576xf32>
      %cst_51 = arith.constant dense<0.000000e+00> : vector<161x2576xf32>
      %98 = tpu.matmul %96, %97, %cst_51 {dimension_numbers = #tpu.dot_dimension_numbers<[1], [0], [0], [1], [0, 0, 1, 1], [], []>} : vector<161x16xf32>, vector<16x2576xf32>, vector<161x2576xf32> -> vector<161x2576xf32>
      %99 = tpu.iota {dimensions = array<i32: 1>} : vector<161x2576xi32>
      %100 = tpu.iota {dimensions = array<i32: 0>} : vector<161x2576xi32>
      %c16_i32 = arith.constant 16 : i32
      %101 = vector.broadcast %c16_i32 : i32 to vector<161x2576xi32>
      %102 = arith.muli %100, %101 : vector<161x2576xi32>
      %103 = arith.cmpi sge, %99, %102 : vector<161x2576xi32>
      %c16_i32_52 = arith.constant 16 : i32
      %104 = vector.broadcast %c16_i32_52 : i32 to vector<161x2576xi32>
      %105 = arith.muli %100, %104 : vector<161x2576xi32>
      %c16_i32_53 = arith.constant 16 : i32
      %106 = vector.broadcast %c16_i32_53 : i32 to vector<161x2576xi32>
      %107 = arith.addi %105, %106 : vector<161x2576xi32>
      %108 = arith.cmpi slt, %99, %107 : vector<161x2576xi32>
      %109 = arith.andi %103, %108 : vector<161x2576xi1>
      %cst_54 = arith.constant 0.000000e+00 : f32
      %110 = vector.broadcast %cst_54 : f32 to vector<161x2576xf32>
      %111 = arith.select %109, %98, %110 : vector<161x2576xi1>, vector<161x2576xf32>
      %cst_55 = arith.constant dense<0.000000e+00> : vector<2576xf32>
      %112 = vector.multi_reduction <add>, %111, %cst_55 [0] : vector<161x2576xf32> to vector<2576xf32>
      %113 = vector.shape_cast %112 : vector<2576xf32> to vector<1x2576xf32>
      %c0_56 = arith.constant 0 : index
      %c0_57 = arith.constant 0 : index
      %114 = vector.load %arg12[%c0_56, %c0_57] : memref<1x2576xf32, #tpu.memory_space<vmem>>, vector<1x2576xf32>
      tpu.vector_store %arg12[%c0_56, %c0_57], %113 {strides = array<i32>} : memref<1x2576xf32, #tpu.memory_space<vmem>>, vector<1x2576xf32>,
    } else {
    }
    %c0 = arith.constant 0 : index
    %c0_1 = arith.constant 0 : index
    %c0_2 = arith.constant 0 : index
    %3 = vector.load %arg3[%c0, %c0_1, %c0_2] : memref<1x8x2576xf32, #tpu.memory_space<vmem>>, vector<1x8x2576xf32>
    %4 = vector.shape_cast %3 : vector<1x8x2576xf32> to vector<8x2576xf32>
    %c0_3 = arith.constant 0 : index
    %c0_4 = arith.constant 0 : index
    %5 = vector.load %arg12[%c0_3, %c0_4] : memref<1x2576xf32, #tpu.memory_space<vmem>>, vector<1x2576xf32>
    %6 = vector.broadcast %5 : vector<1x2576xf32> to vector<8x2576xf32>
    %7 = arith.mulf %4, %6 : vector<8x2576xf32>
    %c0_5 = arith.constant 0 : index
    %c0_6 = arith.constant 0 : index
    %c0_7 = arith.constant 0 : index
    %8 = vector.load %arg11[%c0_5, %c0_6, %c0_7] : memref<1x8x2576xf32, #tpu.memory_space<vmem>>, vector<1x8x2576xf32>
    %9 = vector.shape_cast %8 : vector<1x8x2576xf32> to vector<8x2576xf32>
    %10 = vector.shape_cast %7 : vector<8x2576xf32> to vector<1x8x2576xf32>
    tpu.vector_store %arg11[%c0_5, %c0_6, %c0_7], %10 {strides = array<i32>} : memref<1x8x2576xf32, #tpu.memory_space<vmem>>, vector<1x8x2576xf32>,
    return
  }
  func.func @transform_0(%arg0: i32, %arg1: i32) -> (i32, i32, i32, i32) {
    %c0_i32 = arith.constant 0 : i32
    %c0_i32_0 = arith.constant 0 : i32
    %c0_i32_1 = arith.constant 0 : i32
    %c0_i32_2 = arith.constant 0 : i32
    return %arg0, %c0_i32, %c0_i32_0, %c0_i32_1 : i32, i32, i32, i32
  }
  func.func @transform_1(%arg0: i32, %arg1: i32) -> (i32, i32, i32) {
    %c0_i32 = arith.constant 0 : i32
    %c0_i32_0 = arith.constant 0 : i32
    return %arg0, %arg1, %c0_i32 : i32, i32, i32
  }
  func.func @transform_2(%arg0: i32, %arg1: i32) -> (i32, i32) {
    %c0_i32 = arith.constant 0 : i32
    %c0_i32_0 = arith.constant 0 : i32
    %c0_i32_1 = arith.constant 0 : i32
    return %c0_i32, %c0_i32_0 : i32, i32
  }
  func.func @transform_3(%arg0: i32, %arg1: i32) -> (i32, i32) {
    %c0_i32 = arith.constant 0 : i32
    %c0_i32_0 = arith.constant 0 : i32
    %c0_i32_1 = arith.constant 0 : i32
    return %c0_i32, %c0_i32_0 : i32, i32
  }
  func.func @transform_4(%arg0: i32, %arg1: i32) -> (i32, i32) {
    %c0_i32 = arith.constant 0 : i32
    %c0_i32_0 = arith.constant 0 : i32
    %c0_i32_1 = arith.constant 0 : i32
    return %c0_i32, %c0_i32_0 : i32, i32
  }
  func.func @transform_5(%arg0: i32, %arg1: i32) -> (i32, i32) {
    %c0_i32 = arith.constant 0 : i32
    %c0_i32_0 = arith.constant 0 : i32
    %c0_i32_1 = arith.constant 0 : i32
    return %c0_i32, %c0_i32_0 : i32, i32
  }
  func.func @transform_6(%arg0: i32, %arg1: i32) -> (i32, i32) {
    %c0_i32 = arith.constant 0 : i32
    %c0_i32_0 = arith.constant 0 : i32
    %c0_i32_1 = arith.constant 0 : i32
    return %c0_i32, %c0_i32_0 : i32, i32
  }
  func.func @transform_7(%arg0: i32, %arg1: i32) -> (i32, i32) {
    %c0_i32 = arith.constant 0 : i32
    %c0_i32_0 = arith.constant 0 : i32
    %c0_i32_1 = arith.constant 0 : i32
    return %c0_i32, %c0_i32_0 : i32, i32
  }
  func.func @transform_8(%arg0: i32, %arg1: i32) -> (i32, i32) {
    %c0_i32 = arith.constant 0 : i32
    %c0_i32_0 = arith.constant 0 : i32
    %c0_i32_1 = arith.constant 0 : i32
    return %c0_i32, %c0_i32_0 : i32, i32
  }
  func.func @transform_9(%arg0: i32, %arg1: i32) -> (i32, i32, i32) {
    %c0_i32 = arith.constant 0 : i32
    %c0_i32_0 = arith.constant 0 : i32
    return %arg0, %arg1, %c0_i32 : i32, i32, i32
  }
}

</mosaic_0001>

<llo_original>
// kernel: skip_att.1
$region0: #{skip_att.1}
  #allocation0 [shape = 'u32[]', space=smem, size = 0x4, offset = 0x4, fixed_abs, tag = 'smem constant byte address 0x4 - core index']
  #allocation1 [shape = 'u32[144,128]{1,0:T(1,128)}', space=vmem, size = 0x12000, scoped, tag = 'internal scratch']
  #allocation2 [shape = 'f32[1,2576]{1,0:T(1,128)}', space=vmem, size = 0x2a00, scoped, tag = 'scratch operand']
  %s0 = inlined_call_operand.vmem [shape: f32[2,8,161,16], index: 0, kind: input, shape index: {}]
  %s1 = inlined_call_operand.vmem [shape: f32[2,16,2576], index: 1, kind: input, shape index: {}]
  %s2 = inlined_call_operand.vmem [shape: f32[16,2576], index: 2, kind: input, shape index: {}]
  %s3 = inlined_call_operand.vmem [shape: f32[48,16], index: 3, kind: input, shape index: {}]
  %s4 = inlined_call_operand.vmem [shape: f32[1,16], index: 4, kind: input, shape index: {}]
  %s5 = inlined_call_operand.vmem [shape: f32[48,16], index: 5, kind: input, shape index: {}]
  %s6 = inlined_call_operand.vmem [shape: f32[1,16], index: 6, kind: input, shape index: {}]
  %s7 = inlined_call_operand.vmem [shape: f32[48,16], index: 7, kind: input, shape index: {}]
  %s8 = inlined_call_operand.vmem [shape: f32[1,16], index: 8, kind: input, shape index: {}]
  %s9 = inlined_call_operand.vmem [shape: f32[2,16,2576], index: 9, kind: output, shape index: {}]
  %s10 = sld [smem:[#allocation0]]
  $region73: #{skip_att.1} parent=0
    _
  %s12 = ssub.s32 1, %s10
  %s13 = scalar_select 0, %s12, %s10
  loop: start=0, step=1, limit=6
  $region2: #{skip_att.1} parent=0 // loop_pre_header
    _
  $region3: #{skip_att.1} parent=0 // loop_header
    %s15 = sphi 0, %s19
    %p16 = scmp.ge.s32.totalorder %s15, 6
    %s22 = sphi 0, %s34
    %s23 = sphi 0, %s30
    %s24 = sphi 0, %s22
    %s25 = sphi 0, %s23
    %s26 = sphi 0, %s24
    %s27 = sphi 0, %s25
    %s37 = sphi 0, %s39
    %s40 = sphi 0, %s37
    %s41 = sphi 0, %s40
    %s57 = sphi 0, %s41
    %s65 = sphi 0, %s67
    %s68 = sphi 0, %s65
    %s69 = sphi 0, %s68
    %s85 = sphi 0, %s69
    %s89 = sphi 0, %s89
    %s91 = sphi 0, %s89
    %s92 = sphi 0, %s91
    %s106 = sphi 0, %s92
    %s110 = sphi 0, %s110
    %s112 = sphi 0, %s110
    %s113 = sphi 0, %s112
    %s127 = sphi 0, %s113
    %s131 = sphi 0, %s131
    %s133 = sphi 0, %s131
    %s134 = sphi 0, %s133
    %s148 = sphi 0, %s134
    %s152 = sphi 0, %s152
    %s154 = sphi 0, %s152
    %s155 = sphi 0, %s154
    %s169 = sphi 0, %s155
    %s173 = sphi 0, %s173
    %s175 = sphi 0, %s173
    %s176 = sphi 0, %s175
    %s190 = sphi 0, %s176
    %s194 = sphi 0, %s194
    %s196 = sphi 0, %s194
    %s197 = sphi 0, %s196
    %s211 = sphi 0, %s197
    %s215 = sphi 0, %s215
    %s217 = sphi 0, %s215
    %s218 = sphi 0, %s217
    %s232 = sphi 0, %s218
    %s240 = sphi 0, %s242
    %s243 = sphi 0, %s240
    %s244 = sphi 0, %s243
    %s260 = sphi 0, %s244
  $region4: #{skip_att.1} parent=0 // loop_header_branch
    %18 = sbr.rel (%p16) target = $region8
  $region5: #{skip_att.1} parent=0 // loop_body
    %s20 = ssub.s32 %s15, 1
    %s21 = ssub.s32 %s15, 2
    %s28 = sadd.s32 1, %s23
    %p29 = scmp.ge.s32.totalorder %s28, 2
    %s30 = scalar_select %p29, 0, %s28
    %s31 = sadd.s32 1, %s22
    %s32 = scalar_select %p29, %s31, %s22
    %p33 = scmp.ge.s32.totalorder %s32, 2
    %s34 = scalar_select %p33, 0, %s32
    %s35 = ssub.s32 %s22, %s34
    %p36 = scmp.eq.s32.totalorder %s35, 0
    %s38 = sadd.s32 %s37, 1
    %s39 = scalar_select %p36, %s37, %s38
    %p42 = pneg %p36
    %p43 = scmp.eq.s32.totalorder %s15, 3
    %p44 = por %p42, %p43
    %p45 = scmp.ne.s32.totalorder %s37, %s40
    %p46 = scmp.eq.s32.totalorder %s15, 0
    %p47 = por %p45, %p46
    %p48 = scmp.ne.s32.totalorder %s37, %s40
    %p49 = scmp.eq.s32.totalorder %s20, 3
    %p50 = por %p48, %p49
    %p51 = scmp.ne.s32.totalorder %s40, %s41
    %p52 = scmp.eq.s32.totalorder %s20, 0
    %p53 = por %p51, %p52
    %p54 = scmp.ne.s32.totalorder %s40, %s41
    %p55 = scmp.eq.s32.totalorder %s21, 3
    %p56 = por %p54, %p55
    %p58 = scmp.ne.s32.totalorder %s41, %s57
    %p59 = scmp.eq.s32.totalorder %s21, 0
    %p60 = por %p58, %p59
    %s61 = ssub.s32 %s22, %s34
    %s62 = ssub.s32 %s23, %s30
    %s63 = sor.u32 %s61, %s62
    %p64 = scmp.eq.s32.totalorder %s63, 0
    %s66 = sadd.s32 %s65, 1
    %s67 = scalar_select %p64, %s65, %s66
    %p70 = pneg %p64
    %p71 = scmp.eq.s32.totalorder %s15, 3
    %p72 = por %p70, %p71
    %p73 = scmp.ne.s32.totalorder %s65, %s68
    %p74 = scmp.eq.s32.totalorder %s15, 0
    %p75 = por %p73, %p74
    %p76 = scmp.ne.s32.totalorder %s65, %s68
    %p77 = scmp.eq.s32.totalorder %s20, 3
    %p78 = por %p76, %p77
    %p79 = scmp.ne.s32.totalorder %s68, %s69
    %p80 = scmp.eq.s32.totalorder %s20, 0
    %p81 = por %p79, %p80
    %p82 = scmp.ne.s32.totalorder %s68, %s69
    %p83 = scmp.eq.s32.totalorder %s21, 3
    %p84 = por %p82, %p83
    %p86 = scmp.ne.s32.totalorder %s69, %s85
    %p87 = scmp.eq.s32.totalorder %s21, 0
    %p88 = por %p86, %p87
    %s90 = sadd.s32 %s89, 1
    %p93 = scmp.eq.s32.totalorder %s15, 3
    %p94 = scmp.ne.s32.totalorder %s89, %s91
    %p95 = scmp.eq.s32.totalorder %s15, 0
    %p96 = por %p94, %p95
    %p97 = scmp.ne.s32.totalorder %s89, %s91
    %p98 = scmp.eq.s32.totalorder %s20, 3
    %p99 = por %p97, %p98
    %p100 = scmp.ne.s32.totalorder %s91, %s92
    %p101 = scmp.eq.s32.totalorder %s20, 0
    %p102 = por %p100, %p101
    %p103 = scmp.ne.s32.totalorder %s91, %s92
    %p104 = scmp.eq.s32.totalorder %s21, 3
    %p105 = por %p103, %p104
    %p107 = scmp.ne.s32.totalorder %s92, %s106
    %p108 = scmp.eq.s32.totalorder %s21, 0
    %p109 = por %p107, %p108
    %s111 = sadd.s32 %s110, 1
    %p114 = scmp.eq.s32.totalorder %s15, 3
    %p115 = scmp.ne.s32.totalorder %s110, %s112
    %p116 = scmp.eq.s32.totalorder %s15, 0
    %p117 = por %p115, %p116
    %p118 = scmp.ne.s32.totalorder %s110, %s112
    %p119 = scmp.eq.s32.totalorder %s20, 3
    %p120 = por %p118, %p119
    %p121 = scmp.ne.s32.totalorder %s112, %s113
    %p122 = scmp.eq.s32.totalorder %s20, 0
    %p123 = por %p121, %p122
    %p124 = scmp.ne.s32.totalorder %s112, %s113
    %p125 = scmp.eq.s32.totalorder %s21, 3
    %p126 = por %p124, %p125
    %p128 = scmp.ne.s32.totalorder %s113, %s127
    %p129 = scmp.eq.s32.totalorder %s21, 0
    %p130 = por %p128, %p129
    %s132 = sadd.s32 %s131, 1
    %p135 = scmp.eq.s32.totalorder %s15, 3
    %p136 = scmp.ne.s32.totalorder %s131, %s133
    %p137 = scmp.eq.s32.totalorder %s15, 0
    %p138 = por %p136, %p137
    %p139 = scmp.ne.s32.totalorder %s131, %s133
    %p140 = scmp.eq.s32.totalorder %s20, 3
    %p141 = por %p139, %p140
    %p142 = scmp.ne.s32.totalorder %s133, %s134
    %p143 = scmp.eq.s32.totalorder %s20, 0
    %p144 = por %p142, %p143
    %p145 = scmp.ne.s32.totalorder %s133, %s134
    %p146 = scmp.eq.s32.totalorder %s21, 3
    %p147 = por %p145, %p146
    %p149 = scmp.ne.s32.totalorder %s134, %s148
    %p150 = scmp.eq.s32.totalorder %s21, 0
    %p151 = por %p149, %p150
    %s153 = sadd.s32 %s152, 1
    %p156 = scmp.eq.s32.totalorder %s15, 3
    %p157 = scmp.ne.s32.totalorder %s152, %s154
    %p158 = scmp.eq.s32.totalorder %s15, 0
    %p159 = por %p157, %p158
    %p160 = scmp.ne.s32.totalorder %s152, %s154
    %p161 = scmp.eq.s32.totalorder %s20, 3
    %p162 = por %p160, %p161
    %p163 = scmp.ne.s32.totalorder %s154, %s155
    %p164 = scmp.eq.s32.totalorder %s20, 0
    %p165 = por %p163, %p164
    %p166 = scmp.ne.s32.totalorder %s154, %s155
    %p167 = scmp.eq.s32.totalorder %s21, 3
    %p168 = por %p166, %p167
    %p170 = scmp.ne.s32.totalorder %s155, %s169
    %p171 = scmp.eq.s32.totalorder %s21, 0
    %p172 = por %p170, %p171
    %s174 = sadd.s32 %s173, 1
    %p177 = scmp.eq.s32.totalorder %s15, 3
    %p178 = scmp.ne.s32.totalorder %s173, %s175
    %p179 = scmp.eq.s32.totalorder %s15, 0
    %p180 = por %p178, %p179
    %p181 = scmp.ne.s32.totalorder %s173, %s175
    %p182 = scmp.eq.s32.totalorder %s20, 3
    %p183 = por %p181, %p182
    %p184 = scmp.ne.s32.totalorder %s175, %s176
    %p185 = scmp.eq.s32.totalorder %s20, 0
    %p186 = por %p184, %p185
    %p187 = scmp.ne.s32.totalorder %s175, %s176
    %p188 = scmp.eq.s32.totalorder %s21, 3
    %p189 = por %p187, %p188
    %p191 = scmp.ne.s32.totalorder %s176, %s190
    %p192 = scmp.eq.s32.totalorder %s21, 0
    %p193 = por %p191, %p192
    %s195 = sadd.s32 %s194, 1
    %p198 = scmp.eq.s32.totalorder %s15, 3
    %p199 = scmp.ne.s32.totalorder %s194, %s196
    %p200 = scmp.eq.s32.totalorder %s15, 0
    %p201 = por %p199, %p200
    %p202 = scmp.ne.s32.totalorder %s194, %s196
    %p203 = scmp.eq.s32.totalorder %s20, 3
    %p204 = por %p202, %p203
    %p205 = scmp.ne.s32.totalorder %s196, %s197
    %p206 = scmp.eq.s32.totalorder %s20, 0
    %p207 = por %p205, %p206
    %p208 = scmp.ne.s32.totalorder %s196, %s197
    %p209 = scmp.eq.s32.totalorder %s21, 3
    %p210 = por %p208, %p209
    %p212 = scmp.ne.s32.totalorder %s197, %s211
    %p213 = scmp.eq.s32.totalorder %s21, 0
    %p214 = por %p212, %p213
    %s216 = sadd.s32 %s215, 1
    %p219 = scmp.eq.s32.totalorder %s15, 3
    %p220 = scmp.ne.s32.totalorder %s215, %s217
    %p221 = scmp.eq.s32.totalorder %s15, 0
    %p222 = por %p220, %p221
    %p223 = scmp.ne.s32.totalorder %s215, %s217
    %p224 = scmp.eq.s32.totalorder %s20, 3
    %p225 = por %p223, %p224
    %p226 = scmp.ne.s32.totalorder %s217, %s218
    %p227 = scmp.eq.s32.totalorder %s20, 0
    %p228 = por %p226, %p227
    %p229 = scmp.ne.s32.totalorder %s217, %s218
    %p230 = scmp.eq.s32.totalorder %s21, 3
    %p231 = por %p229, %p230
    %p233 = scmp.ne.s32.totalorder %s218, %s232
    %p234 = scmp.eq.s32.totalorder %s21, 0
    %p235 = por %p233, %p234
    %s236 = ssub.s32 %s22, %s34
    %s237 = ssub.s32 %s23, %s30
    %s238 = sor.u32 %s236, %s237
    %p239 = scmp.eq.s32.totalorder %s238, 0
    %s241 = sadd.s32 %s240, 1
    %s242 = scalar_select %p239, %s240, %s241
    %p245 = pneg %p239
    %p246 = scmp.eq.s32.totalorder %s15, 3
    %p247 = por %p245, %p246
    %p248 = scmp.ne.s32.totalorder %s240, %s243
    %p249 = scmp.eq.s32.totalorder %s15, 0
    %p250 = por %p248, %p249
    %p251 = scmp.ne.s32.totalorder %s240, %s243
    %p252 = scmp.eq.s32.totalorder %s20, 3
    %p253 = por %p251, %p252
    %p254 = scmp.ne.s32.totalorder %s243, %s244
    %p255 = scmp.eq.s32.totalorder %s20, 0
    %p256 = por %p254, %p255
    %p257 = scmp.ne.s32.totalorder %s243, %s244
    %p258 = scmp.eq.s32.totalorder %s21, 3
    %p259 = por %p257, %p258
    %p261 = scmp.ne.s32.totalorder %s244, %s260
    %p262 = scmp.eq.s32.totalorder %s21, 0
    %p263 = por %p261, %p262
    %p264 = scmp.le.s32.totalorder 1, %s15
    %p265 = scmp.lt.s32.totalorder %s15, 5
    %p266 = pnand %p264, %p265
    %p267 = pneg %p266
    // Predicated region
    $region9: #{skip_att.1} parent=5 // pred_check
      _
    $region10: #{skip_att.1} parent=5 // pred_check_branch
      %269 = sbr.rel (%p266) target = $region12
    $region11: #{skip_att.1} parent=5 // pred_region
      %s270 = ssub.s32 %s15, 1
      // Predicated region
      $region13: #{skip_att.1} parent=11 // pred_check
        %p271 = pneg %p102
      $region14: #{skip_att.1} parent=11 // pred_check_branch
        %273 = sbr.rel (%p271) target = $region16
      $region15: #{skip_att.1} parent=11 // pred_region
        _
      $region16: #{skip_att.1} parent=11 // pred_fallthru
        _
      // Predicated region
      $region17: #{skip_att.1} parent=11 // pred_check
        %p274 = pneg %p123
      $region18: #{skip_att.1} parent=11 // pred_check_branch
        %276 = sbr.rel (%p274) target = $region20
      $region19: #{skip_att.1} parent=11 // pred_region
        _
      $region20: #{skip_att.1} parent=11 // pred_fallthru
        _
      // Predicated region
      $region21: #{skip_att.1} parent=11 // pred_check
        %p277 = pneg %p144
      $region22: #{skip_att.1} parent=11 // pred_check_branch
        %279 = sbr.rel (%p277) target = $region24
      $region23: #{skip_att.1} parent=11 // pred_region
        _
      $region24: #{skip_att.1} parent=11 // pred_fallthru
        _
      // Predicated region
      $region25: #{skip_att.1} parent=11 // pred_check
        %p280 = pneg %p165
      $region26: #{skip_att.1} parent=11 // pred_check_branch
        %282 = sbr.rel (%p280) target = $region28
      $region27: #{skip_att.1} parent=11 // pred_region
        _
      $region28: #{skip_att.1} parent=11 // pred_fallthru
        _
      // Predicated region
      $region29: #{skip_att.1} parent=11 // pred_check
        %p283 = pneg %p186
      $region30: #{skip_att.1} parent=11 // pred_check_branch
        %285 = sbr.rel (%p283) target = $region32
      $region31: #{skip_att.1} parent=11 // pred_region
        _
      $region32: #{skip_att.1} parent=11 // pred_fallthru
        _
      // Predicated region
      $region33: #{skip_att.1} parent=11 // pred_check
        %p286 = pneg %p207
      $region34: #{skip_att.1} parent=11 // pred_check_branch
        %288 = sbr.rel (%p286) target = $region36
      $region35: #{skip_att.1} parent=11 // pred_region
        _
      $region36: #{skip_att.1} parent=11 // pred_fallthru
        _
      // Predicated region
      $region37: #{skip_att.1} parent=11 // pred_check
        %p289 = pneg %p228
      $region38: #{skip_att.1} parent=11 // pred_check_branch
        %291 = sbr.rel (%p289) target = $region40
      $region39: #{skip_att.1} parent=11 // pred_region
        _
      $region40: #{skip_att.1} parent=11 // pred_fallthru
        _
    $region12: #{skip_att.1} parent=5 // pred_fallthru
      _
    %p292 = scmp.lt.s32.totalorder %s15, 4
    // Predicated region
    $region41: #{skip_att.1} parent=5 // pred_check
      %p293 = pneg %p292
    $region42: #{skip_att.1} parent=5 // pred_check_branch
      %295 = sbr.rel (%p293) target = $region44
    $region43: #{skip_att.1} parent=5 // pred_region
      // Predicated region
      $region45: #{skip_att.1} parent=43 // pred_check
        %p296 = pneg %p47
      $region46: #{skip_att.1} parent=43 // pred_check_branch
        %298 = sbr.rel (%p296) target = $region48
      $region47: #{skip_att.1} parent=43 // pred_region
        %p299 = scmp.lt.s32.totalorder %s22, 1
        %s300 = scalar_select %p299, %s22, 1
        %s301 = smul.addr %s300, 168
        %s302 = smul.addr %s301, 8
        %s303 = scalar_lea.vmem %s0, %s302
      $region48: #{skip_att.1} parent=43 // pred_fallthru
        _
      // Predicated region
      $region49: #{skip_att.1} parent=43 // pred_check
        %p304 = pneg %p75
      $region50: #{skip_att.1} parent=43 // pred_check_branch
        %306 = sbr.rel (%p304) target = $region52
      $region51: #{skip_att.1} parent=43 // pred_region
        %p307 = scmp.lt.s32.totalorder %s22, 1
        %s308 = scalar_select %p307, %s22, 1
        %p309 = scmp.lt.s32.totalorder %s23, 1
        %s310 = scalar_select %p309, %s23, 1
        %s311 = smul.addr %s310, 21
        %s312 = smul.addr %s308, 42
        %s313 = sadd.s32 %s311, %s312
        %s314 = smul.addr %s313, 8
        %s315 = scalar_lea.vmem %s1, %s314
      $region52: #{skip_att.1} parent=43 // pred_fallthru
        _
    $region44: #{skip_att.1} parent=5 // pred_fallthru
      _
    %p316 = scmp.le.s32.totalorder 1, %s15
    %p317 = scmp.lt.s32.totalorder %s15, 5
    %p318 = pnand %p316, %p317
    %p319 = pneg %p318
    // Predicated region
    $region53: #{skip_att.1} parent=5 // pred_check
      _
    $region54: #{skip_att.1} parent=5 // pred_check_branch
      %321 = sbr.rel (%p318) target = $region56
    $region55: #{skip_att.1} parent=5 // pred_region
      %s322 = ssub.s32 %s15, 1
      %p323 = scmp.lt.s32.totalorder %s24, 1
      %s324 = scalar_select %p323, %s24, 1
      %s325 = smul.addr %s324, 168
      %s326 = smul.addr %s325, 8
      %s327 = scalar_lea.vmem %s0, %s326
      %p328 = pneg %p53
      %p329 = pneg %p50
      %p330 = scmp.lt.s32.totalorder %s24, 1
      %s331 = scalar_select %p330, %s24, 1
      %p332 = scmp.lt.s32.totalorder %s25, 1
      %s333 = scalar_select %p332, %s25, 1
      %s334 = smul.addr %s333, 21
      %s335 = smul.addr %s331, 42
      %s336 = sadd.s32 %s334, %s335
      %s337 = smul.addr %s336, 8
      %s338 = scalar_lea.vmem %s1, %s337
      %p339 = pneg %p81
      %p340 = pneg %p78
      %p341 = pneg %p102
      %p342 = pneg %p99
      %p343 = pneg %p123
      %p344 = pneg %p120
      %p345 = pneg %p144
      %p346 = pneg %p141
      %p347 = pneg %p165
      %p348 = pneg %p162
      %p349 = pneg %p186
      %p350 = pneg %p183
      %p351 = pneg %p207
      %p352 = pneg %p204
      %p353 = pneg %p228
      %p354 = pneg %p225
      %p355 = pneg %p256
      %p356 = pneg %p253
      %p357 = scmp.lt.s32.totalorder %s24, 1
      %s358 = scalar_select %p357, %s24, 1
      %p359 = scmp.lt.s32.totalorder %s25, 1
      %s360 = scalar_select %p359, %s25, 1
      %s361 = smul.addr %s360, 21
      %s362 = smul.addr %s358, 42
      %s363 = sadd.s32 %s361, %s362
      %s364 = smul.addr %s363, 8
      %s365 = scalar_lea.vmem %s9, %s364
      %p366 = scmp.lt.s32.totalorder %s24, 1
      %s367 = scalar_select %p366, %s24, 1
      %s368 = smul.addr %s367, 168
      %s369 = smul.addr %s368, 8
      %s370 = scalar_lea.vmem %s0, %s369
      %p371 = scmp.lt.s32.totalorder %s24, 1
      %s372 = scalar_select %p371, %s24, 1
      %p373 = scmp.lt.s32.totalorder %s25, 1
      %s374 = scalar_select %p373, %s25, 1
      %s375 = smul.addr %s374, 21
      %s376 = smul.addr %s372, 42
      %s377 = sadd.s32 %s375, %s376
      %s378 = smul.addr %s377, 8
      %s379 = scalar_lea.vmem %s1, %s378
      %p380 = scmp.lt.s32.totalorder %s24, 1
      %s381 = scalar_select %p380, %s24, 1
      %p382 = scmp.lt.s32.totalorder %s25, 1
      %s383 = scalar_select %p382, %s25, 1
      %s384 = smul.addr %s383, 21
      %s385 = smul.addr %s381, 42
      %s386 = sadd.s32 %s384, %s385
      %s387 = smul.addr %s386, 8
      %s388 = scalar_lea.vmem %s9, %s387
      %p389 = scmp.eq.s32.totalorder %s25, 0
      // Predicated region
      $region57: #{skip_att.1} parent=55 // pred_check
        %p390 = pneg %p389
      $region58: #{skip_att.1} parent=55 // pred_check_branch
        %392 = sbr.rel (%p390) target = $region60
      $region59: #{skip_att.1} parent=55 // pred_region
        %v393 = vld [vmem:[%s370] sm:$0xff]
        %v394 = vld [vmem:[%s370 + $0x8] sm:$0xff]
        %v395 = vld [vmem:[%s370 + $0x10] sm:$0xff]
        %v396 = vld [vmem:[%s370 + $0x18] sm:$0xff]
        %v397 = vld [vmem:[%s370 + $0x20] sm:$0xff]
        %v398 = vld [vmem:[%s370 + $0x28] sm:$0xff]
        %v399 = vld [vmem:[%s370 + $0x30] sm:$0xff]
        %v400 = vld [vmem:[%s370 + $0x38] sm:$0xff]
        %v401 = vld [vmem:[%s370 + $0x40] sm:$0xff]
        %v402 = vld [vmem:[%s370 + $0x48] sm:$0xff]
        %v403 = vld [vmem:[%s370 + $0x50] sm:$0xff]
        %v404 = vld [vmem:[%s370 + $0x58] sm:$0xff]
        %v405 = vld [vmem:[%s370 + $0x60] sm:$0xff]
        %v406 = vld [vmem:[%s370 + $0x68] sm:$0xff]
        %v407 = vld [vmem:[%s370 + $0x70] sm:$0xff]
        %v408 = vld [vmem:[%s370 + $0x78] sm:$0xff]
        %v409 = vld [vmem:[%s370 + $0x80] sm:$0xff]
        %v410 = vld [vmem:[%s370 + $0x88] sm:$0xff]
        %v411 = vld [vmem:[%s370 + $0x90] sm:$0xff]
        %v412 = vld [vmem:[%s370 + $0x98] sm:$0xff]
        %v413 = vld [vmem:[%s370 + $0xa0] sm:$0x1]
        %v414 = vld [vmem:[%s370 + $0xa8] sm:$0xff]
        %v415 = vld [vmem:[%s370 + $0xb0] sm:$0xff]
        %v416 = vld [vmem:[%s370 + $0xb8] sm:$0xff]
        %v417 = vld [vmem:[%s370 + $0xc0] sm:$0xff]
        %v418 = vld [vmem:[%s370 + $0xc8] sm:$0xff]
        %v419 = vld [vmem:[%s370 + $0xd0] sm:$0xff]
        %v420 = vld [vmem:[%s370 + $0xd8] sm:$0xff]
        %v421 = vld [vmem:[%s370 + $0xe0] sm:$0xff]
        %v422 = vld [vmem:[%s370 + $0xe8] sm:$0xff]
        %v423 = vld [vmem:[%s370 + $0xf0] sm:$0xff]
        %v424 = vld [vmem:[%s370 + $0xf8] sm:$0xff]
        %v425 = vld [vmem:[%s370 + $0x100] sm:$0xff]
        %v426 = vld [vmem:[%s370 + $0x108] sm:$0xff]
        %v427 = vld [vmem:[%s370 + $0x110] sm:$0xff]
        %v428 = vld [vmem:[%s370 + $0x118] sm:$0xff]
        %v429 = vld [vmem:[%s370 + $0x120] sm:$0xff]
        %v430 = vld [vmem:[%s370 + $0x128] sm:$0xff]
        %v431 = vld [vmem:[%s370 + $0x130] sm:$0xff]
        %v432 = vld [vmem:[%s370 + $0x138] sm:$0xff]
        %v433 = vld [vmem:[%s370 + $0x140] sm:$0xff]
        %v434 = vld [vmem:[%s370 + $0x148] sm:$0x1]
        %v435 = vld [vmem:[%s370 + $0x150] sm:$0xff]
        %v436 = vld [vmem:[%s370 + $0x158] sm:$0xff]
        %v437 = vld [vmem:[%s370 + $0x160] sm:$0xff]
        %v438 = vld [vmem:[%s370 + $0x168] sm:$0xff]
        %v439 = vld [vmem:[%s370 + $0x170] sm:$0xff]
        %v440 = vld [vmem:[%s370 + $0x178] sm:$0xff]
        %v441 = vld [vmem:[%s370 + $0x180] sm:$0xff]
        %v442 = vld [vmem:[%s370 + $0x188] sm:$0xff]
        %v443 = vld [vmem:[%s370 + $0x190] sm:$0xff]
        %v444 = vld [vmem:[%s370 + $0x198] sm:$0xff]
        %v445 = vld [vmem:[%s370 + $0x1a0] sm:$0xff]
        %v446 = vld [vmem:[%s370 + $0x1a8] sm:$0xff]
        %v447 = vld [vmem:[%s370 + $0x1b0] sm:$0xff]
        %v448 = vld [vmem:[%s370 + $0x1b8] sm:$0xff]
        %v449 = vld [vmem:[%s370 + $0x1c0] sm:$0xff]
        %v450 = vld [vmem:[%s370 + $0x1c8] sm:$0xff]
        %v451 = vld [vmem:[%s370 + $0x1d0] sm:$0xff]
        %v452 = vld [vmem:[%s370 + $0x1d8] sm:$0xff]
        %v453 = vld [vmem:[%s370 + $0x1e0] sm:$0xff]
        %v454 = vld [vmem:[%s370 + $0x1e8] sm:$0xff]
        %v455 = vld [vmem:[%s370 + $0x1f0] sm:$0x1]
        %v456 = vld [vmem:[%s370 + $0x1f8] sm:$0xff]
        %v457 = vld [vmem:[%s370 + $0x200] sm:$0xff]
        %v458 = vld [vmem:[%s370 + $0x208] sm:$0xff]
        %v459 = vld [vmem:[%s370 + $0x210] sm:$0xff]
        %v460 = vld [vmem:[%s370 + $0x218] sm:$0xff]
        %v461 = vld [vmem:[%s370 + $0x220] sm:$0xff]
        %v462 = vld [vmem:[%s370 + $0x228] sm:$0xff]
        %v463 = vld [vmem:[%s370 + $0x230] sm:$0xff]
        %v464 = vld [vmem:[%s370 + $0x238] sm:$0xff]
        %v465 = vld [vmem:[%s370 + $0x240] sm:$0xff]
        %v466 = vld [vmem:[%s370 + $0x248] sm:$0xff]
        %v467 = vld [vmem:[%s370 + $0x250] sm:$0xff]
        %v468 = vld [vmem:[%s370 + $0x258] sm:$0xff]
        %v469 = vld [vmem:[%s370 + $0x260] sm:$0xff]
        %v470 = vld [vmem:[%s370 + $0x268] sm:$0xff]
        %v471 = vld [vmem:[%s370 + $0x270] sm:$0xff]
        %v472 = vld [vmem:[%s370 + $0x278] sm:$0xff]
        %v473 = vld [vmem:[%s370 + $0x280] sm:$0xff]
        %v474 = vld [vmem:[%s370 + $0x288] sm:$0xff]
        %v475 = vld [vmem:[%s370 + $0x290] sm:$0xff]
        %v476 = vld [vmem:[%s370 + $0x298] sm:$0x1]
        %v477 = vld [vmem:[%s370 + $0x2a0] sm:$0xff]
        %v478 = vld [vmem:[%s370 + $0x2a8] sm:$0xff]
        %v479 = vld [vmem:[%s370 + $0x2b0] sm:$0xff]
        %v480 = vld [vmem:[%s370 + $0x2b8] sm:$0xff]
        %v481 = vld [vmem:[%s370 + $0x2c0] sm:$0xff]
        %v482 = vld [vmem:[%s370 + $0x2c8] sm:$0xff]
        %v483 = vld [vmem:[%s370 + $0x2d0] sm:$0xff]
        %v484 = vld [vmem:[%s370 + $0x2d8] sm:$0xff]
        %v485 = vld [vmem:[%s370 + $0x2e0] sm:$0xff]
        %v486 = vld [vmem:[%s370 + $0x2e8] sm:$0xff]
        %v487 = vld [vmem:[%s370 + $0x2f0] sm:$0xff]
        %v488 = vld [vmem:[%s370 + $0x2f8] sm:$0xff]
        %v489 = vld [vmem:[%s370 + $0x300] sm:$0xff]
        %v490 = vld [vmem:[%s370 + $0x308] sm:$0xff]
        %v491 = vld [vmem:[%s370 + $0x310] sm:$0xff]
        %v492 = vld [vmem:[%s370 + $0x318] sm:$0xff]
        %v493 = vld [vmem:[%s370 + $0x320] sm:$0xff]
        %v494 = vld [vmem:[%s370 + $0x328] sm:$0xff]
        %v495 = vld [vmem:[%s370 + $0x330] sm:$0xff]
        %v496 = vld [vmem:[%s370 + $0x338] sm:$0xff]
        %v497 = vld [vmem:[%s370 + $0x340] sm:$0x1]
        %v498 = vld [vmem:[%s370 + $0x348] sm:$0xff]
        %v499 = vld [vmem:[%s370 + $0x350] sm:$0xff]
        %v500 = vld [vmem:[%s370 + $0x358] sm:$0xff]
        %v501 = vld [vmem:[%s370 + $0x360] sm:$0xff]
        %v502 = vld [vmem:[%s370 + $0x368] sm:$0xff]
        %v503 = vld [vmem:[%s370 + $0x370] sm:$0xff]
        %v504 = vld [vmem:[%s370 + $0x378] sm:$0xff]
        %v505 = vld [vmem:[%s370 + $0x380] sm:$0xff]
        %v506 = vld [vmem:[%s370 + $0x388] sm:$0xff]
        %v507 = vld [vmem:[%s370 + $0x390] sm:$0xff]
        %v508 = vld [vmem:[%s370 + $0x398] sm:$0xff]
        %v509 = vld [vmem:[%s370 + $0x3a0] sm:$0xff]
        %v510 = vld [vmem:[%s370 + $0x3a8] sm:$0xff]
        %v511 = vld [vmem:[%s370 + $0x3b0] sm:$0xff]
        %v512 = vld [vmem:[%s370 + $0x3b8] sm:$0xff]
        %v513 = vld [vmem:[%s370 + $0x3c0] sm:$0xff]
        %v514 = vld [vmem:[%s370 + $0x3c8] sm:$0xff]
        %v515 = vld [vmem:[%s370 + $0x3d0] sm:$0xff]
        %v516 = vld [vmem:[%s370 + $0x3d8] sm:$0xff]
        %v517 = vld [vmem:[%s370 + $0x3e0] sm:$0xff]
        %v518 = vld [vmem:[%s370 + $0x3e8] sm:$0x1]
        %v519 = vld [vmem:[%s370 + $0x3f0] sm:$0xff]
        %v520 = vld [vmem:[%s370 + $0x3f8] sm:$0xff]
        %v521 = vld [vmem:[%s370 + $0x400] sm:$0xff]
        %v522 = vld [vmem:[%s370 + $0x408] sm:$0xff]
        %v523 = vld [vmem:[%s370 + $0x410] sm:$0xff]
        %v524 = vld [vmem:[%s370 + $0x418] sm:$0xff]
        %v525 = vld [vmem:[%s370 + $0x420] sm:$0xff]
        %v526 = vld [vmem:[%s370 + $0x428] sm:$0xff]
        %v527 = vld [vmem:[%s370 + $0x430] sm:$0xff]
        %v528 = vld [vmem:[%s370 + $0x438] sm:$0xff]
        %v529 = vld [vmem:[%s370 + $0x440] sm:$0xff]
        %v530 = vld [vmem:[%s370 + $0x448] sm:$0xff]
        %v531 = vld [vmem:[%s370 + $0x450] sm:$0xff]
        %v532 = vld [vmem:[%s370 + $0x458] sm:$0xff]
        %v533 = vld [vmem:[%s370 + $0x460] sm:$0xff]
        %v534 = vld [vmem:[%s370 + $0x468] sm:$0xff]
        %v535 = vld [vmem:[%s370 + $0x470] sm:$0xff]
        %v536 = vld [vmem:[%s370 + $0x478] sm:$0xff]
        %v537 = vld [vmem:[%s370 + $0x480] sm:$0xff]
        %v538 = vld [vmem:[%s370 + $0x488] sm:$0xff]
        %v539 = vld [vmem:[%s370 + $0x490] sm:$0x1]
        %v540 = vld [vmem:[%s370 + $0x498] sm:$0xff]
        %v541 = vld [vmem:[%s370 + $0x4a0] sm:$0xff]
        %v542 = vld [vmem:[%s370 + $0x4a8] sm:$0xff]
        %v543 = vld [vmem:[%s370 + $0x4b0] sm:$0xff]
        %v544 = vld [vmem:[%s370 + $0x4b8] sm:$0xff]
        %v545 = vld [vmem:[%s370 + $0x4c0] sm:$0xff]
        %v546 = vld [vmem:[%s370 + $0x4c8] sm:$0xff]
        %v547 = vld [vmem:[%s370 + $0x4d0] sm:$0xff]
        %v548 = vld [vmem:[%s370 + $0x4d8] sm:$0xff]
        %v549 = vld [vmem:[%s370 + $0x4e0] sm:$0xff]
        %v550 = vld [vmem:[%s370 + $0x4e8] sm:$0xff]
        %v551 = vld [vmem:[%s370 + $0x4f0] sm:$0xff]
        %v552 = vld [vmem:[%s370 + $0x4f8] sm:$0xff]
        %v553 = vld [vmem:[%s370 + $0x500] sm:$0xff]
        %v554 = vld [vmem:[%s370 + $0x508] sm:$0xff]
        %v555 = vld [vmem:[%s370 + $0x510] sm:$0xff]
        %v556 = vld [vmem:[%s370 + $0x518] sm:$0xff]
        %v557 = vld [vmem:[%s370 + $0x520] sm:$0xff]
        %v558 = vld [vmem:[%s370 + $0x528] sm:$0xff]
        %v559 = vld [vmem:[%s370 + $0x530] sm:$0xff]
        %v560 = vld [vmem:[%s370 + $0x538] sm:$0x1]
        %vm561 = vcmask 130048
        %v562 = vsel %vm561, %v393, 0.0
        %v563 = vsel %vm561, %v414, 0.0
        %v564 = vadd.f32 %v562, %v563
        %v565 = vsel %vm561, %v435, 0.0
        %v566 = vadd.f32 %v564, %v565
        %v567 = vsel %vm561, %v456, 0.0
        %v568 = vadd.f32 %v566, %v567
        %v569 = vsel %vm561, %v477, 0.0
        %v570 = vadd.f32 %v568, %v569
        %v571 = vsel %vm561, %v498, 0.0
        %v572 = vadd.f32 %v570, %v571
        %v573 = vsel %vm561, %v519, 0.0
        %v574 = vadd.f32 %v572, %v573
        %v575 = vsel %vm561, %v540, 0.0
        %v576 = vadd.f32 %v574, %v575
        %v577 = vsel %vm561, %v394, 0.0
        %v578 = vsel %vm561, %v415, 0.0
        %v579 = vadd.f32 %v577, %v578
        %v580 = vsel %vm561, %v436, 0.0
        %v581 = vadd.f32 %v579, %v580
        %v582 = vsel %vm561, %v457, 0.0
        %v583 = vadd.f32 %v581, %v582
        %v584 = vsel %vm561, %v478, 0.0
        %v585 = vadd.f32 %v583, %v584
        %v586 = vsel %vm561, %v499, 0.0
        %v587 = vadd.f32 %v585, %v586
        %v588 = vsel %vm561, %v520, 0.0
        %v589 = vadd.f32 %v587, %v588
        %v590 = vsel %vm561, %v541, 0.0
        %v591 = vadd.f32 %v589, %v590
        %v592 = vsel %vm561, %v395, 0.0
        %v593 = vsel %vm561, %v416, 0.0
        %v594 = vadd.f32 %v592, %v593
        %v595 = vsel %vm561, %v437, 0.0
        %v596 = vadd.f32 %v594, %v595
        %v597 = vsel %vm561, %v458, 0.0
        %v598 = vadd.f32 %v596, %v597
        %v599 = vsel %vm561, %v479, 0.0
        %v600 = vadd.f32 %v598, %v599
        %v601 = vsel %vm561, %v500, 0.0
        %v602 = vadd.f32 %v600, %v601
        %v603 = vsel %vm561, %v521, 0.0
        %v604 = vadd.f32 %v602, %v603
        %v605 = vsel %vm561, %v542, 0.0
        %v606 = vadd.f32 %v604, %v605
        %v607 = vsel %vm561, %v396, 0.0
        %v608 = vsel %vm561, %v417, 0.0
        %v609 = vadd.f32 %v607, %v608
        %v610 = vsel %vm561, %v438, 0.0
        %v611 = vadd.f32 %v609, %v610
        %v612 = vsel %vm561, %v459, 0.0
        %v613 = vadd.f32 %v611, %v612
        %v614 = vsel %vm561, %v480, 0.0
        %v615 = vadd.f32 %v613, %v614
        %v616 = vsel %vm561, %v501, 0.0
        %v617 = vadd.f32 %v615, %v616
        %v618 = vsel %vm561, %v522, 0.0
        %v619 = vadd.f32 %v617, %v618
        %v620 = vsel %vm561, %v543, 0.0
        %v621 = vadd.f32 %v619, %v620
        %v622 = vsel %vm561, %v397, 0.0
        %v623 = vsel %vm561, %v418, 0.0
        %v624 = vadd.f32 %v622, %v623
        %v625 = vsel %vm561, %v439, 0.0
        %v626 = vadd.f32 %v624, %v625
        %v627 = vsel %vm561, %v460, 0.0
        %v628 = vadd.f32 %v626, %v627
        %v629 = vsel %vm561, %v481, 0.0
        %v630 = vadd.f32 %v628, %v629
        %v631 = vsel %vm561, %v502, 0.0
        %v632 = vadd.f32 %v630, %v631
        %v633 = vsel %vm561, %v523, 0.0
        %v634 = vadd.f32 %v632, %v633
        %v635 = vsel %vm561, %v544, 0.0
        %v636 = vadd.f32 %v634, %v635
        %v637 = vsel %vm561, %v398, 0.0
        %v638 = vsel %vm561, %v419, 0.0
        %v639 = vadd.f32 %v637, %v638
        %v640 = vsel %vm561, %v440, 0.0
        %v641 = vadd.f32 %v639, %v640
        %v642 = vsel %vm561, %v461, 0.0
        %v643 = vadd.f32 %v641, %v642
        %v644 = vsel %vm561, %v482, 0.0
        %v645 = vadd.f32 %v643, %v644
        %v646 = vsel %vm561, %v503, 0.0
        %v647 = vadd.f32 %v645, %v646
        %v648 = vsel %vm561, %v524, 0.0
        %v649 = vadd.f32 %v647, %v648
        %v650 = vsel %vm561, %v545, 0.0
        %v651 = vadd.f32 %v649, %v650
        %v652 = vsel %vm561, %v399, 0.0
        %v653 = vsel %vm561, %v420, 0.0
        %v654 = vadd.f32 %v652, %v653
        %v655 = vsel %vm561, %v441, 0.0
        %v656 = vadd.f32 %v654, %v655
        %v657 = vsel %vm561, %v462, 0.0
        %v658 = vadd.f32 %v656, %v657
        %v659 = vsel %vm561, %v483, 0.0
        %v660 = vadd.f32 %v658, %v659
        %v661 = vsel %vm561, %v504, 0.0
        %v662 = vadd.f32 %v660, %v661
        %v663 = vsel %vm561, %v525, 0.0
        %v664 = vadd.f32 %v662, %v663
        %v665 = vsel %vm561, %v546, 0.0
        %v666 = vadd.f32 %v664, %v665
        %v667 = vsel %vm561, %v400, 0.0
        %v668 = vsel %vm561, %v421, 0.0
        %v669 = vadd.f32 %v667, %v668
        %v670 = vsel %vm561, %v442, 0.0
        %v671 = vadd.f32 %v669, %v670
        %v672 = vsel %vm561, %v463, 0.0
        %v673 = vadd.f32 %v671, %v672
        %v674 = vsel %vm561, %v484, 0.0
        %v675 = vadd.f32 %v673, %v674
        %v676 = vsel %vm561, %v505, 0.0
        %v677 = vadd.f32 %v675, %v676
        %v678 = vsel %vm561, %v526, 0.0
        %v679 = vadd.f32 %v677, %v678
        %v680 = vsel %vm561, %v547, 0.0
        %v681 = vadd.f32 %v679, %v680
        %v682 = vsel %vm561, %v401, 0.0
        %v683 = vsel %vm561, %v422, 0.0
        %v684 = vadd.f32 %v682, %v683
        %v685 = vsel %vm561, %v443, 0.0
        %v686 = vadd.f32 %v684, %v685
        %v687 = vsel %vm561, %v464, 0.0
        %v688 = vadd.f32 %v686, %v687
        %v689 = vsel %vm561, %v485, 0.0
        %v690 = vadd.f32 %v688, %v689
        %v691 = vsel %vm561, %v506, 0.0
        %v692 = vadd.f32 %v690, %v691
        %v693 = vsel %vm561, %v527, 0.0
        %v694 = vadd.f32 %v692, %v693
        %v695 = vsel %vm561, %v548, 0.0
        %v696 = vadd.f32 %v694, %v695
        %v697 = vsel %vm561, %v402, 0.0
        %v698 = vsel %vm561, %v423, 0.0
        %v699 = vadd.f32 %v697, %v698
        %v700 = vsel %vm561, %v444, 0.0
        %v701 = vadd.f32 %v699, %v700
        %v702 = vsel %vm561, %v465, 0.0
        %v703 = vadd.f32 %v701, %v702
        %v704 = vsel %vm561, %v486, 0.0
        %v705 = vadd.f32 %v703, %v704
        %v706 = vsel %vm561, %v507, 0.0
        %v707 = vadd.f32 %v705, %v706
        %v708 = vsel %vm561, %v528, 0.0
        %v709 = vadd.f32 %v707, %v708
        %v710 = vsel %vm561, %v549, 0.0
        %v711 = vadd.f32 %v709, %v710
        %v712 = vsel %vm561, %v403, 0.0
        %v713 = vsel %vm561, %v424, 0.0
        %v714 = vadd.f32 %v712, %v713
        %v715 = vsel %vm561, %v445, 0.0
        %v716 = vadd.f32 %v714, %v715
        %v717 = vsel %vm561, %v466, 0.0
        %v718 = vadd.f32 %v716, %v717
        %v719 = vsel %vm561, %v487, 0.0
        %v720 = vadd.f32 %v718, %v719
        %v721 = vsel %vm561, %v508, 0.0
        %v722 = vadd.f32 %v720, %v721
        %v723 = vsel %vm561, %v529, 0.0
        %v724 = vadd.f32 %v722, %v723
        %v725 = vsel %vm561, %v550, 0.0
        %v726 = vadd.f32 %v724, %v725
        %v727 = vsel %vm561, %v404, 0.0
        %v728 = vsel %vm561, %v425, 0.0
        %v729 = vadd.f32 %v727, %v728
        %v730 = vsel %vm561, %v446, 0.0
        %v731 = vadd.f32 %v729, %v730
        %v732 = vsel %vm561, %v467, 0.0
        %v733 = vadd.f32 %v731, %v732
        %v734 = vsel %vm561, %v488, 0.0
        %v735 = vadd.f32 %v733, %v734
        %v736 = vsel %vm561, %v509, 0.0
        %v737 = vadd.f32 %v735, %v736
        %v738 = vsel %vm561, %v530, 0.0
        %v739 = vadd.f32 %v737, %v738
        %v740 = vsel %vm561, %v551, 0.0
        %v741 = vadd.f32 %v739, %v740
        %v742 = vsel %vm561, %v405, 0.0
        %v743 = vsel %vm561, %v426, 0.0
        %v744 = vadd.f32 %v742, %v743
        %v745 = vsel %vm561, %v447, 0.0
        %v746 = vadd.f32 %v744, %v745
        %v747 = vsel %vm561, %v468, 0.0
        %v748 = vadd.f32 %v746, %v747
        %v749 = vsel %vm561, %v489, 0.0
        %v750 = vadd.f32 %v748, %v749
        %v751 = vsel %vm561, %v510, 0.0
        %v752 = vadd.f32 %v750, %v751
        %v753 = vsel %vm561, %v531, 0.0
        %v754 = vadd.f32 %v752, %v753
        %v755 = vsel %vm561, %v552, 0.0
        %v756 = vadd.f32 %v754, %v755
        %v757 = vsel %vm561, %v406, 0.0
        %v758 = vsel %vm561, %v427, 0.0
        %v759 = vadd.f32 %v757, %v758
        %v760 = vsel %vm561, %v448, 0.0
        %v761 = vadd.f32 %v759, %v760
        %v762 = vsel %vm561, %v469, 0.0
        %v763 = vadd.f32 %v761, %v762
        %v764 = vsel %vm561, %v490, 0.0
        %v765 = vadd.f32 %v763, %v764
        %v766 = vsel %vm561, %v511, 0.0
        %v767 = vadd.f32 %v765, %v766
        %v768 = vsel %vm561, %v532, 0.0
        %v769 = vadd.f32 %v767, %v768
        %v770 = vsel %vm561, %v553, 0.0
        %v771 = vadd.f32 %v769, %v770
        %v772 = vsel %vm561, %v407, 0.0
        %v773 = vsel %vm561, %v428, 0.0
        %v774 = vadd.f32 %v772, %v773
        %v775 = vsel %vm561, %v449, 0.0
        %v776 = vadd.f32 %v774, %v775
        %v777 = vsel %vm561, %v470, 0.0
        %v778 = vadd.f32 %v776, %v777
        %v779 = vsel %vm561, %v491, 0.0
        %v780 = vadd.f32 %v778, %v779
        %v781 = vsel %vm561, %v512, 0.0
        %v782 = vadd.f32 %v780, %v781
        %v783 = vsel %vm561, %v533, 0.0
        %v784 = vadd.f32 %v782, %v783
        %v785 = vsel %vm561, %v554, 0.0
        %v786 = vadd.f32 %v784, %v785
        %v787 = vsel %vm561, %v408, 0.0
        %v788 = vsel %vm561, %v429, 0.0
        %v789 = vadd.f32 %v787, %v788
        %v790 = vsel %vm561, %v450, 0.0
        %v791 = vadd.f32 %v789, %v790
        %v792 = vsel %vm561, %v471, 0.0
        %v793 = vadd.f32 %v791, %v792
        %v794 = vsel %vm561, %v492, 0.0
        %v795 = vadd.f32 %v793, %v794
        %v796 = vsel %vm561, %v513, 0.0
        %v797 = vadd.f32 %v795, %v796
        %v798 = vsel %vm561, %v534, 0.0
        %v799 = vadd.f32 %v797, %v798
        %v800 = vsel %vm561, %v555, 0.0
        %v801 = vadd.f32 %v799, %v800
        %v802 = vsel %vm561, %v409, 0.0
        %v803 = vsel %vm561, %v430, 0.0
        %v804 = vadd.f32 %v802, %v803
        %v805 = vsel %vm561, %v451, 0.0
        %v806 = vadd.f32 %v804, %v805
        %v807 = vsel %vm561, %v472, 0.0
        %v808 = vadd.f32 %v806, %v807
        %v809 = vsel %vm561, %v493, 0.0
        %v810 = vadd.f32 %v808, %v809
        %v811 = vsel %vm561, %v514, 0.0
        %v812 = vadd.f32 %v810, %v811
        %v813 = vsel %vm561, %v535, 0.0
        %v814 = vadd.f32 %v812, %v813
        %v815 = vsel %vm561, %v556, 0.0
        %v816 = vadd.f32 %v814, %v815
        %v817 = vsel %vm561, %v410, 0.0
        %v818 = vsel %vm561, %v431, 0.0
        %v819 = vadd.f32 %v817, %v818
        %v820 = vsel %vm561, %v452, 0.0
        %v821 = vadd.f32 %v819, %v820
        %v822 = vsel %vm561, %v473, 0.0
        %v823 = vadd.f32 %v821, %v822
        %v824 = vsel %vm561, %v494, 0.0
        %v825 = vadd.f32 %v823, %v824
        %v826 = vsel %vm561, %v515, 0.0
        %v827 = vadd.f32 %v825, %v826
        %v828 = vsel %vm561, %v536, 0.0
        %v829 = vadd.f32 %v827, %v828
        %v830 = vsel %vm561, %v557, 0.0
        %v831 = vadd.f32 %v829, %v830
        %v832 = vsel %vm561, %v411, 0.0
        %v833 = vsel %vm561, %v432, 0.0
        %v834 = vadd.f32 %v832, %v833
        %v835 = vsel %vm561, %v453, 0.0
        %v836 = vadd.f32 %v834, %v835
        %v837 = vsel %vm561, %v474, 0.0
        %v838 = vadd.f32 %v836, %v837
        %v839 = vsel %vm561, %v495, 0.0
        %v840 = vadd.f32 %v838, %v839
        %v841 = vsel %vm561, %v516, 0.0
        %v842 = vadd.f32 %v840, %v841
        %v843 = vsel %vm561, %v537, 0.0
        %v844 = vadd.f32 %v842, %v843
        %v845 = vsel %vm561, %v558, 0.0
        %v846 = vadd.f32 %v844, %v845
        %v847 = vsel %vm561, %v412, 0.0
        %v848 = vsel %vm561, %v433, 0.0
        %v849 = vadd.f32 %v847, %v848
        %v850 = vsel %vm561, %v454, 0.0
        %v851 = vadd.f32 %v849, %v850
        %v852 = vsel %vm561, %v475, 0.0
        %v853 = vadd.f32 %v851, %v852
        %v854 = vsel %vm561, %v496, 0.0
        %v855 = vadd.f32 %v853, %v854
        %v856 = vsel %vm561, %v517, 0.0
        %v857 = vadd.f32 %v855, %v856
        %v858 = vsel %vm561, %v538, 0.0
        %v859 = vadd.f32 %v857, %v858
        %v860 = vsel %vm561, %v559, 0.0
        %v861 = vadd.f32 %v859, %v860
        %vm862 = vcmask 122880
        %v863 = vsel %vm862, %v413, 0.0
        %v864 = vsel %vm862, %v434, 0.0
        %v865 = vadd.f32 %v863, %v864
        %v866 = vsel %vm862, %v455, 0.0
        %v867 = vadd.f32 %v865, %v866
        %v868 = vsel %vm862, %v476, 0.0
        %v869 = vadd.f32 %v867, %v868
        %v870 = vsel %vm862, %v497, 0.0
        %v871 = vadd.f32 %v869, %v870
        %v872 = vsel %vm862, %v518, 0.0
        %v873 = vadd.f32 %v871, %v872
        %v874 = vsel %vm862, %v539, 0.0
        %v875 = vadd.f32 %v873, %v874
        %v876 = vsel %vm862, %v560, 0.0
        %v877 = vadd.f32 %v875, %v876
        %v878 = vrcp.pop 8.0
        %v879 = vmul.f32 %v576, %v878
        %v880 = vmul.f32 %v591, %v878
        %v881 = vmul.f32 %v606, %v878
        %v882 = vmul.f32 %v621, %v878
        %v883 = vmul.f32 %v636, %v878
        %v884 = vmul.f32 %v651, %v878
        %v885 = vmul.f32 %v666, %v878
        %v886 = vmul.f32 %v681, %v878
        %v887 = vmul.f32 %v696, %v878
        %v888 = vmul.f32 %v711, %v878
        %v889 = vmul.f32 %v726, %v878
        %v890 = vmul.f32 %v741, %v878
        %v891 = vmul.f32 %v756, %v878
        %v892 = vmul.f32 %v771, %v878
        %v893 = vmul.f32 %v786, %v878
        %v894 = vmul.f32 %v801, %v878
        %v895 = vmul.f32 %v816, %v878
        %v896 = vmul.f32 %v831, %v878
        %v897 = vmul.f32 %v846, %v878
        %v898 = vmul.f32 %v861, %v878
        %v899 = vmul.f32 %v877, %v878
        %v900 = vld [vmem:[%s3] sm:$0xff]
        %v901 = vld [vmem:[%s3 + $0x8] sm:$0xff]
        %v902 = vld [vmem:[%s3 + $0x10] sm:$0xff]
        %v903 = vld [vmem:[%s3 + $0x18] sm:$0xff]
        %v904 = vld [vmem:[%s3 + $0x20] sm:$0xff]
        %v905 = vld [vmem:[%s3 + $0x28] sm:$0xff]
        %v906 = vld [vmem:[%s4] sm:$0x1]
        %vm928 = vcmask 1041408
        %v929 = vrot.slane %v879, 6
        %v930 = vrot.slane %v880, 6
        %v931 = vsel %vm928, %v929, %v930
        %v932 = vrot.slane %v881, 6
        %v933 = vsel %vm928, %v930, %v932
        %v934 = vrot.slane %v882, 6
        %v935 = vsel %vm928, %v932, %v934
        %v936 = vrot.slane %v883, 6
        %v937 = vsel %vm928, %v934, %v936
        %v938 = vrot.slane %v884, 6
        %v939 = vsel %vm928, %v936, %v938
        %v940 = vrot.slane %v885, 6
        %v941 = vsel %vm928, %v938, %v940
        %v942 = vrot.slane %v886, 6
        %v943 = vsel %vm928, %v940, %v942
        %v944 = vrot.slane %v887, 6
        %v945 = vsel %vm928, %v942, %v944
        %v946 = vrot.slane %v888, 6
        %v947 = vsel %vm928, %v944, %v946
        %v948 = vrot.slane %v889, 6
        %v949 = vsel %vm928, %v946, %v948
        %v950 = vrot.slane %v890, 6
        %v951 = vsel %vm928, %v948, %v950
        %v952 = vrot.slane %v891, 6
        %v953 = vsel %vm928, %v950, %v952
        %v954 = vrot.slane %v892, 6
        %v955 = vsel %vm928, %v952, %v954
        %v956 = vrot.slane %v893, 6
        %v957 = vsel %vm928, %v954, %v956
        %v958 = vrot.slane %v894, 6
        %v959 = vsel %vm928, %v956, %v958
        %v960 = vrot.slane %v895, 6
        %v961 = vsel %vm928, %v958, %v960
        %v962 = vrot.slane %v896, 6
        %v963 = vsel %vm928, %v960, %v962
        %v964 = vrot.slane %v897, 6
        %v965 = vsel %vm928, %v962, %v964
        %v966 = vrot.slane %v898, 6
        %v967 = vsel %vm928, %v964, %v966
        %v968 = vrot.slane %v899, 6
        %v969 = vsel %vm928, %v966, %v968
        %v972 = vsel %vm928, 0.0, %v929
        %vm973 = vcmask 1042432
        %v974 = vsel %vm973, %v969, 0.0
        %vm977 = vcmask 1045504
        %v978 = vrot.slane %v972, 2
        %v979 = vrot.slane %v931, 2
        %v980 = vsel %vm977, %v978, %v979
        %v981 = vrot.slane %v933, 2
        %v982 = vsel %vm977, %v979, %v981
        %v983 = vrot.slane %v935, 2
        %v984 = vsel %vm977, %v981, %v983
        %v985 = vrot.slane %v937, 2
        %v986 = vsel %vm977, %v983, %v985
        %v987 = vrot.slane %v939, 2
        %v988 = vsel %vm977, %v985, %v987
        %v989 = vrot.slane %v941, 2
        %v990 = vsel %vm977, %v987, %v989
        %v991 = vrot.slane %v943, 2
        %v992 = vsel %vm977, %v989, %v991
        %v993 = vrot.slane %v945, 2
        %v994 = vsel %vm977, %v991, %v993
        %v995 = vrot.slane %v947, 2
        %v996 = vsel %vm977, %v993, %v995
        %v997 = vrot.slane %v949, 2
        %v998 = vsel %vm977, %v995, %v997
        %v999 = vrot.slane %v951, 2
        %v1000 = vsel %vm977, %v997, %v999
        %v1001 = vrot.slane %v953, 2
        %v1002 = vsel %vm977, %v999, %v1001
        %v1003 = vrot.slane %v955, 2
        %v1004 = vsel %vm977, %v1001, %v1003
        %v1005 = vrot.slane %v957, 2
        %v1006 = vsel %vm977, %v1003, %v1005
        %v1007 = vrot.slane %v959, 2
        %v1008 = vsel %vm977, %v1005, %v1007
        %v1009 = vrot.slane %v961, 2
        %v1010 = vsel %vm977, %v1007, %v1009
        %v1011 = vrot.slane %v963, 2
        %v1012 = vsel %vm977, %v1009, %v1011
        %v1013 = vrot.slane %v965, 2
        %v1014 = vsel %vm977, %v1011, %v1013
        %v1015 = vrot.slane %v967, 2
        %v1016 = vsel %vm977, %v1013, %v1015
        %v1017 = vrot.slane %v974, 2
        %v1018 = vsel %vm977, %v1015, %v1017
        %v1019 = vsel %vm561, %v980, 0
        %v1021 = vsel %vm561, %v982, 0
        %v1023 = vsel %vm561, %v984, 0
        %v1025 = vsel %vm561, %v986, 0
        %v1027 = vsel %vm561, %v988, 0
        %v1029 = vsel %vm561, %v990, 0
        %v1031 = vsel %vm561, %v992, 0
        %v1033 = vsel %vm561, %v994, 0
        %v1035 = vsel %vm561, %v996, 0
        %v1037 = vsel %vm561, %v998, 0
        %v1039 = vsel %vm561, %v1000, 0
        %v1041 = vsel %vm561, %v1002, 0
        %v1043 = vsel %vm561, %v1004, 0
        %v1045 = vsel %vm561, %v1006, 0
        %v1047 = vsel %vm561, %v1008, 0
        %v1049 = vsel %vm561, %v1010, 0
        %v1051 = vsel %vm561, %v1012, 0
        %v1053 = vsel %vm561, %v1014, 0
        %v1055 = vsel %vm561, %v1016, 0
        %v1057 = vsel %vm561, %v1018, 0
        %v1059 = vsel %vm561, %v1017, 0
        %1061 = vmatprep.subr.mxu0 0.0
        %1062 = vmatpush1.msra.mxu0 %v902
        %1063 = vmatprep.subr.mxu0 0.0
        %1064 = vmatpush1.msra.mxu0 %v903
        %1065 = vmatprep.subr.mxu0 0.0
        %1066 = vmatpush1.msra.mxu0 0.0
        %1067 = vmatprep.subr.mxu0 0.0
        %1068 = vmatpush1.msra.mxu0 0.0
        %1069 = vmatprep.subr.mxu0 0.0
        %1070 = vmatpush1.msra.mxu0 0.0
        %1071 = vmatprep.subr.mxu0 0.0
        %1072 = vmatpush1.msra.mxu0 0.0
        %1073 = vmatprep.subr.mxu0 0.0
        %1074 = vmatpush1.msra.mxu0 0.0
        %1075 = vmatprep.subr.mxu0 0.0
        %1076 = vmatpush1.msra.mxu0 0.0
        %1077 = vmatprep.subr.mxu0 0.0
        %1078 = vmatpush1.msra.mxu0 0.0
        %1079 = vmatprep.subr.mxu0 0.0
        %1080 = vmatpush1.msra.mxu0 0.0
        %1081 = vmatprep.subr.mxu0 0.0
        %1082 = vmatpush1.msra.mxu0 0.0
        %1083 = vmatprep.subr.mxu0 0.0
        %1084 = vmatpush1.msra.mxu0 0.0
        %1085 = vmatprep.subr.mxu0 0.0
        %1086 = vmatpush1.msra.mxu0 0.0
        %1087 = vmatprep.subr.mxu0 0.0
        %1088 = vmatpush1.msra.mxu0 0.0
        %1089 = vmatprep.subr.mxu0 0.0
        %1090 = vmatpush1.msra.mxu0 0.0
        %1091 = vmatprep.subr.mxu0 0.0
        %1092 = vmatpush1.msra.mxu0 0.0
        %1093 = vmatprep.subr.mxu0 0.0
        %1094 = vmatpush1.msra.mxu0 0.0
        %1095 = vmatprep.subr.mxu0 0.0
        %1096 = vmatpush1.msra.mxu0 0.0
        %1097 = vmatprep.subr.mxu0 0.0
        %1098 = vmatpush1.msra.mxu0 0.0
        %1099 = vmatprep.subr.mxu0 0.0
        %1100 = vmatpush1.msra.mxu0 0.0
        %1101 = vmatprep.subr.mxu0 0.0
        %1102 = vmatpush1.msra.mxu0 0.0
        %1103 = vmatprep.subr.mxu0 0.0
        %1104 = vmatpush1.msra.mxu0 0.0
        %1105 = vmatprep.subr.mxu0 0.0
        %1106 = vmatpush1.msra.mxu0 0.0
        %1107 = vmatprep.subr.mxu0 0.0
        %1108 = vmatpush1.msra.mxu0 0.0
        %1109 = vmatprep.subr.mxu0 0.0
        %1110 = vmatpush1.msra.mxu0 0.0
        %1111 = vmatprep.subr.mxu0 0.0
        %1112 = vmatpush1.msra.mxu0 0.0
        %1113 = vmatprep.subr.mxu0 0.0
        %1114 = vmatpush1.msra.mxu0 0.0
        %1115 = vmatprep.subr.mxu0 0.0
        %1116 = vmatpush1.msra.mxu0 0.0
        %1117 = vmatprep.subr.mxu0 0.0
        %1118 = vmatpush1.msra.mxu0 0.0
        %1119 = vmatprep.subr.mxu0 0.0
        %1120 = vmatpush1.msra.mxu0 0.0
        %1121 = vmatprep.subr.mxu0 0.0
        %1122 = vmatpush1.msra.mxu0 0.0
        %1123 = vmatprep.subr.mxu0 0.0
        %1124 = vmatpush1.msra.mxu0 0.0
        %1125 = vmatprep.mubr.f32.mxu0 0.0
        %1126 = vmatmul.mubr.f32.gmra.mrb[0].mxu0 %v1019
        %v1127 = vpop.f32.mrb[0].mxu0
        %v1128 = vadd.f32 0.0, %v1127
        %v1129 = vpop.f32.mrb[0].mxu0
        %1130 = vmatprep.mubr.f32.mxu0 0.0
        %1131 = vmatmul.mubr.f32.gmra.mrb[0].mxu0 %v1021
        %v1132 = vpop.f32.mrb[0].mxu0
        %v1133 = vadd.f32 0.0, %v1132
        %v1134 = vpop.f32.mrb[0].mxu0
        %1135 = vmatprep.mubr.f32.mxu0 0.0
        %1136 = vmatmul.mubr.f32.gmra.mrb[0].mxu0 %v1023
        %v1137 = vpop.f32.mrb[0].mxu0
        %v1138 = vadd.f32 0.0, %v1137
        %v1139 = vpop.f32.mrb[0].mxu0
        %1140 = vmatprep.mubr.f32.mxu0 0.0
        %1141 = vmatmul.mubr.f32.gmra.mrb[0].mxu0 %v1025
        %v1142 = vpop.f32.mrb[0].mxu0
        %v1143 = vadd.f32 0.0, %v1142
        %v1144 = vpop.f32.mrb[0].mxu0
        %1145 = vmatprep.mubr.f32.mxu0 0.0
        %1146 = vmatmul.mubr.f32.gmra.mrb[0].mxu0 %v1027
        %v1147 = vpop.f32.mrb[0].mxu0
        %v1148 = vadd.f32 0.0, %v1147
        %v1149 = vpop.f32.mrb[0].mxu0
        %1150 = vmatprep.mubr.f32.mxu0 0.0
        %1151 = vmatmul.mubr.f32.gmra.mrb[0].mxu0 %v1029
        %v1152 = vpop.f32.mrb[0].mxu0
        %v1153 = vadd.f32 0.0, %v1152
        %v1154 = vpop.f32.mrb[0].mxu0
        %1155 = vmatprep.mubr.f32.mxu0 0.0
        %1156 = vmatmul.mubr.f32.gmra.mrb[0].mxu0 %v1031
        %v1157 = vpop.f32.mrb[0].mxu0
        %v1158 = vadd.f32 0.0, %v1157
        %v1159 = vpop.f32.mrb[0].mxu0
        %1160 = vmatprep.mubr.f32.mxu0 0.0
        %1161 = vmatmul.mubr.f32.gmra.mrb[0].mxu0 %v1033
        %v1162 = vpop.f32.mrb[0].mxu0
        %v1163 = vadd.f32 0.0, %v1162
        %v1164 = vpop.f32.mrb[0].mxu0
        %1165 = vmatprep.mubr.f32.mxu0 0.0
        %1166 = vmatmul.mubr.f32.gmra.mrb[0].mxu0 %v1035
        %v1167 = vpop.f32.mrb[0].mxu0
        %v1168 = vadd.f32 0.0, %v1167
        %v1169 = vpop.f32.mrb[0].mxu0
        %1170 = vmatprep.mubr.f32.mxu0 0.0
        %1171 = vmatmul.mubr.f32.gmra.mrb[0].mxu0 %v1037
        %v1172 = vpop.f32.mrb[0].mxu0
        %v1173 = vadd.f32 0.0, %v1172
        %v1174 = vpop.f32.mrb[0].mxu0
        %1175 = vmatprep.mubr.f32.mxu0 0.0
        %1176 = vmatmul.mubr.f32.gmra.mrb[0].mxu0 %v1039
        %v1177 = vpop.f32.mrb[0].mxu0
        %v1178 = vadd.f32 0.0, %v1177
        %v1179 = vpop.f32.mrb[0].mxu0
        %1180 = vmatprep.mubr.f32.mxu0 0.0
        %1181 = vmatmul.mubr.f32.gmra.mrb[0].mxu0 %v1041
        %v1182 = vpop.f32.mrb[0].mxu0
        %v1183 = vadd.f32 0.0, %v1182
        %v1184 = vpop.f32.mrb[0].mxu0
        %1185 = vmatprep.mubr.f32.mxu0 0.0
        %1186 = vmatmul.mubr.f32.gmra.mrb[0].mxu0 %v1043
        %v1187 = vpop.f32.mrb[0].mxu0
        %v1188 = vadd.f32 0.0, %v1187
        %v1189 = vpop.f32.mrb[0].mxu0
        %1190 = vmatprep.mubr.f32.mxu0 0.0
        %1191 = vmatmul.mubr.f32.gmra.mrb[0].mxu0 %v1045
        %v1192 = vpop.f32.mrb[0].mxu0
        %v1193 = vadd.f32 0.0, %v1192
        %v1194 = vpop.f32.mrb[0].mxu0
        %1195 = vmatprep.mubr.f32.mxu0 0.0
        %1196 = vmatmul.mubr.f32.gmra.mrb[0].mxu0 %v1047
        %v1197 = vpop.f32.mrb[0].mxu0
        %v1198 = vadd.f32 0.0, %v1197
        %v1199 = vpop.f32.mrb[0].mxu0
        %1200 = vmatprep.mubr.f32.mxu0 0.0
        %1201 = vmatmul.mubr.f32.gmra.mrb[0].mxu0 %v1049
        %v1202 = vpop.f32.mrb[0].mxu0
        %v1203 = vadd.f32 0.0, %v1202
        %v1204 = vpop.f32.mrb[0].mxu0
        %1205 = vmatprep.mubr.f32.mxu0 0.0
        %1206 = vmatmul.mubr.f32.gmra.mrb[0].mxu0 %v1051
        %v1207 = vpop.f32.mrb[0].mxu0
        %v1208 = vadd.f32 0.0, %v1207
        %v1209 = vpop.f32.mrb[0].mxu0
        %1210 = vmatprep.mubr.f32.mxu0 0.0
        %1211 = vmatmul.mubr.f32.gmra.mrb[0].mxu0 %v1053
        %v1212 = vpop.f32.mrb[0].mxu0
        %v1213 = vadd.f32 0.0, %v1212
        %v1214 = vpop.f32.mrb[0].mxu0
        %1215 = vmatprep.mubr.f32.mxu0 0.0
        %1216 = vmatmul.mubr.f32.gmra.mrb[0].mxu0 %v1055
        %v1217 = vpop.f32.mrb[0].mxu0
        %v1218 = vadd.f32 0.0, %v1217
        %v1219 = vpop.f32.mrb[0].mxu0
        %1220 = vmatprep.mubr.f32.mxu0 0.0
        %1221 = vmatmul.mubr.f32.gmra.mrb[0].mxu0 %v1057
        %v1222 = vpop.f32.mrb[0].mxu0
        %v1223 = vadd.f32 0.0, %v1222
        %v1224 = vpop.f32.mrb[0].mxu0
        %1225 = vmatprep.mubr.f32.mxu0 0.0
        %1226 = vmatmul.mubr.f32.gmra.mrb[0].mxu0 %v1059
        %v1227 = vpop.f32.mrb[0].mxu0
        %v1228 = vadd.f32 0.0, %v1227
        %v1229 = vpop.f32.mrb[0].mxu0
        %1230 = vdwg.mxu0
        %v1231 = vsel %vm561, %v972, 0
        %v1233 = vsel %vm561, %v931, 0
        %v1235 = vsel %vm561, %v933, 0
        %v1237 = vsel %vm561, %v935, 0
        %v1239 = vsel %vm561, %v937, 0
        %v1241 = vsel %vm561, %v939, 0
        %v1243 = vsel %vm561, %v941, 0
        %v1245 = vsel %vm561, %v943, 0
        %v1247 = vsel %vm561, %v945, 0
        %v1249 = vsel %vm561, %v947, 0
        %v1251 = vsel %vm561, %v949, 0
        %v1253 = vsel %vm561, %v951, 0
        %v1255 = vsel %vm561, %v953, 0
        %v1257 = vsel %vm561, %v955, 0
        %v1259 = vsel %vm561, %v957, 0
        %v1261 = vsel %vm561, %v959, 0
        %v1263 = vsel %vm561, %v961, 0
        %v1265 = vsel %vm561, %v963, 0
        %v1267 = vsel %vm561, %v965, 0
        %v1269 = vsel %vm561, %v967, 0
        %v1271 = vsel %vm561, %v974, 0
        %1273 = vmatprep.subr.mxu0 0.0
        %1274 = vmatpush1.msra.mxu0 %v900
        %1275 = vmatprep.subr.mxu0 0.0
        %1276 = vmatpush1.msra.mxu0 %v901
        %1277 = vmatprep.subr.mxu0 0.0
        %1278 = vmatpush1.msra.mxu0 0.0
        %1279 = vmatprep.subr.mxu0 0.0
        %1280 = vmatpush1.msra.mxu0 0.0
        %1281 = vmatprep.subr.mxu0 0.0
        %1282 = vmatpush1.msra.mxu0 0.0
        %1283 = vmatprep.subr.mxu0 0.0
        %1284 = vmatpush1.msra.mxu0 0.0
        %1285 = vmatprep.subr.mxu0 0.0
        %1286 = vmatpush1.msra.mxu0 0.0
        %1287 = vmatprep.subr.mxu0 0.0
        %1288 = vmatpush1.msra.mxu0 0.0
        %1289 = vmatprep.subr.mxu0 0.0
        %1290 = vmatpush1.msra.mxu0 0.0
        %1291 = vmatprep.subr.mxu0 0.0
        %1292 = vmatpush1.msra.mxu0 0.0
        %1293 = vmatprep.subr.mxu0 0.0
        %1294 = vmatpush1.msra.mxu0 0.0
        %1295 = vmatprep.subr.mxu0 0.0
        %1296 = vmatpush1.msra.mxu0 0.0
        %1297 = vmatprep.subr.mxu0 0.0
        %1298 = vmatpush1.msra.mxu0 0.0
        %1299 = vmatprep.subr.mxu0 0.0
        %1300 = vmatpush1.msra.mxu0 0.0
        %1301 = vmatprep.subr.mxu0 0.0
        %1302 = vmatpush1.msra.mxu0 0.0
        %1303 = vmatprep.subr.mxu0 0.0
        %1304 = vmatpush1.msra.mxu0 0.0
        %1305 = vmatprep.subr.mxu0 0.0
        %1306 = vmatpush1.msra.mxu0 0.0
        %1307 = vmatprep.subr.mxu0 0.0
        %1308 = vmatpush1.msra.mxu0 0.0
        %1309 = vmatprep.subr.mxu0 0.0
        %1310 = vmatpush1.msra.mxu0 0.0
        %1311 = vmatprep.subr.mxu0 0.0
        %1312 = vmatpush1.msra.mxu0 0.0
        %1313 = vmatprep.subr.mxu0 0.0
        %1314 = vmatpush1.msra.mxu0 0.0
        %1315 = vmatprep.subr.mxu0 0.0
        %1316 = vmatpush1.msra.mxu0 0.0
        %1317 = vmatprep.subr.mxu0 0.0
        %1318 = vmatpush1.msra.mxu0 0.0
        %1319 = vmatprep.subr.mxu0 0.0
        %1320 = vmatpush1.msra.mxu0 0.0
        %1321 = vmatprep.subr.mxu0 0.0
        %1322 = vmatpush1.msra.mxu0 0.0
        %1323 = vmatprep.subr.mxu0 0.0
        %1324 = vmatpush1.msra.mxu0 0.0
        %1325 = vmatprep.subr.mxu0 0.0
        %1326 = vmatpush1.msra.mxu0 0.0
        %1327 = vmatprep.subr.mxu0 0.0
        %1328 = vmatpush1.msra.mxu0 0.0
        %1329 = vmatprep.subr.mxu0 0.0
        %1330 = vmatpush1.msra.mxu0 0.0
        %1331 = vmatprep.subr.mxu0 0.0
        %1332 = vmatpush1.msra.mxu0 0.0
        %1333 = vmatprep.subr.mxu0 0.0
        %1334 = vmatpush1.msra.mxu0 0.0
        %1335 = vmatprep.subr.mxu0 0.0
        %1336 = vmatpush1.msra.mxu0 0.0
        %1337 = vmatprep.mubr.f32.mxu0 0.0
        %1338 = vmatmul.mubr.f32.gmra.mrb[0].mxu0 %v1231
        %v1339 = vpop.f32.mrb[0].mxu0
        %v1340 = vadd.f32 %v1128, %v1339
        %v1341 = vpop.f32.mrb[0].mxu0
        %1342 = vmatprep.mubr.f32.mxu0 0.0
        %1343 = vmatmul.mubr.f32.gmra.mrb[0].mxu0 %v1233
        %v1344 = vpop.f32.mrb[0].mxu0
        %v1345 = vadd.f32 %v1133, %v1344
        %v1346 = vpop.f32.mrb[0].mxu0
        %1347 = vmatprep.mubr.f32.mxu0 0.0
        %1348 = vmatmul.mubr.f32.gmra.mrb[0].mxu0 %v1235
        %v1349 = vpop.f32.mrb[0].mxu0
        %v1350 = vadd.f32 %v1138, %v1349
        %v1351 = vpop.f32.mrb[0].mxu0
        %1352 = vmatprep.mubr.f32.mxu0 0.0
        %1353 = vmatmul.mubr.f32.gmra.mrb[0].mxu0 %v1237
        %v1354 = vpop.f32.mrb[0].mxu0
        %v1355 = vadd.f32 %v1143, %v1354
        %v1356 = vpop.f32.mrb[0].mxu0
        %1357 = vmatprep.mubr.f32.mxu0 0.0
        %1358 = vmatmul.mubr.f32.gmra.mrb[0].mxu0 %v1239
        %v1359 = vpop.f32.mrb[0].mxu0
        %v1360 = vadd.f32 %v1148, %v1359
        %v1361 = vpop.f32.mrb[0].mxu0
        %1362 = vmatprep.mubr.f32.mxu0 0.0
        %1363 = vmatmul.mubr.f32.gmra.mrb[0].mxu0 %v1241
        %v1364 = vpop.f32.mrb[0].mxu0
        %v1365 = vadd.f32 %v1153, %v1364
        %v1366 = vpop.f32.mrb[0].mxu0
        %1367 = vmatprep.mubr.f32.mxu0 0.0
        %1368 = vmatmul.mubr.f32.gmra.mrb[0].mxu0 %v1243
        %v1369 = vpop.f32.mrb[0].mxu0
        %v1370 = vadd.f32 %v1158, %v1369
        %v1371 = vpop.f32.mrb[0].mxu0
        %1372 = vmatprep.mubr.f32.mxu0 0.0
        %1373 = vmatmul.mubr.f32.gmra.mrb[0].mxu0 %v1245
        %v1374 = vpop.f32.mrb[0].mxu0
        %v1375 = vadd.f32 %v1163, %v1374
        %v1376 = vpop.f32.mrb[0].mxu0
        %1377 = vmatprep.mubr.f32.mxu0 0.0
        %1378 = vmatmul.mubr.f32.gmra.mrb[0].mxu0 %v1247
        %v1379 = vpop.f32.mrb[0].mxu0
        %v1380 = vadd.f32 %v1168, %v1379
        %v1381 = vpop.f32.mrb[0].mxu0
        %1382 = vmatprep.mubr.f32.mxu0 0.0
        %1383 = vmatmul.mubr.f32.gmra.mrb[0].mxu0 %v1249
        %v1384 = vpop.f32.mrb[0].mxu0
        %v1385 = vadd.f32 %v1173, %v1384
        %v1386 = vpop.f32.mrb[0].mxu0
        %1387 = vmatprep.mubr.f32.mxu0 0.0
        %1388 = vmatmul.mubr.f32.gmra.mrb[0].mxu0 %v1251
        %v1389 = vpop.f32.mrb[0].mxu0
        %v1390 = vadd.f32 %v1178, %v1389
        %v1391 = vpop.f32.mrb[0].mxu0
        %1392 = vmatprep.mubr.f32.mxu0 0.0
        %1393 = vmatmul.mubr.f32.gmra.mrb[0].mxu0 %v1253
        %v1394 = vpop.f32.mrb[0].mxu0
        %v1395 = vadd.f32 %v1183, %v1394
        %v1396 = vpop.f32.mrb[0].mxu0
        %1397 = vmatprep.mubr.f32.mxu0 0.0
        %1398 = vmatmul.mubr.f32.gmra.mrb[0].mxu0 %v1255
        %v1399 = vpop.f32.mrb[0].mxu0
        %v1400 = vadd.f32 %v1188, %v1399
        %v1401 = vpop.f32.mrb[0].mxu0
        %1402 = vmatprep.mubr.f32.mxu0 0.0
        %1403 = vmatmul.mubr.f32.gmra.mrb[0].mxu0 %v1257
        %v1404 = vpop.f32.mrb[0].mxu0
        %v1405 = vadd.f32 %v1193, %v1404
        %v1406 = vpop.f32.mrb[0].mxu0
        %1407 = vmatprep.mubr.f32.mxu0 0.0
        %1408 = vmatmul.mubr.f32.gmra.mrb[0].mxu0 %v1259
        %v1409 = vpop.f32.mrb[0].mxu0
        %v1410 = vadd.f32 %v1198, %v1409
        %v1411 = vpop.f32.mrb[0].mxu0
        %1412 = vmatprep.mubr.f32.mxu0 0.0
        %1413 = vmatmul.mubr.f32.gmra.mrb[0].mxu0 %v1261
        %v1414 = vpop.f32.mrb[0].mxu0
        %v1415 = vadd.f32 %v1203, %v1414
        %v1416 = vpop.f32.mrb[0].mxu0
        %1417 = vmatprep.mubr.f32.mxu0 0.0
        %1418 = vmatmul.mubr.f32.gmra.mrb[0].mxu0 %v1263
        %v1419 = vpop.f32.mrb[0].mxu0
        %v1420 = vadd.f32 %v1208, %v1419
        %v1421 = vpop.f32.mrb[0].mxu0
        %1422 = vmatprep.mubr.f32.mxu0 0.0
        %1423 = vmatmul.mubr.f32.gmra.mrb[0].mxu0 %v1265
        %v1424 = vpop.f32.mrb[0].mxu0
        %v1425 = vadd.f32 %v1213, %v1424
        %v1426 = vpop.f32.mrb[0].mxu0
        %1427 = vmatprep.mubr.f32.mxu0 0.0
        %1428 = vmatmul.mubr.f32.gmra.mrb[0].mxu0 %v1267
        %v1429 = vpop.f32.mrb[0].mxu0
        %v1430 = vadd.f32 %v1218, %v1429
        %v1431 = vpop.f32.mrb[0].mxu0
        %1432 = vmatprep.mubr.f32.mxu0 0.0
        %1433 = vmatmul.mubr.f32.gmra.mrb[0].mxu0 %v1269
        %v1434 = vpop.f32.mrb[0].mxu0
        %v1435 = vadd.f32 %v1223, %v1434
        %v1436 = vpop.f32.mrb[0].mxu0
        %1437 = vmatprep.mubr.f32.mxu0 0.0
        %1438 = vmatmul.mubr.f32.gmra.mrb[0].mxu0 %v1271
        %v1439 = vpop.f32.mrb[0].mxu0
        %v1440 = vadd.f32 %v1228, %v1439
        %v1441 = vpop.f32.mrb[0].mxu0
        %1442 = vdwg.mxu0
        %vm1443 = vcmask 1043456
        %v1444 = vrot.slane %v972, 4
        %v1445 = vrot.slane %v931, 4
        %v1446 = vsel %vm1443, %v1444, %v1445
        %v1447 = vrot.slane %v933, 4
        %v1448 = vsel %vm1443, %v1445, %v1447
        %v1449 = vrot.slane %v935, 4
        %v1450 = vsel %vm1443, %v1447, %v1449
        %v1451 = vrot.slane %v937, 4
        %v1452 = vsel %vm1443, %v1449, %v1451
        %v1453 = vrot.slane %v939, 4
        %v1454 = vsel %vm1443, %v1451, %v1453
        %v1455 = vrot.slane %v941, 4
        %v1456 = vsel %vm1443, %v1453, %v1455
        %v1457 = vrot.slane %v943, 4
        %v1458 = vsel %vm1443, %v1455, %v1457
        %v1459 = vrot.slane %v945, 4
        %v1460 = vsel %vm1443, %v1457, %v1459
        %v1461 = vrot.slane %v947, 4
        %v1462 = vsel %vm1443, %v1459, %v1461
        %v1463 = vrot.slane %v949, 4
        %v1464 = vsel %vm1443, %v1461, %v1463
        %v1465 = vrot.slane %v951, 4
        %v1466 = vsel %vm1443, %v1463, %v1465
        %v1467 = vrot.slane %v953, 4
        %v1468 = vsel %vm1443, %v1465, %v1467
        %v1469 = vrot.slane %v955, 4
        %v1470 = vsel %vm1443, %v1467, %v1469
        %v1471 = vrot.slane %v957, 4
        %v1472 = vsel %vm1443, %v1469, %v1471
        %v1473 = vrot.slane %v959, 4
        %v1474 = vsel %vm1443, %v1471, %v1473
        %v1475 = vrot.slane %v961, 4
        %v1476 = vsel %vm1443, %v1473, %v1475
        %v1477 = vrot.slane %v963, 4
        %v1478 = vsel %vm1443, %v1475, %v1477
        %v1479 = vrot.slane %v965, 4
        %v1480 = vsel %vm1443, %v1477, %v1479
        %v1481 = vrot.slane %v967, 4
        %v1482 = vsel %vm1443, %v1479, %v1481
        %v1483 = vrot.slane %v974, 4
        %v1484 = vsel %vm1443, %v1481, %v1483
        %v1485 = vsel %vm561, %v1446, 0
        %v1487 = vsel %vm561, %v1448, 0
        %v1489 = vsel %vm561, %v1450, 0
        %v1491 = vsel %vm561, %v1452, 0
        %v1493 = vsel %vm561, %v1454, 0
        %v1495 = vsel %vm561, %v1456, 0
        %v1497 = vsel %vm561, %v1458, 0
        %v1499 = vsel %vm561, %v1460, 0
        %v1501 = vsel %vm561, %v1462, 0
        %v1503 = vsel %vm561, %v1464, 0
        %v1505 = vsel %vm561, %v1466, 0
        %v1507 = vsel %vm561, %v1468, 0
        %v1509 = vsel %vm561, %v1470, 0
        %v1511 = vsel %vm561, %v1472, 0
        %v1513 = vsel %vm561, %v1474, 0
        %v1515 = vsel %vm561, %v1476, 0
        %v1517 = vsel %vm561, %v1478, 0
        %v1519 = vsel %vm561, %v1480, 0
        %v1521 = vsel %vm561, %v1482, 0
        %v1523 = vsel %vm561, %v1484, 0
        %v1525 = vsel %vm561, %v1483, 0
        %1527 = vmatprep.subr.mxu0 0.0
        %1528 = vmatpush1.msra.mxu0 %v904
        %1529 = vmatprep.subr.mxu0 0.0
        %1530 = vmatpush1.msra.mxu0 %v905
        %1531 = vmatprep.subr.mxu0 0.0
        %1532 = vmatpush1.msra.mxu0 0.0
        %1533 = vmatprep.subr.mxu0 0.0
        %1534 = vmatpush1.msra.mxu0 0.0
        %1535 = vmatprep.subr.mxu0 0.0
        %1536 = vmatpush1.msra.mxu0 0.0
        %1537 = vmatprep.subr.mxu0 0.0
        %1538 = vmatpush1.msra.mxu0 0.0
        %1539 = vmatprep.subr.mxu0 0.0
        %1540 = vmatpush1.msra.mxu0 0.0
        %1541 = vmatprep.subr.mxu0 0.0
        %1542 = vmatpush1.msra.mxu0 0.0
        %1543 = vmatprep.subr.mxu0 0.0
        %1544 = vmatpush1.msra.mxu0 0.0
        %1545 = vmatprep.subr.mxu0 0.0
        %1546 = vmatpush1.msra.mxu0 0.0
        %1547 = vmatprep.subr.mxu0 0.0
        %1548 = vmatpush1.msra.mxu0 0.0
        %1549 = vmatprep.subr.mxu0 0.0
        %1550 = vmatpush1.msra.mxu0 0.0
        %1551 = vmatprep.subr.mxu0 0.0
        %1552 = vmatpush1.msra.mxu0 0.0
        %1553 = vmatprep.subr.mxu0 0.0
        %1554 = vmatpush1.msra.mxu0 0.0
        %1555 = vmatprep.subr.mxu0 0.0
        %1556 = vmatpush1.msra.mxu0 0.0
        %1557 = vmatprep.subr.mxu0 0.0
        %1558 = vmatpush1.msra.mxu0 0.0
        %1559 = vmatprep.subr.mxu0 0.0
        %1560 = vmatpush1.msra.mxu0 0.0
        %1561 = vmatprep.subr.mxu0 0.0
        %1562 = vmatpush1.msra.mxu0 0.0
        %1563 = vmatprep.subr.mxu0 0.0
        %1564 = vmatpush1.msra.mxu0 0.0
        %1565 = vmatprep.subr.mxu0 0.0
        %1566 = vmatpush1.msra.mxu0 0.0
        %1567 = vmatprep.subr.mxu0 0.0
        %1568 = vmatpush1.msra.mxu0 0.0
        %1569 = vmatprep.subr.mxu0 0.0
        %1570 = vmatpush1.msra.mxu0 0.0
        %1571 = vmatprep.subr.mxu0 0.0
        %1572 = vmatpush1.msra.mxu0 0.0
        %1573 = vmatprep.subr.mxu0 0.0
        %1574 = vmatpush1.msra.mxu0 0.0
        %1575 = vmatprep.subr.mxu0 0.0
        %1576 = vmatpush1.msra.mxu0 0.0
        %1577 = vmatprep.subr.mxu0 0.0
        %1578 = vmatpush1.msra.mxu0 0.0
        %1579 = vmatprep.subr.mxu0 0.0
        %1580 = vmatpush1.msra.mxu0 0.0
        %1581 = vmatprep.subr.mxu0 0.0
        %1582 = vmatpush1.msra.mxu0 0.0
        %1583 = vmatprep.subr.mxu0 0.0
        %1584 = vmatpush1.msra.mxu0 0.0
        %1585 = vmatprep.subr.mxu0 0.0
        %1586 = vmatpush1.msra.mxu0 0.0
        %1587 = vmatprep.subr.mxu0 0.0
        %1588 = vmatpush1.msra.mxu0 0.0
        %1589 = vmatprep.subr.mxu0 0.0
        %1590 = vmatpush1.msra.mxu0 0.0
        %1591 = vmatprep.mubr.f32.mxu0 0.0
        %1592 = vmatmul.mubr.f32.gmra.mrb[0].mxu0 %v1485
        %v1593 = vpop.f32.mrb[0].mxu0
        %v1594 = vadd.f32 0.0, %v1593
        %v1595 = vpop.f32.mrb[0].mxu0
        %1596 = vmatprep.mubr.f32.mxu0 0.0
        %1597 = vmatmul.mubr.f32.gmra.mrb[0].mxu0 %v1487
        %v1598 = vpop.f32.mrb[0].mxu0
        %v1599 = vadd.f32 0.0, %v1598
        %v1600 = vpop.f32.mrb[0].mxu0
        %1601 = vmatprep.mubr.f32.mxu0 0.0
        %1602 = vmatmul.mubr.f32.gmra.mrb[0].mxu0 %v1489
        %v1603 = vpop.f32.mrb[0].mxu0
        %v1604 = vadd.f32 0.0, %v1603
        %v1605 = vpop.f32.mrb[0].mxu0
        %1606 = vmatprep.mubr.f32.mxu0 0.0
        %1607 = vmatmul.mubr.f32.gmra.mrb[0].mxu0 %v1491
        %v1608 = vpop.f32.mrb[0].mxu0
        %v1609 = vadd.f32 0.0, %v1608
        %v1610 = vpop.f32.mrb[0].mxu0
        %1611 = vmatprep.mubr.f32.mxu0 0.0
        %1612 = vmatmul.mubr.f32.gmra.mrb[0].mxu0 %v1493
        %v1613 = vpop.f32.mrb[0].mxu0
        %v1614 = vadd.f32 0.0, %v1613
        %v1615 = vpop.f32.mrb[0].mxu0
        %1616 = vmatprep.mubr.f32.mxu0 0.0
        %1617 = vmatmul.mubr.f32.gmra.mrb[0].mxu0 %v1495
        %v1618 = vpop.f32.mrb[0].mxu0
        %v1619 = vadd.f32 0.0, %v1618
        %v1620 = vpop.f32.mrb[0].mxu0
        %1621 = vmatprep.mubr.f32.mxu0 0.0
        %1622 = vmatmul.mubr.f32.gmra.mrb[0].mxu0 %v1497
        %v1623 = vpop.f32.mrb[0].mxu0
        %v1624 = vadd.f32 0.0, %v1623
        %v1625 = vpop.f32.mrb[0].mxu0
        %1626 = vmatprep.mubr.f32.mxu0 0.0
        %1627 = vmatmul.mubr.f32.gmra.mrb[0].mxu0 %v1499
        %v1628 = vpop.f32.mrb[0].mxu0
        %v1629 = vadd.f32 0.0, %v1628
        %v1630 = vpop.f32.mrb[0].mxu0
        %1631 = vmatprep.mubr.f32.mxu0 0.0
        %1632 = vmatmul.mubr.f32.gmra.mrb[0].mxu0 %v1501
        %v1633 = vpop.f32.mrb[0].mxu0
        %v1634 = vadd.f32 0.0, %v1633
        %v1635 = vpop.f32.mrb[0].mxu0
        %1636 = vmatprep.mubr.f32.mxu0 0.0
        %1637 = vmatmul.mubr.f32.gmra.mrb[0].mxu0 %v1503
        %v1638 = vpop.f32.mrb[0].mxu0
        %v1639 = vadd.f32 0.0, %v1638
        %v1640 = vpop.f32.mrb[0].mxu0
        %1641 = vmatprep.mubr.f32.mxu0 0.0
        %1642 = vmatmul.mubr.f32.gmra.mrb[0].mxu0 %v1505
        %v1643 = vpop.f32.mrb[0].mxu0
        %v1644 = vadd.f32 0.0, %v1643
        %v1645 = vpop.f32.mrb[0].mxu0
        %1646 = vmatprep.mubr.f32.mxu0 0.0
        %1647 = vmatmul.mubr.f32.gmra.mrb[0].mxu0 %v1507
        %v1648 = vpop.f32.mrb[0].mxu0
        %v1649 = vadd.f32 0.0, %v1648
        %v1650 = vpop.f32.mrb[0].mxu0
        %1651 = vmatprep.mubr.f32.mxu0 0.0
        %1652 = vmatmul.mubr.f32.gmra.mrb[0].mxu0 %v1509
        %v1653 = vpop.f32.mrb[0].mxu0
        %v1654 = vadd.f32 0.0, %v1653
        %v1655 = vpop.f32.mrb[0].mxu0
        %1656 = vmatprep.mubr.f32.mxu0 0.0
        %1657 = vmatmul.mubr.f32.gmra.mrb[0].mxu0 %v1511
        %v1658 = vpop.f32.mrb[0].mxu0
        %v1659 = vadd.f32 0.0, %v1658
        %v1660 = vpop.f32.mrb[0].mxu0
        %1661 = vmatprep.mubr.f32.mxu0 0.0
        %1662 = vmatmul.mubr.f32.gmra.mrb[0].mxu0 %v1513
        %v1663 = vpop.f32.mrb[0].mxu0
        %v1664 = vadd.f32 0.0, %v1663
        %v1665 = vpop.f32.mrb[0].mxu0
        %1666 = vmatprep.mubr.f32.mxu0 0.0
        %1667 = vmatmul.mubr.f32.gmra.mrb[0].mxu0 %v1515
        %v1668 = vpop.f32.mrb[0].mxu0
        %v1669 = vadd.f32 0.0, %v1668
        %v1670 = vpop.f32.mrb[0].mxu0
        %1671 = vmatprep.mubr.f32.mxu0 0.0
        %1672 = vmatmul.mubr.f32.gmra.mrb[0].mxu0 %v1517
        %v1673 = vpop.f32.mrb[0].mxu0
        %v1674 = vadd.f32 0.0, %v1673
        %v1675 = vpop.f32.mrb[0].mxu0
        %1676 = vmatprep.mubr.f32.mxu0 0.0
        %1677 = vmatmul.mubr.f32.gmra.mrb[0].mxu0 %v1519
        %v1678 = vpop.f32.mrb[0].mxu0
        %v1679 = vadd.f32 0.0, %v1678
        %v1680 = vpop.f32.mrb[0].mxu0
        %1681 = vmatprep.mubr.f32.mxu0 0.0
        %1682 = vmatmul.mubr.f32.gmra.mrb[0].mxu0 %v1521
        %v1683 = vpop.f32.mrb[0].mxu0
        %v1684 = vadd.f32 0.0, %v1683
        %v1685 = vpop.f32.mrb[0].mxu0
        %1686 = vmatprep.mubr.f32.mxu0 0.0
        %1687 = vmatmul.mubr.f32.gmra.mrb[0].mxu0 %v1523
        %v1688 = vpop.f32.mrb[0].mxu0
        %v1689 = vadd.f32 0.0, %v1688
        %v1690 = vpop.f32.mrb[0].mxu0
        %1691 = vmatprep.mubr.f32.mxu0 0.0
        %1692 = vmatmul.mubr.f32.gmra.mrb[0].mxu0 %v1525
        %v1693 = vpop.f32.mrb[0].mxu0
        %v1694 = vadd.f32 0.0, %v1693
        %v1695 = vpop.f32.mrb[0].mxu0
        %1696 = vdwg.mxu0
        %v1697 = vadd.f32 %v1340, %v1594
        %v1698 = vadd.f32 %v1345, %v1599
        %v1699 = vadd.f32 %v1350, %v1604
        %v1700 = vadd.f32 %v1355, %v1609
        %v1701 = vadd.f32 %v1360, %v1614
        %v1702 = vadd.f32 %v1365, %v1619
        %v1703 = vadd.f32 %v1370, %v1624
        %v1704 = vadd.f32 %v1375, %v1629
        %v1705 = vadd.f32 %v1380, %v1634
        %v1706 = vadd.f32 %v1385, %v1639
        %v1707 = vadd.f32 %v1390, %v1644
        %v1708 = vadd.f32 %v1395, %v1649
        %v1709 = vadd.f32 %v1400, %v1654
        %v1710 = vadd.f32 %v1405, %v1659
        %v1711 = vadd.f32 %v1410, %v1664
        %v1712 = vadd.f32 %v1415, %v1669
        %v1713 = vadd.f32 %v1420, %v1674
        %v1714 = vadd.f32 %v1425, %v1679
        %v1715 = vadd.f32 %v1430, %v1684
        %v1716 = vadd.f32 %v1435, %v1689
        %v1717 = vadd.f32 %v1440, %v1694
        %v1719 = vlaneseq
        %v1720 = vshrl.u32 %v1719, 7
        %v1721 = vsub.s32 0, %v1720
        %v1722 = vrot.slane %v906, %v1721
        %v1724 = vadd.f32 %v1697, %v1722
        %v1725 = vadd.f32 %v1698, %v1722
        %v1726 = vadd.f32 %v1699, %v1722
        %v1727 = vadd.f32 %v1700, %v1722
        %v1728 = vadd.f32 %v1701, %v1722
        %v1729 = vadd.f32 %v1702, %v1722
        %v1730 = vadd.f32 %v1703, %v1722
        %v1731 = vadd.f32 %v1704, %v1722
        %v1732 = vadd.f32 %v1705, %v1722
        %v1733 = vadd.f32 %v1706, %v1722
        %v1734 = vadd.f32 %v1707, %v1722
        %v1735 = vadd.f32 %v1708, %v1722
        %v1736 = vadd.f32 %v1709, %v1722
        %v1737 = vadd.f32 %v1710, %v1722
        %v1738 = vadd.f32 %v1711, %v1722
        %v1739 = vadd.f32 %v1712, %v1722
        %v1740 = vadd.f32 %v1713, %v1722
        %v1741 = vadd.f32 %v1714, %v1722
        %v1742 = vadd.f32 %v1715, %v1722
        %v1743 = vadd.f32 %v1716, %v1722
        %v1744 = vadd.f32 %v1717, %v1722
        %vm1745 = vcmp.gt.f32.partialorder %v1724, 0.0
        %vm1746 = vcmp.gt.f32.partialorder %v1725, 0.0
        %vm1747 = vcmp.gt.f32.partialorder %v1726, 0.0
        %vm1748 = vcmp.gt.f32.partialorder %v1727, 0.0
        %vm1749 = vcmp.gt.f32.partialorder %v1728, 0.0
        %vm1750 = vcmp.gt.f32.partialorder %v1729, 0.0
        %vm1751 = vcmp.gt.f32.partialorder %v1730, 0.0
        %vm1752 = vcmp.gt.f32.partialorder %v1731, 0.0
        %vm1753 = vcmp.gt.f32.partialorder %v1732, 0.0
        %vm1754 = vcmp.gt.f32.partialorder %v1733, 0.0
        %vm1755 = vcmp.gt.f32.partialorder %v1734, 0.0
        %vm1756 = vcmp.gt.f32.partialorder %v1735, 0.0
        %vm1757 = vcmp.gt.f32.partialorder %v1736, 0.0
        %vm1758 = vcmp.gt.f32.partialorder %v1737, 0.0
        %vm1759 = vcmp.gt.f32.partialorder %v1738, 0.0
        %vm1760 = vcmp.gt.f32.partialorder %v1739, 0.0
        %vm1761 = vcmp.gt.f32.partialorder %v1740, 0.0
        %vm1762 = vcmp.gt.f32.partialorder %v1741, 0.0
        %vm1763 = vcmp.gt.f32.partialorder %v1742, 0.0
        %vm1764 = vcmp.gt.f32.partialorder %v1743, 0.0
        %vm1765 = vcmp.gt.f32.partialorder %v1744, 0.0
        %v1766 = vmin.f32 %v1724, 0.0
        %v1767 = vmin.f32 %v1725, 0.0
        %v1768 = vmin.f32 %v1726, 0.0
        %v1769 = vmin.f32 %v1727, 0.0
        %v1770 = vmin.f32 %v1728, 0.0
        %v1771 = vmin.f32 %v1729, 0.0
        %v1772 = vmin.f32 %v1730, 0.0
        %v1773 = vmin.f32 %v1731, 0.0
        %v1774 = vmin.f32 %v1732, 0.0
        %v1775 = vmin.f32 %v1733, 0.0
        %v1776 = vmin.f32 %v1734, 0.0
        %v1777 = vmin.f32 %v1735, 0.0
        %v1778 = vmin.f32 %v1736, 0.0
        %v1779 = vmin.f32 %v1737, 0.0
        %v1780 = vmin.f32 %v1738, 0.0
        %v1781 = vmin.f32 %v1739, 0.0
        %v1782 = vmin.f32 %v1740, 0.0
        %v1783 = vmin.f32 %v1741, 0.0
        %v1784 = vmin.f32 %v1742, 0.0
        %v1785 = vmin.f32 %v1743, 0.0
        %v1786 = vmin.f32 %v1744, 0.0
        %v1787 = vmul.f32 %v1766, 1.442695
        %v1788 = vpow.pop %v1787
        %v1789 = vmul.f32 %v1767, 1.442695
        %v1790 = vpow.pop %v1789
        %v1791 = vmul.f32 %v1768, 1.442695
        %v1792 = vpow.pop %v1791
        %v1793 = vmul.f32 %v1769, 1.442695
        %v1794 = vpow.pop %v1793
        %v1795 = vmul.f32 %v1770, 1.442695
        %v1796 = vpow.pop %v1795
        %v1797 = vmul.f32 %v1771, 1.442695
        %v1798 = vpow.pop %v1797
        %v1799 = vmul.f32 %v1772, 1.442695
        %v1800 = vpow.pop %v1799
        %v1801 = vmul.f32 %v1773, 1.442695
        %v1802 = vpow.pop %v1801
        %v1803 = vmul.f32 %v1774, 1.442695
        %v1804 = vpow.pop %v1803
        %v1805 = vmul.f32 %v1775, 1.442695
        %v1806 = vpow.pop %v1805
        %v1807 = vmul.f32 %v1776, 1.442695
        %v1808 = vpow.pop %v1807
        %v1809 = vmul.f32 %v1777, 1.442695
        %v1810 = vpow.pop %v1809
        %v1811 = vmul.f32 %v1778, 1.442695
        %v1812 = vpow.pop %v1811
        %v1813 = vmul.f32 %v1779, 1.442695
        %v1814 = vpow.pop %v1813
        %v1815 = vmul.f32 %v1780, 1.442695
        %v1816 = vpow.pop %v1815
        %v1817 = vmul.f32 %v1781, 1.442695
        %v1818 = vpow.pop %v1817
        %v1819 = vmul.f32 %v1782, 1.442695
        %v1820 = vpow.pop %v1819
        %v1821 = vmul.f32 %v1783, 1.442695
        %v1822 = vpow.pop %v1821
        %v1823 = vmul.f32 %v1784, 1.442695
        %v1824 = vpow.pop %v1823
        %v1825 = vmul.f32 %v1785, 1.442695
        %v1826 = vpow.pop %v1825
        %v1827 = vmul.f32 %v1786, 1.442695
        %v1828 = vpow.pop %v1827
        %v1829 = vsub.f32 %v1788, 1.0
        %v1830 = vsub.f32 %v1790, 1.0
        %v1831 = vsub.f32 %v1792, 1.0
        %v1832 = vsub.f32 %v1794, 1.0
        %v1833 = vsub.f32 %v1796, 1.0
        %v1834 = vsub.f32 %v1798, 1.0
        %v1835 = vsub.f32 %v1800, 1.0
        %v1836 = vsub.f32 %v1802, 1.0
        %v1837 = vsub.f32 %v1804, 1.0
        %v1838 = vsub.f32 %v1806, 1.0
        %v1839 = vsub.f32 %v1808, 1.0
        %v1840 = vsub.f32 %v1810, 1.0
        %v1841 = vsub.f32 %v1812, 1.0
        %v1842 = vsub.f32 %v1814, 1.0
        %v1843 = vsub.f32 %v1816, 1.0
        %v1844 = vsub.f32 %v1818, 1.0
        %v1845 = vsub.f32 %v1820, 1.0
        %v1846 = vsub.f32 %v1822, 1.0
        %v1847 = vsub.f32 %v1824, 1.0
        %v1848 = vsub.f32 %v1826, 1.0
        %v1849 = vsub.f32 %v1828, 1.0
        %v1850 = vsel %vm1745, %v1724, %v1829
        %v1851 = vsel %vm1746, %v1725, %v1830
        %v1852 = vsel %vm1747, %v1726, %v1831
        %v1853 = vsel %vm1748, %v1727, %v1832
        %v1854 = vsel %vm1749, %v1728, %v1833
        %v1855 = vsel %vm1750, %v1729, %v1834
        %v1856 = vsel %vm1751, %v1730, %v1835
        %v1857 = vsel %vm1752, %v1731, %v1836
        %v1858 = vsel %vm1753, %v1732, %v1837
        %v1859 = vsel %vm1754, %v1733, %v1838
        %v1860 = vsel %vm1755, %v1734, %v1839
        %v1861 = vsel %vm1756, %v1735, %v1840
        %v1862 = vsel %vm1757, %v1736, %v1841
        %v1863 = vsel %vm1758, %v1737, %v1842
        %v1864 = vsel %vm1759, %v1738, %v1843
        %v1865 = vsel %vm1760, %v1739, %v1844
        %v1866 = vsel %vm1761, %v1740, %v1845
        %v1867 = vsel %vm1762, %v1741, %v1846
        %v1868 = vsel %vm1763, %v1742, %v1847
        %v1869 = vsel %vm1764, %v1743, %v1848
        %v1870 = vsel %vm1765, %v1744, %v1849
        %v1871 = vld [vmem:[%s5] sm:$0xff]
        %v1872 = vld [vmem:[%s5 + $0x8] sm:$0xff]
        %v1873 = vld [vmem:[%s5 + $0x10] sm:$0xff]
        %v1874 = vld [vmem:[%s5 + $0x18] sm:$0xff]
        %v1875 = vld [vmem:[%s5 + $0x20] sm:$0xff]
        %v1876 = vld [vmem:[%s5 + $0x28] sm:$0xff]
        %v1877 = vld [vmem:[%s6] sm:$0x1]
        %v1899 = vrot.slane %v1850, 4
        %v1900 = vrot.slane %v1851, 4
        %v1901 = vsel %vm1443, %v1899, %v1900
        %v1902 = vrot.slane %v1852, 4
        %v1903 = vsel %vm1443, %v1900, %v1902
        %v1904 = vrot.slane %v1853, 4
        %v1905 = vsel %vm1443, %v1902, %v1904
        %v1906 = vrot.slane %v1854, 4
        %v1907 = vsel %vm1443, %v1904, %v1906
        %v1908 = vrot.slane %v1855, 4
        %v1909 = vsel %vm1443, %v1906, %v1908
        %v1910 = vrot.slane %v1856, 4
        %v1911 = vsel %vm1443, %v1908, %v1910
        %v1912 = vrot.slane %v1857, 4
        %v1913 = vsel %vm1443, %v1910, %v1912
        %v1914 = vrot.slane %v1858, 4
        %v1915 = vsel %vm1443, %v1912, %v1914
        %v1916 = vrot.slane %v1859, 4
        %v1917 = vsel %vm1443, %v1914, %v1916
        %v1918 = vrot.slane %v1860, 4
        %v1919 = vsel %vm1443, %v1916, %v1918
        %v1920 = vrot.slane %v1861, 4
        %v1921 = vsel %vm1443, %v1918, %v1920
        %v1922 = vrot.slane %v1862, 4
        %v1923 = vsel %vm1443, %v1920, %v1922
        %v1924 = vrot.slane %v1863, 4
        %v1925 = vsel %vm1443, %v1922, %v1924
        %v1926 = vrot.slane %v1864, 4
        %v1927 = vsel %vm1443, %v1924, %v1926
        %v1928 = vrot.slane %v1865, 4
        %v1929 = vsel %vm1443, %v1926, %v1928
        %v1930 = vrot.slane %v1866, 4
        %v1931 = vsel %vm1443, %v1928, %v1930
        %v1932 = vrot.slane %v1867, 4
        %v1933 = vsel %vm1443, %v1930, %v1932
        %v1934 = vrot.slane %v1868, 4
        %v1935 = vsel %vm1443, %v1932, %v1934
        %v1936 = vrot.slane %v1869, 4
        %v1937 = vsel %vm1443, %v1934, %v1936
        %v1938 = vrot.slane %v1870, 4
        %v1939 = vsel %vm1443, %v1936, %v1938
        %v1942 = vsel %vm1443, 0.0, %v1899
        %vm1943 = vcmask 1044480
        %v1944 = vsel %vm1943, %v1939, 0.0
        %v1947 = vrot.slane %v1942, 4
        %v1948 = vrot.slane %v1901, 4
        %v1949 = vsel %vm1443, %v1947, %v1948
        %v1950 = vrot.slane %v1903, 4
        %v1951 = vsel %vm1443, %v1948, %v1950
        %v1952 = vrot.slane %v1905, 4
        %v1953 = vsel %vm1443, %v1950, %v1952
        %v1954 = vrot.slane %v1907, 4
        %v1955 = vsel %vm1443, %v1952, %v1954
        %v1956 = vrot.slane %v1909, 4
        %v1957 = vsel %vm1443, %v1954, %v1956
        %v1958 = vrot.slane %v1911, 4
        %v1959 = vsel %vm1443, %v1956, %v1958
        %v1960 = vrot.slane %v1913, 4
        %v1961 = vsel %vm1443, %v1958, %v1960
        %v1962 = vrot.slane %v1915, 4
        %v1963 = vsel %vm1443, %v1960, %v1962
        %v1964 = vrot.slane %v1917, 4
        %v1965 = vsel %vm1443, %v1962, %v1964
        %v1966 = vrot.slane %v1919, 4
        %v1967 = vsel %vm1443, %v1964, %v1966
        %v1968 = vrot.slane %v1921, 4
        %v1969 = vsel %vm1443, %v1966, %v1968
        %v1970 = vrot.slane %v1923, 4
        %v1971 = vsel %vm1443, %v1968, %v1970
        %v1972 = vrot.slane %v1925, 4
        %v1973 = vsel %vm1443, %v1970, %v1972
        %v1974 = vrot.slane %v1927, 4
        %v1975 = vsel %vm1443, %v1972, %v1974
        %v1976 = vrot.slane %v1929, 4
        %v1977 = vsel %vm1443, %v1974, %v1976
        %v1978 = vrot.slane %v1931, 4
        %v1979 = vsel %vm1443, %v1976, %v1978
        %v1980 = vrot.slane %v1933, 4
        %v1981 = vsel %vm1443, %v1978, %v1980
        %v1982 = vrot.slane %v1935, 4
        %v1983 = vsel %vm1443, %v1980, %v1982
        %v1984 = vrot.slane %v1937, 4
        %v1985 = vsel %vm1443, %v1982, %v1984
        %v1986 = vrot.slane %v1944, 4
        %v1987 = vsel %vm1443, %v1984, %v1986
        %v1988 = vsel %vm561, %v1949, 0
        %v1990 = vsel %vm561, %v1951, 0
        %v1992 = vsel %vm561, %v1953, 0
        %v1994 = vsel %vm561, %v1955, 0
        %v1996 = vsel %vm561, %v1957, 0
        %v1998 = vsel %vm561, %v1959, 0
        %v2000 = vsel %vm561, %v1961, 0
        %v2002 = vsel %vm561, %v1963, 0
        %v2004 = vsel %vm561, %v1965, 0
        %v2006 = vsel %vm561, %v1967, 0
        %v2008 = vsel %vm561, %v1969, 0
        %v2010 = vsel %vm561, %v1971, 0
        %v2012 = vsel %vm561, %v1973, 0
        %v2014 = vsel %vm561, %v1975, 0
        %v2016 = vsel %vm561, %v1977, 0
        %v2018 = vsel %vm561, %v1979, 0
        %v2020 = vsel %vm561, %v1981, 0
        %v2022 = vsel %vm561, %v1983, 0
        %v2024 = vsel %vm561, %v1985, 0
        %v2026 = vsel %vm561, %v1987, 0
        %v2028 = vsel %vm561, %v1986, 0
        %2030 = vmatprep.subr.mxu0 0.0
        %2031 = vmatpush1.msra.mxu0 %v1873
        %2032 = vmatprep.subr.mxu0 0.0
        %2033 = vmatpush1.msra.mxu0 %v1874
        %2034 = vmatprep.subr.mxu0 0.0
        %2035 = vmatpush1.msra.mxu0 0.0
        %2036 = vmatprep.subr.mxu0 0.0
        %2037 = vmatpush1.msra.mxu0 0.0
        %2038 = vmatprep.subr.mxu0 0.0
        %2039 = vmatpush1.msra.mxu0 0.0
        %2040 = vmatprep.subr.mxu0 0.0
        %2041 = vmatpush1.msra.mxu0 0.0
        %2042 = vmatprep.subr.mxu0 0.0
        %2043 = vmatpush1.msra.mxu0 0.0
        %2044 = vmatprep.subr.mxu0 0.0
        %2045 = vmatpush1.msra.mxu0 0.0
        %2046 = vmatprep.subr.mxu0 0.0
        %2047 = vmatpush1.msra.mxu0 0.0
        %2048 = vmatprep.subr.mxu0 0.0
        %2049 = vmatpush1.msra.mxu0 0.0
        %2050 = vmatprep.subr.mxu0 0.0
        %2051 = vmatpush1.msra.mxu0 0.0
        %2052 = vmatprep.subr.mxu0 0.0
        %2053 = vmatpush1.msra.mxu0 0.0
        %2054 = vmatprep.subr.mxu0 0.0
        %2055 = vmatpush1.msra.mxu0 0.0
        %2056 = vmatprep.subr.mxu0 0.0
        %2057 = vmatpush1.msra.mxu0 0.0
        %2058 = vmatprep.subr.mxu0 0.0
        %2059 = vmatpush1.msra.mxu0 0.0
        %2060 = vmatprep.subr.mxu0 0.0
        %2061 = vmatpush1.msra.mxu0 0.0
        %2062 = vmatprep.subr.mxu0 0.0
        %2063 = vmatpush1.msra.mxu0 0.0
        %2064 = vmatprep.subr.mxu0 0.0
        %2065 = vmatpush1.msra.mxu0 0.0
        %2066 = vmatprep.subr.mxu0 0.0
        %2067 = vmatpush1.msra.mxu0 0.0
        %2068 = vmatprep.subr.mxu0 0.0
        %2069 = vmatpush1.msra.mxu0 0.0
        %2070 = vmatprep.subr.mxu0 0.0
        %2071 = vmatpush1.msra.mxu0 0.0
        %2072 = vmatprep.subr.mxu0 0.0
        %2073 = vmatpush1.msra.mxu0 0.0
        %2074 = vmatprep.subr.mxu0 0.0
        %2075 = vmatpush1.msra.mxu0 0.0
        %2076 = vmatprep.subr.mxu0 0.0
        %2077 = vmatpush1.msra.mxu0 0.0
        %2078 = vmatprep.subr.mxu0 0.0
        %2079 = vmatpush1.msra.mxu0 0.0
        %2080 = vmatprep.subr.mxu0 0.0
        %2081 = vmatpush1.msra.mxu0 0.0
        %2082 = vmatprep.subr.mxu0 0.0
        %2083 = vmatpush1.msra.mxu0 0.0
        %2084 = vmatprep.subr.mxu0 0.0
        %2085 = vmatpush1.msra.mxu0 0.0
        %2086 = vmatprep.subr.mxu0 0.0
        %2087 = vmatpush1.msra.mxu0 0.0
        %2088 = vmatprep.subr.mxu0 0.0
        %2089 = vmatpush1.msra.mxu0 0.0
        %2090 = vmatprep.subr.mxu0 0.0
        %2091 = vmatpush1.msra.mxu0 0.0
        %2092 = vmatprep.subr.mxu0 0.0
        %2093 = vmatpush1.msra.mxu0 0.0
        %2094 = vmatprep.mubr.f32.mxu0 0.0
        %2095 = vmatmul.mubr.f32.gmra.mrb[0].mxu0 %v1988
        %v2096 = vpop.f32.mrb[0].mxu0
        %v2097 = vadd.f32 0.0, %v2096
        %v2098 = vpop.f32.mrb[0].mxu0
        %2099 = vmatprep.mubr.f32.mxu0 0.0
        %2100 = vmatmul.mubr.f32.gmra.mrb[0].mxu0 %v1990
        %v2101 = vpop.f32.mrb[0].mxu0
        %v2102 = vadd.f32 0.0, %v2101
        %v2103 = vpop.f32.mrb[0].mxu0
        %2104 = vmatprep.mubr.f32.mxu0 0.0
        %2105 = vmatmul.mubr.f32.gmra.mrb[0].mxu0 %v1992
        %v2106 = vpop.f32.mrb[0].mxu0
        %v2107 = vadd.f32 0.0, %v2106
        %v2108 = vpop.f32.mrb[0].mxu0
        %2109 = vmatprep.mubr.f32.mxu0 0.0
        %2110 = vmatmul.mubr.f32.gmra.mrb[0].mxu0 %v1994
        %v2111 = vpop.f32.mrb[0].mxu0
        %v2112 = vadd.f32 0.0, %v2111
        %v2113 = vpop.f32.mrb[0].mxu0
        %2114 = vmatprep.mubr.f32.mxu0 0.0
        %2115 = vmatmul.mubr.f32.gmra.mrb[0].mxu0 %v1996
        %v2116 = vpop.f32.mrb[0].mxu0
        %v2117 = vadd.f32 0.0, %v2116
        %v2118 = vpop.f32.mrb[0].mxu0
        %2119 = vmatprep.mubr.f32.mxu0 0.0
        %2120 = vmatmul.mubr.f32.gmra.mrb[0].mxu0 %v1998
        %v2121 = vpop.f32.mrb[0].mxu0
        %v2122 = vadd.f32 0.0, %v2121
        %v2123 = vpop.f32.mrb[0].mxu0
        %2124 = vmatprep.mubr.f32.mxu0 0.0
        %2125 = vmatmul.mubr.f32.gmra.mrb[0].mxu0 %v2000
        %v2126 = vpop.f32.mrb[0].mxu0
        %v2127 = vadd.f32 0.0, %v2126
        %v2128 = vpop.f32.mrb[0].mxu0
        %2129 = vmatprep.mubr.f32.mxu0 0.0
        %2130 = vmatmul.mubr.f32.gmra.mrb[0].mxu0 %v2002
        %v2131 = vpop.f32.mrb[0].mxu0
        %v2132 = vadd.f32 0.0, %v2131
        %v2133 = vpop.f32.mrb[0].mxu0
        %2134 = vmatprep.mubr.f32.mxu0 0.0
        %2135 = vmatmul.mubr.f32.gmra.mrb[0].mxu0 %v2004
        %v2136 = vpop.f32.mrb[0].mxu0
        %v2137 = vadd.f32 0.0, %v2136
        %v2138 = vpop.f32.mrb[0].mxu0
        %2139 = vmatprep.mubr.f32.mxu0 0.0
        %2140 = vmatmul.mubr.f32.gmra.mrb[0].mxu0 %v2006
        %v2141 = vpop.f32.mrb[0].mxu0
        %v2142 = vadd.f32 0.0, %v2141
        %v2143 = vpop.f32.mrb[0].mxu0
        %2144 = vmatprep.mubr.f32.mxu0 0.0
        %2145 = vmatmul.mubr.f32.gmra.mrb[0].mxu0 %v2008
        %v2146 = vpop.f32.mrb[0].mxu0
        %v2147 = vadd.f32 0.0, %v2146
        %v2148 = vpop.f32.mrb[0].mxu0
        %2149 = vmatprep.mubr.f32.mxu0 0.0
        %2150 = vmatmul.mubr.f32.gmra.mrb[0].mxu0 %v2010
        %v2151 = vpop.f32.mrb[0].mxu0
        %v2152 = vadd.f32 0.0, %v2151
        %v2153 = vpop.f32.mrb[0].mxu0
        %2154 = vmatprep.mubr.f32.mxu0 0.0
        %2155 = vmatmul.mubr.f32.gmra.mrb[0].mxu0 %v2012
        %v2156 = vpop.f32.mrb[0].mxu0
        %v2157 = vadd.f32 0.0, %v2156
        %v2158 = vpop.f32.mrb[0].mxu0
        %2159 = vmatprep.mubr.f32.mxu0 0.0
        %2160 = vmatmul.mubr.f32.gmra.mrb[0].mxu0 %v2014
        %v2161 = vpop.f32.mrb[0].mxu0
        %v2162 = vadd.f32 0.0, %v2161
        %v2163 = vpop.f32.mrb[0].mxu0
        %2164 = vmatprep.mubr.f32.mxu0 0.0
        %2165 = vmatmul.mubr.f32.gmra.mrb[0].mxu0 %v2016
        %v2166 = vpop.f32.mrb[0].mxu0
        %v2167 = vadd.f32 0.0, %v2166
        %v2168 = vpop.f32.mrb[0].mxu0
        %2169 = vmatprep.mubr.f32.mxu0 0.0
        %2170 = vmatmul.mubr.f32.gmra.mrb[0].mxu0 %v2018
        %v2171 = vpop.f32.mrb[0].mxu0
        %v2172 = vadd.f32 0.0, %v2171
        %v2173 = vpop.f32.mrb[0].mxu0
        %2174 = vmatprep.mubr.f32.mxu0 0.0
        %2175 = vmatmul.mubr.f32.gmra.mrb[0].mxu0 %v2020
        %v2176 = vpop.f32.mrb[0].mxu0
        %v2177 = vadd.f32 0.0, %v2176
        %v2178 = vpop.f32.mrb[0].mxu0
        %2179 = vmatprep.mubr.f32.mxu0 0.0
        %2180 = vmatmul.mubr.f32.gmra.mrb[0].mxu0 %v2022
        %v2181 = vpop.f32.mrb[0].mxu0
        %v2182 = vadd.f32 0.0, %v2181
        %v2183 = vpop.f32.mrb[0].mxu0
        %2184 = vmatprep.mubr.f32.mxu0 0.0
        %2185 = vmatmul.mubr.f32.gmra.mrb[0].mxu0 %v2024
        %v2186 = vpop.f32.mrb[0].mxu0
        %v2187 = vadd.f32 0.0, %v2186
        %v2188 = vpop.f32.mrb[0].mxu0
        %2189 = vmatprep.mubr.f32.mxu0 0.0
        %2190 = vmatmul.mubr.f32.gmra.mrb[0].mxu0 %v2026
        %v2191 = vpop.f32.mrb[0].mxu0
        %v2192 = vadd.f32 0.0, %v2191
        %v2193 = vpop.f32.mrb[0].mxu0
        %2194 = vmatprep.mubr.f32.mxu0 0.0
        %2195 = vmatmul.mubr.f32.gmra.mrb[0].mxu0 %v2028
        %v2196 = vpop.f32.mrb[0].mxu0
        %v2197 = vadd.f32 0.0, %v2196
        %v2198 = vpop.f32.mrb[0].mxu0
        %2199 = vdwg.mxu0
        %v2200 = vsel %vm561, %v1942, 0
        %v2202 = vsel %vm561, %v1901, 0
        %v2204 = vsel %vm561, %v1903, 0
        %v2206 = vsel %vm561, %v1905, 0
        %v2208 = vsel %vm561, %v1907, 0
        %v2210 = vsel %vm561, %v1909, 0
        %v2212 = vsel %vm561, %v1911, 0
        %v2214 = vsel %vm561, %v1913, 0
        %v2216 = vsel %vm561, %v1915, 0
        %v2218 = vsel %vm561, %v1917, 0
        %v2220 = vsel %vm561, %v1919, 0
        %v2222 = vsel %vm561, %v1921, 0
        %v2224 = vsel %vm561, %v1923, 0
        %v2226 = vsel %vm561, %v1925, 0
        %v2228 = vsel %vm561, %v1927, 0
        %v2230 = vsel %vm561, %v1929, 0
        %v2232 = vsel %vm561, %v1931, 0
        %v2234 = vsel %vm561, %v1933, 0
        %v2236 = vsel %vm561, %v1935, 0
        %v2238 = vsel %vm561, %v1937, 0
        %v2240 = vsel %vm561, %v1944, 0
        %2242 = vmatprep.subr.mxu0 0.0
        %2243 = vmatpush1.msra.mxu0 %v1871
        %2244 = vmatprep.subr.mxu0 0.0
        %2245 = vmatpush1.msra.mxu0 %v1872
        %2246 = vmatprep.subr.mxu0 0.0
        %2247 = vmatpush1.msra.mxu0 0.0
        %2248 = vmatprep.subr.mxu0 0.0
        %2249 = vmatpush1.msra.mxu0 0.0
        %2250 = vmatprep.subr.mxu0 0.0
        %2251 = vmatpush1.msra.mxu0 0.0
        %2252 = vmatprep.subr.mxu0 0.0
        %2253 = vmatpush1.msra.mxu0 0.0
        %2254 = vmatprep.subr.mxu0 0.0
        %2255 = vmatpush1.msra.mxu0 0.0
        %2256 = vmatprep.subr.mxu0 0.0
        %2257 = vmatpush1.msra.mxu0 0.0
        %2258 = vmatprep.subr.mxu0 0.0
        %2259 = vmatpush1.msra.mxu0 0.0
        %2260 = vmatprep.subr.mxu0 0.0
        %2261 = vmatpush1.msra.mxu0 0.0
        %2262 = vmatprep.subr.mxu0 0.0
        %2263 = vmatpush1.msra.mxu0 0.0
        %2264 = vmatprep.subr.mxu0 0.0
        %2265 = vmatpush1.msra.mxu0 0.0
        %2266 = vmatprep.subr.mxu0 0.0
        %2267 = vmatpush1.msra.mxu0 0.0
        %2268 = vmatprep.subr.mxu0 0.0
        %2269 = vmatpush1.msra.mxu0 0.0
        %2270 = vmatprep.subr.mxu0 0.0
        %2271 = vmatpush1.msra.mxu0 0.0
        %2272 = vmatprep.subr.mxu0 0.0
        %2273 = vmatpush1.msra.mxu0 0.0
        %2274 = vmatprep.subr.mxu0 0.0
        %2275 = vmatpush1.msra.mxu0 0.0
        %2276 = vmatprep.subr.mxu0 0.0
        %2277 = vmatpush1.msra.mxu0 0.0
        %2278 = vmatprep.subr.mxu0 0.0
        %2279 = vmatpush1.msra.mxu0 0.0
        %2280 = vmatprep.subr.mxu0 0.0
        %2281 = vmatpush1.msra.mxu0 0.0
        %2282 = vmatprep.subr.mxu0 0.0
        %2283 = vmatpush1.msra.mxu0 0.0
        %2284 = vmatprep.subr.mxu0 0.0
        %2285 = vmatpush1.msra.mxu0 0.0
        %2286 = vmatprep.subr.mxu0 0.0
        %2287 = vmatpush1.msra.mxu0 0.0
        %2288 = vmatprep.subr.mxu0 0.0
        %2289 = vmatpush1.msra.mxu0 0.0
        %2290 = vmatprep.subr.mxu0 0.0
        %2291 = vmatpush1.msra.mxu0 0.0
        %2292 = vmatprep.subr.mxu0 0.0
        %2293 = vmatpush1.msra.mxu0 0.0
        %2294 = vmatprep.subr.mxu0 0.0
        %2295 = vmatpush1.msra.mxu0 0.0
        %2296 = vmatprep.subr.mxu0 0.0
        %2297 = vmatpush1.msra.mxu0 0.0
        %2298 = vmatprep.subr.mxu0 0.0
        %2299 = vmatpush1.msra.mxu0 0.0
        %2300 = vmatprep.subr.mxu0 0.0
        %2301 = vmatpush1.msra.mxu0 0.0
        %2302 = vmatprep.subr.mxu0 0.0
        %2303 = vmatpush1.msra.mxu0 0.0
        %2304 = vmatprep.subr.mxu0 0.0
        %2305 = vmatpush1.msra.mxu0 0.0
        %2306 = vmatprep.mubr.f32.mxu0 0.0
        %2307 = vmatmul.mubr.f32.gmra.mrb[0].mxu0 %v2200
        %v2308 = vpop.f32.mrb[0].mxu0
        %v2309 = vadd.f32 %v2097, %v2308
        %v2310 = vpop.f32.mrb[0].mxu0
        %2311 = vmatprep.mubr.f32.mxu0 0.0
        %2312 = vmatmul.mubr.f32.gmra.mrb[0].mxu0 %v2202
        %v2313 = vpop.f32.mrb[0].mxu0
        %v2314 = vadd.f32 %v2102, %v2313
        %v2315 = vpop.f32.mrb[0].mxu0
        %2316 = vmatprep.mubr.f32.mxu0 0.0
        %2317 = vmatmul.mubr.f32.gmra.mrb[0].mxu0 %v2204
        %v2318 = vpop.f32.mrb[0].mxu0
        %v2319 = vadd.f32 %v2107, %v2318
        %v2320 = vpop.f32.mrb[0].mxu0
        %2321 = vmatprep.mubr.f32.mxu0 0.0
        %2322 = vmatmul.mubr.f32.gmra.mrb[0].mxu0 %v2206
        %v2323 = vpop.f32.mrb[0].mxu0
        %v2324 = vadd.f32 %v2112, %v2323
        %v2325 = vpop.f32.mrb[0].mxu0
        %2326 = vmatprep.mubr.f32.mxu0 0.0
        %2327 = vmatmul.mubr.f32.gmra.mrb[0].mxu0 %v2208
        %v2328 = vpop.f32.mrb[0].mxu0
        %v2329 = vadd.f32 %v2117, %v2328
        %v2330 = vpop.f32.mrb[0].mxu0
        %2331 = vmatprep.mubr.f32.mxu0 0.0
        %2332 = vmatmul.mubr.f32.gmra.mrb[0].mxu0 %v2210
        %v2333 = vpop.f32.mrb[0].mxu0
        %v2334 = vadd.f32 %v2122, %v2333
        %v2335 = vpop.f32.mrb[0].mxu0
        %2336 = vmatprep.mubr.f32.mxu0 0.0
        %2337 = vmatmul.mubr.f32.gmra.mrb[0].mxu0 %v2212
        %v2338 = vpop.f32.mrb[0].mxu0
        %v2339 = vadd.f32 %v2127, %v2338
        %v2340 = vpop.f32.mrb[0].mxu0
        %2341 = vmatprep.mubr.f32.mxu0 0.0
        %2342 = vmatmul.mubr.f32.gmra.mrb[0].mxu0 %v2214
        %v2343 = vpop.f32.mrb[0].mxu0
        %v2344 = vadd.f32 %v2132, %v2343
        %v2345 = vpop.f32.mrb[0].mxu0
        %2346 = vmatprep.mubr.f32.mxu0 0.0
        %2347 = vmatmul.mubr.f32.gmra.mrb[0].mxu0 %v2216
        %v2348 = vpop.f32.mrb[0].mxu0
        %v2349 = vadd.f32 %v2137, %v2348
        %v2350 = vpop.f32.mrb[0].mxu0
        %2351 = vmatprep.mubr.f32.mxu0 0.0
        %2352 = vmatmul.mubr.f32.gmra.mrb[0].mxu0 %v2218
        %v2353 = vpop.f32.mrb[0].mxu0
        %v2354 = vadd.f32 %v2142, %v2353
        %v2355 = vpop.f32.mrb[0].mxu0
        %2356 = vmatprep.mubr.f32.mxu0 0.0
        %2357 = vmatmul.mubr.f32.gmra.mrb[0].mxu0 %v2220
        %v2358 = vpop.f32.mrb[0].mxu0
        %v2359 = vadd.f32 %v2147, %v2358
        %v2360 = vpop.f32.mrb[0].mxu0
        %2361 = vmatprep.mubr.f32.mxu0 0.0
        %2362 = vmatmul.mubr.f32.gmra.mrb[0].mxu0 %v2222
        %v2363 = vpop.f32.mrb[0].mxu0
        %v2364 = vadd.f32 %v2152, %v2363
        %v2365 = vpop.f32.mrb[0].mxu0
        %2366 = vmatprep.mubr.f32.mxu0 0.0
        %2367 = vmatmul.mubr.f32.gmra.mrb[0].mxu0 %v2224
        %v2368 = vpop.f32.mrb[0].mxu0
        %v2369 = vadd.f32 %v2157, %v2368
        %v2370 = vpop.f32.mrb[0].mxu0
        %2371 = vmatprep.mubr.f32.mxu0 0.0
        %2372 = vmatmul.mubr.f32.gmra.mrb[0].mxu0 %v2226
        %v2373 = vpop.f32.mrb[0].mxu0
        %v2374 = vadd.f32 %v2162, %v2373
        %v2375 = vpop.f32.mrb[0].mxu0
        %2376 = vmatprep.mubr.f32.mxu0 0.0
        %2377 = vmatmul.mubr.f32.gmra.mrb[0].mxu0 %v2228
        %v2378 = vpop.f32.mrb[0].mxu0
        %v2379 = vadd.f32 %v2167, %v2378
        %v2380 = vpop.f32.mrb[0].mxu0
        %2381 = vmatprep.mubr.f32.mxu0 0.0
        %2382 = vmatmul.mubr.f32.gmra.mrb[0].mxu0 %v2230
        %v2383 = vpop.f32.mrb[0].mxu0
        %v2384 = vadd.f32 %v2172, %v2383
        %v2385 = vpop.f32.mrb[0].mxu0
        %2386 = vmatprep.mubr.f32.mxu0 0.0
        %2387 = vmatmul.mubr.f32.gmra.mrb[0].mxu0 %v2232
        %v2388 = vpop.f32.mrb[0].mxu0
        %v2389 = vadd.f32 %v2177, %v2388
        %v2390 = vpop.f32.mrb[0].mxu0
        %2391 = vmatprep.mubr.f32.mxu0 0.0
        %2392 = vmatmul.mubr.f32.gmra.mrb[0].mxu0 %v2234
        %v2393 = vpop.f32.mrb[0].mxu0
        %v2394 = vadd.f32 %v2182, %v2393
        %v2395 = vpop.f32.mrb[0].mxu0
        %2396 = vmatprep.mubr.f32.mxu0 0.0
        %2397 = vmatmul.mubr.f32.gmra.mrb[0].mxu0 %v2236
        %v2398 = vpop.f32.mrb[0].mxu0
        %v2399 = vadd.f32 %v2187, %v2398
        %v2400 = vpop.f32.mrb[0].mxu0
        %2401 = vmatprep.mubr.f32.mxu0 0.0
        %2402 = vmatmul.mubr.f32.gmra.mrb[0].mxu0 %v2238
        %v2403 = vpop.f32.mrb[0].mxu0
        %v2404 = vadd.f32 %v2192, %v2403
        %v2405 = vpop.f32.mrb[0].mxu0
        %2406 = vmatprep.mubr.f32.mxu0 0.0
        %2407 = vmatmul.mubr.f32.gmra.mrb[0].mxu0 %v2240
        %v2408 = vpop.f32.mrb[0].mxu0
        %v2409 = vadd.f32 %v2197, %v2408
        %v2410 = vpop.f32.mrb[0].mxu0
        %2411 = vdwg.mxu0
        %v2413 = vsel %vm561, 0.0, 0
        %2415 = vmatprep.subr.mxu0 0.0
        %2416 = vmatpush1.msra.mxu0 %v1875
        %2417 = vmatprep.subr.mxu0 0.0
        %2418 = vmatpush1.msra.mxu0 %v1876
        %2419 = vmatprep.subr.mxu0 0.0
        %2420 = vmatpush1.msra.mxu0 0.0
        %2421 = vmatprep.subr.mxu0 0.0
        %2422 = vmatpush1.msra.mxu0 0.0
        %2423 = vmatprep.subr.mxu0 0.0
        %2424 = vmatpush1.msra.mxu0 0.0
        %2425 = vmatprep.subr.mxu0 0.0
        %2426 = vmatpush1.msra.mxu0 0.0
        %2427 = vmatprep.subr.mxu0 0.0
        %2428 = vmatpush1.msra.mxu0 0.0
        %2429 = vmatprep.subr.mxu0 0.0
        %2430 = vmatpush1.msra.mxu0 0.0
        %2431 = vmatprep.subr.mxu0 0.0
        %2432 = vmatpush1.msra.mxu0 0.0
        %2433 = vmatprep.subr.mxu0 0.0
        %2434 = vmatpush1.msra.mxu0 0.0
        %2435 = vmatprep.subr.mxu0 0.0
        %2436 = vmatpush1.msra.mxu0 0.0
        %2437 = vmatprep.subr.mxu0 0.0
        %2438 = vmatpush1.msra.mxu0 0.0
        %2439 = vmatprep.subr.mxu0 0.0
        %2440 = vmatpush1.msra.mxu0 0.0
        %2441 = vmatprep.subr.mxu0 0.0
        %2442 = vmatpush1.msra.mxu0 0.0
        %2443 = vmatprep.subr.mxu0 0.0
        %2444 = vmatpush1.msra.mxu0 0.0
        %2445 = vmatprep.subr.mxu0 0.0
        %2446 = vmatpush1.msra.mxu0 0.0
        %2447 = vmatprep.subr.mxu0 0.0
        %2448 = vmatpush1.msra.mxu0 0.0
        %2449 = vmatprep.subr.mxu0 0.0
        %2450 = vmatpush1.msra.mxu0 0.0
        %2451 = vmatprep.subr.mxu0 0.0
        %2452 = vmatpush1.msra.mxu0 0.0
        %2453 = vmatprep.subr.mxu0 0.0
        %2454 = vmatpush1.msra.mxu0 0.0
        %2455 = vmatprep.subr.mxu0 0.0
        %2456 = vmatpush1.msra.mxu0 0.0
        %2457 = vmatprep.subr.mxu0 0.0
        %2458 = vmatpush1.msra.mxu0 0.0
        %2459 = vmatprep.subr.mxu0 0.0
        %2460 = vmatpush1.msra.mxu0 0.0
        %2461 = vmatprep.subr.mxu0 0.0
        %2462 = vmatpush1.msra.mxu0 0.0
        %2463 = vmatprep.subr.mxu0 0.0
        %2464 = vmatpush1.msra.mxu0 0.0
        %2465 = vmatprep.subr.mxu0 0.0
        %2466 = vmatpush1.msra.mxu0 0.0
        %2467 = vmatprep.subr.mxu0 0.0
        %2468 = vmatpush1.msra.mxu0 0.0
        %2469 = vmatprep.subr.mxu0 0.0
        %2470 = vmatpush1.msra.mxu0 0.0
        %2471 = vmatprep.subr.mxu0 0.0
        %2472 = vmatpush1.msra.mxu0 0.0
        %2473 = vmatprep.subr.mxu0 0.0
        %2474 = vmatpush1.msra.mxu0 0.0
        %2475 = vmatprep.subr.mxu0 0.0
        %2476 = vmatpush1.msra.mxu0 0.0
        %2477 = vmatprep.subr.mxu0 0.0
        %2478 = vmatpush1.msra.mxu0 0.0
        %2479 = vmatprep.mubr.f32.mxu0 0.0
        %2480 = vmatmul.mubr.f32.gmra.mrb[0].mxu0 %v2202
        %v2481 = vpop.f32.mrb[0].mxu0
        %v2482 = vadd.f32 0.0, %v2481
        %v2483 = vpop.f32.mrb[0].mxu0
        %2484 = vmatprep.mubr.f32.mxu0 0.0
        %2485 = vmatmul.mubr.f32.gmra.mrb[0].mxu0 %v2204
        %v2486 = vpop.f32.mrb[0].mxu0
        %v2487 = vadd.f32 0.0, %v2486
        %v2488 = vpop.f32.mrb[0].mxu0
        %2489 = vmatprep.mubr.f32.mxu0 0.0
        %2490 = vmatmul.mubr.f32.gmra.mrb[0].mxu0 %v2206
        %v2491 = vpop.f32.mrb[0].mxu0
        %v2492 = vadd.f32 0.0, %v2491
        %v2493 = vpop.f32.mrb[0].mxu0
        %2494 = vmatprep.mubr.f32.mxu0 0.0
        %2495 = vmatmul.mubr.f32.gmra.mrb[0].mxu0 %v2208
        %v2496 = vpop.f32.mrb[0].mxu0
        %v2497 = vadd.f32 0.0, %v2496
        %v2498 = vpop.f32.mrb[0].mxu0
        %2499 = vmatprep.mubr.f32.mxu0 0.0
        %2500 = vmatmul.mubr.f32.gmra.mrb[0].mxu0 %v2210
        %v2501 = vpop.f32.mrb[0].mxu0
        %v2502 = vadd.f32 0.0, %v2501
        %v2503 = vpop.f32.mrb[0].mxu0
        %2504 = vmatprep.mubr.f32.mxu0 0.0
        %2505 = vmatmul.mubr.f32.gmra.mrb[0].mxu0 %v2212
        %v2506 = vpop.f32.mrb[0].mxu0
        %v2507 = vadd.f32 0.0, %v2506
        %v2508 = vpop.f32.mrb[0].mxu0
        %2509 = vmatprep.mubr.f32.mxu0 0.0
        %2510 = vmatmul.mubr.f32.gmra.mrb[0].mxu0 %v2214
        %v2511 = vpop.f32.mrb[0].mxu0
        %v2512 = vadd.f32 0.0, %v2511
        %v2513 = vpop.f32.mrb[0].mxu0
        %2514 = vmatprep.mubr.f32.mxu0 0.0
        %2515 = vmatmul.mubr.f32.gmra.mrb[0].mxu0 %v2216
        %v2516 = vpop.f32.mrb[0].mxu0
        %v2517 = vadd.f32 0.0, %v2516
        %v2518 = vpop.f32.mrb[0].mxu0
        %2519 = vmatprep.mubr.f32.mxu0 0.0
        %2520 = vmatmul.mubr.f32.gmra.mrb[0].mxu0 %v2218
        %v2521 = vpop.f32.mrb[0].mxu0
        %v2522 = vadd.f32 0.0, %v2521
        %v2523 = vpop.f32.mrb[0].mxu0
        %2524 = vmatprep.mubr.f32.mxu0 0.0
        %2525 = vmatmul.mubr.f32.gmra.mrb[0].mxu0 %v2220
        %v2526 = vpop.f32.mrb[0].mxu0
        %v2527 = vadd.f32 0.0, %v2526
        %v2528 = vpop.f32.mrb[0].mxu0
        %2529 = vmatprep.mubr.f32.mxu0 0.0
        %2530 = vmatmul.mubr.f32.gmra.mrb[0].mxu0 %v2222
        %v2531 = vpop.f32.mrb[0].mxu0
        %v2532 = vadd.f32 0.0, %v2531
        %v2533 = vpop.f32.mrb[0].mxu0
        %2534 = vmatprep.mubr.f32.mxu0 0.0
        %2535 = vmatmul.mubr.f32.gmra.mrb[0].mxu0 %v2224
        %v2536 = vpop.f32.mrb[0].mxu0
        %v2537 = vadd.f32 0.0, %v2536
        %v2538 = vpop.f32.mrb[0].mxu0
        %2539 = vmatprep.mubr.f32.mxu0 0.0
        %2540 = vmatmul.mubr.f32.gmra.mrb[0].mxu0 %v2226
        %v2541 = vpop.f32.mrb[0].mxu0
        %v2542 = vadd.f32 0.0, %v2541
        %v2543 = vpop.f32.mrb[0].mxu0
        %2544 = vmatprep.mubr.f32.mxu0 0.0
        %2545 = vmatmul.mubr.f32.gmra.mrb[0].mxu0 %v2228
        %v2546 = vpop.f32.mrb[0].mxu0
        %v2547 = vadd.f32 0.0, %v2546
        %v2548 = vpop.f32.mrb[0].mxu0
        %2549 = vmatprep.mubr.f32.mxu0 0.0
        %2550 = vmatmul.mubr.f32.gmra.mrb[0].mxu0 %v2230
        %v2551 = vpop.f32.mrb[0].mxu0
        %v2552 = vadd.f32 0.0, %v2551
        %v2553 = vpop.f32.mrb[0].mxu0
        %2554 = vmatprep.mubr.f32.mxu0 0.0
        %2555 = vmatmul.mubr.f32.gmra.mrb[0].mxu0 %v2232
        %v2556 = vpop.f32.mrb[0].mxu0
        %v2557 = vadd.f32 0.0, %v2556
        %v2558 = vpop.f32.mrb[0].mxu0
        %2559 = vmatprep.mubr.f32.mxu0 0.0
        %2560 = vmatmul.mubr.f32.gmra.mrb[0].mxu0 %v2234
        %v2561 = vpop.f32.mrb[0].mxu0
        %v2562 = vadd.f32 0.0, %v2561
        %v2563 = vpop.f32.mrb[0].mxu0
        %2564 = vmatprep.mubr.f32.mxu0 0.0
        %2565 = vmatmul.mubr.f32.gmra.mrb[0].mxu0 %v2236
        %v2566 = vpop.f32.mrb[0].mxu0
        %v2567 = vadd.f32 0.0, %v2566
        %v2568 = vpop.f32.mrb[0].mxu0
        %2569 = vmatprep.mubr.f32.mxu0 0.0
        %2570 = vmatmul.mubr.f32.gmra.mrb[0].mxu0 %v2238
        %v2571 = vpop.f32.mrb[0].mxu0
        %v2572 = vadd.f32 0.0, %v2571
        %v2573 = vpop.f32.mrb[0].mxu0
        %2574 = vmatprep.mubr.f32.mxu0 0.0
        %2575 = vmatmul.mubr.f32.gmra.mrb[0].mxu0 %v2240
        %v2576 = vpop.f32.mrb[0].mxu0
        %v2577 = vadd.f32 0.0, %v2576
        %v2578 = vpop.f32.mrb[0].mxu0
        %2579 = vmatprep.mubr.f32.mxu0 0.0
        %2580 = vmatmul.mubr.f32.gmra.mrb[0].mxu0 %v2413
        %v2581 = vpop.f32.mrb[0].mxu0
        %v2582 = vadd.f32 0.0, %v2581
        %v2583 = vpop.f32.mrb[0].mxu0
        %2584 = vdwg.mxu0
        %v2585 = vadd.f32 %v2309, %v2482
        %v2586 = vadd.f32 %v2314, %v2487
        %v2587 = vadd.f32 %v2319, %v2492
        %v2588 = vadd.f32 %v2324, %v2497
        %v2589 = vadd.f32 %v2329, %v2502
        %v2590 = vadd.f32 %v2334, %v2507
        %v2591 = vadd.f32 %v2339, %v2512
        %v2592 = vadd.f32 %v2344, %v2517
        %v2593 = vadd.f32 %v2349, %v2522
        %v2594 = vadd.f32 %v2354, %v2527
        %v2595 = vadd.f32 %v2359, %v2532
        %v2596 = vadd.f32 %v2364, %v2537
        %v2597 = vadd.f32 %v2369, %v2542
        %v2598 = vadd.f32 %v2374, %v2547
        %v2599 = vadd.f32 %v2379, %v2552
        %v2600 = vadd.f32 %v2384, %v2557
        %v2601 = vadd.f32 %v2389, %v2562
        %v2602 = vadd.f32 %v2394, %v2567
        %v2603 = vadd.f32 %v2399, %v2572
        %v2604 = vadd.f32 %v2404, %v2577
        %v2605 = vadd.f32 %v2409, %v2582
        %v2607 = vlaneseq
        %v2608 = vshrl.u32 %v2607, 7
        %v2609 = vsub.s32 0, %v2608
        %v2610 = vrot.slane %v1877, %v2609
        %v2612 = vadd.f32 %v2585, %v2610
        %v2613 = vadd.f32 %v2586, %v2610
        %v2614 = vadd.f32 %v2587, %v2610
        %v2615 = vadd.f32 %v2588, %v2610
        %v2616 = vadd.f32 %v2589, %v2610
        %v2617 = vadd.f32 %v2590, %v2610
        %v2618 = vadd.f32 %v2591, %v2610
        %v2619 = vadd.f32 %v2592, %v2610
        %v2620 = vadd.f32 %v2593, %v2610
        %v2621 = vadd.f32 %v2594, %v2610
        %v2622 = vadd.f32 %v2595, %v2610
        %v2623 = vadd.f32 %v2596, %v2610
        %v2624 = vadd.f32 %v2597, %v2610
        %v2625 = vadd.f32 %v2598, %v2610
        %v2626 = vadd.f32 %v2599, %v2610
        %v2627 = vadd.f32 %v2600, %v2610
        %v2628 = vadd.f32 %v2601, %v2610
        %v2629 = vadd.f32 %v2602, %v2610
        %v2630 = vadd.f32 %v2603, %v2610
        %v2631 = vadd.f32 %v2604, %v2610
        %v2632 = vadd.f32 %v2605, %v2610
        %vm2633 = vcmp.gt.f32.partialorder %v2612, 0.0
        %vm2634 = vcmp.gt.f32.partialorder %v2613, 0.0
        %vm2635 = vcmp.gt.f32.partialorder %v2614, 0.0
        %vm2636 = vcmp.gt.f32.partialorder %v2615, 0.0
        %vm2637 = vcmp.gt.f32.partialorder %v2616, 0.0
        %vm2638 = vcmp.gt.f32.partialorder %v2617, 0.0
        %vm2639 = vcmp.gt.f32.partialorder %v2618, 0.0
        %vm2640 = vcmp.gt.f32.partialorder %v2619, 0.0
        %vm2641 = vcmp.gt.f32.partialorder %v2620, 0.0
        %vm2642 = vcmp.gt.f32.partialorder %v2621, 0.0
        %vm2643 = vcmp.gt.f32.partialorder %v2622, 0.0
        %vm2644 = vcmp.gt.f32.partialorder %v2623, 0.0
        %vm2645 = vcmp.gt.f32.partialorder %v2624, 0.0
        %vm2646 = vcmp.gt.f32.partialorder %v2625, 0.0
        %vm2647 = vcmp.gt.f32.partialorder %v2626, 0.0
        %vm2648 = vcmp.gt.f32.partialorder %v2627, 0.0
        %vm2649 = vcmp.gt.f32.partialorder %v2628, 0.0
        %vm2650 = vcmp.gt.f32.partialorder %v2629, 0.0
        %vm2651 = vcmp.gt.f32.partialorder %v2630, 0.0
        %vm2652 = vcmp.gt.f32.partialorder %v2631, 0.0
        %vm2653 = vcmp.gt.f32.partialorder %v2632, 0.0
        %v2654 = vmin.f32 %v2612, 0.0
        %v2655 = vmin.f32 %v2613, 0.0
        %v2656 = vmin.f32 %v2614, 0.0
        %v2657 = vmin.f32 %v2615, 0.0
        %v2658 = vmin.f32 %v2616, 0.0
        %v2659 = vmin.f32 %v2617, 0.0
        %v2660 = vmin.f32 %v2618, 0.0
        %v2661 = vmin.f32 %v2619, 0.0
        %v2662 = vmin.f32 %v2620, 0.0
        %v2663 = vmin.f32 %v2621, 0.0
        %v2664 = vmin.f32 %v2622, 0.0
        %v2665 = vmin.f32 %v2623, 0.0
        %v2666 = vmin.f32 %v2624, 0.0
        %v2667 = vmin.f32 %v2625, 0.0
        %v2668 = vmin.f32 %v2626, 0.0
        %v2669 = vmin.f32 %v2627, 0.0
        %v2670 = vmin.f32 %v2628, 0.0
        %v2671 = vmin.f32 %v2629, 0.0
        %v2672 = vmin.f32 %v2630, 0.0
        %v2673 = vmin.f32 %v2631, 0.0
        %v2674 = vmin.f32 %v2632, 0.0
        %v2675 = vmul.f32 %v2654, 1.442695
        %v2676 = vpow.pop %v2675
        %v2677 = vmul.f32 %v2655, 1.442695
        %v2678 = vpow.pop %v2677
        %v2679 = vmul.f32 %v2656, 1.442695
        %v2680 = vpow.pop %v2679
        %v2681 = vmul.f32 %v2657, 1.442695
        %v2682 = vpow.pop %v2681
        %v2683 = vmul.f32 %v2658, 1.442695
        %v2684 = vpow.pop %v2683
        %v2685 = vmul.f32 %v2659, 1.442695
        %v2686 = vpow.pop %v2685
        %v2687 = vmul.f32 %v2660, 1.442695
        %v2688 = vpow.pop %v2687
        %v2689 = vmul.f32 %v2661, 1.442695
        %v2690 = vpow.pop %v2689
        %v2691 = vmul.f32 %v2662, 1.442695
        %v2692 = vpow.pop %v2691
        %v2693 = vmul.f32 %v2663, 1.442695
        %v2694 = vpow.pop %v2693
        %v2695 = vmul.f32 %v2664, 1.442695
        %v2696 = vpow.pop %v2695
        %v2697 = vmul.f32 %v2665, 1.442695
        %v2698 = vpow.pop %v2697
        %v2699 = vmul.f32 %v2666, 1.442695
        %v2700 = vpow.pop %v2699
        %v2701 = vmul.f32 %v2667, 1.442695
        %v2702 = vpow.pop %v2701
        %v2703 = vmul.f32 %v2668, 1.442695
        %v2704 = vpow.pop %v2703
        %v2705 = vmul.f32 %v2669, 1.442695
        %v2706 = vpow.pop %v2705
        %v2707 = vmul.f32 %v2670, 1.442695
        %v2708 = vpow.pop %v2707
        %v2709 = vmul.f32 %v2671, 1.442695
        %v2710 = vpow.pop %v2709
        %v2711 = vmul.f32 %v2672, 1.442695
        %v2712 = vpow.pop %v2711
        %v2713 = vmul.f32 %v2673, 1.442695
        %v2714 = vpow.pop %v2713
        %v2715 = vmul.f32 %v2674, 1.442695
        %v2716 = vpow.pop %v2715
        %v2717 = vsub.f32 %v2676, 1.0
        %v2718 = vsub.f32 %v2678, 1.0
        %v2719 = vsub.f32 %v2680, 1.0
        %v2720 = vsub.f32 %v2682, 1.0
        %v2721 = vsub.f32 %v2684, 1.0
        %v2722 = vsub.f32 %v2686, 1.0
        %v2723 = vsub.f32 %v2688, 1.0
        %v2724 = vsub.f32 %v2690, 1.0
        %v2725 = vsub.f32 %v2692, 1.0
        %v2726 = vsub.f32 %v2694, 1.0
        %v2727 = vsub.f32 %v2696, 1.0
        %v2728 = vsub.f32 %v2698, 1.0
        %v2729 = vsub.f32 %v2700, 1.0
        %v2730 = vsub.f32 %v2702, 1.0
        %v2731 = vsub.f32 %v2704, 1.0
        %v2732 = vsub.f32 %v2706, 1.0
        %v2733 = vsub.f32 %v2708, 1.0
        %v2734 = vsub.f32 %v2710, 1.0
        %v2735 = vsub.f32 %v2712, 1.0
        %v2736 = vsub.f32 %v2714, 1.0
        %v2737 = vsub.f32 %v2716, 1.0
        %v2738 = vsel %vm2633, %v2612, %v2717
        %v2739 = vsel %vm2634, %v2613, %v2718
        %v2740 = vsel %vm2635, %v2614, %v2719
        %v2741 = vsel %vm2636, %v2615, %v2720
        %v2742 = vsel %vm2637, %v2616, %v2721
        %v2743 = vsel %vm2638, %v2617, %v2722
        %v2744 = vsel %vm2639, %v2618, %v2723
        %v2745 = vsel %vm2640, %v2619, %v2724
        %v2746 = vsel %vm2641, %v2620, %v2725
        %v2747 = vsel %vm2642, %v2621, %v2726
        %v2748 = vsel %vm2643, %v2622, %v2727
        %v2749 = vsel %vm2644, %v2623, %v2728
        %v2750 = vsel %vm2645, %v2624, %v2729
        %v2751 = vsel %vm2646, %v2625, %v2730
        %v2752 = vsel %vm2647, %v2626, %v2731
        %v2753 = vsel %vm2648, %v2627, %v2732
        %v2754 = vsel %vm2649, %v2628, %v2733
        %v2755 = vsel %vm2650, %v2629, %v2734
        %v2756 = vsel %vm2651, %v2630, %v2735
        %v2757 = vsel %vm2652, %v2631, %v2736
        %v2758 = vsel %vm2653, %v2632, %v2737
        %v2759 = vld [vmem:[%s7] sm:$0xff]
        %v2760 = vld [vmem:[%s7 + $0x8] sm:$0xff]
        %v2761 = vld [vmem:[%s7 + $0x10] sm:$0xff]
        %v2762 = vld [vmem:[%s7 + $0x18] sm:$0xff]
        %v2763 = vld [vmem:[%s7 + $0x20] sm:$0xff]
        %v2764 = vld [vmem:[%s7 + $0x28] sm:$0xff]
        %v2765 = vld [vmem:[%s8] sm:$0x1]
        %vm2766 = vcmask 1040384
        %v2767 = vsel %vm2766, %v2758, 0.0
        %v2769 = vsel %vm561, %v2738, 0
        %v2772 = vsel %vm561, %v2739, 0
        %v2775 = vsel %vm561, %v2740, 0
        %v2778 = vsel %vm561, %v2741, 0
        %v2781 = vsel %vm561, %v2742, 0
        %v2784 = vsel %vm561, %v2743, 0
        %v2787 = vsel %vm561, %v2744, 0
        %v2790 = vsel %vm561, %v2745, 0
        %v2793 = vsel %vm561, %v2746, 0
        %v2796 = vsel %vm561, %v2747, 0
        %v2799 = vsel %vm561, %v2748, 0
        %v2802 = vsel %vm561, %v2749, 0
        %v2805 = vsel %vm561, %v2750, 0
        %v2808 = vsel %vm561, %v2751, 0
        %v2811 = vsel %vm561, %v2752, 0
        %v2814 = vsel %vm561, %v2753, 0
        %v2817 = vsel %vm561, %v2754, 0
        %v2820 = vsel %vm561, %v2755, 0
        %v2823 = vsel %vm561, %v2756, 0
        %v2826 = vsel %vm561, %v2757, 0
        %v2829 = vsel %vm561, %v2767, 0
        %2831 = vmatprep.subr.mxu0 0.0
        %2832 = vmatpush1.msra.mxu0 %v2761
        %2833 = vmatprep.subr.mxu0 0.0
        %2834 = vmatpush1.msra.mxu0 %v2762
        %2835 = vmatprep.subr.mxu0 0.0
        %2836 = vmatpush1.msra.mxu0 0.0
        %2837 = vmatprep.subr.mxu0 0.0
        %2838 = vmatpush1.msra.mxu0 0.0
        %2839 = vmatprep.subr.mxu0 0.0
        %2840 = vmatpush1.msra.mxu0 0.0
        %2841 = vmatprep.subr.mxu0 0.0
        %2842 = vmatpush1.msra.mxu0 0.0
        %2843 = vmatprep.subr.mxu0 0.0
        %2844 = vmatpush1.msra.mxu0 0.0
        %2845 = vmatprep.subr.mxu0 0.0
        %2846 = vmatpush1.msra.mxu0 0.0
        %2847 = vmatprep.subr.mxu0 0.0
        %2848 = vmatpush1.msra.mxu0 0.0
        %2849 = vmatprep.subr.mxu0 0.0
        %2850 = vmatpush1.msra.mxu0 0.0
        %2851 = vmatprep.subr.mxu0 0.0
        %2852 = vmatpush1.msra.mxu0 0.0
        %2853 = vmatprep.subr.mxu0 0.0
        %2854 = vmatpush1.msra.mxu0 0.0
        %2855 = vmatprep.subr.mxu0 0.0
        %2856 = vmatpush1.msra.mxu0 0.0
        %2857 = vmatprep.subr.mxu0 0.0
        %2858 = vmatpush1.msra.mxu0 0.0
        %2859 = vmatprep.subr.mxu0 0.0
        %2860 = vmatpush1.msra.mxu0 0.0
        %2861 = vmatprep.subr.mxu0 0.0
        %2862 = vmatpush1.msra.mxu0 0.0
        %2863 = vmatprep.subr.mxu0 0.0
        %2864 = vmatpush1.msra.mxu0 0.0
        %2865 = vmatprep.subr.mxu0 0.0
        %2866 = vmatpush1.msra.mxu0 0.0
        %2867 = vmatprep.subr.mxu0 0.0
        %2868 = vmatpush1.msra.mxu0 0.0
        %2869 = vmatprep.subr.mxu0 0.0
        %2870 = vmatpush1.msra.mxu0 0.0
        %2871 = vmatprep.subr.mxu0 0.0
        %2872 = vmatpush1.msra.mxu0 0.0
        %2873 = vmatprep.subr.mxu0 0.0
        %2874 = vmatpush1.msra.mxu0 0.0
        %2875 = vmatprep.subr.mxu0 0.0
        %2876 = vmatpush1.msra.mxu0 0.0
        %2877 = vmatprep.subr.mxu0 0.0
        %2878 = vmatpush1.msra.mxu0 0.0
        %2879 = vmatprep.subr.mxu0 0.0
        %2880 = vmatpush1.msra.mxu0 0.0
        %2881 = vmatprep.subr.mxu0 0.0
        %2882 = vmatpush1.msra.mxu0 0.0
        %2883 = vmatprep.subr.mxu0 0.0
        %2884 = vmatpush1.msra.mxu0 0.0
        %2885 = vmatprep.subr.mxu0 0.0
        %2886 = vmatpush1.msra.mxu0 0.0
        %2887 = vmatprep.subr.mxu0 0.0
        %2888 = vmatpush1.msra.mxu0 0.0
        %2889 = vmatprep.subr.mxu0 0.0
        %2890 = vmatpush1.msra.mxu0 0.0
        %2891 = vmatprep.subr.mxu0 0.0
        %2892 = vmatpush1.msra.mxu0 0.0
        %2893 = vmatprep.subr.mxu0 0.0
        %2894 = vmatpush1.msra.mxu0 0.0
        %2895 = vmatprep.mubr.f32.mxu0 0.0
        %2896 = vmatmul.mubr.f32.gmra.mrb[0].mxu0 %v2769
        %v2897 = vpop.f32.mrb[0].mxu0
        %v2898 = vadd.f32 0.0, %v2897
        %v2899 = vpop.f32.mrb[0].mxu0
        %2900 = vmatprep.mubr.f32.mxu0 0.0
        %2901 = vmatmul.mubr.f32.gmra.mrb[0].mxu0 %v2772
        %v2902 = vpop.f32.mrb[0].mxu0
        %v2903 = vadd.f32 0.0, %v2902
        %v2904 = vpop.f32.mrb[0].mxu0
        %2905 = vmatprep.mubr.f32.mxu0 0.0
        %2906 = vmatmul.mubr.f32.gmra.mrb[0].mxu0 %v2775
        %v2907 = vpop.f32.mrb[0].mxu0
        %v2908 = vadd.f32 0.0, %v2907
        %v2909 = vpop.f32.mrb[0].mxu0
        %2910 = vmatprep.mubr.f32.mxu0 0.0
        %2911 = vmatmul.mubr.f32.gmra.mrb[0].mxu0 %v2778
        %v2912 = vpop.f32.mrb[0].mxu0
        %v2913 = vadd.f32 0.0, %v2912
        %v2914 = vpop.f32.mrb[0].mxu0
        %2915 = vmatprep.mubr.f32.mxu0 0.0
        %2916 = vmatmul.mubr.f32.gmra.mrb[0].mxu0 %v2781
        %v2917 = vpop.f32.mrb[0].mxu0
        %v2918 = vadd.f32 0.0, %v2917
        %v2919 = vpop.f32.mrb[0].mxu0
        %2920 = vmatprep.mubr.f32.mxu0 0.0
        %2921 = vmatmul.mubr.f32.gmra.mrb[0].mxu0 %v2784
        %v2922 = vpop.f32.mrb[0].mxu0
        %v2923 = vadd.f32 0.0, %v2922
        %v2924 = vpop.f32.mrb[0].mxu0
        %2925 = vmatprep.mubr.f32.mxu0 0.0
        %2926 = vmatmul.mubr.f32.gmra.mrb[0].mxu0 %v2787
        %v2927 = vpop.f32.mrb[0].mxu0
        %v2928 = vadd.f32 0.0, %v2927
        %v2929 = vpop.f32.mrb[0].mxu0
        %2930 = vmatprep.mubr.f32.mxu0 0.0
        %2931 = vmatmul.mubr.f32.gmra.mrb[0].mxu0 %v2790
        %v2932 = vpop.f32.mrb[0].mxu0
        %v2933 = vadd.f32 0.0, %v2932
        %v2934 = vpop.f32.mrb[0].mxu0
        %2935 = vmatprep.mubr.f32.mxu0 0.0
        %2936 = vmatmul.mubr.f32.gmra.mrb[0].mxu0 %v2793
        %v2937 = vpop.f32.mrb[0].mxu0
        %v2938 = vadd.f32 0.0, %v2937
        %v2939 = vpop.f32.mrb[0].mxu0
        %2940 = vmatprep.mubr.f32.mxu0 0.0
        %2941 = vmatmul.mubr.f32.gmra.mrb[0].mxu0 %v2796
        %v2942 = vpop.f32.mrb[0].mxu0
        %v2943 = vadd.f32 0.0, %v2942
        %v2944 = vpop.f32.mrb[0].mxu0
        %2945 = vmatprep.mubr.f32.mxu0 0.0
        %2946 = vmatmul.mubr.f32.gmra.mrb[0].mxu0 %v2799
        %v2947 = vpop.f32.mrb[0].mxu0
        %v2948 = vadd.f32 0.0, %v2947
        %v2949 = vpop.f32.mrb[0].mxu0
        %2950 = vmatprep.mubr.f32.mxu0 0.0
        %2951 = vmatmul.mubr.f32.gmra.mrb[0].mxu0 %v2802
        %v2952 = vpop.f32.mrb[0].mxu0
        %v2953 = vadd.f32 0.0, %v2952
        %v2954 = vpop.f32.mrb[0].mxu0
        %2955 = vmatprep.mubr.f32.mxu0 0.0
        %2956 = vmatmul.mubr.f32.gmra.mrb[0].mxu0 %v2805
        %v2957 = vpop.f32.mrb[0].mxu0
        %v2958 = vadd.f32 0.0, %v2957
        %v2959 = vpop.f32.mrb[0].mxu0
        %2960 = vmatprep.mubr.f32.mxu0 0.0
        %2961 = vmatmul.mubr.f32.gmra.mrb[0].mxu0 %v2808
        %v2962 = vpop.f32.mrb[0].mxu0
        %v2963 = vadd.f32 0.0, %v2962
        %v2964 = vpop.f32.mrb[0].mxu0
        %2965 = vmatprep.mubr.f32.mxu0 0.0
        %2966 = vmatmul.mubr.f32.gmra.mrb[0].mxu0 %v2811
        %v2967 = vpop.f32.mrb[0].mxu0
        %v2968 = vadd.f32 0.0, %v2967
        %v2969 = vpop.f32.mrb[0].mxu0
        %2970 = vmatprep.mubr.f32.mxu0 0.0
        %2971 = vmatmul.mubr.f32.gmra.mrb[0].mxu0 %v2814
        %v2972 = vpop.f32.mrb[0].mxu0
        %v2973 = vadd.f32 0.0, %v2972
        %v2974 = vpop.f32.mrb[0].mxu0
        %2975 = vmatprep.mubr.f32.mxu0 0.0
        %2976 = vmatmul.mubr.f32.gmra.mrb[0].mxu0 %v2817
        %v2977 = vpop.f32.mrb[0].mxu0
        %v2978 = vadd.f32 0.0, %v2977
        %v2979 = vpop.f32.mrb[0].mxu0
        %2980 = vmatprep.mubr.f32.mxu0 0.0
        %2981 = vmatmul.mubr.f32.gmra.mrb[0].mxu0 %v2820
        %v2982 = vpop.f32.mrb[0].mxu0
        %v2983 = vadd.f32 0.0, %v2982
        %v2984 = vpop.f32.mrb[0].mxu0
        %2985 = vmatprep.mubr.f32.mxu0 0.0
        %2986 = vmatmul.mubr.f32.gmra.mrb[0].mxu0 %v2823
        %v2987 = vpop.f32.mrb[0].mxu0
        %v2988 = vadd.f32 0.0, %v2987
        %v2989 = vpop.f32.mrb[0].mxu0
        %2990 = vmatprep.mubr.f32.mxu0 0.0
        %2991 = vmatmul.mubr.f32.gmra.mrb[0].mxu0 %v2826
        %v2992 = vpop.f32.mrb[0].mxu0
        %v2993 = vadd.f32 0.0, %v2992
        %v2994 = vpop.f32.mrb[0].mxu0
        %2995 = vmatprep.mubr.f32.mxu0 0.0
        %2996 = vmatmul.mubr.f32.gmra.mrb[0].mxu0 %v2829
        %v2997 = vpop.f32.mrb[0].mxu0
        %v2998 = vadd.f32 0.0, %v2997
        %v2999 = vpop.f32.mrb[0].mxu0
        %3000 = vdwg.mxu0
        %3001 = vmatprep.subr.mxu0 0.0
        %3002 = vmatpush1.msra.mxu0 %v2759
        %3003 = vmatprep.subr.mxu0 0.0
        %3004 = vmatpush1.msra.mxu0 %v2760
        %3005 = vmatprep.subr.mxu0 0.0
        %3006 = vmatpush1.msra.mxu0 0.0
        %3007 = vmatprep.subr.mxu0 0.0
        %3008 = vmatpush1.msra.mxu0 0.0
        %3009 = vmatprep.subr.mxu0 0.0
        %3010 = vmatpush1.msra.mxu0 0.0
        %3011 = vmatprep.subr.mxu0 0.0
        %3012 = vmatpush1.msra.mxu0 0.0
        %3013 = vmatprep.subr.mxu0 0.0
        %3014 = vmatpush1.msra.mxu0 0.0
        %3015 = vmatprep.subr.mxu0 0.0
        %3016 = vmatpush1.msra.mxu0 0.0
        %3017 = vmatprep.subr.mxu0 0.0
        %3018 = vmatpush1.msra.mxu0 0.0
        %3019 = vmatprep.subr.mxu0 0.0
        %3020 = vmatpush1.msra.mxu0 0.0
        %3021 = vmatprep.subr.mxu0 0.0
        %3022 = vmatpush1.msra.mxu0 0.0
        %3023 = vmatprep.subr.mxu0 0.0
        %3024 = vmatpush1.msra.mxu0 0.0
        %3025 = vmatprep.subr.mxu0 0.0
        %3026 = vmatpush1.msra.mxu0 0.0
        %3027 = vmatprep.subr.mxu0 0.0
        %3028 = vmatpush1.msra.mxu0 0.0
        %3029 = vmatprep.subr.mxu0 0.0
        %3030 = vmatpush1.msra.mxu0 0.0
        %3031 = vmatprep.subr.mxu0 0.0
        %3032 = vmatpush1.msra.mxu0 0.0
        %3033 = vmatprep.subr.mxu0 0.0
        %3034 = vmatpush1.msra.mxu0 0.0
        %3035 = vmatprep.subr.mxu0 0.0
        %3036 = vmatpush1.msra.mxu0 0.0
        %3037 = vmatprep.subr.mxu0 0.0
        %3038 = vmatpush1.msra.mxu0 0.0
        %3039 = vmatprep.subr.mxu0 0.0
        %3040 = vmatpush1.msra.mxu0 0.0
        %3041 = vmatprep.subr.mxu0 0.0
        %3042 = vmatpush1.msra.mxu0 0.0
        %3043 = vmatprep.subr.mxu0 0.0
        %3044 = vmatpush1.msra.mxu0 0.0
        %3045 = vmatprep.subr.mxu0 0.0
        %3046 = vmatpush1.msra.mxu0 0.0
        %3047 = vmatprep.subr.mxu0 0.0
        %3048 = vmatpush1.msra.mxu0 0.0
        %3049 = vmatprep.subr.mxu0 0.0
        %3050 = vmatpush1.msra.mxu0 0.0
        %3051 = vmatprep.subr.mxu0 0.0
        %3052 = vmatpush1.msra.mxu0 0.0
        %3053 = vmatprep.subr.mxu0 0.0
        %3054 = vmatpush1.msra.mxu0 0.0
        %3055 = vmatprep.subr.mxu0 0.0
        %3056 = vmatpush1.msra.mxu0 0.0
        %3057 = vmatprep.subr.mxu0 0.0
        %3058 = vmatpush1.msra.mxu0 0.0
        %3059 = vmatprep.subr.mxu0 0.0
        %3060 = vmatpush1.msra.mxu0 0.0
        %3061 = vmatprep.subr.mxu0 0.0
        %3062 = vmatpush1.msra.mxu0 0.0
        %3063 = vmatprep.subr.mxu0 0.0
        %3064 = vmatpush1.msra.mxu0 0.0
        %3065 = vmatprep.mubr.f32.mxu0 0.0
        %3066 = vmatmul.mubr.f32.gmra.mrb[0].mxu0 %v2413
        %v3067 = vpop.f32.mrb[0].mxu0
        %v3068 = vadd.f32 %v2898, %v3067
        %v3069 = vpop.f32.mrb[0].mxu0
        %3070 = vmatprep.mubr.f32.mxu0 0.0
        %3071 = vmatmul.mubr.f32.gmra.mrb[0].mxu0 %v2769
        %v3072 = vpop.f32.mrb[0].mxu0
        %v3073 = vadd.f32 %v2903, %v3072
        %v3074 = vpop.f32.mrb[0].mxu0
        %3075 = vmatprep.mubr.f32.mxu0 0.0
        %3076 = vmatmul.mubr.f32.gmra.mrb[0].mxu0 %v2772
        %v3077 = vpop.f32.mrb[0].mxu0
        %v3078 = vadd.f32 %v2908, %v3077
        %v3079 = vpop.f32.mrb[0].mxu0
        %3080 = vmatprep.mubr.f32.mxu0 0.0
        %3081 = vmatmul.mubr.f32.gmra.mrb[0].mxu0 %v2775
        %v3082 = vpop.f32.mrb[0].mxu0
        %v3083 = vadd.f32 %v2913, %v3082
        %v3084 = vpop.f32.mrb[0].mxu0
        %3085 = vmatprep.mubr.f32.mxu0 0.0
        %3086 = vmatmul.mubr.f32.gmra.mrb[0].mxu0 %v2778
        %v3087 = vpop.f32.mrb[0].mxu0
        %v3088 = vadd.f32 %v2918, %v3087
        %v3089 = vpop.f32.mrb[0].mxu0
        %3090 = vmatprep.mubr.f32.mxu0 0.0
        %3091 = vmatmul.mubr.f32.gmra.mrb[0].mxu0 %v2781
        %v3092 = vpop.f32.mrb[0].mxu0
        %v3093 = vadd.f32 %v2923, %v3092
        %v3094 = vpop.f32.mrb[0].mxu0
        %3095 = vmatprep.mubr.f32.mxu0 0.0
        %3096 = vmatmul.mubr.f32.gmra.mrb[0].mxu0 %v2784
        %v3097 = vpop.f32.mrb[0].mxu0
        %v3098 = vadd.f32 %v2928, %v3097
        %v3099 = vpop.f32.mrb[0].mxu0
        %3100 = vmatprep.mubr.f32.mxu0 0.0
        %3101 = vmatmul.mubr.f32.gmra.mrb[0].mxu0 %v2787
        %v3102 = vpop.f32.mrb[0].mxu0
        %v3103 = vadd.f32 %v2933, %v3102
        %v3104 = vpop.f32.mrb[0].mxu0
        %3105 = vmatprep.mubr.f32.mxu0 0.0
        %3106 = vmatmul.mubr.f32.gmra.mrb[0].mxu0 %v2790
        %v3107 = vpop.f32.mrb[0].mxu0
        %v3108 = vadd.f32 %v2938, %v3107
        %v3109 = vpop.f32.mrb[0].mxu0
        %3110 = vmatprep.mubr.f32.mxu0 0.0
        %3111 = vmatmul.mubr.f32.gmra.mrb[0].mxu0 %v2793
        %v3112 = vpop.f32.mrb[0].mxu0
        %v3113 = vadd.f32 %v2943, %v3112
        %v3114 = vpop.f32.mrb[0].mxu0
        %3115 = vmatprep.mubr.f32.mxu0 0.0
        %3116 = vmatmul.mubr.f32.gmra.mrb[0].mxu0 %v2796
        %v3117 = vpop.f32.mrb[0].mxu0
        %v3118 = vadd.f32 %v2948, %v3117
        %v3119 = vpop.f32.mrb[0].mxu0
        %3120 = vmatprep.mubr.f32.mxu0 0.0
        %3121 = vmatmul.mubr.f32.gmra.mrb[0].mxu0 %v2799
        %v3122 = vpop.f32.mrb[0].mxu0
        %v3123 = vadd.f32 %v2953, %v3122
        %v3124 = vpop.f32.mrb[0].mxu0
        %3125 = vmatprep.mubr.f32.mxu0 0.0
        %3126 = vmatmul.mubr.f32.gmra.mrb[0].mxu0 %v2802
        %v3127 = vpop.f32.mrb[0].mxu0
        %v3128 = vadd.f32 %v2958, %v3127
        %v3129 = vpop.f32.mrb[0].mxu0
        %3130 = vmatprep.mubr.f32.mxu0 0.0
        %3131 = vmatmul.mubr.f32.gmra.mrb[0].mxu0 %v2805
        %v3132 = vpop.f32.mrb[0].mxu0
        %v3133 = vadd.f32 %v2963, %v3132
        %v3134 = vpop.f32.mrb[0].mxu0
        %3135 = vmatprep.mubr.f32.mxu0 0.0
        %3136 = vmatmul.mubr.f32.gmra.mrb[0].mxu0 %v2808
        %v3137 = vpop.f32.mrb[0].mxu0
        %v3138 = vadd.f32 %v2968, %v3137
        %v3139 = vpop.f32.mrb[0].mxu0
        %3140 = vmatprep.mubr.f32.mxu0 0.0
        %3141 = vmatmul.mubr.f32.gmra.mrb[0].mxu0 %v2811
        %v3142 = vpop.f32.mrb[0].mxu0
        %v3143 = vadd.f32 %v2973, %v3142
        %v3144 = vpop.f32.mrb[0].mxu0
        %3145 = vmatprep.mubr.f32.mxu0 0.0
        %3146 = vmatmul.mubr.f32.gmra.mrb[0].mxu0 %v2814
        %v3147 = vpop.f32.mrb[0].mxu0
        %v3148 = vadd.f32 %v2978, %v3147
        %v3149 = vpop.f32.mrb[0].mxu0
        %3150 = vmatprep.mubr.f32.mxu0 0.0
        %3151 = vmatmul.mubr.f32.gmra.mrb[0].mxu0 %v2817
        %v3152 = vpop.f32.mrb[0].mxu0
        %v3153 = vadd.f32 %v2983, %v3152
        %v3154 = vpop.f32.mrb[0].mxu0
        %3155 = vmatprep.mubr.f32.mxu0 0.0
        %3156 = vmatmul.mubr.f32.gmra.mrb[0].mxu0 %v2820
        %v3157 = vpop.f32.mrb[0].mxu0
        %v3158 = vadd.f32 %v2988, %v3157
        %v3159 = vpop.f32.mrb[0].mxu0
        %3160 = vmatprep.mubr.f32.mxu0 0.0
        %3161 = vmatmul.mubr.f32.gmra.mrb[0].mxu0 %v2823
        %v3162 = vpop.f32.mrb[0].mxu0
        %v3163 = vadd.f32 %v2993, %v3162
        %v3164 = vpop.f32.mrb[0].mxu0
        %3165 = vmatprep.mubr.f32.mxu0 0.0
        %3166 = vmatmul.mubr.f32.gmra.mrb[0].mxu0 %v2826
        %v3167 = vpop.f32.mrb[0].mxu0
        %v3168 = vadd.f32 %v2998, %v3167
        %v3169 = vpop.f32.mrb[0].mxu0
        %3170 = vdwg.mxu0
        %3171 = vmatprep.subr.mxu0 0.0
        %3172 = vmatpush1.msra.mxu0 %v2763
        %3173 = vmatprep.subr.mxu0 0.0
        %3174 = vmatpush1.msra.mxu0 %v2764
        %3175 = vmatprep.subr.mxu0 0.0
        %3176 = vmatpush1.msra.mxu0 0.0
        %3177 = vmatprep.subr.mxu0 0.0
        %3178 = vmatpush1.msra.mxu0 0.0
        %3179 = vmatprep.subr.mxu0 0.0
        %3180 = vmatpush1.msra.mxu0 0.0
        %3181 = vmatprep.subr.mxu0 0.0
        %3182 = vmatpush1.msra.mxu0 0.0
        %3183 = vmatprep.subr.mxu0 0.0
        %3184 = vmatpush1.msra.mxu0 0.0
        %3185 = vmatprep.subr.mxu0 0.0
        %3186 = vmatpush1.msra.mxu0 0.0
        %3187 = vmatprep.subr.mxu0 0.0
        %3188 = vmatpush1.msra.mxu0 0.0
        %3189 = vmatprep.subr.mxu0 0.0
        %3190 = vmatpush1.msra.mxu0 0.0
        %3191 = vmatprep.subr.mxu0 0.0
        %3192 = vmatpush1.msra.mxu0 0.0
        %3193 = vmatprep.subr.mxu0 0.0
        %3194 = vmatpush1.msra.mxu0 0.0
        %3195 = vmatprep.subr.mxu0 0.0
        %3196 = vmatpush1.msra.mxu0 0.0
        %3197 = vmatprep.subr.mxu0 0.0
        %3198 = vmatpush1.msra.mxu0 0.0
        %3199 = vmatprep.subr.mxu0 0.0
        %3200 = vmatpush1.msra.mxu0 0.0
        %3201 = vmatprep.subr.mxu0 0.0
        %3202 = vmatpush1.msra.mxu0 0.0
        %3203 = vmatprep.subr.mxu0 0.0
        %3204 = vmatpush1.msra.mxu0 0.0
        %3205 = vmatprep.subr.mxu0 0.0
        %3206 = vmatpush1.msra.mxu0 0.0
        %3207 = vmatprep.subr.mxu0 0.0
        %3208 = vmatpush1.msra.mxu0 0.0
        %3209 = vmatprep.subr.mxu0 0.0
        %3210 = vmatpush1.msra.mxu0 0.0
        %3211 = vmatprep.subr.mxu0 0.0
        %3212 = vmatpush1.msra.mxu0 0.0
        %3213 = vmatprep.subr.mxu0 0.0
        %3214 = vmatpush1.msra.mxu0 0.0
        %3215 = vmatprep.subr.mxu0 0.0
        %3216 = vmatpush1.msra.mxu0 0.0
        %3217 = vmatprep.subr.mxu0 0.0
        %3218 = vmatpush1.msra.mxu0 0.0
        %3219 = vmatprep.subr.mxu0 0.0
        %3220 = vmatpush1.msra.mxu0 0.0
        %3221 = vmatprep.subr.mxu0 0.0
        %3222 = vmatpush1.msra.mxu0 0.0
        %3223 = vmatprep.subr.mxu0 0.0
        %3224 = vmatpush1.msra.mxu0 0.0
        %3225 = vmatprep.subr.mxu0 0.0
        %3226 = vmatpush1.msra.mxu0 0.0
        %3227 = vmatprep.subr.mxu0 0.0
        %3228 = vmatpush1.msra.mxu0 0.0
        %3229 = vmatprep.subr.mxu0 0.0
        %3230 = vmatpush1.msra.mxu0 0.0
        %3231 = vmatprep.subr.mxu0 0.0
        %3232 = vmatpush1.msra.mxu0 0.0
        %3233 = vmatprep.subr.mxu0 0.0
        %3234 = vmatpush1.msra.mxu0 0.0
        %3235 = vmatprep.mubr.f32.mxu0 0.0
        %3236 = vmatmul.mubr.f32.gmra.mrb[0].mxu0 %v2772
        %v3237 = vpop.f32.mrb[0].mxu0
        %v3238 = vadd.f32 0.0, %v3237
        %v3239 = vpop.f32.mrb[0].mxu0
        %3240 = vmatprep.mubr.f32.mxu0 0.0
        %3241 = vmatmul.mubr.f32.gmra.mrb[0].mxu0 %v2775
        %v3242 = vpop.f32.mrb[0].mxu0
        %v3243 = vadd.f32 0.0, %v3242
        %v3244 = vpop.f32.mrb[0].mxu0
        %3245 = vmatprep.mubr.f32.mxu0 0.0
        %3246 = vmatmul.mubr.f32.gmra.mrb[0].mxu0 %v2778
        %v3247 = vpop.f32.mrb[0].mxu0
        %v3248 = vadd.f32 0.0, %v3247
        %v3249 = vpop.f32.mrb[0].mxu0
        %3250 = vmatprep.mubr.f32.mxu0 0.0
        %3251 = vmatmul.mubr.f32.gmra.mrb[0].mxu0 %v2781
        %v3252 = vpop.f32.mrb[0].mxu0
        %v3253 = vadd.f32 0.0, %v3252
        %v3254 = vpop.f32.mrb[0].mxu0
        %3255 = vmatprep.mubr.f32.mxu0 0.0
        %3256 = vmatmul.mubr.f32.gmra.mrb[0].mxu0 %v2784
        %v3257 = vpop.f32.mrb[0].mxu0
        %v3258 = vadd.f32 0.0, %v3257
        %v3259 = vpop.f32.mrb[0].mxu0
        %3260 = vmatprep.mubr.f32.mxu0 0.0
        %3261 = vmatmul.mubr.f32.gmra.mrb[0].mxu0 %v2787
        %v3262 = vpop.f32.mrb[0].mxu0
        %v3263 = vadd.f32 0.0, %v3262
        %v3264 = vpop.f32.mrb[0].mxu0
        %3265 = vmatprep.mubr.f32.mxu0 0.0
        %3266 = vmatmul.mubr.f32.gmra.mrb[0].mxu0 %v2790
        %v3267 = vpop.f32.mrb[0].mxu0
        %v3268 = vadd.f32 0.0, %v3267
        %v3269 = vpop.f32.mrb[0].mxu0
        %3270 = vmatprep.mubr.f32.mxu0 0.0
        %3271 = vmatmul.mubr.f32.gmra.mrb[0].mxu0 %v2793
        %v3272 = vpop.f32.mrb[0].mxu0
        %v3273 = vadd.f32 0.0, %v3272
        %v3274 = vpop.f32.mrb[0].mxu0
        %3275 = vmatprep.mubr.f32.mxu0 0.0
        %3276 = vmatmul.mubr.f32.gmra.mrb[0].mxu0 %v2796
        %v3277 = vpop.f32.mrb[0].mxu0
        %v3278 = vadd.f32 0.0, %v3277
        %v3279 = vpop.f32.mrb[0].mxu0
        %3280 = vmatprep.mubr.f32.mxu0 0.0
        %3281 = vmatmul.mubr.f32.gmra.mrb[0].mxu0 %v2799
        %v3282 = vpop.f32.mrb[0].mxu0
        %v3283 = vadd.f32 0.0, %v3282
        %v3284 = vpop.f32.mrb[0].mxu0
        %3285 = vmatprep.mubr.f32.mxu0 0.0
        %3286 = vmatmul.mubr.f32.gmra.mrb[0].mxu0 %v2802
        %v3287 = vpop.f32.mrb[0].mxu0
        %v3288 = vadd.f32 0.0, %v3287
        %v3289 = vpop.f32.mrb[0].mxu0
        %3290 = vmatprep.mubr.f32.mxu0 0.0
        %3291 = vmatmul.mubr.f32.gmra.mrb[0].mxu0 %v2805
        %v3292 = vpop.f32.mrb[0].mxu0
        %v3293 = vadd.f32 0.0, %v3292
        %v3294 = vpop.f32.mrb[0].mxu0
        %3295 = vmatprep.mubr.f32.mxu0 0.0
        %3296 = vmatmul.mubr.f32.gmra.mrb[0].mxu0 %v2808
        %v3297 = vpop.f32.mrb[0].mxu0
        %v3298 = vadd.f32 0.0, %v3297
        %v3299 = vpop.f32.mrb[0].mxu0
        %3300 = vmatprep.mubr.f32.mxu0 0.0
        %3301 = vmatmul.mubr.f32.gmra.mrb[0].mxu0 %v2811
        %v3302 = vpop.f32.mrb[0].mxu0
        %v3303 = vadd.f32 0.0, %v3302
        %v3304 = vpop.f32.mrb[0].mxu0
        %3305 = vmatprep.mubr.f32.mxu0 0.0
        %3306 = vmatmul.mubr.f32.gmra.mrb[0].mxu0 %v2814
        %v3307 = vpop.f32.mrb[0].mxu0
        %v3308 = vadd.f32 0.0, %v3307
        %v3309 = vpop.f32.mrb[0].mxu0
        %3310 = vmatprep.mubr.f32.mxu0 0.0
        %3311 = vmatmul.mubr.f32.gmra.mrb[0].mxu0 %v2817
        %v3312 = vpop.f32.mrb[0].mxu0
        %v3313 = vadd.f32 0.0, %v3312
        %v3314 = vpop.f32.mrb[0].mxu0
        %3315 = vmatprep.mubr.f32.mxu0 0.0
        %3316 = vmatmul.mubr.f32.gmra.mrb[0].mxu0 %v2820
        %v3317 = vpop.f32.mrb[0].mxu0
        %v3318 = vadd.f32 0.0, %v3317
        %v3319 = vpop.f32.mrb[0].mxu0
        %3320 = vmatprep.mubr.f32.mxu0 0.0
        %3321 = vmatmul.mubr.f32.gmra.mrb[0].mxu0 %v2823
        %v3322 = vpop.f32.mrb[0].mxu0
        %v3323 = vadd.f32 0.0, %v3322
        %v3324 = vpop.f32.mrb[0].mxu0
        %3325 = vmatprep.mubr.f32.mxu0 0.0
        %3326 = vmatmul.mubr.f32.gmra.mrb[0].mxu0 %v2826
        %v3327 = vpop.f32.mrb[0].mxu0
        %v3328 = vadd.f32 0.0, %v3327
        %v3329 = vpop.f32.mrb[0].mxu0
        %3330 = vmatprep.mubr.f32.mxu0 0.0
        %3331 = vmatmul.mubr.f32.gmra.mrb[0].mxu0 %v2829
        %v3332 = vpop.f32.mrb[0].mxu0
        %v3333 = vadd.f32 0.0, %v3332
        %v3334 = vpop.f32.mrb[0].mxu0
        %3335 = vmatprep.mubr.f32.mxu0 0.0
        %3336 = vmatmul.mubr.f32.gmra.mrb[0].mxu0 %v2413
        %v3337 = vpop.f32.mrb[0].mxu0
        %v3338 = vadd.f32 0.0, %v3337
        %v3339 = vpop.f32.mrb[0].mxu0
        %3340 = vdwg.mxu0
        %v3341 = vadd.f32 %v3068, %v3238
        %v3342 = vadd.f32 %v3073, %v3243
        %v3343 = vadd.f32 %v3078, %v3248
        %v3344 = vadd.f32 %v3083, %v3253
        %v3345 = vadd.f32 %v3088, %v3258
        %v3346 = vadd.f32 %v3093, %v3263
        %v3347 = vadd.f32 %v3098, %v3268
        %v3348 = vadd.f32 %v3103, %v3273
        %v3349 = vadd.f32 %v3108, %v3278
        %v3350 = vadd.f32 %v3113, %v3283
        %v3351 = vadd.f32 %v3118, %v3288
        %v3352 = vadd.f32 %v3123, %v3293
        %v3353 = vadd.f32 %v3128, %v3298
        %v3354 = vadd.f32 %v3133, %v3303
        %v3355 = vadd.f32 %v3138, %v3308
        %v3356 = vadd.f32 %v3143, %v3313
        %v3357 = vadd.f32 %v3148, %v3318
        %v3358 = vadd.f32 %v3153, %v3323
        %v3359 = vadd.f32 %v3158, %v3328
        %v3360 = vadd.f32 %v3163, %v3333
        %v3361 = vadd.f32 %v3168, %v3338
        %v3363 = vlaneseq
        %v3364 = vshrl.u32 %v3363, 7
        %v3365 = vsub.s32 0, %v3364
        %v3366 = vrot.slane %v2765, %v3365
        %v3368 = vadd.f32 %v3341, %v3366
        %v3369 = vadd.f32 %v3342, %v3366
        %v3370 = vadd.f32 %v3343, %v3366
        %v3371 = vadd.f32 %v3344, %v3366
        %v3372 = vadd.f32 %v3345, %v3366
        %v3373 = vadd.f32 %v3346, %v3366
        %v3374 = vadd.f32 %v3347, %v3366
        %v3375 = vadd.f32 %v3348, %v3366
        %v3376 = vadd.f32 %v3349, %v3366
        %v3377 = vadd.f32 %v3350, %v3366
        %v3378 = vadd.f32 %v3351, %v3366
        %v3379 = vadd.f32 %v3352, %v3366
        %v3380 = vadd.f32 %v3353, %v3366
        %v3381 = vadd.f32 %v3354, %v3366
        %v3382 = vadd.f32 %v3355, %v3366
        %v3383 = vadd.f32 %v3356, %v3366
        %v3384 = vadd.f32 %v3357, %v3366
        %v3385 = vadd.f32 %v3358, %v3366
        %v3386 = vadd.f32 %v3359, %v3366
        %v3387 = vadd.f32 %v3360, %v3366
        %v3388 = vadd.f32 %v3361, %v3366
        %vm3389 = vcmp.gt.f32.partialorder %v3368, 0.0
        %vm3390 = vcmp.gt.f32.partialorder %v3369, 0.0
        %vm3391 = vcmp.gt.f32.partialorder %v3370, 0.0
        %vm3392 = vcmp.gt.f32.partialorder %v3371, 0.0
        %vm3393 = vcmp.gt.f32.partialorder %v3372, 0.0
        %vm3394 = vcmp.gt.f32.partialorder %v3373, 0.0
        %vm3395 = vcmp.gt.f32.partialorder %v3374, 0.0
        %vm3396 = vcmp.gt.f32.partialorder %v3375, 0.0
        %vm3397 = vcmp.gt.f32.partialorder %v3376, 0.0
        %vm3398 = vcmp.gt.f32.partialorder %v3377, 0.0
        %vm3399 = vcmp.gt.f32.partialorder %v3378, 0.0
        %vm3400 = vcmp.gt.f32.partialorder %v3379, 0.0
        %vm3401 = vcmp.gt.f32.partialorder %v3380, 0.0
        %vm3402 = vcmp.gt.f32.partialorder %v3381, 0.0
        %vm3403 = vcmp.gt.f32.partialorder %v3382, 0.0
        %vm3404 = vcmp.gt.f32.partialorder %v3383, 0.0
        %vm3405 = vcmp.gt.f32.partialorder %v3384, 0.0
        %vm3406 = vcmp.gt.f32.partialorder %v3385, 0.0
        %vm3407 = vcmp.gt.f32.partialorder %v3386, 0.0
        %vm3408 = vcmp.gt.f32.partialorder %v3387, 0.0
        %vm3409 = vcmp.gt.f32.partialorder %v3388, 0.0
        %v3410 = vmin.f32 %v3368, 0.0
        %v3411 = vmin.f32 %v3369, 0.0
        %v3412 = vmin.f32 %v3370, 0.0
        %v3413 = vmin.f32 %v3371, 0.0
        %v3414 = vmin.f32 %v3372, 0.0
        %v3415 = vmin.f32 %v3373, 0.0
        %v3416 = vmin.f32 %v3374, 0.0
        %v3417 = vmin.f32 %v3375, 0.0
        %v3418 = vmin.f32 %v3376, 0.0
        %v3419 = vmin.f32 %v3377, 0.0
        %v3420 = vmin.f32 %v3378, 0.0
        %v3421 = vmin.f32 %v3379, 0.0
        %v3422 = vmin.f32 %v3380, 0.0
        %v3423 = vmin.f32 %v3381, 0.0
        %v3424 = vmin.f32 %v3382, 0.0
        %v3425 = vmin.f32 %v3383, 0.0
        %v3426 = vmin.f32 %v3384, 0.0
        %v3427 = vmin.f32 %v3385, 0.0
        %v3428 = vmin.f32 %v3386, 0.0
        %v3429 = vmin.f32 %v3387, 0.0
        %v3430 = vmin.f32 %v3388, 0.0
        %v3431 = vmul.f32 %v3410, 1.442695
        %v3432 = vpow.pop %v3431
        %v3433 = vmul.f32 %v3411, 1.442695
        %v3434 = vpow.pop %v3433
        %v3435 = vmul.f32 %v3412, 1.442695
        %v3436 = vpow.pop %v3435
        %v3437 = vmul.f32 %v3413, 1.442695
        %v3438 = vpow.pop %v3437
        %v3439 = vmul.f32 %v3414, 1.442695
        %v3440 = vpow.pop %v3439
        %v3441 = vmul.f32 %v3415, 1.442695
        %v3442 = vpow.pop %v3441
        %v3443 = vmul.f32 %v3416, 1.442695
        %v3444 = vpow.pop %v3443
        %v3445 = vmul.f32 %v3417, 1.442695
        %v3446 = vpow.pop %v3445
        %v3447 = vmul.f32 %v3418, 1.442695
        %v3448 = vpow.pop %v3447
        %v3449 = vmul.f32 %v3419, 1.442695
        %v3450 = vpow.pop %v3449
        %v3451 = vmul.f32 %v3420, 1.442695
        %v3452 = vpow.pop %v3451
        %v3453 = vmul.f32 %v3421, 1.442695
        %v3454 = vpow.pop %v3453
        %v3455 = vmul.f32 %v3422, 1.442695
        %v3456 = vpow.pop %v3455
        %v3457 = vmul.f32 %v3423, 1.442695
        %v3458 = vpow.pop %v3457
        %v3459 = vmul.f32 %v3424, 1.442695
        %v3460 = vpow.pop %v3459
        %v3461 = vmul.f32 %v3425, 1.442695
        %v3462 = vpow.pop %v3461
        %v3463 = vmul.f32 %v3426, 1.442695
        %v3464 = vpow.pop %v3463
        %v3465 = vmul.f32 %v3427, 1.442695
        %v3466 = vpow.pop %v3465
        %v3467 = vmul.f32 %v3428, 1.442695
        %v3468 = vpow.pop %v3467
        %v3469 = vmul.f32 %v3429, 1.442695
        %v3470 = vpow.pop %v3469
        %v3471 = vmul.f32 %v3430, 1.442695
        %v3472 = vpow.pop %v3471
        %v3473 = vsub.f32 %v3432, 1.0
        %v3474 = vsub.f32 %v3434, 1.0
        %v3475 = vsub.f32 %v3436, 1.0
        %v3476 = vsub.f32 %v3438, 1.0
        %v3477 = vsub.f32 %v3440, 1.0
        %v3478 = vsub.f32 %v3442, 1.0
        %v3479 = vsub.f32 %v3444, 1.0
        %v3480 = vsub.f32 %v3446, 1.0
        %v3481 = vsub.f32 %v3448, 1.0
        %v3482 = vsub.f32 %v3450, 1.0
        %v3483 = vsub.f32 %v3452, 1.0
        %v3484 = vsub.f32 %v3454, 1.0
        %v3485 = vsub.f32 %v3456, 1.0
        %v3486 = vsub.f32 %v3458, 1.0
        %v3487 = vsub.f32 %v3460, 1.0
        %v3488 = vsub.f32 %v3462, 1.0
        %v3489 = vsub.f32 %v3464, 1.0
        %v3490 = vsub.f32 %v3466, 1.0
        %v3491 = vsub.f32 %v3468, 1.0
        %v3492 = vsub.f32 %v3470, 1.0
        %v3493 = vsub.f32 %v3472, 1.0
        %v3494 = vsel %vm3389, %v3368, %v3473
        %v3495 = vsel %vm3390, %v3369, %v3474
        %v3496 = vsel %vm3391, %v3370, %v3475
        %v3497 = vsel %vm3392, %v3371, %v3476
        %v3498 = vsel %vm3393, %v3372, %v3477
        %v3499 = vsel %vm3394, %v3373, %v3478
        %v3500 = vsel %vm3395, %v3374, %v3479
        %v3501 = vsel %vm3396, %v3375, %v3480
        %v3502 = vsel %vm3397, %v3376, %v3481
        %v3503 = vsel %vm3398, %v3377, %v3482
        %v3504 = vsel %vm3399, %v3378, %v3483
        %v3505 = vsel %vm3400, %v3379, %v3484
        %v3506 = vsel %vm3401, %v3380, %v3485
        %v3507 = vsel %vm3402, %v3381, %v3486
        %v3508 = vsel %vm3403, %v3382, %v3487
        %v3509 = vsel %vm3404, %v3383, %v3488
        %v3510 = vsel %vm3405, %v3384, %v3489
        %v3511 = vsel %vm3406, %v3385, %v3490
        %v3512 = vsel %vm3407, %v3386, %v3491
        %v3513 = vsel %vm3408, %v3387, %v3492
        %v3514 = vsel %vm3409, %v3388, %v3493
        %v3515 = vld [vmem:[%s2] sm:$0xff]
        %v3516 = vld [vmem:[%s2 + $0x8] sm:$0xff]
        %v3517 = vld [vmem:[%s2 + $0x10] sm:$0xff]
        %v3518 = vld [vmem:[%s2 + $0x18] sm:$0xff]
        %v3519 = vld [vmem:[%s2 + $0x20] sm:$0xff]
        %v3520 = vld [vmem:[%s2 + $0x28] sm:$0xff]
        %v3521 = vld [vmem:[%s2 + $0x30] sm:$0xff]
        %v3522 = vld [vmem:[%s2 + $0x38] sm:$0xff]
        %v3523 = vld [vmem:[%s2 + $0x40] sm:$0xff]
        %v3524 = vld [vmem:[%s2 + $0x48] sm:$0xff]
        %v3525 = vld [vmem:[%s2 + $0x50] sm:$0xff]
        %v3526 = vld [vmem:[%s2 + $0x58] sm:$0xff]
        %v3527 = vld [vmem:[%s2 + $0x60] sm:$0xff]
        %v3528 = vld [vmem:[%s2 + $0x68] sm:$0xff]
        %v3529 = vld [vmem:[%s2 + $0x70] sm:$0xff]
        %v3530 = vld [vmem:[%s2 + $0x78] sm:$0xff]
        %v3531 = vld [vmem:[%s2 + $0x80] sm:$0xff]
        %v3532 = vld [vmem:[%s2 + $0x88] sm:$0xff]
        %v3533 = vld [vmem:[%s2 + $0x90] sm:$0xff]
        %v3534 = vld [vmem:[%s2 + $0x98] sm:$0xff]
        %v3535 = vld [vmem:[%s2 + $0xa0] sm:$0xff]
        %v3536 = vld [vmem:[%s2 + $0xa8] sm:$0xff]
        %v3537 = vld [vmem:[%s2 + $0xb0] sm:$0xff]
        %v3538 = vld [vmem:[%s2 + $0xb8] sm:$0xff]
        %v3539 = vld [vmem:[%s2 + $0xc0] sm:$0xff]
        %v3540 = vld [vmem:[%s2 + $0xc8] sm:$0xff]
        %v3541 = vld [vmem:[%s2 + $0xd0] sm:$0xff]
        %v3542 = vld [vmem:[%s2 + $0xd8] sm:$0xff]
        %v3543 = vld [vmem:[%s2 + $0xe0] sm:$0xff]
        %v3544 = vld [vmem:[%s2 + $0xe8] sm:$0xff]
        %v3545 = vld [vmem:[%s2 + $0xf0] sm:$0xff]
        %v3546 = vld [vmem:[%s2 + $0xf8] sm:$0xff]
        %v3547 = vld [vmem:[%s2 + $0x100] sm:$0xff]
        %v3548 = vld [vmem:[%s2 + $0x108] sm:$0xff]
        %v3549 = vld [vmem:[%s2 + $0x110] sm:$0xff]
        %v3550 = vld [vmem:[%s2 + $0x118] sm:$0xff]
        %v3551 = vld [vmem:[%s2 + $0x120] sm:$0xff]
        %v3552 = vld [vmem:[%s2 + $0x128] sm:$0xff]
        %v3553 = vld [vmem:[%s2 + $0x130] sm:$0xff]
        %v3554 = vld [vmem:[%s2 + $0x138] sm:$0xff]
        %v3555 = vld [vmem:[%s2 + $0x140] sm:$0xff]
        %v3556 = vld [vmem:[%s2 + $0x148] sm:$0xff]
        %v3558 = vsel %vm561, %v3494, 0
        %v3561 = vsel %vm561, %v3495, 0
        %v3564 = vsel %vm561, %v3496, 0
        %v3567 = vsel %vm561, %v3497, 0
        %v3570 = vsel %vm561, %v3498, 0
        %v3573 = vsel %vm561, %v3499, 0
        %v3576 = vsel %vm561, %v3500, 0
        %v3579 = vsel %vm561, %v3501, 0
        %v3582 = vsel %vm561, %v3502, 0
        %v3585 = vsel %vm561, %v3503, 0
        %v3588 = vsel %vm561, %v3504, 0
        %v3591 = vsel %vm561, %v3505, 0
        %v3594 = vsel %vm561, %v3506, 0
        %v3597 = vsel %vm561, %v3507, 0
        %v3600 = vsel %vm561, %v3508, 0
        %v3603 = vsel %vm561, %v3509, 0
        %v3606 = vsel %vm561, %v3510, 0
        %v3609 = vsel %vm561, %v3511, 0
        %v3612 = vsel %vm561, %v3512, 0
        %v3615 = vsel %vm561, %v3513, 0
        %v3618 = vsel %vm561, %v3514, 0
        %3620 = vmatprep.subr.mxu0 %v3516
        %3621 = vmatpush1.msra.mxu0 %v3515
        %3622 = vmatprep.subr.mxu0 %v3537
        %3623 = vmatpush1.msra.mxu0 %v3536
        %3624 = vmatprep.subr.mxu0 0.0
        %3625 = vmatpush1.msra.mxu0 0.0
        %3626 = vmatprep.subr.mxu0 0.0
        %3627 = vmatpush1.msra.mxu0 0.0
        %3628 = vmatprep.subr.mxu0 0.0
        %3629 = vmatpush1.msra.mxu0 0.0
        %3630 = vmatprep.subr.mxu0 0.0
        %3631 = vmatpush1.msra.mxu0 0.0
        %3632 = vmatprep.subr.mxu0 0.0
        %3633 = vmatpush1.msra.mxu0 0.0
        %3634 = vmatprep.subr.mxu0 0.0
        %3635 = vmatpush1.msra.mxu0 0.0
        %3636 = vmatprep.subr.mxu0 0.0
        %3637 = vmatpush1.msra.mxu0 0.0
        %3638 = vmatprep.subr.mxu0 0.0
        %3639 = vmatpush1.msra.mxu0 0.0
        %3640 = vmatprep.subr.mxu0 0.0
        %3641 = vmatpush1.msra.mxu0 0.0
        %3642 = vmatprep.subr.mxu0 0.0
        %3643 = vmatpush1.msra.mxu0 0.0
        %3644 = vmatprep.subr.mxu0 0.0
        %3645 = vmatpush1.msra.mxu0 0.0
        %3646 = vmatprep.subr.mxu0 0.0
        %3647 = vmatpush1.msra.mxu0 0.0
        %3648 = vmatprep.subr.mxu0 0.0
        %3649 = vmatpush1.msra.mxu0 0.0
        %3650 = vmatprep.subr.mxu0 0.0
        %3651 = vmatpush1.msra.mxu0 0.0
        %3652 = vmatprep.subr.mxu0 0.0
        %3653 = vmatpush1.msra.mxu0 0.0
        %3654 = vmatprep.subr.mxu0 0.0
        %3655 = vmatpush1.msra.mxu0 0.0
        %3656 = vmatprep.subr.mxu0 0.0
        %3657 = vmatpush1.msra.mxu0 0.0
        %3658 = vmatprep.subr.mxu0 0.0
        %3659 = vmatpush1.msra.mxu0 0.0
        %3660 = vmatprep.subr.mxu0 0.0
        %3661 = vmatpush1.msra.mxu0 0.0
        %3662 = vmatprep.subr.mxu0 0.0
        %3663 = vmatpush1.msra.mxu0 0.0
        %3664 = vmatprep.subr.mxu0 0.0
        %3665 = vmatpush1.msra.mxu0 0.0
        %3666 = vmatprep.subr.mxu0 0.0
        %3667 = vmatpush1.msra.mxu0 0.0
        %3668 = vmatprep.subr.mxu0 0.0
        %3669 = vmatpush1.msra.mxu0 0.0
        %3670 = vmatprep.subr.mxu0 0.0
        %3671 = vmatpush1.msra.mxu0 0.0
        %3672 = vmatprep.subr.mxu0 0.0
        %3673 = vmatpush1.msra.mxu0 0.0
        %3674 = vmatprep.subr.mxu0 0.0
        %3675 = vmatpush1.msra.mxu0 0.0
        %3676 = vmatprep.subr.mxu0 0.0
        %3677 = vmatpush1.msra.mxu0 0.0
        %3678 = vmatprep.subr.mxu0 0.0
        %3679 = vmatpush1.msra.mxu0 0.0
        %3680 = vmatprep.subr.mxu0 0.0
        %3681 = vmatpush1.msra.mxu0 0.0
        %3682 = vmatprep.subr.mxu0 0.0
        %3683 = vmatpush1.msra.mxu0 0.0
        %3684 = vmatprep.mubr.f32.mxu0 0.0
        %3685 = vmatmul.mubr.f32.gmra.mrb[0].mxu0 %v3558
        %v3686 = vpop.f32.mrb[0].mxu0
        %v3687 = vadd.f32 0.0, %v3686
        %v3688 = vpop.f32.mrb[0].mxu0
        %v3689 = vadd.f32 0.0, %v3688
        %3690 = vmatprep.mubr.f32.mxu0 0.0
        %3691 = vmatmul.mubr.f32.gmra.mrb[0].mxu0 %v3561
        %v3692 = vpop.f32.mrb[0].mxu0
        %v3693 = vadd.f32 0.0, %v3692
        %v3694 = vpop.f32.mrb[0].mxu0
        %v3695 = vadd.f32 0.0, %v3694
        %3696 = vmatprep.mubr.f32.mxu0 0.0
        %3697 = vmatmul.mubr.f32.gmra.mrb[0].mxu0 %v3564
        %v3698 = vpop.f32.mrb[0].mxu0
        %v3699 = vadd.f32 0.0, %v3698
        %v3700 = vpop.f32.mrb[0].mxu0
        %v3701 = vadd.f32 0.0, %v3700
        %3702 = vmatprep.mubr.f32.mxu0 0.0
        %3703 = vmatmul.mubr.f32.gmra.mrb[0].mxu0 %v3567
        %v3704 = vpop.f32.mrb[0].mxu0
        %v3705 = vadd.f32 0.0, %v3704
        %v3706 = vpop.f32.mrb[0].mxu0
        %v3707 = vadd.f32 0.0, %v3706
        %3708 = vmatprep.mubr.f32.mxu0 0.0
        %3709 = vmatmul.mubr.f32.gmra.mrb[0].mxu0 %v3570
        %v3710 = vpop.f32.mrb[0].mxu0
        %v3711 = vadd.f32 0.0, %v3710
        %v3712 = vpop.f32.mrb[0].mxu0
        %v3713 = vadd.f32 0.0, %v3712
        %3714 = vmatprep.mubr.f32.mxu0 0.0
        %3715 = vmatmul.mubr.f32.gmra.mrb[0].mxu0 %v3573
        %v3716 = vpop.f32.mrb[0].mxu0
        %v3717 = vadd.f32 0.0, %v3716
        %v3718 = vpop.f32.mrb[0].mxu0
        %v3719 = vadd.f32 0.0, %v3718
        %3720 = vmatprep.mubr.f32.mxu0 0.0
        %3721 = vmatmul.mubr.f32.gmra.mrb[0].mxu0 %v3576
        %v3722 = vpop.f32.mrb[0].mxu0
        %v3723 = vadd.f32 0.0, %v3722
        %v3724 = vpop.f32.mrb[0].mxu0
        %v3725 = vadd.f32 0.0, %v3724
        %3726 = vmatprep.mubr.f32.mxu0 0.0
        %3727 = vmatmul.mubr.f32.gmra.mrb[0].mxu0 %v3579
        %v3728 = vpop.f32.mrb[0].mxu0
        %v3729 = vadd.f32 0.0, %v3728
        %v3730 = vpop.f32.mrb[0].mxu0
        %v3731 = vadd.f32 0.0, %v3730
        %3732 = vmatprep.mubr.f32.mxu0 0.0
        %3733 = vmatmul.mubr.f32.gmra.mrb[0].mxu0 %v3582
        %v3734 = vpop.f32.mrb[0].mxu0
        %v3735 = vadd.f32 0.0, %v3734
        %v3736 = vpop.f32.mrb[0].mxu0
        %v3737 = vadd.f32 0.0, %v3736
        %3738 = vmatprep.mubr.f32.mxu0 0.0
        %3739 = vmatmul.mubr.f32.gmra.mrb[0].mxu0 %v3585
        %v3740 = vpop.f32.mrb[0].mxu0
        %v3741 = vadd.f32 0.0, %v3740
        %v3742 = vpop.f32.mrb[0].mxu0
        %v3743 = vadd.f32 0.0, %v3742
        %3744 = vmatprep.mubr.f32.mxu0 0.0
        %3745 = vmatmul.mubr.f32.gmra.mrb[0].mxu0 %v3588
        %v3746 = vpop.f32.mrb[0].mxu0
        %v3747 = vadd.f32 0.0, %v3746
        %v3748 = vpop.f32.mrb[0].mxu0
        %v3749 = vadd.f32 0.0, %v3748
        %3750 = vmatprep.mubr.f32.mxu0 0.0
        %3751 = vmatmul.mubr.f32.gmra.mrb[0].mxu0 %v3591
        %v3752 = vpop.f32.mrb[0].mxu0
        %v3753 = vadd.f32 0.0, %v3752
        %v3754 = vpop.f32.mrb[0].mxu0
        %v3755 = vadd.f32 0.0, %v3754
        %3756 = vmatprep.mubr.f32.mxu0 0.0
        %3757 = vmatmul.mubr.f32.gmra.mrb[0].mxu0 %v3594
        %v3758 = vpop.f32.mrb[0].mxu0
        %v3759 = vadd.f32 0.0, %v3758
        %v3760 = vpop.f32.mrb[0].mxu0
        %v3761 = vadd.f32 0.0, %v3760
        %3762 = vmatprep.mubr.f32.mxu0 0.0
        %3763 = vmatmul.mubr.f32.gmra.mrb[0].mxu0 %v3597
        %v3764 = vpop.f32.mrb[0].mxu0
        %v3765 = vadd.f32 0.0, %v3764
        %v3766 = vpop.f32.mrb[0].mxu0
        %v3767 = vadd.f32 0.0, %v3766
        %3768 = vmatprep.mubr.f32.mxu0 0.0
        %3769 = vmatmul.mubr.f32.gmra.mrb[0].mxu0 %v3600
        %v3770 = vpop.f32.mrb[0].mxu0
        %v3771 = vadd.f32 0.0, %v3770
        %v3772 = vpop.f32.mrb[0].mxu0
        %v3773 = vadd.f32 0.0, %v3772
        %3774 = vmatprep.mubr.f32.mxu0 0.0
        %3775 = vmatmul.mubr.f32.gmra.mrb[0].mxu0 %v3603
        %v3776 = vpop.f32.mrb[0].mxu0
        %v3777 = vadd.f32 0.0, %v3776
        %v3778 = vpop.f32.mrb[0].mxu0
        %v3779 = vadd.f32 0.0, %v3778
        %3780 = vmatprep.mubr.f32.mxu0 0.0
        %3781 = vmatmul.mubr.f32.gmra.mrb[0].mxu0 %v3606
        %v3782 = vpop.f32.mrb[0].mxu0
        %v3783 = vadd.f32 0.0, %v3782
        %v3784 = vpop.f32.mrb[0].mxu0
        %v3785 = vadd.f32 0.0, %v3784
        %3786 = vmatprep.mubr.f32.mxu0 0.0
        %3787 = vmatmul.mubr.f32.gmra.mrb[0].mxu0 %v3609
        %v3788 = vpop.f32.mrb[0].mxu0
        %v3789 = vadd.f32 0.0, %v3788
        %v3790 = vpop.f32.mrb[0].mxu0
        %v3791 = vadd.f32 0.0, %v3790
        %3792 = vmatprep.mubr.f32.mxu0 0.0
        %3793 = vmatmul.mubr.f32.gmra.mrb[0].mxu0 %v3612
        %v3794 = vpop.f32.mrb[0].mxu0
        %v3795 = vadd.f32 0.0, %v3794
        %v3796 = vpop.f32.mrb[0].mxu0
        %v3797 = vadd.f32 0.0, %v3796
        %3798 = vmatprep.mubr.f32.mxu0 0.0
        %3799 = vmatmul.mubr.f32.gmra.mrb[0].mxu0 %v3615
        %v3800 = vpop.f32.mrb[0].mxu0
        %v3801 = vadd.f32 0.0, %v3800
        %v3802 = vpop.f32.mrb[0].mxu0
        %v3803 = vadd.f32 0.0, %v3802
        %3804 = vmatprep.mubr.f32.mxu0 0.0
        %3805 = vmatmul.mubr.f32.gmra.mrb[0].mxu0 %v3618
        %v3806 = vpop.f32.mrb[0].mxu0
        %v3807 = vadd.f32 0.0, %v3806
        %v3808 = vpop.f32.mrb[0].mxu0
        %v3809 = vadd.f32 0.0, %v3808
        %3810 = vdwg.mxu0
        %3811 = vmatprep.subr.mxu0 %v3518
        %3812 = vmatpush1.msra.mxu0 %v3517
        %3813 = vmatprep.subr.mxu0 %v3539
        %3814 = vmatpush1.msra.mxu0 %v3538
        %3815 = vmatprep.subr.mxu0 0.0
        %3816 = vmatpush1.msra.mxu0 0.0
        %3817 = vmatprep.subr.mxu0 0.0
        %3818 = vmatpush1.msra.mxu0 0.0
        %3819 = vmatprep.subr.mxu0 0.0
        %3820 = vmatpush1.msra.mxu0 0.0
        %3821 = vmatprep.subr.mxu0 0.0
        %3822 = vmatpush1.msra.mxu0 0.0
        %3823 = vmatprep.subr.mxu0 0.0
        %3824 = vmatpush1.msra.mxu0 0.0
        %3825 = vmatprep.subr.mxu0 0.0
        %3826 = vmatpush1.msra.mxu0 0.0
        %3827 = vmatprep.subr.mxu0 0.0
        %3828 = vmatpush1.msra.mxu0 0.0
        %3829 = vmatprep.subr.mxu0 0.0
        %3830 = vmatpush1.msra.mxu0 0.0
        %3831 = vmatprep.subr.mxu0 0.0
        %3832 = vmatpush1.msra.mxu0 0.0
        %3833 = vmatprep.subr.mxu0 0.0
        %3834 = vmatpush1.msra.mxu0 0.0
        %3835 = vmatprep.subr.mxu0 0.0
        %3836 = vmatpush1.msra.mxu0 0.0
        %3837 = vmatprep.subr.mxu0 0.0
        %3838 = vmatpush1.msra.mxu0 0.0
        %3839 = vmatprep.subr.mxu0 0.0
        %3840 = vmatpush1.msra.mxu0 0.0
        %3841 = vmatprep.subr.mxu0 0.0
        %3842 = vmatpush1.msra.mxu0 0.0
        %3843 = vmatprep.subr.mxu0 0.0
        %3844 = vmatpush1.msra.mxu0 0.0
        %3845 = vmatprep.subr.mxu0 0.0
        %3846 = vmatpush1.msra.mxu0 0.0
        %3847 = vmatprep.subr.mxu0 0.0
        %3848 = vmatpush1.msra.mxu0 0.0
        %3849 = vmatprep.subr.mxu0 0.0
        %3850 = vmatpush1.msra.mxu0 0.0
        %3851 = vmatprep.subr.mxu0 0.0
        %3852 = vmatpush1.msra.mxu0 0.0
        %3853 = vmatprep.subr.mxu0 0.0
        %3854 = vmatpush1.msra.mxu0 0.0
        %3855 = vmatprep.subr.mxu0 0.0
        %3856 = vmatpush1.msra.mxu0 0.0
        %3857 = vmatprep.subr.mxu0 0.0
        %3858 = vmatpush1.msra.mxu0 0.0
        %3859 = vmatprep.subr.mxu0 0.0
        %3860 = vmatpush1.msra.mxu0 0.0
        %3861 = vmatprep.subr.mxu0 0.0
        %3862 = vmatpush1.msra.mxu0 0.0
        %3863 = vmatprep.subr.mxu0 0.0
        %3864 = vmatpush1.msra.mxu0 0.0
        %3865 = vmatprep.subr.mxu0 0.0
        %3866 = vmatpush1.msra.mxu0 0.0
        %3867 = vmatprep.subr.mxu0 0.0
        %3868 = vmatpush1.msra.mxu0 0.0
        %3869 = vmatprep.subr.mxu0 0.0
        %3870 = vmatpush1.msra.mxu0 0.0
        %3871 = vmatprep.subr.mxu0 0.0
        %3872 = vmatpush1.msra.mxu0 0.0
        %3873 = vmatprep.subr.mxu0 0.0
        %3874 = vmatpush1.msra.mxu0 0.0
        %3875 = vmatprep.mubr.f32.mxu0 0.0
        %3876 = vmatmul.mubr.f32.gmra.mrb[0].mxu0 %v3558
        %v3877 = vpop.f32.mrb[0].mxu0
        %v3878 = vadd.f32 0.0, %v3877
        %v3879 = vpop.f32.mrb[0].mxu0
        %v3880 = vadd.f32 0.0, %v3879
        %3881 = vmatprep.mubr.f32.mxu0 0.0
        %3882 = vmatmul.mubr.f32.gmra.mrb[0].mxu0 %v3561
        %v3883 = vpop.f32.mrb[0].mxu0
        %v3884 = vadd.f32 0.0, %v3883
        %v3885 = vpop.f32.mrb[0].mxu0
        %v3886 = vadd.f32 0.0, %v3885
        %3887 = vmatprep.mubr.f32.mxu0 0.0
        %3888 = vmatmul.mubr.f32.gmra.mrb[0].mxu0 %v3564
        %v3889 = vpop.f32.mrb[0].mxu0
        %v3890 = vadd.f32 0.0, %v3889
        %v3891 = vpop.f32.mrb[0].mxu0
        %v3892 = vadd.f32 0.0, %v3891
        %3893 = vmatprep.mubr.f32.mxu0 0.0
        %3894 = vmatmul.mubr.f32.gmra.mrb[0].mxu0 %v3567
        %v3895 = vpop.f32.mrb[0].mxu0
        %v3896 = vadd.f32 0.0, %v3895
        %v3897 = vpop.f32.mrb[0].mxu0
        %v3898 = vadd.f32 0.0, %v3897
        %3899 = vmatprep.mubr.f32.mxu0 0.0
        %3900 = vmatmul.mubr.f32.gmra.mrb[0].mxu0 %v3570
        %v3901 = vpop.f32.mrb[0].mxu0
        %v3902 = vadd.f32 0.0, %v3901
        %v3903 = vpop.f32.mrb[0].mxu0
        %v3904 = vadd.f32 0.0, %v3903
        %3905 = vmatprep.mubr.f32.mxu0 0.0
        %3906 = vmatmul.mubr.f32.gmra.mrb[0].mxu0 %v3573
        %v3907 = vpop.f32.mrb[0].mxu0
        %v3908 = vadd.f32 0.0, %v3907
        %v3909 = vpop.f32.mrb[0].mxu0
        %v3910 = vadd.f32 0.0, %v3909
        %3911 = vmatprep.mubr.f32.mxu0 0.0
        %3912 = vmatmul.mubr.f32.gmra.mrb[0].mxu0 %v3576
        %v3913 = vpop.f32.mrb[0].mxu0
        %v3914 = vadd.f32 0.0, %v3913
        %v3915 = vpop.f32.mrb[0].mxu0
        %v3916 = vadd.f32 0.0, %v3915
        %3917 = vmatprep.mubr.f32.mxu0 0.0
        %3918 = vmatmul.mubr.f32.gmra.mrb[0].mxu0 %v3579
        %v3919 = vpop.f32.mrb[0].mxu0
        %v3920 = vadd.f32 0.0, %v3919
        %v3921 = vpop.f32.mrb[0].mxu0
        %v3922 = vadd.f32 0.0, %v3921
        %3923 = vmatprep.mubr.f32.mxu0 0.0
        %3924 = vmatmul.mubr.f32.gmra.mrb[0].mxu0 %v3582
        %v3925 = vpop.f32.mrb[0].mxu0
        %v3926 = vadd.f32 0.0, %v3925
        %v3927 = vpop.f32.mrb[0].mxu0
        %v3928 = vadd.f32 0.0, %v3927
        %3929 = vmatprep.mubr.f32.mxu0 0.0
        %3930 = vmatmul.mubr.f32.gmra.mrb[0].mxu0 %v3585
        %v3931 = vpop.f32.mrb[0].mxu0
        %v3932 = vadd.f32 0.0, %v3931
        %v3933 = vpop.f32.mrb[0].mxu0
        %v3934 = vadd.f32 0.0, %v3933
        %3935 = vmatprep.mubr.f32.mxu0 0.0
        %3936 = vmatmul.mubr.f32.gmra.mrb[0].mxu0 %v3588
        %v3937 = vpop.f32.mrb[0].mxu0
        %v3938 = vadd.f32 0.0, %v3937
        %v3939 = vpop.f32.mrb[0].mxu0
        %v3940 = vadd.f32 0.0, %v3939
        %3941 = vmatprep.mubr.f32.mxu0 0.0
        %3942 = vmatmul.mubr.f32.gmra.mrb[0].mxu0 %v3591
        %v3943 = vpop.f32.mrb[0].mxu0
        %v3944 = vadd.f32 0.0, %v3943
        %v3945 = vpop.f32.mrb[0].mxu0
        %v3946 = vadd.f32 0.0, %v3945
        %3947 = vmatprep.mubr.f32.mxu0 0.0
        %3948 = vmatmul.mubr.f32.gmra.mrb[0].mxu0 %v3594
        %v3949 = vpop.f32.mrb[0].mxu0
        %v3950 = vadd.f32 0.0, %v3949
        %v3951 = vpop.f32.mrb[0].mxu0
        %v3952 = vadd.f32 0.0, %v3951
        %3953 = vmatprep.mubr.f32.mxu0 0.0
        %3954 = vmatmul.mubr.f32.gmra.mrb[0].mxu0 %v3597
        %v3955 = vpop.f32.mrb[0].mxu0
        %v3956 = vadd.f32 0.0, %v3955
        %v3957 = vpop.f32.mrb[0].mxu0
        %v3958 = vadd.f32 0.0, %v3957
        %3959 = vmatprep.mubr.f32.mxu0 0.0
        %3960 = vmatmul.mubr.f32.gmra.mrb[0].mxu0 %v3600
        %v3961 = vpop.f32.mrb[0].mxu0
        %v3962 = vadd.f32 0.0, %v3961
        %v3963 = vpop.f32.mrb[0].mxu0
        %v3964 = vadd.f32 0.0, %v3963
        %3965 = vmatprep.mubr.f32.mxu0 0.0
        %3966 = vmatmul.mubr.f32.gmra.mrb[0].mxu0 %v3603
        %v3967 = vpop.f32.mrb[0].mxu0
        %v3968 = vadd.f32 0.0, %v3967
        %v3969 = vpop.f32.mrb[0].mxu0
        %v3970 = vadd.f32 0.0, %v3969
        %3971 = vmatprep.mubr.f32.mxu0 0.0
        %3972 = vmatmul.mubr.f32.gmra.mrb[0].mxu0 %v3606
        %v3973 = vpop.f32.mrb[0].mxu0
        %v3974 = vadd.f32 0.0, %v3973
        %v3975 = vpop.f32.mrb[0].mxu0
        %v3976 = vadd.f32 0.0, %v3975
        %3977 = vmatprep.mubr.f32.mxu0 0.0
        %3978 = vmatmul.mubr.f32.gmra.mrb[0].mxu0 %v3609
        %v3979 = vpop.f32.mrb[0].mxu0
        %v3980 = vadd.f32 0.0, %v3979
        %v3981 = vpop.f32.mrb[0].mxu0
        %v3982 = vadd.f32 0.0, %v3981
        %3983 = vmatprep.mubr.f32.mxu0 0.0
        %3984 = vmatmul.mubr.f32.gmra.mrb[0].mxu0 %v3612
        %v3985 = vpop.f32.mrb[0].mxu0
        %v3986 = vadd.f32 0.0, %v3985
        %v3987 = vpop.f32.mrb[0].mxu0
        %v3988 = vadd.f32 0.0, %v3987
        %3989 = vmatprep.mubr.f32.mxu0 0.0
        %3990 = vmatmul.mubr.f32.gmra.mrb[0].mxu0 %v3615
        %v3991 = vpop.f32.mrb[0].mxu0
        %v3992 = vadd.f32 0.0, %v3991
        %v3993 = vpop.f32.mrb[0].mxu0
        %v3994 = vadd.f32 0.0, %v3993
        %3995 = vmatprep.mubr.f32.mxu0 0.0
        %3996 = vmatmul.mubr.f32.gmra.mrb[0].mxu0 %v3618
        %v3997 = vpop.f32.mrb[0].mxu0
        %v3998 = vadd.f32 0.0, %v3997
        %v3999 = vpop.f32.mrb[0].mxu0
        %v4000 = vadd.f32 0.0, %v3999
        %4001 = vdwg.mxu0
        %4002 = vmatprep.subr.mxu0 %v3520
        %4003 = vmatpush1.msra.mxu0 %v3519
        %4004 = vmatprep.subr.mxu0 %v3541
        %4005 = vmatpush1.msra.mxu0 %v3540
        %4006 = vmatprep.subr.mxu0 0.0
        %4007 = vmatpush1.msra.mxu0 0.0
        %4008 = vmatprep.subr.mxu0 0.0
        %4009 = vmatpush1.msra.mxu0 0.0
        %4010 = vmatprep.subr.mxu0 0.0
        %4011 = vmatpush1.msra.mxu0 0.0
        %4012 = vmatprep.subr.mxu0 0.0
        %4013 = vmatpush1.msra.mxu0 0.0
        %4014 = vmatprep.subr.mxu0 0.0
        %4015 = vmatpush1.msra.mxu0 0.0
        %4016 = vmatprep.subr.mxu0 0.0
        %4017 = vmatpush1.msra.mxu0 0.0
        %4018 = vmatprep.subr.mxu0 0.0
        %4019 = vmatpush1.msra.mxu0 0.0
        %4020 = vmatprep.subr.mxu0 0.0
        %4021 = vmatpush1.msra.mxu0 0.0
        %4022 = vmatprep.subr.mxu0 0.0
        %4023 = vmatpush1.msra.mxu0 0.0
        %4024 = vmatprep.subr.mxu0 0.0
        %4025 = vmatpush1.msra.mxu0 0.0
        %4026 = vmatprep.subr.mxu0 0.0
        %4027 = vmatpush1.msra.mxu0 0.0
        %4028 = vmatprep.subr.mxu0 0.0
        %4029 = vmatpush1.msra.mxu0 0.0
        %4030 = vmatprep.subr.mxu0 0.0
        %4031 = vmatpush1.msra.mxu0 0.0
        %4032 = vmatprep.subr.mxu0 0.0
        %4033 = vmatpush1.msra.mxu0 0.0
        %4034 = vmatprep.subr.mxu0 0.0
        %4035 = vmatpush1.msra.mxu0 0.0
        %4036 = vmatprep.subr.mxu0 0.0
        %4037 = vmatpush1.msra.mxu0 0.0
        %4038 = vmatprep.subr.mxu0 0.0
        %4039 = vmatpush1.msra.mxu0 0.0
        %4040 = vmatprep.subr.mxu0 0.0
        %4041 = vmatpush1.msra.mxu0 0.0
        %4042 = vmatprep.subr.mxu0 0.0
        %4043 = vmatpush1.msra.mxu0 0.0
        %4044 = vmatprep.subr.mxu0 0.0
        %4045 = vmatpush1.msra.mxu0 0.0
        %4046 = vmatprep.subr.mxu0 0.0
        %4047 = vmatpush1.msra.mxu0 0.0
        %4048 = vmatprep.subr.mxu0 0.0
        %4049 = vmatpush1.msra.mxu0 0.0
        %4050 = vmatprep.subr.mxu0 0.0
        %4051 = vmatpush1.msra.mxu0 0.0
        %4052 = vmatprep.subr.mxu0 0.0
        %4053 = vmatpush1.msra.mxu0 0.0
        %4054 = vmatprep.subr.mxu0 0.0
        %4055 = vmatpush1.msra.mxu0 0.0
        %4056 = vmatprep.subr.mxu0 0.0
        %4057 = vmatpush1.msra.mxu0 0.0
        %4058 = vmatprep.subr.mxu0 0.0
        %4059 = vmatpush1.msra.mxu0 0.0
        %4060 = vmatprep.subr.mxu0 0.0
        %4061 = vmatpush1.msra.mxu0 0.0
        %4062 = vmatprep.subr.mxu0 0.0
        %4063 = vmatpush1.msra.mxu0 0.0
        %4064 = vmatprep.subr.mxu0 0.0
        %4065 = vmatpush1.msra.mxu0 0.0
        %4066 = vmatprep.mubr.f32.mxu0 0.0
        %4067 = vmatmul.mubr.f32.gmra.mrb[0].mxu0 %v3558
        %v4068 = vpop.f32.mrb[0].mxu0
        %v4069 = vadd.f32 0.0, %v4068
        %v4070 = vpop.f32.mrb[0].mxu0
        %v4071 = vadd.f32 0.0, %v4070
        %4072 = vmatprep.mubr.f32.mxu0 0.0
        %4073 = vmatmul.mubr.f32.gmra.mrb[0].mxu0 %v3561
        %v4074 = vpop.f32.mrb[0].mxu0
        %v4075 = vadd.f32 0.0, %v4074
        %v4076 = vpop.f32.mrb[0].mxu0
        %v4077 = vadd.f32 0.0, %v4076
        %4078 = vmatprep.mubr.f32.mxu0 0.0
        %4079 = vmatmul.mubr.f32.gmra.mrb[0].mxu0 %v3564
        %v4080 = vpop.f32.mrb[0].mxu0
        %v4081 = vadd.f32 0.0, %v4080
        %v4082 = vpop.f32.mrb[0].mxu0
        %v4083 = vadd.f32 0.0, %v4082
        %4084 = vmatprep.mubr.f32.mxu0 0.0
        %4085 = vmatmul.mubr.f32.gmra.mrb[0].mxu0 %v3567
        %v4086 = vpop.f32.mrb[0].mxu0
        %v4087 = vadd.f32 0.0, %v4086
        %v4088 = vpop.f32.mrb[0].mxu0
        %v4089 = vadd.f32 0.0, %v4088
        %4090 = vmatprep.mubr.f32.mxu0 0.0
        %4091 = vmatmul.mubr.f32.gmra.mrb[0].mxu0 %v3570
        %v4092 = vpop.f32.mrb[0].mxu0
        %v4093 = vadd.f32 0.0, %v4092
        %v4094 = vpop.f32.mrb[0].mxu0
        %v4095 = vadd.f32 0.0, %v4094
        %4096 = vmatprep.mubr.f32.mxu0 0.0
        %4097 = vmatmul.mubr.f32.gmra.mrb[0].mxu0 %v3573
        %v4098 = vpop.f32.mrb[0].mxu0
        %v4099 = vadd.f32 0.0, %v4098
        %v4100 = vpop.f32.mrb[0].mxu0
        %v4101 = vadd.f32 0.0, %v4100
        %4102 = vmatprep.mubr.f32.mxu0 0.0
        %4103 = vmatmul.mubr.f32.gmra.mrb[0].mxu0 %v3576
        %v4104 = vpop.f32.mrb[0].mxu0
        %v4105 = vadd.f32 0.0, %v4104
        %v4106 = vpop.f32.mrb[0].mxu0
        %v4107 = vadd.f32 0.0, %v4106
        %4108 = vmatprep.mubr.f32.mxu0 0.0
        %4109 = vmatmul.mubr.f32.gmra.mrb[0].mxu0 %v3579
        %v4110 = vpop.f32.mrb[0].mxu0
        %v4111 = vadd.f32 0.0, %v4110
        %v4112 = vpop.f32.mrb[0].mxu0
        %v4113 = vadd.f32 0.0, %v4112
        %4114 = vmatprep.mubr.f32.mxu0 0.0
        %4115 = vmatmul.mubr.f32.gmra.mrb[0].mxu0 %v3582
        %v4116 = vpop.f32.mrb[0].mxu0
        %v4117 = vadd.f32 0.0, %v4116
        %v4118 = vpop.f32.mrb[0].mxu0
        %v4119 = vadd.f32 0.0, %v4118
        %4120 = vmatprep.mubr.f32.mxu0 0.0
        %4121 = vmatmul.mubr.f32.gmra.mrb[0].mxu0 %v3585
        %v4122 = vpop.f32.mrb[0].mxu0
        %v4123 = vadd.f32 0.0, %v4122
        %v4124 = vpop.f32.mrb[0].mxu0
        %v4125 = vadd.f32 0.0, %v4124
        %4126 = vmatprep.mubr.f32.mxu0 0.0
        %4127 = vmatmul.mubr.f32.gmra.mrb[0].mxu0 %v3588
        %v4128 = vpop.f32.mrb[0].mxu0
        %v4129 = vadd.f32 0.0, %v4128
        %v4130 = vpop.f32.mrb[0].mxu0
        %v4131 = vadd.f32 0.0, %v4130
        %4132 = vmatprep.mubr.f32.mxu0 0.0
        %4133 = vmatmul.mubr.f32.gmra.mrb[0].mxu0 %v3591
        %v4134 = vpop.f32.mrb[0].mxu0
        %v4135 = vadd.f32 0.0, %v4134
        %v4136 = vpop.f32.mrb[0].mxu0
        %v4137 = vadd.f32 0.0, %v4136
        %4138 = vmatprep.mubr.f32.mxu0 0.0
        %4139 = vmatmul.mubr.f32.gmra.mrb[0].mxu0 %v3594
        %v4140 = vpop.f32.mrb[0].mxu0
        %v4141 = vadd.f32 0.0, %v4140
        %v4142 = vpop.f32.mrb[0].mxu0
        %v4143 = vadd.f32 0.0, %v4142
        %4144 = vmatprep.mubr.f32.mxu0 0.0
        %4145 = vmatmul.mubr.f32.gmra.mrb[0].mxu0 %v3597
        %v4146 = vpop.f32.mrb[0].mxu0
        %v4147 = vadd.f32 0.0, %v4146
        %v4148 = vpop.f32.mrb[0].mxu0
        %v4149 = vadd.f32 0.0, %v4148
        %4150 = vmatprep.mubr.f32.mxu0 0.0
        %4151 = vmatmul.mubr.f32.gmra.mrb[0].mxu0 %v3600
        %v4152 = vpop.f32.mrb[0].mxu0
        %v4153 = vadd.f32 0.0, %v4152
        %v4154 = vpop.f32.mrb[0].mxu0
        %v4155 = vadd.f32 0.0, %v4154
        %4156 = vmatprep.mubr.f32.mxu0 0.0
        %4157 = vmatmul.mubr.f32.gmra.mrb[0].mxu0 %v3603
        %v4158 = vpop.f32.mrb[0].mxu0
        %v4159 = vadd.f32 0.0, %v4158
        %v4160 = vpop.f32.mrb[0].mxu0
        %v4161 = vadd.f32 0.0, %v4160
        %4162 = vmatprep.mubr.f32.mxu0 0.0
        %4163 = vmatmul.mubr.f32.gmra.mrb[0].mxu0 %v3606
        %v4164 = vpop.f32.mrb[0].mxu0
        %v4165 = vadd.f32 0.0, %v4164
        %v4166 = vpop.f32.mrb[0].mxu0
        %v4167 = vadd.f32 0.0, %v4166
        %4168 = vmatprep.mubr.f32.mxu0 0.0
        %4169 = vmatmul.mubr.f32.gmra.mrb[0].mxu0 %v3609
        %v4170 = vpop.f32.mrb[0].mxu0
        %v4171 = vadd.f32 0.0, %v4170
        %v4172 = vpop.f32.mrb[0].mxu0
        %v4173 = vadd.f32 0.0, %v4172
        %4174 = vmatprep.mubr.f32.mxu0 0.0
        %4175 = vmatmul.mubr.f32.gmra.mrb[0].mxu0 %v3612
        %v4176 = vpop.f32.mrb[0].mxu0
        %v4177 = vadd.f32 0.0, %v4176
        %v4178 = vpop.f32.mrb[0].mxu0
        %v4179 = vadd.f32 0.0, %v4178
        %4180 = vmatprep.mubr.f32.mxu0 0.0
        %4181 = vmatmul.mubr.f32.gmra.mrb[0].mxu0 %v3615
        %v4182 = vpop.f32.mrb[0].mxu0
        %v4183 = vadd.f32 0.0, %v4182
        %v4184 = vpop.f32.mrb[0].mxu0
        %v4185 = vadd.f32 0.0, %v4184
        %4186 = vmatprep.mubr.f32.mxu0 0.0
        %4187 = vmatmul.mubr.f32.gmra.mrb[0].mxu0 %v3618
        %v4188 = vpop.f32.mrb[0].mxu0
        %v4189 = vadd.f32 0.0, %v4188
        %v4190 = vpop.f32.mrb[0].mxu0
        %v4191 = vadd.f32 0.0, %v4190
        %4192 = vdwg.mxu0
        %4193 = vmatprep.subr.mxu0 %v3522
        %4194 = vmatpush1.msra.mxu0 %v3521
        %4195 = vmatprep.subr.mxu0 %v3543
        %4196 = vmatpush1.msra.mxu0 %v3542
        %4197 = vmatprep.subr.mxu0 0.0
        %4198 = vmatpush1.msra.mxu0 0.0
        %4199 = vmatprep.subr.mxu0 0.0
        %4200 = vmatpush1.msra.mxu0 0.0
        %4201 = vmatprep.subr.mxu0 0.0
        %4202 = vmatpush1.msra.mxu0 0.0
        %4203 = vmatprep.subr.mxu0 0.0
        %4204 = vmatpush1.msra.mxu0 0.0
        %4205 = vmatprep.subr.mxu0 0.0
        %4206 = vmatpush1.msra.mxu0 0.0
        %4207 = vmatprep.subr.mxu0 0.0
        %4208 = vmatpush1.msra.mxu0 0.0
        %4209 = vmatprep.subr.mxu0 0.0
        %4210 = vmatpush1.msra.mxu0 0.0
        %4211 = vmatprep.subr.mxu0 0.0
        %4212 = vmatpush1.msra.mxu0 0.0
        %4213 = vmatprep.subr.mxu0 0.0
        %4214 = vmatpush1.msra.mxu0 0.0
        %4215 = vmatprep.subr.mxu0 0.0
        %4216 = vmatpush1.msra.mxu0 0.0
        %4217 = vmatprep.subr.mxu0 0.0
        %4218 = vmatpush1.msra.mxu0 0.0
        %4219 = vmatprep.subr.mxu0 0.0
        %4220 = vmatpush1.msra.mxu0 0.0
        %4221 = vmatprep.subr.mxu0 0.0
        %4222 = vmatpush1.msra.mxu0 0.0
        %4223 = vmatprep.subr.mxu0 0.0
        %4224 = vmatpush1.msra.mxu0 0.0
        %4225 = vmatprep.subr.mxu0 0.0
        %4226 = vmatpush1.msra.mxu0 0.0
        %4227 = vmatprep.subr.mxu0 0.0
        %4228 = vmatpush1.msra.mxu0 0.0
        %4229 = vmatprep.subr.mxu0 0.0
        %4230 = vmatpush1.msra.mxu0 0.0
        %4231 = vmatprep.subr.mxu0 0.0
        %4232 = vmatpush1.msra.mxu0 0.0
        %4233 = vmatprep.subr.mxu0 0.0
        %4234 = vmatpush1.msra.mxu0 0.0
        %4235 = vmatprep.subr.mxu0 0.0
        %4236 = vmatpush1.msra.mxu0 0.0
        %4237 = vmatprep.subr.mxu0 0.0
        %4238 = vmatpush1.msra.mxu0 0.0
        %4239 = vmatprep.subr.mxu0 0.0
        %4240 = vmatpush1.msra.mxu0 0.0
        %4241 = vmatprep.subr.mxu0 0.0
        %4242 = vmatpush1.msra.mxu0 0.0
        %4243 = vmatprep.subr.mxu0 0.0
        %4244 = vmatpush1.msra.mxu0 0.0
        %4245 = vmatprep.subr.mxu0 0.0
        %4246 = vmatpush1.msra.mxu0 0.0
        %4247 = vmatprep.subr.mxu0 0.0
        %4248 = vmatpush1.msra.mxu0 0.0
        %4249 = vmatprep.subr.mxu0 0.0
        %4250 = vmatpush1.msra.mxu0 0.0
        %4251 = vmatprep.subr.mxu0 0.0
        %4252 = vmatpush1.msra.mxu0 0.0
        %4253 = vmatprep.subr.mxu0 0.0
        %4254 = vmatpush1.msra.mxu0 0.0
        %4255 = vmatprep.subr.mxu0 0.0
        %4256 = vmatpush1.msra.mxu0 0.0
        %4257 = vmatprep.mubr.f32.mxu0 0.0
        %4258 = vmatmul.mubr.f32.gmra.mrb[0].mxu0 %v3558
        %v4259 = vpop.f32.mrb[0].mxu0
        %v4260 = vadd.f32 0.0, %v4259
        %v4261 = vpop.f32.mrb[0].mxu0
        %v4262 = vadd.f32 0.0, %v4261
        %4263 = vmatprep.mubr.f32.mxu0 0.0
        %4264 = vmatmul.mubr.f32.gmra.mrb[0].mxu0 %v3561
        %v4265 = vpop.f32.mrb[0].mxu0
        %v4266 = vadd.f32 0.0, %v4265
        %v4267 = vpop.f32.mrb[0].mxu0
        %v4268 = vadd.f32 0.0, %v4267
        %4269 = vmatprep.mubr.f32.mxu0 0.0
        %4270 = vmatmul.mubr.f32.gmra.mrb[0].mxu0 %v3564
        %v4271 = vpop.f32.mrb[0].mxu0
        %v4272 = vadd.f32 0.0, %v4271
        %v4273 = vpop.f32.mrb[0].mxu0
        %v4274 = vadd.f32 0.0, %v4273
        %4275 = vmatprep.mubr.f32.mxu0 0.0
        %4276 = vmatmul.mubr.f32.gmra.mrb[0].mxu0 %v3567
        %v4277 = vpop.f32.mrb[0].mxu0
        %v4278 = vadd.f32 0.0, %v4277
        %v4279 = vpop.f32.mrb[0].mxu0
        %v4280 = vadd.f32 0.0, %v4279
        %4281 = vmatprep.mubr.f32.mxu0 0.0
        %4282 = vmatmul.mubr.f32.gmra.mrb[0].mxu0 %v3570
        %v4283 = vpop.f32.mrb[0].mxu0
        %v4284 = vadd.f32 0.0, %v4283
        %v4285 = vpop.f32.mrb[0].mxu0
        %v4286 = vadd.f32 0.0, %v4285
        %4287 = vmatprep.mubr.f32.mxu0 0.0
        %4288 = vmatmul.mubr.f32.gmra.mrb[0].mxu0 %v3573
        %v4289 = vpop.f32.mrb[0].mxu0
        %v4290 = vadd.f32 0.0, %v4289
        %v4291 = vpop.f32.mrb[0].mxu0
        %v4292 = vadd.f32 0.0, %v4291
        %4293 = vmatprep.mubr.f32.mxu0 0.0
        %4294 = vmatmul.mubr.f32.gmra.mrb[0].mxu0 %v3576
        %v4295 = vpop.f32.mrb[0].mxu0
        %v4296 = vadd.f32 0.0, %v4295
        %v4297 = vpop.f32.mrb[0].mxu0
        %v4298 = vadd.f32 0.0, %v4297
        %4299 = vmatprep.mubr.f32.mxu0 0.0
        %4300 = vmatmul.mubr.f32.gmra.mrb[0].mxu0 %v3579
        %v4301 = vpop.f32.mrb[0].mxu0
        %v4302 = vadd.f32 0.0, %v4301
        %v4303 = vpop.f32.mrb[0].mxu0
        %v4304 = vadd.f32 0.0, %v4303
        %4305 = vmatprep.mubr.f32.mxu0 0.0
        %4306 = vmatmul.mubr.f32.gmra.mrb[0].mxu0 %v3582
        %v4307 = vpop.f32.mrb[0].mxu0
        %v4308 = vadd.f32 0.0, %v4307
        %v4309 = vpop.f32.mrb[0].mxu0
        %v4310 = vadd.f32 0.0, %v4309
        %4311 = vmatprep.mubr.f32.mxu0 0.0
        %4312 = vmatmul.mubr.f32.gmra.mrb[0].mxu0 %v3585
        %v4313 = vpop.f32.mrb[0].mxu0
        %v4314 = vadd.f32 0.0, %v4313
        %v4315 = vpop.f32.mrb[0].mxu0
        %v4316 = vadd.f32 0.0, %v4315
        %4317 = vmatprep.mubr.f32.mxu0 0.0
        %4318 = vmatmul.mubr.f32.gmra.mrb[0].mxu0 %v3588
        %v4319 = vpop.f32.mrb[0].mxu0
        %v4320 = vadd.f32 0.0, %v4319
        %v4321 = vpop.f32.mrb[0].mxu0
        %v4322 = vadd.f32 0.0, %v4321
        %4323 = vmatprep.mubr.f32.mxu0 0.0
        %4324 = vmatmul.mubr.f32.gmra.mrb[0].mxu0 %v3591
        %v4325 = vpop.f32.mrb[0].mxu0
        %v4326 = vadd.f32 0.0, %v4325
        %v4327 = vpop.f32.mrb[0].mxu0
        %v4328 = vadd.f32 0.0, %v4327
        %4329 = vmatprep.mubr.f32.mxu0 0.0
        %4330 = vmatmul.mubr.f32.gmra.mrb[0].mxu0 %v3594
        %v4331 = vpop.f32.mrb[0].mxu0
        %v4332 = vadd.f32 0.0, %v4331
        %v4333 = vpop.f32.mrb[0].mxu0
        %v4334 = vadd.f32 0.0, %v4333
        %4335 = vmatprep.mubr.f32.mxu0 0.0
        %4336 = vmatmul.mubr.f32.gmra.mrb[0].mxu0 %v3597
        %v4337 = vpop.f32.mrb[0].mxu0
        %v4338 = vadd.f32 0.0, %v4337
        %v4339 = vpop.f32.mrb[0].mxu0
        %v4340 = vadd.f32 0.0, %v4339
        %4341 = vmatprep.mubr.f32.mxu0 0.0
        %4342 = vmatmul.mubr.f32.gmra.mrb[0].mxu0 %v3600
        %v4343 = vpop.f32.mrb[0].mxu0
        %v4344 = vadd.f32 0.0, %v4343
        %v4345 = vpop.f32.mrb[0].mxu0
        %v4346 = vadd.f32 0.0, %v4345
        %4347 = vmatprep.mubr.f32.mxu0 0.0
        %4348 = vmatmul.mubr.f32.gmra.mrb[0].mxu0 %v3603
        %v4349 = vpop.f32.mrb[0].mxu0
        %v4350 = vadd.f32 0.0, %v4349
        %v4351 = vpop.f32.mrb[0].mxu0
        %v4352 = vadd.f32 0.0, %v4351
        %4353 = vmatprep.mubr.f32.mxu0 0.0
        %4354 = vmatmul.mubr.f32.gmra.mrb[0].mxu0 %v3606
        %v4355 = vpop.f32.mrb[0].mxu0
        %v4356 = vadd.f32 0.0, %v4355
        %v4357 = vpop.f32.mrb[0].mxu0
        %v4358 = vadd.f32 0.0, %v4357
        %4359 = vmatprep.mubr.f32.mxu0 0.0
        %4360 = vmatmul.mubr.f32.gmra.mrb[0].mxu0 %v3609
        %v4361 = vpop.f32.mrb[0].mxu0
        %v4362 = vadd.f32 0.0, %v4361
        %v4363 = vpop.f32.mrb[0].mxu0
        %v4364 = vadd.f32 0.0, %v4363
        %4365 = vmatprep.mubr.f32.mxu0 0.0
        %4366 = vmatmul.mubr.f32.gmra.mrb[0].mxu0 %v3612
        %v4367 = vpop.f32.mrb[0].mxu0
        %v4368 = vadd.f32 0.0, %v4367
        %v4369 = vpop.f32.mrb[0].mxu0
        %v4370 = vadd.f32 0.0, %v4369
        %4371 = vmatprep.mubr.f32.mxu0 0.0
        %4372 = vmatmul.mubr.f32.gmra.mrb[0].mxu0 %v3615
        %v4373 = vpop.f32.mrb[0].mxu0
        %v4374 = vadd.f32 0.0, %v4373
        %v4375 = vpop.f32.mrb[0].mxu0
        %v4376 = vadd.f32 0.0, %v4375
        %4377 = vmatprep.mubr.f32.mxu0 0.0
        %4378 = vmatmul.mubr.f32.gmra.mrb[0].mxu0 %v3618
        %v4379 = vpop.f32.mrb[0].mxu0
        %v4380 = vadd.f32 0.0, %v4379
        %v4381 = vpop.f32.mrb[0].mxu0
        %v4382 = vadd.f32 0.0, %v4381
        %4383 = vdwg.mxu0
        %4384 = vmatprep.subr.mxu0 %v3524
        %4385 = vmatpush1.msra.mxu0 %v3523
        %4386 = vmatprep.subr.mxu0 %v3545
        %4387 = vmatpush1.msra.mxu0 %v3544
        %4388 = vmatprep.subr.mxu0 0.0
        %4389 = vmatpush1.msra.mxu0 0.0
        %4390 = vmatprep.subr.mxu0 0.0
        %4391 = vmatpush1.msra.mxu0 0.0
        %4392 = vmatprep.subr.mxu0 0.0
        %4393 = vmatpush1.msra.mxu0 0.0
        %4394 = vmatprep.subr.mxu0 0.0
        %4395 = vmatpush1.msra.mxu0 0.0
        %4396 = vmatprep.subr.mxu0 0.0
        %4397 = vmatpush1.msra.mxu0 0.0
        %4398 = vmatprep.subr.mxu0 0.0
        %4399 = vmatpush1.msra.mxu0 0.0
        %4400 = vmatprep.subr.mxu0 0.0
        %4401 = vmatpush1.msra.mxu0 0.0
        %4402 = vmatprep.subr.mxu0 0.0
        %4403 = vmatpush1.msra.mxu0 0.0
        %4404 = vmatprep.subr.mxu0 0.0
        %4405 = vmatpush1.msra.mxu0 0.0
        %4406 = vmatprep.subr.mxu0 0.0
        %4407 = vmatpush1.msra.mxu0 0.0
        %4408 = vmatprep.subr.mxu0 0.0
        %4409 = vmatpush1.msra.mxu0 0.0
        %4410 = vmatprep.subr.mxu0 0.0
        %4411 = vmatpush1.msra.mxu0 0.0
        %4412 = vmatprep.subr.mxu0 0.0
        %4413 = vmatpush1.msra.mxu0 0.0
        %4414 = vmatprep.subr.mxu0 0.0
        %4415 = vmatpush1.msra.mxu0 0.0
        %4416 = vmatprep.subr.mxu0 0.0
        %4417 = vmatpush1.msra.mxu0 0.0
        %4418 = vmatprep.subr.mxu0 0.0
        %4419 = vmatpush1.msra.mxu0 0.0
        %4420 = vmatprep.subr.mxu0 0.0
        %4421 = vmatpush1.msra.mxu0 0.0
        %4422 = vmatprep.subr.mxu0 0.0
        %4423 = vmatpush1.msra.mxu0 0.0
        %4424 = vmatprep.subr.mxu0 0.0
        %4425 = vmatpush1.msra.mxu0 0.0
        %4426 = vmatprep.subr.mxu0 0.0
        %4427 = vmatpush1.msra.mxu0 0.0
        %4428 = vmatprep.subr.mxu0 0.0
        %4429 = vmatpush1.msra.mxu0 0.0
        %4430 = vmatprep.subr.mxu0 0.0
        %4431 = vmatpush1.msra.mxu0 0.0
        %4432 = vmatprep.subr.mxu0 0.0
        %4433 = vmatpush1.msra.mxu0 0.0
        %4434 = vmatprep.subr.mxu0 0.0
        %4435 = vmatpush1.msra.mxu0 0.0
        %4436 = vmatprep.subr.mxu0 0.0
        %4437 = vmatpush1.msra.mxu0 0.0
        %4438 = vmatprep.subr.mxu0 0.0
        %4439 = vmatpush1.msra.mxu0 0.0
        %4440 = vmatprep.subr.mxu0 0.0
        %4441 = vmatpush1.msra.mxu0 0.0
        %4442 = vmatprep.subr.mxu0 0.0
        %4443 = vmatpush1.msra.mxu0 0.0
        %4444 = vmatprep.subr.mxu0 0.0
        %4445 = vmatpush1.msra.mxu0 0.0
        %4446 = vmatprep.subr.mxu0 0.0
        %4447 = vmatpush1.msra.mxu0 0.0
        %4448 = vmatprep.mubr.f32.mxu0 0.0
        %4449 = vmatmul.mubr.f32.gmra.mrb[0].mxu0 %v3558
        %v4450 = vpop.f32.mrb[0].mxu0
        %v4451 = vadd.f32 0.0, %v4450
        %v4452 = vpop.f32.mrb[0].mxu0
        %v4453 = vadd.f32 0.0, %v4452
        %4454 = vmatprep.mubr.f32.mxu0 0.0
        %4455 = vmatmul.mubr.f32.gmra.mrb[0].mxu0 %v3561
        %v4456 = vpop.f32.mrb[0].mxu0
        %v4457 = vadd.f32 0.0, %v4456
        %v4458 = vpop.f32.mrb[0].mxu0
        %v4459 = vadd.f32 0.0, %v4458
        %4460 = vmatprep.mubr.f32.mxu0 0.0
        %4461 = vmatmul.mubr.f32.gmra.mrb[0].mxu0 %v3564
        %v4462 = vpop.f32.mrb[0].mxu0
        %v4463 = vadd.f32 0.0, %v4462
        %v4464 = vpop.f32.mrb[0].mxu0
        %v4465 = vadd.f32 0.0, %v4464
        %4466 = vmatprep.mubr.f32.mxu0 0.0
        %4467 = vmatmul.mubr.f32.gmra.mrb[0].mxu0 %v3567
        %v4468 = vpop.f32.mrb[0].mxu0
        %v4469 = vadd.f32 0.0, %v4468
        %v4470 = vpop.f32.mrb[0].mxu0
        %v4471 = vadd.f32 0.0, %v4470
        %4472 = vmatprep.mubr.f32.mxu0 0.0
        %4473 = vmatmul.mubr.f32.gmra.mrb[0].mxu0 %v3570
        %v4474 = vpop.f32.mrb[0].mxu0
        %v4475 = vadd.f32 0.0, %v4474
        %v4476 = vpop.f32.mrb[0].mxu0
        %v4477 = vadd.f32 0.0, %v4476
        %4478 = vmatprep.mubr.f32.mxu0 0.0
        %4479 = vmatmul.mubr.f32.gmra.mrb[0].mxu0 %v3573
        %v4480 = vpop.f32.mrb[0].mxu0
        %v4481 = vadd.f32 0.0, %v4480
        %v4482 = vpop.f32.mrb[0].mxu0
        %v4483 = vadd.f32 0.0, %v4482
        %4484 = vmatprep.mubr.f32.mxu0 0.0
        %4485 = vmatmul.mubr.f32.gmra.mrb[0].mxu0 %v3576
        %v4486 = vpop.f32.mrb[0].mxu0
        %v4487 = vadd.f32 0.0, %v4486
        %v4488 = vpop.f32.mrb[0].mxu0
        %v4489 = vadd.f32 0.0, %v4488
        %4490 = vmatprep.mubr.f32.mxu0 0.0
        %4491 = vmatmul.mubr.f32.gmra.mrb[0].mxu0 %v3579
        %v4492 = vpop.f32.mrb[0].mxu0
        %v4493 = vadd.f32 0.0, %v4492
        %v4494 = vpop.f32.mrb[0].mxu0
        %v4495 = vadd.f32 0.0, %v4494
        %4496 = vmatprep.mubr.f32.mxu0 0.0
        %4497 = vmatmul.mubr.f32.gmra.mrb[0].mxu0 %v3582
        %v4498 = vpop.f32.mrb[0].mxu0
        %v4499 = vadd.f32 0.0, %v4498
        %v4500 = vpop.f32.mrb[0].mxu0
        %v4501 = vadd.f32 0.0, %v4500
        %4502 = vmatprep.mubr.f32.mxu0 0.0
        %4503 = vmatmul.mubr.f32.gmra.mrb[0].mxu0 %v3585
        %v4504 = vpop.f32.mrb[0].mxu0
        %v4505 = vadd.f32 0.0, %v4504
        %v4506 = vpop.f32.mrb[0].mxu0
        %v4507 = vadd.f32 0.0, %v4506
        %4508 = vmatprep.mubr.f32.mxu0 0.0
        %4509 = vmatmul.mubr.f32.gmra.mrb[0].mxu0 %v3588
        %v4510 = vpop.f32.mrb[0].mxu0
        %v4511 = vadd.f32 0.0, %v4510
        %v4512 = vpop.f32.mrb[0].mxu0
        %v4513 = vadd.f32 0.0, %v4512
        %4514 = vmatprep.mubr.f32.mxu0 0.0
        %4515 = vmatmul.mubr.f32.gmra.mrb[0].mxu0 %v3591
        %v4516 = vpop.f32.mrb[0].mxu0
        %v4517 = vadd.f32 0.0, %v4516
        %v4518 = vpop.f32.mrb[0].mxu0
        %v4519 = vadd.f32 0.0, %v4518
        %4520 = vmatprep.mubr.f32.mxu0 0.0
        %4521 = vmatmul.mubr.f32.gmra.mrb[0].mxu0 %v3594
        %v4522 = vpop.f32.mrb[0].mxu0
        %v4523 = vadd.f32 0.0, %v4522
        %v4524 = vpop.f32.mrb[0].mxu0
        %v4525 = vadd.f32 0.0, %v4524
        %4526 = vmatprep.mubr.f32.mxu0 0.0
        %4527 = vmatmul.mubr.f32.gmra.mrb[0].mxu0 %v3597
        %v4528 = vpop.f32.mrb[0].mxu0
        %v4529 = vadd.f32 0.0, %v4528
        %v4530 = vpop.f32.mrb[0].mxu0
        %v4531 = vadd.f32 0.0, %v4530
        %4532 = vmatprep.mubr.f32.mxu0 0.0
        %4533 = vmatmul.mubr.f32.gmra.mrb[0].mxu0 %v3600
        %v4534 = vpop.f32.mrb[0].mxu0
        %v4535 = vadd.f32 0.0, %v4534
        %v4536 = vpop.f32.mrb[0].mxu0
        %v4537 = vadd.f32 0.0, %v4536
        %4538 = vmatprep.mubr.f32.mxu0 0.0
        %4539 = vmatmul.mubr.f32.gmra.mrb[0].mxu0 %v3603
        %v4540 = vpop.f32.mrb[0].mxu0
        %v4541 = vadd.f32 0.0, %v4540
        %v4542 = vpop.f32.mrb[0].mxu0
        %v4543 = vadd.f32 0.0, %v4542
        %4544 = vmatprep.mubr.f32.mxu0 0.0
        %4545 = vmatmul.mubr.f32.gmra.mrb[0].mxu0 %v3606
        %v4546 = vpop.f32.mrb[0].mxu0
        %v4547 = vadd.f32 0.0, %v4546
        %v4548 = vpop.f32.mrb[0].mxu0
        %v4549 = vadd.f32 0.0, %v4548
        %4550 = vmatprep.mubr.f32.mxu0 0.0
        %4551 = vmatmul.mubr.f32.gmra.mrb[0].mxu0 %v3609
        %v4552 = vpop.f32.mrb[0].mxu0
        %v4553 = vadd.f32 0.0, %v4552
        %v4554 = vpop.f32.mrb[0].mxu0
        %v4555 = vadd.f32 0.0, %v4554
        %4556 = vmatprep.mubr.f32.mxu0 0.0
        %4557 = vmatmul.mubr.f32.gmra.mrb[0].mxu0 %v3612
        %v4558 = vpop.f32.mrb[0].mxu0
        %v4559 = vadd.f32 0.0, %v4558
        %v4560 = vpop.f32.mrb[0].mxu0
        %v4561 = vadd.f32 0.0, %v4560
        %4562 = vmatprep.mubr.f32.mxu0 0.0
        %4563 = vmatmul.mubr.f32.gmra.mrb[0].mxu0 %v3615
        %v4564 = vpop.f32.mrb[0].mxu0
        %v4565 = vadd.f32 0.0, %v4564
        %v4566 = vpop.f32.mrb[0].mxu0
        %v4567 = vadd.f32 0.0, %v4566
        %4568 = vmatprep.mubr.f32.mxu0 0.0
        %4569 = vmatmul.mubr.f32.gmra.mrb[0].mxu0 %v3618
        %v4570 = vpop.f32.mrb[0].mxu0
        %v4571 = vadd.f32 0.0, %v4570
        %v4572 = vpop.f32.mrb[0].mxu0
        %v4573 = vadd.f32 0.0, %v4572
        %4574 = vdwg.mxu0
        %4575 = vmatprep.subr.mxu0 %v3526
        %4576 = vmatpush1.msra.mxu0 %v3525
        %4577 = vmatprep.subr.mxu0 %v3547
        %4578 = vmatpush1.msra.mxu0 %v3546
        %4579 = vmatprep.subr.mxu0 0.0
        %4580 = vmatpush1.msra.mxu0 0.0
        %4581 = vmatprep.subr.mxu0 0.0
        %4582 = vmatpush1.msra.mxu0 0.0
        %4583 = vmatprep.subr.mxu0 0.0
        %4584 = vmatpush1.msra.mxu0 0.0
        %4585 = vmatprep.subr.mxu0 0.0
        %4586 = vmatpush1.msra.mxu0 0.0
        %4587 = vmatprep.subr.mxu0 0.0
        %4588 = vmatpush1.msra.mxu0 0.0
        %4589 = vmatprep.subr.mxu0 0.0
        %4590 = vmatpush1.msra.mxu0 0.0
        %4591 = vmatprep.subr.mxu0 0.0
        %4592 = vmatpush1.msra.mxu0 0.0
        %4593 = vmatprep.subr.mxu0 0.0
        %4594 = vmatpush1.msra.mxu0 0.0
        %4595 = vmatprep.subr.mxu0 0.0
        %4596 = vmatpush1.msra.mxu0 0.0
        %4597 = vmatprep.subr.mxu0 0.0
        %4598 = vmatpush1.msra.mxu0 0.0
        %4599 = vmatprep.subr.mxu0 0.0
        %4600 = vmatpush1.msra.mxu0 0.0
        %4601 = vmatprep.subr.mxu0 0.0
        %4602 = vmatpush1.msra.mxu0 0.0
        %4603 = vmatprep.subr.mxu0 0.0
        %4604 = vmatpush1.msra.mxu0 0.0
        %4605 = vmatprep.subr.mxu0 0.0
        %4606 = vmatpush1.msra.mxu0 0.0
        %4607 = vmatprep.subr.mxu0 0.0
        %4608 = vmatpush1.msra.mxu0 0.0
        %4609 = vmatprep.subr.mxu0 0.0
        %4610 = vmatpush1.msra.mxu0 0.0
        %4611 = vmatprep.subr.mxu0 0.0
        %4612 = vmatpush1.msra.mxu0 0.0
        %4613 = vmatprep.subr.mxu0 0.0
        %4614 = vmatpush1.msra.mxu0 0.0
        %4615 = vmatprep.subr.mxu0 0.0
        %4616 = vmatpush1.msra.mxu0 0.0
        %4617 = vmatprep.subr.mxu0 0.0
        %4618 = vmatpush1.msra.mxu0 0.0
        %4619 = vmatprep.subr.mxu0 0.0
        %4620 = vmatpush1.msra.mxu0 0.0
        %4621 = vmatprep.subr.mxu0 0.0
        %4622 = vmatpush1.msra.mxu0 0.0
        %4623 = vmatprep.subr.mxu0 0.0
        %4624 = vmatpush1.msra.mxu0 0.0
        %4625 = vmatprep.subr.mxu0 0.0
        %4626 = vmatpush1.msra.mxu0 0.0
        %4627 = vmatprep.subr.mxu0 0.0
        %4628 = vmatpush1.msra.mxu0 0.0
        %4629 = vmatprep.subr.mxu0 0.0
        %4630 = vmatpush1.msra.mxu0 0.0
        %4631 = vmatprep.subr.mxu0 0.0
        %4632 = vmatpush1.msra.mxu0 0.0
        %4633 = vmatprep.subr.mxu0 0.0
        %4634 = vmatpush1.msra.mxu0 0.0
        %4635 = vmatprep.subr.mxu0 0.0
        %4636 = vmatpush1.msra.mxu0 0.0
        %4637 = vmatprep.subr.mxu0 0.0
        %4638 = vmatpush1.msra.mxu0 0.0
        %4639 = vmatprep.mubr.f32.mxu0 0.0
        %4640 = vmatmul.mubr.f32.gmra.mrb[0].mxu0 %v3558
        %v4641 = vpop.f32.mrb[0].mxu0
        %v4642 = vadd.f32 0.0, %v4641
        %v4643 = vpop.f32.mrb[0].mxu0
        %v4644 = vadd.f32 0.0, %v4643
        %4645 = vmatprep.mubr.f32.mxu0 0.0
        %4646 = vmatmul.mubr.f32.gmra.mrb[0].mxu0 %v3561
        %v4647 = vpop.f32.mrb[0].mxu0
        %v4648 = vadd.f32 0.0, %v4647
        %v4649 = vpop.f32.mrb[0].mxu0
        %v4650 = vadd.f32 0.0, %v4649
        %4651 = vmatprep.mubr.f32.mxu0 0.0
        %4652 = vmatmul.mubr.f32.gmra.mrb[0].mxu0 %v3564
        %v4653 = vpop.f32.mrb[0].mxu0
        %v4654 = vadd.f32 0.0, %v4653
        %v4655 = vpop.f32.mrb[0].mxu0
        %v4656 = vadd.f32 0.0, %v4655
        %4657 = vmatprep.mubr.f32.mxu0 0.0
        %4658 = vmatmul.mubr.f32.gmra.mrb[0].mxu0 %v3567
        %v4659 = vpop.f32.mrb[0].mxu0
        %v4660 = vadd.f32 0.0, %v4659
        %v4661 = vpop.f32.mrb[0].mxu0
        %v4662 = vadd.f32 0.0, %v4661
        %4663 = vmatprep.mubr.f32.mxu0 0.0
        %4664 = vmatmul.mubr.f32.gmra.mrb[0].mxu0 %v3570
        %v4665 = vpop.f32.mrb[0].mxu0
        %v4666 = vadd.f32 0.0, %v4665
        %v4667 = vpop.f32.mrb[0].mxu0
        %v4668 = vadd.f32 0.0, %v4667
        %4669 = vmatprep.mubr.f32.mxu0 0.0
        %4670 = vmatmul.mubr.f32.gmra.mrb[0].mxu0 %v3573
        %v4671 = vpop.f32.mrb[0].mxu0
        %v4672 = vadd.f32 0.0, %v4671
        %v4673 = vpop.f32.mrb[0].mxu0
        %v4674 = vadd.f32 0.0, %v4673
        %4675 = vmatprep.mubr.f32.mxu0 0.0
        %4676 = vmatmul.mubr.f32.gmra.mrb[0].mxu0 %v3576
        %v4677 = vpop.f32.mrb[0].mxu0
        %v4678 = vadd.f32 0.0, %v4677
        %v4679 = vpop.f32.mrb[0].mxu0
        %v4680 = vadd.f32 0.0, %v4679
        %4681 = vmatprep.mubr.f32.mxu0 0.0
        %4682 = vmatmul.mubr.f32.gmra.mrb[0].mxu0 %v3579
        %v4683 = vpop.f32.mrb[0].mxu0
        %v4684 = vadd.f32 0.0, %v4683
        %v4685 = vpop.f32.mrb[0].mxu0
        %v4686 = vadd.f32 0.0, %v4685
        %4687 = vmatprep.mubr.f32.mxu0 0.0
        %4688 = vmatmul.mubr.f32.gmra.mrb[0].mxu0 %v3582
        %v4689 = vpop.f32.mrb[0].mxu0
        %v4690 = vadd.f32 0.0, %v4689
        %v4691 = vpop.f32.mrb[0].mxu0
        %v4692 = vadd.f32 0.0, %v4691
        %4693 = vmatprep.mubr.f32.mxu0 0.0
        %4694 = vmatmul.mubr.f32.gmra.mrb[0].mxu0 %v3585
        %v4695 = vpop.f32.mrb[0].mxu0
        %v4696 = vadd.f32 0.0, %v4695
        %v4697 = vpop.f32.mrb[0].mxu0
        %v4698 = vadd.f32 0.0, %v4697
        %4699 = vmatprep.mubr.f32.mxu0 0.0
        %4700 = vmatmul.mubr.f32.gmra.mrb[0].mxu0 %v3588
        %v4701 = vpop.f32.mrb[0].mxu0
        %v4702 = vadd.f32 0.0, %v4701
        %v4703 = vpop.f32.mrb[0].mxu0
        %v4704 = vadd.f32 0.0, %v4703
        %4705 = vmatprep.mubr.f32.mxu0 0.0
        %4706 = vmatmul.mubr.f32.gmra.mrb[0].mxu0 %v3591
        %v4707 = vpop.f32.mrb[0].mxu0
        %v4708 = vadd.f32 0.0, %v4707
        %v4709 = vpop.f32.mrb[0].mxu0
        %v4710 = vadd.f32 0.0, %v4709
        %4711 = vmatprep.mubr.f32.mxu0 0.0
        %4712 = vmatmul.mubr.f32.gmra.mrb[0].mxu0 %v3594
        %v4713 = vpop.f32.mrb[0].mxu0
        %v4714 = vadd.f32 0.0, %v4713
        %v4715 = vpop.f32.mrb[0].mxu0
        %v4716 = vadd.f32 0.0, %v4715
        %4717 = vmatprep.mubr.f32.mxu0 0.0
        %4718 = vmatmul.mubr.f32.gmra.mrb[0].mxu0 %v3597
        %v4719 = vpop.f32.mrb[0].mxu0
        %v4720 = vadd.f32 0.0, %v4719
        %v4721 = vpop.f32.mrb[0].mxu0
        %v4722 = vadd.f32 0.0, %v4721
        %4723 = vmatprep.mubr.f32.mxu0 0.0
        %4724 = vmatmul.mubr.f32.gmra.mrb[0].mxu0 %v3600
        %v4725 = vpop.f32.mrb[0].mxu0
        %v4726 = vadd.f32 0.0, %v4725
        %v4727 = vpop.f32.mrb[0].mxu0
        %v4728 = vadd.f32 0.0, %v4727
        %4729 = vmatprep.mubr.f32.mxu0 0.0
        %4730 = vmatmul.mubr.f32.gmra.mrb[0].mxu0 %v3603
        %v4731 = vpop.f32.mrb[0].mxu0
        %v4732 = vadd.f32 0.0, %v4731
        %v4733 = vpop.f32.mrb[0].mxu0
        %v4734 = vadd.f32 0.0, %v4733
        %4735 = vmatprep.mubr.f32.mxu0 0.0
        %4736 = vmatmul.mubr.f32.gmra.mrb[0].mxu0 %v3606
        %v4737 = vpop.f32.mrb[0].mxu0
        %v4738 = vadd.f32 0.0, %v4737
        %v4739 = vpop.f32.mrb[0].mxu0
        %v4740 = vadd.f32 0.0, %v4739
        %4741 = vmatprep.mubr.f32.mxu0 0.0
        %4742 = vmatmul.mubr.f32.gmra.mrb[0].mxu0 %v3609
        %v4743 = vpop.f32.mrb[0].mxu0
        %v4744 = vadd.f32 0.0, %v4743
        %v4745 = vpop.f32.mrb[0].mxu0
        %v4746 = vadd.f32 0.0, %v4745
        %4747 = vmatprep.mubr.f32.mxu0 0.0
        %4748 = vmatmul.mubr.f32.gmra.mrb[0].mxu0 %v3612
        %v4749 = vpop.f32.mrb[0].mxu0
        %v4750 = vadd.f32 0.0, %v4749
        %v4751 = vpop.f32.mrb[0].mxu0
        %v4752 = vadd.f32 0.0, %v4751
        %4753 = vmatprep.mubr.f32.mxu0 0.0
        %4754 = vmatmul.mubr.f32.gmra.mrb[0].mxu0 %v3615
        %v4755 = vpop.f32.mrb[0].mxu0
        %v4756 = vadd.f32 0.0, %v4755
        %v4757 = vpop.f32.mrb[0].mxu0
        %v4758 = vadd.f32 0.0, %v4757
        %4759 = vmatprep.mubr.f32.mxu0 0.0
        %4760 = vmatmul.mubr.f32.gmra.mrb[0].mxu0 %v3618
        %v4761 = vpop.f32.mrb[0].mxu0
        %v4762 = vadd.f32 0.0, %v4761
        %v4763 = vpop.f32.mrb[0].mxu0
        %v4764 = vadd.f32 0.0, %v4763
        %4765 = vdwg.mxu0
        %4766 = vmatprep.subr.mxu0 %v3528
        %4767 = vmatpush1.msra.mxu0 %v3527
        %4768 = vmatprep.subr.mxu0 %v3549
        %4769 = vmatpush1.msra.mxu0 %v3548
        %4770 = vmatprep.subr.mxu0 0.0
        %4771 = vmatpush1.msra.mxu0 0.0
        %4772 = vmatprep.subr.mxu0 0.0
        %4773 = vmatpush1.msra.mxu0 0.0
        %4774 = vmatprep.subr.mxu0 0.0
        %4775 = vmatpush1.msra.mxu0 0.0
        %4776 = vmatprep.subr.mxu0 0.0
        %4777 = vmatpush1.msra.mxu0 0.0
        %4778 = vmatprep.subr.mxu0 0.0
        %4779 = vmatpush1.msra.mxu0 0.0
        %4780 = vmatprep.subr.mxu0 0.0
        %4781 = vmatpush1.msra.mxu0 0.0
        %4782 = vmatprep.subr.mxu0 0.0
        %4783 = vmatpush1.msra.mxu0 0.0
        %4784 = vmatprep.subr.mxu0 0.0
        %4785 = vmatpush1.msra.mxu0 0.0
        %4786 = vmatprep.subr.mxu0 0.0
        %4787 = vmatpush1.msra.mxu0 0.0
        %4788 = vmatprep.subr.mxu0 0.0
        %4789 = vmatpush1.msra.mxu0 0.0
        %4790 = vmatprep.subr.mxu0 0.0
        %4791 = vmatpush1.msra.mxu0 0.0
        %4792 = vmatprep.subr.mxu0 0.0
        %4793 = vmatpush1.msra.mxu0 0.0
        %4794 = vmatprep.subr.mxu0 0.0
        %4795 = vmatpush1.msra.mxu0 0.0
        %4796 = vmatprep.subr.mxu0 0.0
        %4797 = vmatpush1.msra.mxu0 0.0
        %4798 = vmatprep.subr.mxu0 0.0
        %4799 = vmatpush1.msra.mxu0 0.0
        %4800 = vmatprep.subr.mxu0 0.0
        %4801 = vmatpush1.msra.mxu0 0.0
        %4802 = vmatprep.subr.mxu0 0.0
        %4803 = vmatpush1.msra.mxu0 0.0
        %4804 = vmatprep.subr.mxu0 0.0
        %4805 = vmatpush1.msra.mxu0 0.0
        %4806 = vmatprep.subr.mxu0 0.0
        %4807 = vmatpush1.msra.mxu0 0.0
        %4808 = vmatprep.subr.mxu0 0.0
        %4809 = vmatpush1.msra.mxu0 0.0
        %4810 = vmatprep.subr.mxu0 0.0
        %4811 = vmatpush1.msra.mxu0 0.0
        %4812 = vmatprep.subr.mxu0 0.0
        %4813 = vmatpush1.msra.mxu0 0.0
        %4814 = vmatprep.subr.mxu0 0.0
        %4815 = vmatpush1.msra.mxu0 0.0
        %4816 = vmatprep.subr.mxu0 0.0
        %4817 = vmatpush1.msra.mxu0 0.0
        %4818 = vmatprep.subr.mxu0 0.0
        %4819 = vmatpush1.msra.mxu0 0.0
        %4820 = vmatprep.subr.mxu0 0.0
        %4821 = vmatpush1.msra.mxu0 0.0
        %4822 = vmatprep.subr.mxu0 0.0
        %4823 = vmatpush1.msra.mxu0 0.0
        %4824 = vmatprep.subr.mxu0 0.0
        %4825 = vmatpush1.msra.mxu0 0.0
        %4826 = vmatprep.subr.mxu0 0.0
        %4827 = vmatpush1.msra.mxu0 0.0
        %4828 = vmatprep.subr.mxu0 0.0
        %4829 = vmatpush1.msra.mxu0 0.0
        %4830 = vmatprep.mubr.f32.mxu0 0.0
        %4831 = vmatmul.mubr.f32.gmra.mrb[0].mxu0 %v3558
        %v4832 = vpop.f32.mrb[0].mxu0
        %v4833 = vadd.f32 0.0, %v4832
        %v4834 = vpop.f32.mrb[0].mxu0
        %v4835 = vadd.f32 0.0, %v4834
        %4836 = vmatprep.mubr.f32.mxu0 0.0
        %4837 = vmatmul.mubr.f32.gmra.mrb[0].mxu0 %v3561
        %v4838 = vpop.f32.mrb[0].mxu0
        %v4839 = vadd.f32 0.0, %v4838
        %v4840 = vpop.f32.mrb[0].mxu0
        %v4841 = vadd.f32 0.0, %v4840
        %4842 = vmatprep.mubr.f32.mxu0 0.0
        %4843 = vmatmul.mubr.f32.gmra.mrb[0].mxu0 %v3564
        %v4844 = vpop.f32.mrb[0].mxu0
        %v4845 = vadd.f32 0.0, %v4844
        %v4846 = vpop.f32.mrb[0].mxu0
        %v4847 = vadd.f32 0.0, %v4846
        %4848 = vmatprep.mubr.f32.mxu0 0.0
        %4849 = vmatmul.mubr.f32.gmra.mrb[0].mxu0 %v3567
        %v4850 = vpop.f32.mrb[0].mxu0
        %v4851 = vadd.f32 0.0, %v4850
        %v4852 = vpop.f32.mrb[0].mxu0
        %v4853 = vadd.f32 0.0, %v4852
        %4854 = vmatprep.mubr.f32.mxu0 0.0
        %4855 = vmatmul.mubr.f32.gmra.mrb[0].mxu0 %v3570
        %v4856 = vpop.f32.mrb[0].mxu0
        %v4857 = vadd.f32 0.0, %v4856
        %v4858 = vpop.f32.mrb[0].mxu0
        %v4859 = vadd.f32 0.0, %v4858
        %4860 = vmatprep.mubr.f32.mxu0 0.0
        %4861 = vmatmul.mubr.f32.gmra.mrb[0].mxu0 %v3573
        %v4862 = vpop.f32.mrb[0].mxu0
        %v4863 = vadd.f32 0.0, %v4862
        %v4864 = vpop.f32.mrb[0].mxu0
        %v4865 = vadd.f32 0.0, %v4864
        %4866 = vmatprep.mubr.f32.mxu0 0.0
        %4867 = vmatmul.mubr.f32.gmra.mrb[0].mxu0 %v3576
        %v4868 = vpop.f32.mrb[0].mxu0
        %v4869 = vadd.f32 0.0, %v4868
        %v4870 = vpop.f32.mrb[0].mxu0
        %v4871 = vadd.f32 0.0, %v4870
        %4872 = vmatprep.mubr.f32.mxu0 0.0
        %4873 = vmatmul.mubr.f32.gmra.mrb[0].mxu0 %v3579
        %v4874 = vpop.f32.mrb[0].mxu0
        %v4875 = vadd.f32 0.0, %v4874
        %v4876 = vpop.f32.mrb[0].mxu0
        %v4877 = vadd.f32 0.0, %v4876
        %4878 = vmatprep.mubr.f32.mxu0 0.0
        %4879 = vmatmul.mubr.f32.gmra.mrb[0].mxu0 %v3582
        %v4880 = vpop.f32.mrb[0].mxu0
        %v4881 = vadd.f32 0.0, %v4880
        %v4882 = vpop.f32.mrb[0].mxu0
        %v4883 = vadd.f32 0.0, %v4882
        %4884 = vmatprep.mubr.f32.mxu0 0.0
        %4885 = vmatmul.mubr.f32.gmra.mrb[0].mxu0 %v3585
        %v4886 = vpop.f32.mrb[0].mxu0
        %v4887 = vadd.f32 0.0, %v4886
        %v4888 = vpop.f32.mrb[0].mxu0
        %v4889 = vadd.f32 0.0, %v4888
        %4890 = vmatprep.mubr.f32.mxu0 0.0
        %4891 = vmatmul.mubr.f32.gmra.mrb[0].mxu0 %v3588
        %v4892 = vpop.f32.mrb[0].mxu0
        %v4893 = vadd.f32 0.0, %v4892
        %v4894 = vpop.f32.mrb[0].mxu0
        %v4895 = vadd.f32 0.0, %v4894
        %4896 = vmatprep.mubr.f32.mxu0 0.0
        %4897 = vmatmul.mubr.f32.gmra.mrb[0].mxu0 %v3591
        %v4898 = vpop.f32.mrb[0].mxu0
        %v4899 = vadd.f32 0.0, %v4898
        %v4900 = vpop.f32.mrb[0].mxu0
        %v4901 = vadd.f32 0.0, %v4900
        %4902 = vmatprep.mubr.f32.mxu0 0.0
        %4903 = vmatmul.mubr.f32.gmra.mrb[0].mxu0 %v3594
        %v4904 = vpop.f32.mrb[0].mxu0
        %v4905 = vadd.f32 0.0, %v4904
        %v4906 = vpop.f32.mrb[0].mxu0
        %v4907 = vadd.f32 0.0, %v4906
        %4908 = vmatprep.mubr.f32.mxu0 0.0
        %4909 = vmatmul.mubr.f32.gmra.mrb[0].mxu0 %v3597
        %v4910 = vpop.f32.mrb[0].mxu0
        %v4911 = vadd.f32 0.0, %v4910
        %v4912 = vpop.f32.mrb[0].mxu0
        %v4913 = vadd.f32 0.0, %v4912
        %4914 = vmatprep.mubr.f32.mxu0 0.0
        %4915 = vmatmul.mubr.f32.gmra.mrb[0].mxu0 %v3600
        %v4916 = vpop.f32.mrb[0].mxu0
        %v4917 = vadd.f32 0.0, %v4916
        %v4918 = vpop.f32.mrb[0].mxu0
        %v4919 = vadd.f32 0.0, %v4918
        %4920 = vmatprep.mubr.f32.mxu0 0.0
        %4921 = vmatmul.mubr.f32.gmra.mrb[0].mxu0 %v3603
        %v4922 = vpop.f32.mrb[0].mxu0
        %v4923 = vadd.f32 0.0, %v4922
        %v4924 = vpop.f32.mrb[0].mxu0
        %v4925 = vadd.f32 0.0, %v4924
        %4926 = vmatprep.mubr.f32.mxu0 0.0
        %4927 = vmatmul.mubr.f32.gmra.mrb[0].mxu0 %v3606
        %v4928 = vpop.f32.mrb[0].mxu0
        %v4929 = vadd.f32 0.0, %v4928
        %v4930 = vpop.f32.mrb[0].mxu0
        %v4931 = vadd.f32 0.0, %v4930
        %4932 = vmatprep.mubr.f32.mxu0 0.0
        %4933 = vmatmul.mubr.f32.gmra.mrb[0].mxu0 %v3609
        %v4934 = vpop.f32.mrb[0].mxu0
        %v4935 = vadd.f32 0.0, %v4934
        %v4936 = vpop.f32.mrb[0].mxu0
        %v4937 = vadd.f32 0.0, %v4936
        %4938 = vmatprep.mubr.f32.mxu0 0.0
        %4939 = vmatmul.mubr.f32.gmra.mrb[0].mxu0 %v3612
        %v4940 = vpop.f32.mrb[0].mxu0
        %v4941 = vadd.f32 0.0, %v4940
        %v4942 = vpop.f32.mrb[0].mxu0
        %v4943 = vadd.f32 0.0, %v4942
        %4944 = vmatprep.mubr.f32.mxu0 0.0
        %4945 = vmatmul.mubr.f32.gmra.mrb[0].mxu0 %v3615
        %v4946 = vpop.f32.mrb[0].mxu0
        %v4947 = vadd.f32 0.0, %v4946
        %v4948 = vpop.f32.mrb[0].mxu0
        %v4949 = vadd.f32 0.0, %v4948
        %4950 = vmatprep.mubr.f32.mxu0 0.0
        %4951 = vmatmul.mubr.f32.gmra.mrb[0].mxu0 %v3618
        %v4952 = vpop.f32.mrb[0].mxu0
        %v4953 = vadd.f32 0.0, %v4952
        %v4954 = vpop.f32.mrb[0].mxu0
        %v4955 = vadd.f32 0.0, %v4954
        %4956 = vdwg.mxu0
        %4957 = vmatprep.subr.mxu0 %v3530
        %4958 = vmatpush1.msra.mxu0 %v3529
        %4959 = vmatprep.subr.mxu0 %v3551
        %4960 = vmatpush1.msra.mxu0 %v3550
        %4961 = vmatprep.subr.mxu0 0.0
        %4962 = vmatpush1.msra.mxu0 0.0
        %4963 = vmatprep.subr.mxu0 0.0
        %4964 = vmatpush1.msra.mxu0 0.0
        %4965 = vmatprep.subr.mxu0 0.0
        %4966 = vmatpush1.msra.mxu0 0.0
        %4967 = vmatprep.subr.mxu0 0.0
        %4968 = vmatpush1.msra.mxu0 0.0
        %4969 = vmatprep.subr.mxu0 0.0
        %4970 = vmatpush1.msra.mxu0 0.0
        %4971 = vmatprep.subr.mxu0 0.0
        %4972 = vmatpush1.msra.mxu0 0.0
        %4973 = vmatprep.subr.mxu0 0.0
        %4974 = vmatpush1.msra.mxu0 0.0
        %4975 = vmatprep.subr.mxu0 0.0
        %4976 = vmatpush1.msra.mxu0 0.0
        %4977 = vmatprep.subr.mxu0 0.0
        %4978 = vmatpush1.msra.mxu0 0.0
        %4979 = vmatprep.subr.mxu0 0.0
        %4980 = vmatpush1.msra.mxu0 0.0
        %4981 = vmatprep.subr.mxu0 0.0
        %4982 = vmatpush1.msra.mxu0 0.0
        %4983 = vmatprep.subr.mxu0 0.0
        %4984 = vmatpush1.msra.mxu0 0.0
        %4985 = vmatprep.subr.mxu0 0.0
        %4986 = vmatpush1.msra.mxu0 0.0
        %4987 = vmatprep.subr.mxu0 0.0
        %4988 = vmatpush1.msra.mxu0 0.0
        %4989 = vmatprep.subr.mxu0 0.0
        %4990 = vmatpush1.msra.mxu0 0.0
        %4991 = vmatprep.subr.mxu0 0.0
        %4992 = vmatpush1.msra.mxu0 0.0
        %4993 = vmatprep.subr.mxu0 0.0
        %4994 = vmatpush1.msra.mxu0 0.0
        %4995 = vmatprep.subr.mxu0 0.0
        %4996 = vmatpush1.msra.mxu0 0.0
        %4997 = vmatprep.subr.mxu0 0.0
        %4998 = vmatpush1.msra.mxu0 0.0
        %4999 = vmatprep.subr.mxu0 0.0
        %5000 = vmatpush1.msra.mxu0 0.0
        %5001 = vmatprep.subr.mxu0 0.0
        %5002 = vmatpush1.msra.mxu0 0.0
        %5003 = vmatprep.subr.mxu0 0.0
        %5004 = vmatpush1.msra.mxu0 0.0
        %5005 = vmatprep.subr.mxu0 0.0
        %5006 = vmatpush1.msra.mxu0 0.0
        %5007 = vmatprep.subr.mxu0 0.0
        %5008 = vmatpush1.msra.mxu0 0.0
        %5009 = vmatprep.subr.mxu0 0.0
        %5010 = vmatpush1.msra.mxu0 0.0
        %5011 = vmatprep.subr.mxu0 0.0
        %5012 = vmatpush1.msra.mxu0 0.0
        %5013 = vmatprep.subr.mxu0 0.0
        %5014 = vmatpush1.msra.mxu0 0.0
        %5015 = vmatprep.subr.mxu0 0.0
        %5016 = vmatpush1.msra.mxu0 0.0
        %5017 = vmatprep.subr.mxu0 0.0
        %5018 = vmatpush1.msra.mxu0 0.0
        %5019 = vmatprep.subr.mxu0 0.0
        %5020 = vmatpush1.msra.mxu0 0.0
        %5021 = vmatprep.mubr.f32.mxu0 0.0
        %5022 = vmatmul.mubr.f32.gmra.mrb[0].mxu0 %v3558
        %v5023 = vpop.f32.mrb[0].mxu0
        %v5024 = vadd.f32 0.0, %v5023
        %v5025 = vpop.f32.mrb[0].mxu0
        %v5026 = vadd.f32 0.0, %v5025
        %5027 = vmatprep.mubr.f32.mxu0 0.0
        %5028 = vmatmul.mubr.f32.gmra.mrb[0].mxu0 %v3561
        %v5029 = vpop.f32.mrb[0].mxu0
        %v5030 = vadd.f32 0.0, %v5029
        %v5031 = vpop.f32.mrb[0].mxu0
        %v5032 = vadd.f32 0.0, %v5031
        %5033 = vmatprep.mubr.f32.mxu0 0.0
        %5034 = vmatmul.mubr.f32.gmra.mrb[0].mxu0 %v3564
        %v5035 = vpop.f32.mrb[0].mxu0
        %v5036 = vadd.f32 0.0, %v5035
        %v5037 = vpop.f32.mrb[0].mxu0
        %v5038 = vadd.f32 0.0, %v5037
        %5039 = vmatprep.mubr.f32.mxu0 0.0
        %5040 = vmatmul.mubr.f32.gmra.mrb[0].mxu0 %v3567
        %v5041 = vpop.f32.mrb[0].mxu0
        %v5042 = vadd.f32 0.0, %v5041
        %v5043 = vpop.f32.mrb[0].mxu0
        %v5044 = vadd.f32 0.0, %v5043
        %5045 = vmatprep.mubr.f32.mxu0 0.0
        %5046 = vmatmul.mubr.f32.gmra.mrb[0].mxu0 %v3570
        %v5047 = vpop.f32.mrb[0].mxu0
        %v5048 = vadd.f32 0.0, %v5047
        %v5049 = vpop.f32.mrb[0].mxu0
        %v5050 = vadd.f32 0.0, %v5049
        %5051 = vmatprep.mubr.f32.mxu0 0.0
        %5052 = vmatmul.mubr.f32.gmra.mrb[0].mxu0 %v3573
        %v5053 = vpop.f32.mrb[0].mxu0
        %v5054 = vadd.f32 0.0, %v5053
        %v5055 = vpop.f32.mrb[0].mxu0
        %v5056 = vadd.f32 0.0, %v5055
        %5057 = vmatprep.mubr.f32.mxu0 0.0
        %5058 = vmatmul.mubr.f32.gmra.mrb[0].mxu0 %v3576
        %v5059 = vpop.f32.mrb[0].mxu0
        %v5060 = vadd.f32 0.0, %v5059
        %v5061 = vpop.f32.mrb[0].mxu0
        %v5062 = vadd.f32 0.0, %v5061
        %5063 = vmatprep.mubr.f32.mxu0 0.0
        %5064 = vmatmul.mubr.f32.gmra.mrb[0].mxu0 %v3579
        %v5065 = vpop.f32.mrb[0].mxu0
        %v5066 = vadd.f32 0.0, %v5065
        %v5067 = vpop.f32.mrb[0].mxu0
        %v5068 = vadd.f32 0.0, %v5067
        %5069 = vmatprep.mubr.f32.mxu0 0.0
        %5070 = vmatmul.mubr.f32.gmra.mrb[0].mxu0 %v3582
        %v5071 = vpop.f32.mrb[0].mxu0
        %v5072 = vadd.f32 0.0, %v5071
        %v5073 = vpop.f32.mrb[0].mxu0
        %v5074 = vadd.f32 0.0, %v5073
        %5075 = vmatprep.mubr.f32.mxu0 0.0
        %5076 = vmatmul.mubr.f32.gmra.mrb[0].mxu0 %v3585
        %v5077 = vpop.f32.mrb[0].mxu0
        %v5078 = vadd.f32 0.0, %v5077
        %v5079 = vpop.f32.mrb[0].mxu0
        %v5080 = vadd.f32 0.0, %v5079
        %5081 = vmatprep.mubr.f32.mxu0 0.0
        %5082 = vmatmul.mubr.f32.gmra.mrb[0].mxu0 %v3588
        %v5083 = vpop.f32.mrb[0].mxu0
        %v5084 = vadd.f32 0.0, %v5083
        %v5085 = vpop.f32.mrb[0].mxu0
        %v5086 = vadd.f32 0.0, %v5085
        %5087 = vmatprep.mubr.f32.mxu0 0.0
        %5088 = vmatmul.mubr.f32.gmra.mrb[0].mxu0 %v3591
        %v5089 = vpop.f32.mrb[0].mxu0
        %v5090 = vadd.f32 0.0, %v5089
        %v5091 = vpop.f32.mrb[0].mxu0
        %v5092 = vadd.f32 0.0, %v5091
        %5093 = vmatprep.mubr.f32.mxu0 0.0
        %5094 = vmatmul.mubr.f32.gmra.mrb[0].mxu0 %v3594
        %v5095 = vpop.f32.mrb[0].mxu0
        %v5096 = vadd.f32 0.0, %v5095
        %v5097 = vpop.f32.mrb[0].mxu0
        %v5098 = vadd.f32 0.0, %v5097
        %5099 = vmatprep.mubr.f32.mxu0 0.0
        %5100 = vmatmul.mubr.f32.gmra.mrb[0].mxu0 %v3597
        %v5101 = vpop.f32.mrb[0].mxu0
        %v5102 = vadd.f32 0.0, %v5101
        %v5103 = vpop.f32.mrb[0].mxu0
        %v5104 = vadd.f32 0.0, %v5103
        %5105 = vmatprep.mubr.f32.mxu0 0.0
        %5106 = vmatmul.mubr.f32.gmra.mrb[0].mxu0 %v3600
        %v5107 = vpop.f32.mrb[0].mxu0
        %v5108 = vadd.f32 0.0, %v5107
        %v5109 = vpop.f32.mrb[0].mxu0
        %v5110 = vadd.f32 0.0, %v5109
        %5111 = vmatprep.mubr.f32.mxu0 0.0
        %5112 = vmatmul.mubr.f32.gmra.mrb[0].mxu0 %v3603
        %v5113 = vpop.f32.mrb[0].mxu0
        %v5114 = vadd.f32 0.0, %v5113
        %v5115 = vpop.f32.mrb[0].mxu0
        %v5116 = vadd.f32 0.0, %v5115
        %5117 = vmatprep.mubr.f32.mxu0 0.0
        %5118 = vmatmul.mubr.f32.gmra.mrb[0].mxu0 %v3606
        %v5119 = vpop.f32.mrb[0].mxu0
        %v5120 = vadd.f32 0.0, %v5119
        %v5121 = vpop.f32.mrb[0].mxu0
        %v5122 = vadd.f32 0.0, %v5121
        %5123 = vmatprep.mubr.f32.mxu0 0.0
        %5124 = vmatmul.mubr.f32.gmra.mrb[0].mxu0 %v3609
        %v5125 = vpop.f32.mrb[0].mxu0
        %v5126 = vadd.f32 0.0, %v5125
        %v5127 = vpop.f32.mrb[0].mxu0
        %v5128 = vadd.f32 0.0, %v5127
        %5129 = vmatprep.mubr.f32.mxu0 0.0
        %5130 = vmatmul.mubr.f32.gmra.mrb[0].mxu0 %v3612
        %v5131 = vpop.f32.mrb[0].mxu0
        %v5132 = vadd.f32 0.0, %v5131
        %v5133 = vpop.f32.mrb[0].mxu0
        %v5134 = vadd.f32 0.0, %v5133
        %5135 = vmatprep.mubr.f32.mxu0 0.0
        %5136 = vmatmul.mubr.f32.gmra.mrb[0].mxu0 %v3615
        %v5137 = vpop.f32.mrb[0].mxu0
        %v5138 = vadd.f32 0.0, %v5137
        %v5139 = vpop.f32.mrb[0].mxu0
        %v5140 = vadd.f32 0.0, %v5139
        %5141 = vmatprep.mubr.f32.mxu0 0.0
        %5142 = vmatmul.mubr.f32.gmra.mrb[0].mxu0 %v3618
        %v5143 = vpop.f32.mrb[0].mxu0
        %v5144 = vadd.f32 0.0, %v5143
        %v5145 = vpop.f32.mrb[0].mxu0
        %v5146 = vadd.f32 0.0, %v5145
        %5147 = vdwg.mxu0
        %5148 = vmatprep.subr.mxu0 %v3532
        %5149 = vmatpush1.msra.mxu0 %v3531
        %5150 = vmatprep.subr.mxu0 %v3553
        %5151 = vmatpush1.msra.mxu0 %v3552
        %5152 = vmatprep.subr.mxu0 0.0
        %5153 = vmatpush1.msra.mxu0 0.0
        %5154 = vmatprep.subr.mxu0 0.0
        %5155 = vmatpush1.msra.mxu0 0.0
        %5156 = vmatprep.subr.mxu0 0.0
        %5157 = vmatpush1.msra.mxu0 0.0
        %5158 = vmatprep.subr.mxu0 0.0
        %5159 = vmatpush1.msra.mxu0 0.0
        %5160 = vmatprep.subr.mxu0 0.0
        %5161 = vmatpush1.msra.mxu0 0.0
        %5162 = vmatprep.subr.mxu0 0.0
        %5163 = vmatpush1.msra.mxu0 0.0
        %5164 = vmatprep.subr.mxu0 0.0
        %5165 = vmatpush1.msra.mxu0 0.0
        %5166 = vmatprep.subr.mxu0 0.0
        %5167 = vmatpush1.msra.mxu0 0.0
        %5168 = vmatprep.subr.mxu0 0.0
        %5169 = vmatpush1.msra.mxu0 0.0
        %5170 = vmatprep.subr.mxu0 0.0
        %5171 = vmatpush1.msra.mxu0 0.0
        %5172 = vmatprep.subr.mxu0 0.0
        %5173 = vmatpush1.msra.mxu0 0.0
        %5174 = vmatprep.subr.mxu0 0.0
        %5175 = vmatpush1.msra.mxu0 0.0
        %5176 = vmatprep.subr.mxu0 0.0
        %5177 = vmatpush1.msra.mxu0 0.0
        %5178 = vmatprep.subr.mxu0 0.0
        %5179 = vmatpush1.msra.mxu0 0.0
        %5180 = vmatprep.subr.mxu0 0.0
        %5181 = vmatpush1.msra.mxu0 0.0
        %5182 = vmatprep.subr.mxu0 0.0
        %5183 = vmatpush1.msra.mxu0 0.0
        %5184 = vmatprep.subr.mxu0 0.0
        %5185 = vmatpush1.msra.mxu0 0.0
        %5186 = vmatprep.subr.mxu0 0.0
        %5187 = vmatpush1.msra.mxu0 0.0
        %5188 = vmatprep.subr.mxu0 0.0
        %5189 = vmatpush1.msra.mxu0 0.0
        %5190 = vmatprep.subr.mxu0 0.0
        %5191 = vmatpush1.msra.mxu0 0.0
        %5192 = vmatprep.subr.mxu0 0.0
        %5193 = vmatpush1.msra.mxu0 0.0
        %5194 = vmatprep.subr.mxu0 0.0
        %5195 = vmatpush1.msra.mxu0 0.0
        %5196 = vmatprep.subr.mxu0 0.0
        %5197 = vmatpush1.msra.mxu0 0.0
        %5198 = vmatprep.subr.mxu0 0.0
        %5199 = vmatpush1.msra.mxu0 0.0
        %5200 = vmatprep.subr.mxu0 0.0
        %5201 = vmatpush1.msra.mxu0 0.0
        %5202 = vmatprep.subr.mxu0 0.0
        %5203 = vmatpush1.msra.mxu0 0.0
        %5204 = vmatprep.subr.mxu0 0.0
        %5205 = vmatpush1.msra.mxu0 0.0
        %5206 = vmatprep.subr.mxu0 0.0
        %5207 = vmatpush1.msra.mxu0 0.0
        %5208 = vmatprep.subr.mxu0 0.0
        %5209 = vmatpush1.msra.mxu0 0.0
        %5210 = vmatprep.subr.mxu0 0.0
        %5211 = vmatpush1.msra.mxu0 0.0
        %5212 = vmatprep.mubr.f32.mxu0 0.0
        %5213 = vmatmul.mubr.f32.gmra.mrb[0].mxu0 %v3558
        %v5214 = vpop.f32.mrb[0].mxu0
        %v5215 = vadd.f32 0.0, %v5214
        %v5216 = vpop.f32.mrb[0].mxu0
        %v5217 = vadd.f32 0.0, %v5216
        %5218 = vmatprep.mubr.f32.mxu0 0.0
        %5219 = vmatmul.mubr.f32.gmra.mrb[0].mxu0 %v3561
        %v5220 = vpop.f32.mrb[0].mxu0
        %v5221 = vadd.f32 0.0, %v5220
        %v5222 = vpop.f32.mrb[0].mxu0
        %v5223 = vadd.f32 0.0, %v5222
        %5224 = vmatprep.mubr.f32.mxu0 0.0
        %5225 = vmatmul.mubr.f32.gmra.mrb[0].mxu0 %v3564
        %v5226 = vpop.f32.mrb[0].mxu0
        %v5227 = vadd.f32 0.0, %v5226
        %v5228 = vpop.f32.mrb[0].mxu0
        %v5229 = vadd.f32 0.0, %v5228
        %5230 = vmatprep.mubr.f32.mxu0 0.0
        %5231 = vmatmul.mubr.f32.gmra.mrb[0].mxu0 %v3567
        %v5232 = vpop.f32.mrb[0].mxu0
        %v5233 = vadd.f32 0.0, %v5232
        %v5234 = vpop.f32.mrb[0].mxu0
        %v5235 = vadd.f32 0.0, %v5234
        %5236 = vmatprep.mubr.f32.mxu0 0.0
        %5237 = vmatmul.mubr.f32.gmra.mrb[0].mxu0 %v3570
        %v5238 = vpop.f32.mrb[0].mxu0
        %v5239 = vadd.f32 0.0, %v5238
        %v5240 = vpop.f32.mrb[0].mxu0
        %v5241 = vadd.f32 0.0, %v5240
        %5242 = vmatprep.mubr.f32.mxu0 0.0
        %5243 = vmatmul.mubr.f32.gmra.mrb[0].mxu0 %v3573
        %v5244 = vpop.f32.mrb[0].mxu0
        %v5245 = vadd.f32 0.0, %v5244
        %v5246 = vpop.f32.mrb[0].mxu0
        %v5247 = vadd.f32 0.0, %v5246
        %5248 = vmatprep.mubr.f32.mxu0 0.0
        %5249 = vmatmul.mubr.f32.gmra.mrb[0].mxu0 %v3576
        %v5250 = vpop.f32.mrb[0].mxu0
        %v5251 = vadd.f32 0.0, %v5250
        %v5252 = vpop.f32.mrb[0].mxu0
        %v5253 = vadd.f32 0.0, %v5252
        %5254 = vmatprep.mubr.f32.mxu0 0.0
        %5255 = vmatmul.mubr.f32.gmra.mrb[0].mxu0 %v3579
        %v5256 = vpop.f32.mrb[0].mxu0
        %v5257 = vadd.f32 0.0, %v5256
        %v5258 = vpop.f32.mrb[0].mxu0
        %v5259 = vadd.f32 0.0, %v5258
        %5260 = vmatprep.mubr.f32.mxu0 0.0
        %5261 = vmatmul.mubr.f32.gmra.mrb[0].mxu0 %v3582
        %v5262 = vpop.f32.mrb[0].mxu0
        %v5263 = vadd.f32 0.0, %v5262
        %v5264 = vpop.f32.mrb[0].mxu0
        %v5265 = vadd.f32 0.0, %v5264
        %5266 = vmatprep.mubr.f32.mxu0 0.0
        %5267 = vmatmul.mubr.f32.gmra.mrb[0].mxu0 %v3585
        %v5268 = vpop.f32.mrb[0].mxu0
        %v5269 = vadd.f32 0.0, %v5268
        %v5270 = vpop.f32.mrb[0].mxu0
        %v5271 = vadd.f32 0.0, %v5270
        %5272 = vmatprep.mubr.f32.mxu0 0.0
        %5273 = vmatmul.mubr.f32.gmra.mrb[0].mxu0 %v3588
        %v5274 = vpop.f32.mrb[0].mxu0
        %v5275 = vadd.f32 0.0, %v5274
        %v5276 = vpop.f32.mrb[0].mxu0
        %v5277 = vadd.f32 0.0, %v5276
        %5278 = vmatprep.mubr.f32.mxu0 0.0
        %5279 = vmatmul.mubr.f32.gmra.mrb[0].mxu0 %v3591
        %v5280 = vpop.f32.mrb[0].mxu0
        %v5281 = vadd.f32 0.0, %v5280
        %v5282 = vpop.f32.mrb[0].mxu0
        %v5283 = vadd.f32 0.0, %v5282
        %5284 = vmatprep.mubr.f32.mxu0 0.0
        %5285 = vmatmul.mubr.f32.gmra.mrb[0].mxu0 %v3594
        %v5286 = vpop.f32.mrb[0].mxu0
        %v5287 = vadd.f32 0.0, %v5286
        %v5288 = vpop.f32.mrb[0].mxu0
        %v5289 = vadd.f32 0.0, %v5288
        %5290 = vmatprep.mubr.f32.mxu0 0.0
        %5291 = vmatmul.mubr.f32.gmra.mrb[0].mxu0 %v3597
        %v5292 = vpop.f32.mrb[0].mxu0
        %v5293 = vadd.f32 0.0, %v5292
        %v5294 = vpop.f32.mrb[0].mxu0
        %v5295 = vadd.f32 0.0, %v5294
        %5296 = vmatprep.mubr.f32.mxu0 0.0
        %5297 = vmatmul.mubr.f32.gmra.mrb[0].mxu0 %v3600
        %v5298 = vpop.f32.mrb[0].mxu0
        %v5299 = vadd.f32 0.0, %v5298
        %v5300 = vpop.f32.mrb[0].mxu0
        %v5301 = vadd.f32 0.0, %v5300
        %5302 = vmatprep.mubr.f32.mxu0 0.0
        %5303 = vmatmul.mubr.f32.gmra.mrb[0].mxu0 %v3603
        %v5304 = vpop.f32.mrb[0].mxu0
        %v5305 = vadd.f32 0.0, %v5304
        %v5306 = vpop.f32.mrb[0].mxu0
        %v5307 = vadd.f32 0.0, %v5306
        %5308 = vmatprep.mubr.f32.mxu0 0.0
        %5309 = vmatmul.mubr.f32.gmra.mrb[0].mxu0 %v3606
        %v5310 = vpop.f32.mrb[0].mxu0
        %v5311 = vadd.f32 0.0, %v5310
        %v5312 = vpop.f32.mrb[0].mxu0
        %v5313 = vadd.f32 0.0, %v5312
        %5314 = vmatprep.mubr.f32.mxu0 0.0
        %5315 = vmatmul.mubr.f32.gmra.mrb[0].mxu0 %v3609
        %v5316 = vpop.f32.mrb[0].mxu0
        %v5317 = vadd.f32 0.0, %v5316
        %v5318 = vpop.f32.mrb[0].mxu0
        %v5319 = vadd.f32 0.0, %v5318
        %5320 = vmatprep.mubr.f32.mxu0 0.0
        %5321 = vmatmul.mubr.f32.gmra.mrb[0].mxu0 %v3612
        %v5322 = vpop.f32.mrb[0].mxu0
        %v5323 = vadd.f32 0.0, %v5322
        %v5324 = vpop.f32.mrb[0].mxu0
        %v5325 = vadd.f32 0.0, %v5324
        %5326 = vmatprep.mubr.f32.mxu0 0.0
        %5327 = vmatmul.mubr.f32.gmra.mrb[0].mxu0 %v3615
        %v5328 = vpop.f32.mrb[0].mxu0
        %v5329 = vadd.f32 0.0, %v5328
        %v5330 = vpop.f32.mrb[0].mxu0
        %v5331 = vadd.f32 0.0, %v5330
        %5332 = vmatprep.mubr.f32.mxu0 0.0
        %5333 = vmatmul.mubr.f32.gmra.mrb[0].mxu0 %v3618
        %v5334 = vpop.f32.mrb[0].mxu0
        %v5335 = vadd.f32 0.0, %v5334
        %v5336 = vpop.f32.mrb[0].mxu0
        %v5337 = vadd.f32 0.0, %v5336
        %5338 = vdwg.mxu0
        %5339 = vmatprep.subr.mxu0 %v3534
        %5340 = vmatpush1.msra.mxu0 %v3533
        %5341 = vmatprep.subr.mxu0 %v3555
        %5342 = vmatpush1.msra.mxu0 %v3554
        %5343 = vmatprep.subr.mxu0 0.0
        %5344 = vmatpush1.msra.mxu0 0.0
        %5345 = vmatprep.subr.mxu0 0.0
        %5346 = vmatpush1.msra.mxu0 0.0
        %5347 = vmatprep.subr.mxu0 0.0
        %5348 = vmatpush1.msra.mxu0 0.0
        %5349 = vmatprep.subr.mxu0 0.0
        %5350 = vmatpush1.msra.mxu0 0.0
        %5351 = vmatprep.subr.mxu0 0.0
        %5352 = vmatpush1.msra.mxu0 0.0
        %5353 = vmatprep.subr.mxu0 0.0
        %5354 = vmatpush1.msra.mxu0 0.0
        %5355 = vmatprep.subr.mxu0 0.0
        %5356 = vmatpush1.msra.mxu0 0.0
        %5357 = vmatprep.subr.mxu0 0.0
        %5358 = vmatpush1.msra.mxu0 0.0
        %5359 = vmatprep.subr.mxu0 0.0
        %5360 = vmatpush1.msra.mxu0 0.0
        %5361 = vmatprep.subr.mxu0 0.0
        %5362 = vmatpush1.msra.mxu0 0.0
        %5363 = vmatprep.subr.mxu0 0.0
        %5364 = vmatpush1.msra.mxu0 0.0
        %5365 = vmatprep.subr.mxu0 0.0
        %5366 = vmatpush1.msra.mxu0 0.0
        %5367 = vmatprep.subr.mxu0 0.0
        %5368 = vmatpush1.msra.mxu0 0.0
        %5369 = vmatprep.subr.mxu0 0.0
        %5370 = vmatpush1.msra.mxu0 0.0
        %5371 = vmatprep.subr.mxu0 0.0
        %5372 = vmatpush1.msra.mxu0 0.0
        %5373 = vmatprep.subr.mxu0 0.0
        %5374 = vmatpush1.msra.mxu0 0.0
        %5375 = vmatprep.subr.mxu0 0.0
        %5376 = vmatpush1.msra.mxu0 0.0
        %5377 = vmatprep.subr.mxu0 0.0
        %5378 = vmatpush1.msra.mxu0 0.0
        %5379 = vmatprep.subr.mxu0 0.0
        %5380 = vmatpush1.msra.mxu0 0.0
        %5381 = vmatprep.subr.mxu0 0.0
        %5382 = vmatpush1.msra.mxu0 0.0
        %5383 = vmatprep.subr.mxu0 0.0
        %5384 = vmatpush1.msra.mxu0 0.0
        %5385 = vmatprep.subr.mxu0 0.0
        %5386 = vmatpush1.msra.mxu0 0.0
        %5387 = vmatprep.subr.mxu0 0.0
        %5388 = vmatpush1.msra.mxu0 0.0
        %5389 = vmatprep.subr.mxu0 0.0
        %5390 = vmatpush1.msra.mxu0 0.0
        %5391 = vmatprep.subr.mxu0 0.0
        %5392 = vmatpush1.msra.mxu0 0.0
        %5393 = vmatprep.subr.mxu0 0.0
        %5394 = vmatpush1.msra.mxu0 0.0
        %5395 = vmatprep.subr.mxu0 0.0
        %5396 = vmatpush1.msra.mxu0 0.0
        %5397 = vmatprep.subr.mxu0 0.0
        %5398 = vmatpush1.msra.mxu0 0.0
        %5399 = vmatprep.subr.mxu0 0.0
        %5400 = vmatpush1.msra.mxu0 0.0
        %5401 = vmatprep.subr.mxu0 0.0
        %5402 = vmatpush1.msra.mxu0 0.0
        %5403 = vmatprep.mubr.f32.mxu0 0.0
        %5404 = vmatmul.mubr.f32.gmra.mrb[0].mxu0 %v3558
        %v5405 = vpop.f32.mrb[0].mxu0
        %v5406 = vadd.f32 0.0, %v5405
        %v5407 = vpop.f32.mrb[0].mxu0
        %v5408 = vadd.f32 0.0, %v5407
        %5409 = vmatprep.mubr.f32.mxu0 0.0
        %5410 = vmatmul.mubr.f32.gmra.mrb[0].mxu0 %v3561
        %v5411 = vpop.f32.mrb[0].mxu0
        %v5412 = vadd.f32 0.0, %v5411
        %v5413 = vpop.f32.mrb[0].mxu0
        %v5414 = vadd.f32 0.0, %v5413
        %5415 = vmatprep.mubr.f32.mxu0 0.0
        %5416 = vmatmul.mubr.f32.gmra.mrb[0].mxu0 %v3564
        %v5417 = vpop.f32.mrb[0].mxu0
        %v5418 = vadd.f32 0.0, %v5417
        %v5419 = vpop.f32.mrb[0].mxu0
        %v5420 = vadd.f32 0.0, %v5419
        %5421 = vmatprep.mubr.f32.mxu0 0.0
        %5422 = vmatmul.mubr.f32.gmra.mrb[0].mxu0 %v3567
        %v5423 = vpop.f32.mrb[0].mxu0
        %v5424 = vadd.f32 0.0, %v5423
        %v5425 = vpop.f32.mrb[0].mxu0
        %v5426 = vadd.f32 0.0, %v5425
        %5427 = vmatprep.mubr.f32.mxu0 0.0
        %5428 = vmatmul.mubr.f32.gmra.mrb[0].mxu0 %v3570
        %v5429 = vpop.f32.mrb[0].mxu0
        %v5430 = vadd.f32 0.0, %v5429
        %v5431 = vpop.f32.mrb[0].mxu0
        %v5432 = vadd.f32 0.0, %v5431
        %5433 = vmatprep.mubr.f32.mxu0 0.0
        %5434 = vmatmul.mubr.f32.gmra.mrb[0].mxu0 %v3573
        %v5435 = vpop.f32.mrb[0].mxu0
        %v5436 = vadd.f32 0.0, %v5435
        %v5437 = vpop.f32.mrb[0].mxu0
        %v5438 = vadd.f32 0.0, %v5437
        %5439 = vmatprep.mubr.f32.mxu0 0.0
        %5440 = vmatmul.mubr.f32.gmra.mrb[0].mxu0 %v3576
        %v5441 = vpop.f32.mrb[0].mxu0
        %v5442 = vadd.f32 0.0, %v5441
        %v5443 = vpop.f32.mrb[0].mxu0
        %v5444 = vadd.f32 0.0, %v5443
        %5445 = vmatprep.mubr.f32.mxu0 0.0
        %5446 = vmatmul.mubr.f32.gmra.mrb[0].mxu0 %v3579
        %v5447 = vpop.f32.mrb[0].mxu0
        %v5448 = vadd.f32 0.0, %v5447
        %v5449 = vpop.f32.mrb[0].mxu0
        %v5450 = vadd.f32 0.0, %v5449
        %5451 = vmatprep.mubr.f32.mxu0 0.0
        %5452 = vmatmul.mubr.f32.gmra.mrb[0].mxu0 %v3582
        %v5453 = vpop.f32.mrb[0].mxu0
        %v5454 = vadd.f32 0.0, %v5453
        %v5455 = vpop.f32.mrb[0].mxu0
        %v5456 = vadd.f32 0.0, %v5455
        %5457 = vmatprep.mubr.f32.mxu0 0.0
        %5458 = vmatmul.mubr.f32.gmra.mrb[0].mxu0 %v3585
        %v5459 = vpop.f32.mrb[0].mxu0
        %v5460 = vadd.f32 0.0, %v5459
        %v5461 = vpop.f32.mrb[0].mxu0
        %v5462 = vadd.f32 0.0, %v5461
        %5463 = vmatprep.mubr.f32.mxu0 0.0
        %5464 = vmatmul.mubr.f32.gmra.mrb[0].mxu0 %v3588
        %v5465 = vpop.f32.mrb[0].mxu0
        %v5466 = vadd.f32 0.0, %v5465
        %v5467 = vpop.f32.mrb[0].mxu0
        %v5468 = vadd.f32 0.0, %v5467
        %5469 = vmatprep.mubr.f32.mxu0 0.0
        %5470 = vmatmul.mubr.f32.gmra.mrb[0].mxu0 %v3591
        %v5471 = vpop.f32.mrb[0].mxu0
        %v5472 = vadd.f32 0.0, %v5471
        %v5473 = vpop.f32.mrb[0].mxu0
        %v5474 = vadd.f32 0.0, %v5473
        %5475 = vmatprep.mubr.f32.mxu0 0.0
        %5476 = vmatmul.mubr.f32.gmra.mrb[0].mxu0 %v3594
        %v5477 = vpop.f32.mrb[0].mxu0
        %v5478 = vadd.f32 0.0, %v5477
        %v5479 = vpop.f32.mrb[0].mxu0
        %v5480 = vadd.f32 0.0, %v5479
        %5481 = vmatprep.mubr.f32.mxu0 0.0
        %5482 = vmatmul.mubr.f32.gmra.mrb[0].mxu0 %v3597
        %v5483 = vpop.f32.mrb[0].mxu0
        %v5484 = vadd.f32 0.0, %v5483
        %v5485 = vpop.f32.mrb[0].mxu0
        %v5486 = vadd.f32 0.0, %v5485
        %5487 = vmatprep.mubr.f32.mxu0 0.0
        %5488 = vmatmul.mubr.f32.gmra.mrb[0].mxu0 %v3600
        %v5489 = vpop.f32.mrb[0].mxu0
        %v5490 = vadd.f32 0.0, %v5489
        %v5491 = vpop.f32.mrb[0].mxu0
        %v5492 = vadd.f32 0.0, %v5491
        %5493 = vmatprep.mubr.f32.mxu0 0.0
        %5494 = vmatmul.mubr.f32.gmra.mrb[0].mxu0 %v3603
        %v5495 = vpop.f32.mrb[0].mxu0
        %v5496 = vadd.f32 0.0, %v5495
        %v5497 = vpop.f32.mrb[0].mxu0
        %v5498 = vadd.f32 0.0, %v5497
        %5499 = vmatprep.mubr.f32.mxu0 0.0
        %5500 = vmatmul.mubr.f32.gmra.mrb[0].mxu0 %v3606
        %v5501 = vpop.f32.mrb[0].mxu0
        %v5502 = vadd.f32 0.0, %v5501
        %v5503 = vpop.f32.mrb[0].mxu0
        %v5504 = vadd.f32 0.0, %v5503
        %5505 = vmatprep.mubr.f32.mxu0 0.0
        %5506 = vmatmul.mubr.f32.gmra.mrb[0].mxu0 %v3609
        %v5507 = vpop.f32.mrb[0].mxu0
        %v5508 = vadd.f32 0.0, %v5507
        %v5509 = vpop.f32.mrb[0].mxu0
        %v5510 = vadd.f32 0.0, %v5509
        %5511 = vmatprep.mubr.f32.mxu0 0.0
        %5512 = vmatmul.mubr.f32.gmra.mrb[0].mxu0 %v3612
        %v5513 = vpop.f32.mrb[0].mxu0
        %v5514 = vadd.f32 0.0, %v5513
        %v5515 = vpop.f32.mrb[0].mxu0
        %v5516 = vadd.f32 0.0, %v5515
        %5517 = vmatprep.mubr.f32.mxu0 0.0
        %5518 = vmatmul.mubr.f32.gmra.mrb[0].mxu0 %v3615
        %v5519 = vpop.f32.mrb[0].mxu0
        %v5520 = vadd.f32 0.0, %v5519
        %v5521 = vpop.f32.mrb[0].mxu0
        %v5522 = vadd.f32 0.0, %v5521
        %5523 = vmatprep.mubr.f32.mxu0 0.0
        %5524 = vmatmul.mubr.f32.gmra.mrb[0].mxu0 %v3618
        %v5525 = vpop.f32.mrb[0].mxu0
        %v5526 = vadd.f32 0.0, %v5525
        %v5527 = vpop.f32.mrb[0].mxu0
        %v5528 = vadd.f32 0.0, %v5527
        %5529 = vdwg.mxu0
        %5530 = vmatprep.subr.mxu0 0.0
        %5531 = vmatpush1.msra.mxu0 %v3535
        %5532 = vmatprep.subr.mxu0 0.0
        %5533 = vmatpush1.msra.mxu0 %v3556
        %5534 = vmatprep.subr.mxu0 0.0
        %5535 = vmatpush1.msra.mxu0 0.0
        %5536 = vmatprep.subr.mxu0 0.0
        %5537 = vmatpush1.msra.mxu0 0.0
        %5538 = vmatprep.subr.mxu0 0.0
        %5539 = vmatpush1.msra.mxu0 0.0
        %5540 = vmatprep.subr.mxu0 0.0
        %5541 = vmatpush1.msra.mxu0 0.0
        %5542 = vmatprep.subr.mxu0 0.0
        %5543 = vmatpush1.msra.mxu0 0.0
        %5544 = vmatprep.subr.mxu0 0.0
        %5545 = vmatpush1.msra.mxu0 0.0
        %5546 = vmatprep.subr.mxu0 0.0
        %5547 = vmatpush1.msra.mxu0 0.0
        %5548 = vmatprep.subr.mxu0 0.0
        %5549 = vmatpush1.msra.mxu0 0.0
        %5550 = vmatprep.subr.mxu0 0.0
        %5551 = vmatpush1.msra.mxu0 0.0
        %5552 = vmatprep.subr.mxu0 0.0
        %5553 = vmatpush1.msra.mxu0 0.0
        %5554 = vmatprep.subr.mxu0 0.0
        %5555 = vmatpush1.msra.mxu0 0.0
        %5556 = vmatprep.subr.mxu0 0.0
        %5557 = vmatpush1.msra.mxu0 0.0
        %5558 = vmatprep.subr.mxu0 0.0
        %5559 = vmatpush1.msra.mxu0 0.0
        %5560 = vmatprep.subr.mxu0 0.0
        %5561 = vmatpush1.msra.mxu0 0.0
        %5562 = vmatprep.subr.mxu0 0.0
        %5563 = vmatpush1.msra.mxu0 0.0
        %5564 = vmatprep.subr.mxu0 0.0
        %5565 = vmatpush1.msra.mxu0 0.0
        %5566 = vmatprep.subr.mxu0 0.0
        %5567 = vmatpush1.msra.mxu0 0.0
        %5568 = vmatprep.subr.mxu0 0.0
        %5569 = vmatpush1.msra.mxu0 0.0
        %5570 = vmatprep.subr.mxu0 0.0
        %5571 = vmatpush1.msra.mxu0 0.0
        %5572 = vmatprep.subr.mxu0 0.0
        %5573 = vmatpush1.msra.mxu0 0.0
        %5574 = vmatprep.subr.mxu0 0.0
        %5575 = vmatpush1.msra.mxu0 0.0
        %5576 = vmatprep.subr.mxu0 0.0
        %5577 = vmatpush1.msra.mxu0 0.0
        %5578 = vmatprep.subr.mxu0 0.0
        %5579 = vmatpush1.msra.mxu0 0.0
        %5580 = vmatprep.subr.mxu0 0.0
        %5581 = vmatpush1.msra.mxu0 0.0
        %5582 = vmatprep.subr.mxu0 0.0
        %5583 = vmatpush1.msra.mxu0 0.0
        %5584 = vmatprep.subr.mxu0 0.0
        %5585 = vmatpush1.msra.mxu0 0.0
        %5586 = vmatprep.subr.mxu0 0.0
        %5587 = vmatpush1.msra.mxu0 0.0
        %5588 = vmatprep.subr.mxu0 0.0
        %5589 = vmatpush1.msra.mxu0 0.0
        %5590 = vmatprep.subr.mxu0 0.0
        %5591 = vmatpush1.msra.mxu0 0.0
        %5592 = vmatprep.subr.mxu0 0.0
        %5593 = vmatpush1.msra.mxu0 0.0
        %5594 = vmatprep.mubr.f32.mxu0 0.0
        %5595 = vmatmul.mubr.f32.gmra.mrb[0].mxu0 %v3558
        %v5596 = vpop.f32.mrb[0].mxu0
        %v5597 = vadd.f32 0.0, %v5596
        %v5598 = vpop.f32.mrb[0].mxu0
        %5599 = vmatprep.mubr.f32.mxu0 0.0
        %5600 = vmatmul.mubr.f32.gmra.mrb[0].mxu0 %v3561
        %v5601 = vpop.f32.mrb[0].mxu0
        %v5602 = vadd.f32 0.0, %v5601
        %v5603 = vpop.f32.mrb[0].mxu0
        %5604 = vmatprep.mubr.f32.mxu0 0.0
        %5605 = vmatmul.mubr.f32.gmra.mrb[0].mxu0 %v3564
        %v5606 = vpop.f32.mrb[0].mxu0
        %v5607 = vadd.f32 0.0, %v5606
        %v5608 = vpop.f32.mrb[0].mxu0
        %5609 = vmatprep.mubr.f32.mxu0 0.0
        %5610 = vmatmul.mubr.f32.gmra.mrb[0].mxu0 %v3567
        %v5611 = vpop.f32.mrb[0].mxu0
        %v5612 = vadd.f32 0.0, %v5611
        %v5613 = vpop.f32.mrb[0].mxu0
        %5614 = vmatprep.mubr.f32.mxu0 0.0
        %5615 = vmatmul.mubr.f32.gmra.mrb[0].mxu0 %v3570
        %v5616 = vpop.f32.mrb[0].mxu0
        %v5617 = vadd.f32 0.0, %v5616
        %v5618 = vpop.f32.mrb[0].mxu0
        %5619 = vmatprep.mubr.f32.mxu0 0.0
        %5620 = vmatmul.mubr.f32.gmra.mrb[0].mxu0 %v3573
        %v5621 = vpop.f32.mrb[0].mxu0
        %v5622 = vadd.f32 0.0, %v5621
        %v5623 = vpop.f32.mrb[0].mxu0
        %5624 = vmatprep.mubr.f32.mxu0 0.0
        %5625 = vmatmul.mubr.f32.gmra.mrb[0].mxu0 %v3576
        %v5626 = vpop.f32.mrb[0].mxu0
        %v5627 = vadd.f32 0.0, %v5626
        %v5628 = vpop.f32.mrb[0].mxu0
        %5629 = vmatprep.mubr.f32.mxu0 0.0
        %5630 = vmatmul.mubr.f32.gmra.mrb[0].mxu0 %v3579
        %v5631 = vpop.f32.mrb[0].mxu0
        %v5632 = vadd.f32 0.0, %v5631
        %v5633 = vpop.f32.mrb[0].mxu0
        %5634 = vmatprep.mubr.f32.mxu0 0.0
        %5635 = vmatmul.mubr.f32.gmra.mrb[0].mxu0 %v3582
        %v5636 = vpop.f32.mrb[0].mxu0
        %v5637 = vadd.f32 0.0, %v5636
        %v5638 = vpop.f32.mrb[0].mxu0
        %5639 = vmatprep.mubr.f32.mxu0 0.0
        %5640 = vmatmul.mubr.f32.gmra.mrb[0].mxu0 %v3585
        %v5641 = vpop.f32.mrb[0].mxu0
        %v5642 = vadd.f32 0.0, %v5641
        %v5643 = vpop.f32.mrb[0].mxu0
        %5644 = vmatprep.mubr.f32.mxu0 0.0
        %5645 = vmatmul.mubr.f32.gmra.mrb[0].mxu0 %v3588
        %v5646 = vpop.f32.mrb[0].mxu0
        %v5647 = vadd.f32 0.0, %v5646
        %v5648 = vpop.f32.mrb[0].mxu0
        %5649 = vmatprep.mubr.f32.mxu0 0.0
        %5650 = vmatmul.mubr.f32.gmra.mrb[0].mxu0 %v3591
        %v5651 = vpop.f32.mrb[0].mxu0
        %v5652 = vadd.f32 0.0, %v5651
        %v5653 = vpop.f32.mrb[0].mxu0
        %5654 = vmatprep.mubr.f32.mxu0 0.0
        %5655 = vmatmul.mubr.f32.gmra.mrb[0].mxu0 %v3594
        %v5656 = vpop.f32.mrb[0].mxu0
        %v5657 = vadd.f32 0.0, %v5656
        %v5658 = vpop.f32.mrb[0].mxu0
        %5659 = vmatprep.mubr.f32.mxu0 0.0
        %5660 = vmatmul.mubr.f32.gmra.mrb[0].mxu0 %v3597
        %v5661 = vpop.f32.mrb[0].mxu0
        %v5662 = vadd.f32 0.0, %v5661
        %v5663 = vpop.f32.mrb[0].mxu0
        %5664 = vmatprep.mubr.f32.mxu0 0.0
        %5665 = vmatmul.mubr.f32.gmra.mrb[0].mxu0 %v3600
        %v5666 = vpop.f32.mrb[0].mxu0
        %v5667 = vadd.f32 0.0, %v5666
        %v5668 = vpop.f32.mrb[0].mxu0
        %5669 = vmatprep.mubr.f32.mxu0 0.0
        %5670 = vmatmul.mubr.f32.gmra.mrb[0].mxu0 %v3603
        %v5671 = vpop.f32.mrb[0].mxu0
        %v5672 = vadd.f32 0.0, %v5671
        %v5673 = vpop.f32.mrb[0].mxu0
        %5674 = vmatprep.mubr.f32.mxu0 0.0
        %5675 = vmatmul.mubr.f32.gmra.mrb[0].mxu0 %v3606
        %v5676 = vpop.f32.mrb[0].mxu0
        %v5677 = vadd.f32 0.0, %v5676
        %v5678 = vpop.f32.mrb[0].mxu0
        %5679 = vmatprep.mubr.f32.mxu0 0.0
        %5680 = vmatmul.mubr.f32.gmra.mrb[0].mxu0 %v3609
        %v5681 = vpop.f32.mrb[0].mxu0
        %v5682 = vadd.f32 0.0, %v5681
        %v5683 = vpop.f32.mrb[0].mxu0
        %5684 = vmatprep.mubr.f32.mxu0 0.0
        %5685 = vmatmul.mubr.f32.gmra.mrb[0].mxu0 %v3612
        %v5686 = vpop.f32.mrb[0].mxu0
        %v5687 = vadd.f32 0.0, %v5686
        %v5688 = vpop.f32.mrb[0].mxu0
        %5689 = vmatprep.mubr.f32.mxu0 0.0
        %5690 = vmatmul.mubr.f32.gmra.mrb[0].mxu0 %v3615
        %v5691 = vpop.f32.mrb[0].mxu0
        %v5692 = vadd.f32 0.0, %v5691
        %v5693 = vpop.f32.mrb[0].mxu0
        %5694 = vmatprep.mubr.f32.mxu0 0.0
        %5695 = vmatmul.mubr.f32.gmra.mrb[0].mxu0 %v3618
        %v5696 = vpop.f32.mrb[0].mxu0
        %v5697 = vadd.f32 0.0, %v5696
        %v5698 = vpop.f32.mrb[0].mxu0
        %5699 = vdwg.mxu0
        %v5700 = vlaneseq
        %v5701 = vand.u32 %v5700, 127
        %v5702 = vadd.s32 %v5701, 128
        %v5703 = vadd.s32 %v5701, 256
        %v5704 = vadd.s32 %v5701, 384
        %v5705 = vadd.s32 %v5701, 512
        %v5706 = vadd.s32 %v5701, 640
        %v5707 = vadd.s32 %v5701, 768
        %v5708 = vadd.s32 %v5701, 896
        %v5709 = vadd.s32 %v5701, 1024
        %v5710 = vadd.s32 %v5701, 1152
        %v5711 = vadd.s32 %v5701, 1280
        %v5712 = vadd.s32 %v5701, 1408
        %v5713 = vadd.s32 %v5701, 1536
        %v5714 = vadd.s32 %v5701, 1664
        %v5715 = vadd.s32 %v5701, 1792
        %v5716 = vadd.s32 %v5701, 1920
        %v5717 = vadd.s32 %v5701, 2048
        %v5718 = vadd.s32 %v5701, 2176
        %v5719 = vadd.s32 %v5701, 2304
        %v5720 = vadd.s32 %v5701, 2432
        %v5721 = vadd.s32 %v5701, 2560
        %v5722 = vlaneseq
        %v5723 = vshrl.u32 %v5722, 7
        %v5724 = vadd.s32 %v5723, 8
        %v5725 = vadd.s32 %v5723, 16
        %v5726 = vadd.s32 %v5723, 24
        %v5727 = vadd.s32 %v5723, 32
        %v5728 = vadd.s32 %v5723, 40
        %v5729 = vadd.s32 %v5723, 48
        %v5730 = vadd.s32 %v5723, 56
        %v5731 = vadd.s32 %v5723, 64
        %v5732 = vadd.s32 %v5723, 72
        %v5733 = vadd.s32 %v5723, 80
        %v5734 = vadd.s32 %v5723, 88
        %v5735 = vadd.s32 %v5723, 96
        %v5736 = vadd.s32 %v5723, 104
        %v5737 = vadd.s32 %v5723, 112
        %v5738 = vadd.s32 %v5723, 120
        %v5739 = vadd.s32 %v5723, 128
        %v5740 = vadd.s32 %v5723, 136
        %v5741 = vadd.s32 %v5723, 144
        %v5742 = vadd.s32 %v5723, 152
        %v5743 = vadd.s32 %v5723, 160
        %v5744 = vmul.u32 %v5723, 16
        %v5745 = vmul.u32 %v5724, 16
        %v5746 = vmul.u32 %v5725, 16
        %v5747 = vmul.u32 %v5726, 16
        %v5748 = vmul.u32 %v5727, 16
        %v5749 = vmul.u32 %v5728, 16
        %v5750 = vmul.u32 %v5729, 16
        %v5751 = vmul.u32 %v5730, 16
        %v5752 = vmul.u32 %v5731, 16
        %v5753 = vmul.u32 %v5732, 16
        %v5754 = vmul.u32 %v5733, 16
        %v5755 = vmul.u32 %v5734, 16
        %v5756 = vmul.u32 %v5735, 16
        %v5757 = vmul.u32 %v5736, 16
        %v5758 = vmul.u32 %v5737, 16
        %v5759 = vmul.u32 %v5738, 16
        %v5760 = vmul.u32 %v5739, 16
        %v5761 = vmul.u32 %v5740, 16
        %v5762 = vmul.u32 %v5741, 16
        %v5763 = vmul.u32 %v5742, 16
        %v5764 = vmul.u32 %v5743, 16
        %vm5765 = vcmp.ge.s32.totalorder %v5701, %v5744
        %vm5766 = vcmp.ge.s32.totalorder %v5702, %v5744
        %vm5767 = vcmp.ge.s32.totalorder %v5703, %v5744
        %vm5768 = vcmp.ge.s32.totalorder %v5704, %v5744
        %vm5769 = vcmp.ge.s32.totalorder %v5705, %v5744
        %vm5770 = vcmp.ge.s32.totalorder %v5706, %v5744
        %vm5771 = vcmp.ge.s32.totalorder %v5707, %v5744
        %vm5772 = vcmp.ge.s32.totalorder %v5708, %v5744
        %vm5773 = vcmp.ge.s32.totalorder %v5709, %v5744
        %vm5774 = vcmp.ge.s32.totalorder %v5710, %v5744
        %vm5775 = vcmp.ge.s32.totalorder %v5711, %v5744
        %vm5776 = vcmp.ge.s32.totalorder %v5712, %v5744
        %vm5777 = vcmp.ge.s32.totalorder %v5713, %v5744
        %vm5778 = vcmp.ge.s32.totalorder %v5714, %v5744
        %vm5779 = vcmp.ge.s32.totalorder %v5715, %v5744
        %vm5780 = vcmp.ge.s32.totalorder %v5716, %v5744
        %vm5781 = vcmp.ge.s32.totalorder %v5717, %v5744
        %vm5782 = vcmp.ge.s32.totalorder %v5718, %v5744
        %vm5783 = vcmp.ge.s32.totalorder %v5719, %v5744
        %vm5784 = vcmp.ge.s32.totalorder %v5720, %v5744
        %vm5785 = vcmp.ge.s32.totalorder %v5721, %v5744
        %vm5786 = vcmp.ge.s32.totalorder %v5701, %v5745
        %vm5787 = vcmp.ge.s32.totalorder %v5702, %v5745
        %vm5788 = vcmp.ge.s32.totalorder %v5703, %v5745
        %vm5789 = vcmp.ge.s32.totalorder %v5704, %v5745
        %vm5790 = vcmp.ge.s32.totalorder %v5705, %v5745
        %vm5791 = vcmp.ge.s32.totalorder %v5706, %v5745
        %vm5792 = vcmp.ge.s32.totalorder %v5707, %v5745
        %vm5793 = vcmp.ge.s32.totalorder %v5708, %v5745
        %vm5794 = vcmp.ge.s32.totalorder %v5709, %v5745
        %vm5795 = vcmp.ge.s32.totalorder %v5710, %v5745
        %vm5796 = vcmp.ge.s32.totalorder %v5711, %v5745
        %vm5797 = vcmp.ge.s32.totalorder %v5712, %v5745
        %vm5798 = vcmp.ge.s32.totalorder %v5713, %v5745
        %vm5799 = vcmp.ge.s32.totalorder %v5714, %v5745
        %vm5800 = vcmp.ge.s32.totalorder %v5715, %v5745
        %vm5801 = vcmp.ge.s32.totalorder %v5716, %v5745
        %vm5802 = vcmp.ge.s32.totalorder %v5717, %v5745
        %vm5803 = vcmp.ge.s32.totalorder %v5718, %v5745
        %vm5804 = vcmp.ge.s32.totalorder %v5719, %v5745
        %vm5805 = vcmp.ge.s32.totalorder %v5720, %v5745
        %vm5806 = vcmp.ge.s32.totalorder %v5721, %v5745
        %vm5807 = vcmp.ge.s32.totalorder %v5701, %v5746
        %vm5808 = vcmp.ge.s32.totalorder %v5702, %v5746
        %vm5809 = vcmp.ge.s32.totalorder %v5703, %v5746
        %vm5810 = vcmp.ge.s32.totalorder %v5704, %v5746
        %vm5811 = vcmp.ge.s32.totalorder %v5705, %v5746
        %vm5812 = vcmp.ge.s32.totalorder %v5706, %v5746
        %vm5813 = vcmp.ge.s32.totalorder %v5707, %v5746
        %vm5814 = vcmp.ge.s32.totalorder %v5708, %v5746
        %vm5815 = vcmp.ge.s32.totalorder %v5709, %v5746
        %vm5816 = vcmp.ge.s32.totalorder %v5710, %v5746
        %vm5817 = vcmp.ge.s32.totalorder %v5711, %v5746
        %vm5818 = vcmp.ge.s32.totalorder %v5712, %v5746
        %vm5819 = vcmp.ge.s32.totalorder %v5713, %v5746
        %vm5820 = vcmp.ge.s32.totalorder %v5714, %v5746
        %vm5821 = vcmp.ge.s32.totalorder %v5715, %v5746
        %vm5822 = vcmp.ge.s32.totalorder %v5716, %v5746
        %vm5823 = vcmp.ge.s32.totalorder %v5717, %v5746
        %vm5824 = vcmp.ge.s32.totalorder %v5718, %v5746
        %vm5825 = vcmp.ge.s32.totalorder %v5719, %v5746
        %vm5826 = vcmp.ge.s32.totalorder %v5720, %v5746
        %vm5827 = vcmp.ge.s32.totalorder %v5721, %v5746
        %vm5828 = vcmp.ge.s32.totalorder %v5701, %v5747
        %vm5829 = vcmp.ge.s32.totalorder %v5702, %v5747
        %vm5830 = vcmp.ge.s32.totalorder %v5703, %v5747
        %vm5831 = vcmp.ge.s32.totalorder %v5704, %v5747
        %vm5832 = vcmp.ge.s32.totalorder %v5705, %v5747
        %vm5833 = vcmp.ge.s32.totalorder %v5706, %v5747
        %vm5834 = vcmp.ge.s32.totalorder %v5707, %v5747
        %vm5835 = vcmp.ge.s32.totalorder %v5708, %v5747
        %vm5836 = vcmp.ge.s32.totalorder %v5709, %v5747
        %vm5837 = vcmp.ge.s32.totalorder %v5710, %v5747
        %vm5838 = vcmp.ge.s32.totalorder %v5711, %v5747
        %vm5839 = vcmp.ge.s32.totalorder %v5712, %v5747
        %vm5840 = vcmp.ge.s32.totalorder %v5713, %v5747
        %vm5841 = vcmp.ge.s32.totalorder %v5714, %v5747
        %vm5842 = vcmp.ge.s32.totalorder %v5715, %v5747
        %vm5843 = vcmp.ge.s32.totalorder %v5716, %v5747
        %vm5844 = vcmp.ge.s32.totalorder %v5717, %v5747
        %vm5845 = vcmp.ge.s32.totalorder %v5718, %v5747
        %vm5846 = vcmp.ge.s32.totalorder %v5719, %v5747
        %vm5847 = vcmp.ge.s32.totalorder %v5720, %v5747
        %vm5848 = vcmp.ge.s32.totalorder %v5721, %v5747
        %vm5849 = vcmp.ge.s32.totalorder %v5701, %v5748
        %vm5850 = vcmp.ge.s32.totalorder %v5702, %v5748
        %vm5851 = vcmp.ge.s32.totalorder %v5703, %v5748
        %vm5852 = vcmp.ge.s32.totalorder %v5704, %v5748
        %vm5853 = vcmp.ge.s32.totalorder %v5705, %v5748
        %vm5854 = vcmp.ge.s32.totalorder %v5706, %v5748
        %vm5855 = vcmp.ge.s32.totalorder %v5707, %v5748
        %vm5856 = vcmp.ge.s32.totalorder %v5708, %v5748
        %vm5857 = vcmp.ge.s32.totalorder %v5709, %v5748
        %vm5858 = vcmp.ge.s32.totalorder %v5710, %v5748
        %vm5859 = vcmp.ge.s32.totalorder %v5711, %v5748
        %vm5860 = vcmp.ge.s32.totalorder %v5712, %v5748
        %vm5861 = vcmp.ge.s32.totalorder %v5713, %v5748
        %vm5862 = vcmp.ge.s32.totalorder %v5714, %v5748
        %vm5863 = vcmp.ge.s32.totalorder %v5715, %v5748
        %vm5864 = vcmp.ge.s32.totalorder %v5716, %v5748
        %vm5865 = vcmp.ge.s32.totalorder %v5717, %v5748
        %vm5866 = vcmp.ge.s32.totalorder %v5718, %v5748
        %vm5867 = vcmp.ge.s32.totalorder %v5719, %v5748
        %vm5868 = vcmp.ge.s32.totalorder %v5720, %v5748
        %vm5869 = vcmp.ge.s32.totalorder %v5721, %v5748
        %vm5870 = vcmp.ge.s32.totalorder %v5701, %v5749
        %vm5871 = vcmp.ge.s32.totalorder %v5702, %v5749
        %vm5872 = vcmp.ge.s32.totalorder %v5703, %v5749
        %vm5873 = vcmp.ge.s32.totalorder %v5704, %v5749
        %vm5874 = vcmp.ge.s32.totalorder %v5705, %v5749
        %vm5875 = vcmp.ge.s32.totalorder %v5706, %v5749
        %vm5876 = vcmp.ge.s32.totalorder %v5707, %v5749
        %vm5877 = vcmp.ge.s32.totalorder %v5708, %v5749
        %vm5878 = vcmp.ge.s32.totalorder %v5709, %v5749
        %vm5879 = vcmp.ge.s32.totalorder %v5710, %v5749
        %vm5880 = vcmp.ge.s32.totalorder %v5711, %v5749
        %vm5881 = vcmp.ge.s32.totalorder %v5712, %v5749
        %vm5882 = vcmp.ge.s32.totalorder %v5713, %v5749
        %vm5883 = vcmp.ge.s32.totalorder %v5714, %v5749
        %vm5884 = vcmp.ge.s32.totalorder %v5715, %v5749
        %vm5885 = vcmp.ge.s32.totalorder %v5716, %v5749
        %vm5886 = vcmp.ge.s32.totalorder %v5717, %v5749
        %vm5887 = vcmp.ge.s32.totalorder %v5718, %v5749
        %vm5888 = vcmp.ge.s32.totalorder %v5719, %v5749
        %vm5889 = vcmp.ge.s32.totalorder %v5720, %v5749
        %vm5890 = vcmp.ge.s32.totalorder %v5721, %v5749
        %vm5891 = vcmp.ge.s32.totalorder %v5701, %v5750
        %vm5892 = vcmp.ge.s32.totalorder %v5702, %v5750
        %vm5893 = vcmp.ge.s32.totalorder %v5703, %v5750
        %vm5894 = vcmp.ge.s32.totalorder %v5704, %v5750
        %vm5895 = vcmp.ge.s32.totalorder %v5705, %v5750
        %vm5896 = vcmp.ge.s32.totalorder %v5706, %v5750
        %vm5897 = vcmp.ge.s32.totalorder %v5707, %v5750
        %vm5898 = vcmp.ge.s32.totalorder %v5708, %v5750
        %vm5899 = vcmp.ge.s32.totalorder %v5709, %v5750
        %vm5900 = vcmp.ge.s32.totalorder %v5710, %v5750
        %vm5901 = vcmp.ge.s32.totalorder %v5711, %v5750
        %vm5902 = vcmp.ge.s32.totalorder %v5712, %v5750
        %vm5903 = vcmp.ge.s32.totalorder %v5713, %v5750
        %vm5904 = vcmp.ge.s32.totalorder %v5714, %v5750
        %vm5905 = vcmp.ge.s32.totalorder %v5715, %v5750
        %vm5906 = vcmp.ge.s32.totalorder %v5716, %v5750
        %vm5907 = vcmp.ge.s32.totalorder %v5717, %v5750
        %vm5908 = vcmp.ge.s32.totalorder %v5718, %v5750
        %vm5909 = vcmp.ge.s32.totalorder %v5719, %v5750
        %vm5910 = vcmp.ge.s32.totalorder %v5720, %v5750
        %vm5911 = vcmp.ge.s32.totalorder %v5721, %v5750
        %vm5912 = vcmp.ge.s32.totalorder %v5701, %v5751
        %vm5913 = vcmp.ge.s32.totalorder %v5702, %v5751
        %vm5914 = vcmp.ge.s32.totalorder %v5703, %v5751
        %vm5915 = vcmp.ge.s32.totalorder %v5704, %v5751
        %vm5916 = vcmp.ge.s32.totalorder %v5705, %v5751
        %vm5917 = vcmp.ge.s32.totalorder %v5706, %v5751
        %vm5918 = vcmp.ge.s32.totalorder %v5707, %v5751
        %vm5919 = vcmp.ge.s32.totalorder %v5708, %v5751
        %vm5920 = vcmp.ge.s32.totalorder %v5709, %v5751
        %vm5921 = vcmp.ge.s32.totalorder %v5710, %v5751
        %vm5922 = vcmp.ge.s32.totalorder %v5711, %v5751
        %vm5923 = vcmp.ge.s32.totalorder %v5712, %v5751
        %vm5924 = vcmp.ge.s32.totalorder %v5713, %v5751
        %vm5925 = vcmp.ge.s32.totalorder %v5714, %v5751
        %vm5926 = vcmp.ge.s32.totalorder %v5715, %v5751
        %vm5927 = vcmp.ge.s32.totalorder %v5716, %v5751
        %vm5928 = vcmp.ge.s32.totalorder %v5717, %v5751
        %vm5929 = vcmp.ge.s32.totalorder %v5718, %v5751
        %vm5930 = vcmp.ge.s32.totalorder %v5719, %v5751
        %vm5931 = vcmp.ge.s32.totalorder %v5720, %v5751
        %vm5932 = vcmp.ge.s32.totalorder %v5721, %v5751
        %vm5933 = vcmp.ge.s32.totalorder %v5701, %v5752
        %vm5934 = vcmp.ge.s32.totalorder %v5702, %v5752
        %vm5935 = vcmp.ge.s32.totalorder %v5703, %v5752
        %vm5936 = vcmp.ge.s32.totalorder %v5704, %v5752
        %vm5937 = vcmp.ge.s32.totalorder %v5705, %v5752
        %vm5938 = vcmp.ge.s32.totalorder %v5706, %v5752
        %vm5939 = vcmp.ge.s32.totalorder %v5707, %v5752
        %vm5940 = vcmp.ge.s32.totalorder %v5708, %v5752
        %vm5941 = vcmp.ge.s32.totalorder %v5709, %v5752
        %vm5942 = vcmp.ge.s32.totalorder %v5710, %v5752
        %vm5943 = vcmp.ge.s32.totalorder %v5711, %v5752
        %vm5944 = vcmp.ge.s32.totalorder %v5712, %v5752
        %vm5945 = vcmp.ge.s32.totalorder %v5713, %v5752
        %vm5946 = vcmp.ge.s32.totalorder %v5714, %v5752
        %vm5947 = vcmp.ge.s32.totalorder %v5715, %v5752
        %vm5948 = vcmp.ge.s32.totalorder %v5716, %v5752
        %vm5949 = vcmp.ge.s32.totalorder %v5717, %v5752
        %vm5950 = vcmp.ge.s32.totalorder %v5718, %v5752
        %vm5951 = vcmp.ge.s32.totalorder %v5719, %v5752
        %vm5952 = vcmp.ge.s32.totalorder %v5720, %v5752
        %vm5953 = vcmp.ge.s32.totalorder %v5721, %v5752
        %vm5954 = vcmp.ge.s32.totalorder %v5701, %v5753
        %vm5955 = vcmp.ge.s32.totalorder %v5702, %v5753
        %vm5956 = vcmp.ge.s32.totalorder %v5703, %v5753
        %vm5957 = vcmp.ge.s32.totalorder %v5704, %v5753
        %vm5958 = vcmp.ge.s32.totalorder %v5705, %v5753
        %vm5959 = vcmp.ge.s32.totalorder %v5706, %v5753
        %vm5960 = vcmp.ge.s32.totalorder %v5707, %v5753
        %vm5961 = vcmp.ge.s32.totalorder %v5708, %v5753
        %vm5962 = vcmp.ge.s32.totalorder %v5709, %v5753
        %vm5963 = vcmp.ge.s32.totalorder %v5710, %v5753
        %vm5964 = vcmp.ge.s32.totalorder %v5711, %v5753
        %vm5965 = vcmp.ge.s32.totalorder %v5712, %v5753
        %vm5966 = vcmp.ge.s32.totalorder %v5713, %v5753
        %vm5967 = vcmp.ge.s32.totalorder %v5714, %v5753
        %vm5968 = vcmp.ge.s32.totalorder %v5715, %v5753
        %vm5969 = vcmp.ge.s32.totalorder %v5716, %v5753
        %vm5970 = vcmp.ge.s32.totalorder %v5717, %v5753
        %vm5971 = vcmp.ge.s32.totalorder %v5718, %v5753
        %vm5972 = vcmp.ge.s32.totalorder %v5719, %v5753
        %vm5973 = vcmp.ge.s32.totalorder %v5720, %v5753
        %vm5974 = vcmp.ge.s32.totalorder %v5721, %v5753
        %vm5975 = vcmp.ge.s32.totalorder %v5701, %v5754
        %vm5976 = vcmp.ge.s32.totalorder %v5702, %v5754
        %vm5977 = vcmp.ge.s32.totalorder %v5703, %v5754
        %vm5978 = vcmp.ge.s32.totalorder %v5704, %v5754
        %vm5979 = vcmp.ge.s32.totalorder %v5705, %v5754
        %vm5980 = vcmp.ge.s32.totalorder %v5706, %v5754
        %vm5981 = vcmp.ge.s32.totalorder %v5707, %v5754
        %vm5982 = vcmp.ge.s32.totalorder %v5708, %v5754
        %vm5983 = vcmp.ge.s32.totalorder %v5709, %v5754
        %vm5984 = vcmp.ge.s32.totalorder %v5710, %v5754
        %vm5985 = vcmp.ge.s32.totalorder %v5711, %v5754
        %vm5986 = vcmp.ge.s32.totalorder %v5712, %v5754
        %vm5987 = vcmp.ge.s32.totalorder %v5713, %v5754
        %vm5988 = vcmp.ge.s32.totalorder %v5714, %v5754
        %vm5989 = vcmp.ge.s32.totalorder %v5715, %v5754
        %vm5990 = vcmp.ge.s32.totalorder %v5716, %v5754
        %vm5991 = vcmp.ge.s32.totalorder %v5717, %v5754
        %vm5992 = vcmp.ge.s32.totalorder %v5718, %v5754
        %vm5993 = vcmp.ge.s32.totalorder %v5719, %v5754
        %vm5994 = vcmp.ge.s32.totalorder %v5720, %v5754
        %vm5995 = vcmp.ge.s32.totalorder %v5721, %v5754
        %vm5996 = vcmp.ge.s32.totalorder %v5701, %v5755
        %vm5997 = vcmp.ge.s32.totalorder %v5702, %v5755
        %vm5998 = vcmp.ge.s32.totalorder %v5703, %v5755
        %vm5999 = vcmp.ge.s32.totalorder %v5704, %v5755
        %vm6000 = vcmp.ge.s32.totalorder %v5705, %v5755
        %vm6001 = vcmp.ge.s32.totalorder %v5706, %v5755
        %vm6002 = vcmp.ge.s32.totalorder %v5707, %v5755
        %vm6003 = vcmp.ge.s32.totalorder %v5708, %v5755
        %vm6004 = vcmp.ge.s32.totalorder %v5709, %v5755
        %vm6005 = vcmp.ge.s32.totalorder %v5710, %v5755
        %vm6006 = vcmp.ge.s32.totalorder %v5711, %v5755
        %vm6007 = vcmp.ge.s32.totalorder %v5712, %v5755
        %vm6008 = vcmp.ge.s32.totalorder %v5713, %v5755
        %vm6009 = vcmp.ge.s32.totalorder %v5714, %v5755
        %vm6010 = vcmp.ge.s32.totalorder %v5715, %v5755
        %vm6011 = vcmp.ge.s32.totalorder %v5716, %v5755
        %vm6012 = vcmp.ge.s32.totalorder %v5717, %v5755
        %vm6013 = vcmp.ge.s32.totalorder %v5718, %v5755
        %vm6014 = vcmp.ge.s32.totalorder %v5719, %v5755
        %vm6015 = vcmp.ge.s32.totalorder %v5720, %v5755
        %vm6016 = vcmp.ge.s32.totalorder %v5721, %v5755
        %vm6017 = vcmp.ge.s32.totalorder %v5701, %v5756
        %vm6018 = vcmp.ge.s32.totalorder %v5702, %v5756
        %vm6019 = vcmp.ge.s32.totalorder %v5703, %v5756
        %vm6020 = vcmp.ge.s32.totalorder %v5704, %v5756
        %vm6021 = vcmp.ge.s32.totalorder %v5705, %v5756
        %vm6022 = vcmp.ge.s32.totalorder %v5706, %v5756
        %vm6023 = vcmp.ge.s32.totalorder %v5707, %v5756
        %vm6024 = vcmp.ge.s32.totalorder %v5708, %v5756
        %vm6025 = vcmp.ge.s32.totalorder %v5709, %v5756
        %vm6026 = vcmp.ge.s32.totalorder %v5710, %v5756
        %vm6027 = vcmp.ge.s32.totalorder %v5711, %v5756
        %vm6028 = vcmp.ge.s32.totalorder %v5712, %v5756
        %vm6029 = vcmp.ge.s32.totalorder %v5713, %v5756
        %vm6030 = vcmp.ge.s32.totalorder %v5714, %v5756
        %vm6031 = vcmp.ge.s32.totalorder %v5715, %v5756
        %vm6032 = vcmp.ge.s32.totalorder %v5716, %v5756
        %vm6033 = vcmp.ge.s32.totalorder %v5717, %v5756
        %vm6034 = vcmp.ge.s32.totalorder %v5718, %v5756
        %vm6035 = vcmp.ge.s32.totalorder %v5719, %v5756
        %vm6036 = vcmp.ge.s32.totalorder %v5720, %v5756
        %vm6037 = vcmp.ge.s32.totalorder %v5721, %v5756
        %vm6038 = vcmp.ge.s32.totalorder %v5701, %v5757
        %vm6039 = vcmp.ge.s32.totalorder %v5702, %v5757
        %vm6040 = vcmp.ge.s32.totalorder %v5703, %v5757
        %vm6041 = vcmp.ge.s32.totalorder %v5704, %v5757
        %vm6042 = vcmp.ge.s32.totalorder %v5705, %v5757
        %vm6043 = vcmp.ge.s32.totalorder %v5706, %v5757
        %vm6044 = vcmp.ge.s32.totalorder %v5707, %v5757
        %vm6045 = vcmp.ge.s32.totalorder %v5708, %v5757
        %vm6046 = vcmp.ge.s32.totalorder %v5709, %v5757
        %vm6047 = vcmp.ge.s32.totalorder %v5710, %v5757
        %vm6048 = vcmp.ge.s32.totalorder %v5711, %v5757
        %vm6049 = vcmp.ge.s32.totalorder %v5712, %v5757
        %vm6050 = vcmp.ge.s32.totalorder %v5713, %v5757
        %vm6051 = vcmp.ge.s32.totalorder %v5714, %v5757
        %vm6052 = vcmp.ge.s32.totalorder %v5715, %v5757
        %vm6053 = vcmp.ge.s32.totalorder %v5716, %v5757
        %vm6054 = vcmp.ge.s32.totalorder %v5717, %v5757
        %vm6055 = vcmp.ge.s32.totalorder %v5718, %v5757
        %vm6056 = vcmp.ge.s32.totalorder %v5719, %v5757
        %vm6057 = vcmp.ge.s32.totalorder %v5720, %v5757
        %vm6058 = vcmp.ge.s32.totalorder %v5721, %v5757
        %vm6059 = vcmp.ge.s32.totalorder %v5701, %v5758
        %vm6060 = vcmp.ge.s32.totalorder %v5702, %v5758
        %vm6061 = vcmp.ge.s32.totalorder %v5703, %v5758
        %vm6062 = vcmp.ge.s32.totalorder %v5704, %v5758
        %vm6063 = vcmp.ge.s32.totalorder %v5705, %v5758
        %vm6064 = vcmp.ge.s32.totalorder %v5706, %v5758
        %vm6065 = vcmp.ge.s32.totalorder %v5707, %v5758
        %vm6066 = vcmp.ge.s32.totalorder %v5708, %v5758
        %vm6067 = vcmp.ge.s32.totalorder %v5709, %v5758
        %vm6068 = vcmp.ge.s32.totalorder %v5710, %v5758
        %vm6069 = vcmp.ge.s32.totalorder %v5711, %v5758
        %vm6070 = vcmp.ge.s32.totalorder %v5712, %v5758
        %vm6071 = vcmp.ge.s32.totalorder %v5713, %v5758
        %vm6072 = vcmp.ge.s32.totalorder %v5714, %v5758
        %vm6073 = vcmp.ge.s32.totalorder %v5715, %v5758
        %vm6074 = vcmp.ge.s32.totalorder %v5716, %v5758
        %vm6075 = vcmp.ge.s32.totalorder %v5717, %v5758
        %vm6076 = vcmp.ge.s32.totalorder %v5718, %v5758
        %vm6077 = vcmp.ge.s32.totalorder %v5719, %v5758
        %vm6078 = vcmp.ge.s32.totalorder %v5720, %v5758
        %vm6079 = vcmp.ge.s32.totalorder %v5721, %v5758
        %vm6080 = vcmp.ge.s32.totalorder %v5701, %v5759
        %vm6081 = vcmp.ge.s32.totalorder %v5702, %v5759
        %vm6082 = vcmp.ge.s32.totalorder %v5703, %v5759
        %vm6083 = vcmp.ge.s32.totalorder %v5704, %v5759
        %vm6084 = vcmp.ge.s32.totalorder %v5705, %v5759
        %vm6085 = vcmp.ge.s32.totalorder %v5706, %v5759
        %vm6086 = vcmp.ge.s32.totalorder %v5707, %v5759
        %vm6087 = vcmp.ge.s32.totalorder %v5708, %v5759
        %vm6088 = vcmp.ge.s32.totalorder %v5709, %v5759
        %vm6089 = vcmp.ge.s32.totalorder %v5710, %v5759
        %vm6090 = vcmp.ge.s32.totalorder %v5711, %v5759
        %vm6091 = vcmp.ge.s32.totalorder %v5712, %v5759
        %vm6092 = vcmp.ge.s32.totalorder %v5713, %v5759
        %vm6093 = vcmp.ge.s32.totalorder %v5714, %v5759
        %vm6094 = vcmp.ge.s32.totalorder %v5715, %v5759
        %vm6095 = vcmp.ge.s32.totalorder %v5716, %v5759
        %vm6096 = vcmp.ge.s32.totalorder %v5717, %v5759
        %vm6097 = vcmp.ge.s32.totalorder %v5718, %v5759
        %vm6098 = vcmp.ge.s32.totalorder %v5719, %v5759
        %vm6099 = vcmp.ge.s32.totalorder %v5720, %v5759
        %vm6100 = vcmp.ge.s32.totalorder %v5721, %v5759
        %vm6101 = vcmp.ge.s32.totalorder %v5701, %v5760
        %vm6102 = vcmp.ge.s32.totalorder %v5702, %v5760
        %vm6103 = vcmp.ge.s32.totalorder %v5703, %v5760
        %vm6104 = vcmp.ge.s32.totalorder %v5704, %v5760
        %vm6105 = vcmp.ge.s32.totalorder %v5705, %v5760
        %vm6106 = vcmp.ge.s32.totalorder %v5706, %v5760
        %vm6107 = vcmp.ge.s32.totalorder %v5707, %v5760
        %vm6108 = vcmp.ge.s32.totalorder %v5708, %v5760
        %vm6109 = vcmp.ge.s32.totalorder %v5709, %v5760
        %vm6110 = vcmp.ge.s32.totalorder %v5710, %v5760
        %vm6111 = vcmp.ge.s32.totalorder %v5711, %v5760
        %vm6112 = vcmp.ge.s32.totalorder %v5712, %v5760
        %vm6113 = vcmp.ge.s32.totalorder %v5713, %v5760
        %vm6114 = vcmp.ge.s32.totalorder %v5714, %v5760
        %vm6115 = vcmp.ge.s32.totalorder %v5715, %v5760
        %vm6116 = vcmp.ge.s32.totalorder %v5716, %v5760
        %vm6117 = vcmp.ge.s32.totalorder %v5717, %v5760
        %vm6118 = vcmp.ge.s32.totalorder %v5718, %v5760
        %vm6119 = vcmp.ge.s32.totalorder %v5719, %v5760
        %vm6120 = vcmp.ge.s32.totalorder %v5720, %v5760
        %vm6121 = vcmp.ge.s32.totalorder %v5721, %v5760
        %vm6122 = vcmp.ge.s32.totalorder %v5701, %v5761
        %vm6123 = vcmp.ge.s32.totalorder %v5702, %v5761
        %vm6124 = vcmp.ge.s32.totalorder %v5703, %v5761
        %vm6125 = vcmp.ge.s32.totalorder %v5704, %v5761
        %vm6126 = vcmp.ge.s32.totalorder %v5705, %v5761
        %vm6127 = vcmp.ge.s32.totalorder %v5706, %v5761
        %vm6128 = vcmp.ge.s32.totalorder %v5707, %v5761
        %vm6129 = vcmp.ge.s32.totalorder %v5708, %v5761
        %vm6130 = vcmp.ge.s32.totalorder %v5709, %v5761
        %vm6131 = vcmp.ge.s32.totalorder %v5710, %v5761
        %vm6132 = vcmp.ge.s32.totalorder %v5711, %v5761
        %vm6133 = vcmp.ge.s32.totalorder %v5712, %v5761
        %vm6134 = vcmp.ge.s32.totalorder %v5713, %v5761
        %vm6135 = vcmp.ge.s32.totalorder %v5714, %v5761
        %vm6136 = vcmp.ge.s32.totalorder %v5715, %v5761
        %vm6137 = vcmp.ge.s32.totalorder %v5716, %v5761
        %vm6138 = vcmp.ge.s32.totalorder %v5717, %v5761
        %vm6139 = vcmp.ge.s32.totalorder %v5718, %v5761
        %vm6140 = vcmp.ge.s32.totalorder %v5719, %v5761
        %vm6141 = vcmp.ge.s32.totalorder %v5720, %v5761
        %vm6142 = vcmp.ge.s32.totalorder %v5721, %v5761
        %vm6143 = vcmp.ge.s32.totalorder %v5701, %v5762
        %vm6144 = vcmp.ge.s32.totalorder %v5702, %v5762
        %vm6145 = vcmp.ge.s32.totalorder %v5703, %v5762
        %vm6146 = vcmp.ge.s32.totalorder %v5704, %v5762
        %vm6147 = vcmp.ge.s32.totalorder %v5705, %v5762
        %vm6148 = vcmp.ge.s32.totalorder %v5706, %v5762
        %vm6149 = vcmp.ge.s32.totalorder %v5707, %v5762
        %vm6150 = vcmp.ge.s32.totalorder %v5708, %v5762
        %vm6151 = vcmp.ge.s32.totalorder %v5709, %v5762
        %vm6152 = vcmp.ge.s32.totalorder %v5710, %v5762
        %vm6153 = vcmp.ge.s32.totalorder %v5711, %v5762
        %vm6154 = vcmp.ge.s32.totalorder %v5712, %v5762
        %vm6155 = vcmp.ge.s32.totalorder %v5713, %v5762
        %vm6156 = vcmp.ge.s32.totalorder %v5714, %v5762
        %vm6157 = vcmp.ge.s32.totalorder %v5715, %v5762
        %vm6158 = vcmp.ge.s32.totalorder %v5716, %v5762
        %vm6159 = vcmp.ge.s32.totalorder %v5717, %v5762
        %vm6160 = vcmp.ge.s32.totalorder %v5718, %v5762
        %vm6161 = vcmp.ge.s32.totalorder %v5719, %v5762
        %vm6162 = vcmp.ge.s32.totalorder %v5720, %v5762
        %vm6163 = vcmp.ge.s32.totalorder %v5721, %v5762
        %vm6164 = vcmp.ge.s32.totalorder %v5701, %v5763
        %vm6165 = vcmp.ge.s32.totalorder %v5702, %v5763
        %vm6166 = vcmp.ge.s32.totalorder %v5703, %v5763
        %vm6167 = vcmp.ge.s32.totalorder %v5704, %v5763
        %vm6168 = vcmp.ge.s32.totalorder %v5705, %v5763
        %vm6169 = vcmp.ge.s32.totalorder %v5706, %v5763
        %vm6170 = vcmp.ge.s32.totalorder %v5707, %v5763
        %vm6171 = vcmp.ge.s32.totalorder %v5708, %v5763
        %vm6172 = vcmp.ge.s32.totalorder %v5709, %v5763
        %vm6173 = vcmp.ge.s32.totalorder %v5710, %v5763
        %vm6174 = vcmp.ge.s32.totalorder %v5711, %v5763
        %vm6175 = vcmp.ge.s32.totalorder %v5712, %v5763
        %vm6176 = vcmp.ge.s32.totalorder %v5713, %v5763
        %vm6177 = vcmp.ge.s32.totalorder %v5714, %v5763
        %vm6178 = vcmp.ge.s32.totalorder %v5715, %v5763
        %vm6179 = vcmp.ge.s32.totalorder %v5716, %v5763
        %vm6180 = vcmp.ge.s32.totalorder %v5717, %v5763
        %vm6181 = vcmp.ge.s32.totalorder %v5718, %v5763
        %vm6182 = vcmp.ge.s32.totalorder %v5719, %v5763
        %vm6183 = vcmp.ge.s32.totalorder %v5720, %v5763
        %vm6184 = vcmp.ge.s32.totalorder %v5721, %v5763
        %vm6185 = vcmp.ge.s32.totalorder %v5701, %v5764
        %vm6186 = vcmp.ge.s32.totalorder %v5702, %v5764
        %vm6187 = vcmp.ge.s32.totalorder %v5703, %v5764
        %vm6188 = vcmp.ge.s32.totalorder %v5704, %v5764
        %vm6189 = vcmp.ge.s32.totalorder %v5705, %v5764
        %vm6190 = vcmp.ge.s32.totalorder %v5706, %v5764
        %vm6191 = vcmp.ge.s32.totalorder %v5707, %v5764
        %vm6192 = vcmp.ge.s32.totalorder %v5708, %v5764
        %vm6193 = vcmp.ge.s32.totalorder %v5709, %v5764
        %vm6194 = vcmp.ge.s32.totalorder %v5710, %v5764
        %vm6195 = vcmp.ge.s32.totalorder %v5711, %v5764
        %vm6196 = vcmp.ge.s32.totalorder %v5712, %v5764
        %vm6197 = vcmp.ge.s32.totalorder %v5713, %v5764
        %vm6198 = vcmp.ge.s32.totalorder %v5714, %v5764
        %vm6199 = vcmp.ge.s32.totalorder %v5715, %v5764
        %vm6200 = vcmp.ge.s32.totalorder %v5716, %v5764
        %vm6201 = vcmp.ge.s32.totalorder %v5717, %v5764
        %vm6202 = vcmp.ge.s32.totalorder %v5718, %v5764
        %vm6203 = vcmp.ge.s32.totalorder %v5719, %v5764
        %vm6204 = vcmp.ge.s32.totalorder %v5720, %v5764
        %vm6205 = vcmp.ge.s32.totalorder %v5721, %v5764
        %v6206 = vadd.s32 %v5744, 16
        %v6207 = vadd.s32 %v5745, 16
        %v6208 = vadd.s32 %v5746, 16
        %v6209 = vadd.s32 %v5747, 16
        %v6210 = vadd.s32 %v5748, 16
        %v6211 = vadd.s32 %v5749, 16
        %v6212 = vadd.s32 %v5750, 16
        %v6213 = vadd.s32 %v5751, 16
        %v6214 = vadd.s32 %v5752, 16
        %v6215 = vadd.s32 %v5753, 16
        %v6216 = vadd.s32 %v5754, 16
        %v6217 = vadd.s32 %v5755, 16
        %v6218 = vadd.s32 %v5756, 16
        %v6219 = vadd.s32 %v5757, 16
        %v6220 = vadd.s32 %v5758, 16
        %v6221 = vadd.s32 %v5759, 16
        %v6222 = vadd.s32 %v5760, 16
        %v6223 = vadd.s32 %v5761, 16
        %v6224 = vadd.s32 %v5762, 16
        %v6225 = vadd.s32 %v5763, 16
        %v6226 = vadd.s32 %v5764, 16
        %vm6227 = vcmp.lt.s32.totalorder %v5701, %v6206
        %vm6228 = vcmp.lt.s32.totalorder %v5702, %v6206
        %vm6229 = vcmp.lt.s32.totalorder %v5703, %v6206
        %vm6230 = vcmp.lt.s32.totalorder %v5704, %v6206
        %vm6231 = vcmp.lt.s32.totalorder %v5705, %v6206
        %vm6232 = vcmp.lt.s32.totalorder %v5706, %v6206
        %vm6233 = vcmp.lt.s32.totalorder %v5707, %v6206
        %vm6234 = vcmp.lt.s32.totalorder %v5708, %v6206
        %vm6235 = vcmp.lt.s32.totalorder %v5709, %v6206
        %vm6236 = vcmp.lt.s32.totalorder %v5710, %v6206
        %vm6237 = vcmp.lt.s32.totalorder %v5711, %v6206
        %vm6238 = vcmp.lt.s32.totalorder %v5712, %v6206
        %vm6239 = vcmp.lt.s32.totalorder %v5713, %v6206
        %vm6240 = vcmp.lt.s32.totalorder %v5714, %v6206
        %vm6241 = vcmp.lt.s32.totalorder %v5715, %v6206
        %vm6242 = vcmp.lt.s32.totalorder %v5716, %v6206
        %vm6243 = vcmp.lt.s32.totalorder %v5717, %v6206
        %vm6244 = vcmp.lt.s32.totalorder %v5718, %v6206
        %vm6245 = vcmp.lt.s32.totalorder %v5719, %v6206
        %vm6246 = vcmp.lt.s32.totalorder %v5720, %v6206
        %vm6247 = vcmp.lt.s32.totalorder %v5721, %v6206
        %vm6248 = vcmp.lt.s32.totalorder %v5701, %v6207
        %vm6249 = vcmp.lt.s32.totalorder %v5702, %v6207
        %vm6250 = vcmp.lt.s32.totalorder %v5703, %v6207
        %vm6251 = vcmp.lt.s32.totalorder %v5704, %v6207
        %vm6252 = vcmp.lt.s32.totalorder %v5705, %v6207
        %vm6253 = vcmp.lt.s32.totalorder %v5706, %v6207
        %vm6254 = vcmp.lt.s32.totalorder %v5707, %v6207
        %vm6255 = vcmp.lt.s32.totalorder %v5708, %v6207
        %vm6256 = vcmp.lt.s32.totalorder %v5709, %v6207
        %vm6257 = vcmp.lt.s32.totalorder %v5710, %v6207
        %vm6258 = vcmp.lt.s32.totalorder %v5711, %v6207
        %vm6259 = vcmp.lt.s32.totalorder %v5712, %v6207
        %vm6260 = vcmp.lt.s32.totalorder %v5713, %v6207
        %vm6261 = vcmp.lt.s32.totalorder %v5714, %v6207
        %vm6262 = vcmp.lt.s32.totalorder %v5715, %v6207
        %vm6263 = vcmp.lt.s32.totalorder %v5716, %v6207
        %vm6264 = vcmp.lt.s32.totalorder %v5717, %v6207
        %vm6265 = vcmp.lt.s32.totalorder %v5718, %v6207
        %vm6266 = vcmp.lt.s32.totalorder %v5719, %v6207
        %vm6267 = vcmp.lt.s32.totalorder %v5720, %v6207
        %vm6268 = vcmp.lt.s32.totalorder %v5721, %v6207
        %vm6269 = vcmp.lt.s32.totalorder %v5701, %v6208
        %vm6270 = vcmp.lt.s32.totalorder %v5702, %v6208
        %vm6271 = vcmp.lt.s32.totalorder %v5703, %v6208
        %vm6272 = vcmp.lt.s32.totalorder %v5704, %v6208
        %vm6273 = vcmp.lt.s32.totalorder %v5705, %v6208
        %vm6274 = vcmp.lt.s32.totalorder %v5706, %v6208
        %vm6275 = vcmp.lt.s32.totalorder %v5707, %v6208
        %vm6276 = vcmp.lt.s32.totalorder %v5708, %v6208
        %vm6277 = vcmp.lt.s32.totalorder %v5709, %v6208
        %vm6278 = vcmp.lt.s32.totalorder %v5710, %v6208
        %vm6279 = vcmp.lt.s32.totalorder %v5711, %v6208
        %vm6280 = vcmp.lt.s32.totalorder %v5712, %v6208
        %vm6281 = vcmp.lt.s32.totalorder %v5713, %v6208
        %vm6282 = vcmp.lt.s32.totalorder %v5714, %v6208
        %vm6283 = vcmp.lt.s32.totalorder %v5715, %v6208
        %vm6284 = vcmp.lt.s32.totalorder %v5716, %v6208
        %vm6285 = vcmp.lt.s32.totalorder %v5717, %v6208
        %vm6286 = vcmp.lt.s32.totalorder %v5718, %v6208
        %vm6287 = vcmp.lt.s32.totalorder %v5719, %v6208
        %vm6288 = vcmp.lt.s32.totalorder %v5720, %v6208
        %vm6289 = vcmp.lt.s32.totalorder %v5721, %v6208
        %vm6290 = vcmp.lt.s32.totalorder %v5701, %v6209
        %vm6291 = vcmp.lt.s32.totalorder %v5702, %v6209
        %vm6292 = vcmp.lt.s32.totalorder %v5703, %v6209
        %vm6293 = vcmp.lt.s32.totalorder %v5704, %v6209
        %vm6294 = vcmp.lt.s32.totalorder %v5705, %v6209
        %vm6295 = vcmp.lt.s32.totalorder %v5706, %v6209
        %vm6296 = vcmp.lt.s32.totalorder %v5707, %v6209
        %vm6297 = vcmp.lt.s32.totalorder %v5708, %v6209
        %vm6298 = vcmp.lt.s32.totalorder %v5709, %v6209
        %vm6299 = vcmp.lt.s32.totalorder %v5710, %v6209
        %vm6300 = vcmp.lt.s32.totalorder %v5711, %v6209
        %vm6301 = vcmp.lt.s32.totalorder %v5712, %v6209
        %vm6302 = vcmp.lt.s32.totalorder %v5713, %v6209
        %vm6303 = vcmp.lt.s32.totalorder %v5714, %v6209
        %vm6304 = vcmp.lt.s32.totalorder %v5715, %v6209
        %vm6305 = vcmp.lt.s32.totalorder %v5716, %v6209
        %vm6306 = vcmp.lt.s32.totalorder %v5717, %v6209
        %vm6307 = vcmp.lt.s32.totalorder %v5718, %v6209
        %vm6308 = vcmp.lt.s32.totalorder %v5719, %v6209
        %vm6309 = vcmp.lt.s32.totalorder %v5720, %v6209
        %vm6310 = vcmp.lt.s32.totalorder %v5721, %v6209
        %vm6311 = vcmp.lt.s32.totalorder %v5701, %v6210
        %vm6312 = vcmp.lt.s32.totalorder %v5702, %v6210
        %vm6313 = vcmp.lt.s32.totalorder %v5703, %v6210
        %vm6314 = vcmp.lt.s32.totalorder %v5704, %v6210
        %vm6315 = vcmp.lt.s32.totalorder %v5705, %v6210
        %vm6316 = vcmp.lt.s32.totalorder %v5706, %v6210
        %vm6317 = vcmp.lt.s32.totalorder %v5707, %v6210
        %vm6318 = vcmp.lt.s32.totalorder %v5708, %v6210
        %vm6319 = vcmp.lt.s32.totalorder %v5709, %v6210
        %vm6320 = vcmp.lt.s32.totalorder %v5710, %v6210
        %vm6321 = vcmp.lt.s32.totalorder %v5711, %v6210
        %vm6322 = vcmp.lt.s32.totalorder %v5712, %v6210
        %vm6323 = vcmp.lt.s32.totalorder %v5713, %v6210
        %vm6324 = vcmp.lt.s32.totalorder %v5714, %v6210
        %vm6325 = vcmp.lt.s32.totalorder %v5715, %v6210
        %vm6326 = vcmp.lt.s32.totalorder %v5716, %v6210
        %vm6327 = vcmp.lt.s32.totalorder %v5717, %v6210
        %vm6328 = vcmp.lt.s32.totalorder %v5718, %v6210
        %vm6329 = vcmp.lt.s32.totalorder %v5719, %v6210
        %vm6330 = vcmp.lt.s32.totalorder %v5720, %v6210
        %vm6331 = vcmp.lt.s32.totalorder %v5721, %v6210
        %vm6332 = vcmp.lt.s32.totalorder %v5701, %v6211
        %vm6333 = vcmp.lt.s32.totalorder %v5702, %v6211
        %vm6334 = vcmp.lt.s32.totalorder %v5703, %v6211
        %vm6335 = vcmp.lt.s32.totalorder %v5704, %v6211
        %vm6336 = vcmp.lt.s32.totalorder %v5705, %v6211
        %vm6337 = vcmp.lt.s32.totalorder %v5706, %v6211
        %vm6338 = vcmp.lt.s32.totalorder %v5707, %v6211
        %vm6339 = vcmp.lt.s32.totalorder %v5708, %v6211
        %vm6340 = vcmp.lt.s32.totalorder %v5709, %v6211
        %vm6341 = vcmp.lt.s32.totalorder %v5710, %v6211
        %vm6342 = vcmp.lt.s32.totalorder %v5711, %v6211
        %vm6343 = vcmp.lt.s32.totalorder %v5712, %v6211
        %vm6344 = vcmp.lt.s32.totalorder %v5713, %v6211
        %vm6345 = vcmp.lt.s32.totalorder %v5714, %v6211
        %vm6346 = vcmp.lt.s32.totalorder %v5715, %v6211
        %vm6347 = vcmp.lt.s32.totalorder %v5716, %v6211
        %vm6348 = vcmp.lt.s32.totalorder %v5717, %v6211
        %vm6349 = vcmp.lt.s32.totalorder %v5718, %v6211
        %vm6350 = vcmp.lt.s32.totalorder %v5719, %v6211
        %vm6351 = vcmp.lt.s32.totalorder %v5720, %v6211
        %vm6352 = vcmp.lt.s32.totalorder %v5721, %v6211
        %vm6353 = vcmp.lt.s32.totalorder %v5701, %v6212
        %vm6354 = vcmp.lt.s32.totalorder %v5702, %v6212
        %vm6355 = vcmp.lt.s32.totalorder %v5703, %v6212
        %vm6356 = vcmp.lt.s32.totalorder %v5704, %v6212
        %vm6357 = vcmp.lt.s32.totalorder %v5705, %v6212
        %vm6358 = vcmp.lt.s32.totalorder %v5706, %v6212
        %vm6359 = vcmp.lt.s32.totalorder %v5707, %v6212
        %vm6360 = vcmp.lt.s32.totalorder %v5708, %v6212
        %vm6361 = vcmp.lt.s32.totalorder %v5709, %v6212
        %vm6362 = vcmp.lt.s32.totalorder %v5710, %v6212
        %vm6363 = vcmp.lt.s32.totalorder %v5711, %v6212
        %vm6364 = vcmp.lt.s32.totalorder %v5712, %v6212
        %vm6365 = vcmp.lt.s32.totalorder %v5713, %v6212
        %vm6366 = vcmp.lt.s32.totalorder %v5714, %v6212
        %vm6367 = vcmp.lt.s32.totalorder %v5715, %v6212
        %vm6368 = vcmp.lt.s32.totalorder %v5716, %v6212
        %vm6369 = vcmp.lt.s32.totalorder %v5717, %v6212
        %vm6370 = vcmp.lt.s32.totalorder %v5718, %v6212
        %vm6371 = vcmp.lt.s32.totalorder %v5719, %v6212
        %vm6372 = vcmp.lt.s32.totalorder %v5720, %v6212
        %vm6373 = vcmp.lt.s32.totalorder %v5721, %v6212
        %vm6374 = vcmp.lt.s32.totalorder %v5701, %v6213
        %vm6375 = vcmp.lt.s32.totalorder %v5702, %v6213
        %vm6376 = vcmp.lt.s32.totalorder %v5703, %v6213
        %vm6377 = vcmp.lt.s32.totalorder %v5704, %v6213
        %vm6378 = vcmp.lt.s32.totalorder %v5705, %v6213
        %vm6379 = vcmp.lt.s32.totalorder %v5706, %v6213
        %vm6380 = vcmp.lt.s32.totalorder %v5707, %v6213
        %vm6381 = vcmp.lt.s32.totalorder %v5708, %v6213
        %vm6382 = vcmp.lt.s32.totalorder %v5709, %v6213
        %vm6383 = vcmp.lt.s32.totalorder %v5710, %v6213
        %vm6384 = vcmp.lt.s32.totalorder %v5711, %v6213
        %vm6385 = vcmp.lt.s32.totalorder %v5712, %v6213
        %vm6386 = vcmp.lt.s32.totalorder %v5713, %v6213
        %vm6387 = vcmp.lt.s32.totalorder %v5714, %v6213
        %vm6388 = vcmp.lt.s32.totalorder %v5715, %v6213
        %vm6389 = vcmp.lt.s32.totalorder %v5716, %v6213
        %vm6390 = vcmp.lt.s32.totalorder %v5717, %v6213
        %vm6391 = vcmp.lt.s32.totalorder %v5718, %v6213
        %vm6392 = vcmp.lt.s32.totalorder %v5719, %v6213
        %vm6393 = vcmp.lt.s32.totalorder %v5720, %v6213
        %vm6394 = vcmp.lt.s32.totalorder %v5721, %v6213
        %vm6395 = vcmp.lt.s32.totalorder %v5701, %v6214
        %vm6396 = vcmp.lt.s32.totalorder %v5702, %v6214
        %vm6397 = vcmp.lt.s32.totalorder %v5703, %v6214
        %vm6398 = vcmp.lt.s32.totalorder %v5704, %v6214
        %vm6399 = vcmp.lt.s32.totalorder %v5705, %v6214
        %vm6400 = vcmp.lt.s32.totalorder %v5706, %v6214
        %vm6401 = vcmp.lt.s32.totalorder %v5707, %v6214
        %vm6402 = vcmp.lt.s32.totalorder %v5708, %v6214
        %vm6403 = vcmp.lt.s32.totalorder %v5709, %v6214
        %vm6404 = vcmp.lt.s32.totalorder %v5710, %v6214
        %vm6405 = vcmp.lt.s32.totalorder %v5711, %v6214
        %vm6406 = vcmp.lt.s32.totalorder %v5712, %v6214
        %vm6407 = vcmp.lt.s32.totalorder %v5713, %v6214
        %vm6408 = vcmp.lt.s32.totalorder %v5714, %v6214
        %vm6409 = vcmp.lt.s32.totalorder %v5715, %v6214
        %vm6410 = vcmp.lt.s32.totalorder %v5716, %v6214
        %vm6411 = vcmp.lt.s32.totalorder %v5717, %v6214
        %vm6412 = vcmp.lt.s32.totalorder %v5718, %v6214
        %vm6413 = vcmp.lt.s32.totalorder %v5719, %v6214
        %vm6414 = vcmp.lt.s32.totalorder %v5720, %v6214
        %vm6415 = vcmp.lt.s32.totalorder %v5721, %v6214
        %vm6416 = vcmp.lt.s32.totalorder %v5701, %v6215
        %vm6417 = vcmp.lt.s32.totalorder %v5702, %v6215
        %vm6418 = vcmp.lt.s32.totalorder %v5703, %v6215
        %vm6419 = vcmp.lt.s32.totalorder %v5704, %v6215
        %vm6420 = vcmp.lt.s32.totalorder %v5705, %v6215
        %vm6421 = vcmp.lt.s32.totalorder %v5706, %v6215
        %vm6422 = vcmp.lt.s32.totalorder %v5707, %v6215
        %vm6423 = vcmp.lt.s32.totalorder %v5708, %v6215
        %vm6424 = vcmp.lt.s32.totalorder %v5709, %v6215
        %vm6425 = vcmp.lt.s32.totalorder %v5710, %v6215
        %vm6426 = vcmp.lt.s32.totalorder %v5711, %v6215
        %vm6427 = vcmp.lt.s32.totalorder %v5712, %v6215
        %vm6428 = vcmp.lt.s32.totalorder %v5713, %v6215
        %vm6429 = vcmp.lt.s32.totalorder %v5714, %v6215
        %vm6430 = vcmp.lt.s32.totalorder %v5715, %v6215
        %vm6431 = vcmp.lt.s32.totalorder %v5716, %v6215
        %vm6432 = vcmp.lt.s32.totalorder %v5717, %v6215
        %vm6433 = vcmp.lt.s32.totalorder %v5718, %v6215
        %vm6434 = vcmp.lt.s32.totalorder %v5719, %v6215
        %vm6435 = vcmp.lt.s32.totalorder %v5720, %v6215
        %vm6436 = vcmp.lt.s32.totalorder %v5721, %v6215
        %vm6437 = vcmp.lt.s32.totalorder %v5701, %v6216
        %vm6438 = vcmp.lt.s32.totalorder %v5702, %v6216
        %vm6439 = vcmp.lt.s32.totalorder %v5703, %v6216
        %vm6440 = vcmp.lt.s32.totalorder %v5704, %v6216
        %vm6441 = vcmp.lt.s32.totalorder %v5705, %v6216
        %vm6442 = vcmp.lt.s32.totalorder %v5706, %v6216
        %vm6443 = vcmp.lt.s32.totalorder %v5707, %v6216
        %vm6444 = vcmp.lt.s32.totalorder %v5708, %v6216
        %vm6445 = vcmp.lt.s32.totalorder %v5709, %v6216
        %vm6446 = vcmp.lt.s32.totalorder %v5710, %v6216
        %vm6447 = vcmp.lt.s32.totalorder %v5711, %v6216
        %vm6448 = vcmp.lt.s32.totalorder %v5712, %v6216
        %vm6449 = vcmp.lt.s32.totalorder %v5713, %v6216
        %vm6450 = vcmp.lt.s32.totalorder %v5714, %v6216
        %vm6451 = vcmp.lt.s32.totalorder %v5715, %v6216
        %vm6452 = vcmp.lt.s32.totalorder %v5716, %v6216
        %vm6453 = vcmp.lt.s32.totalorder %v5717, %v6216
        %vm6454 = vcmp.lt.s32.totalorder %v5718, %v6216
        %vm6455 = vcmp.lt.s32.totalorder %v5719, %v6216
        %vm6456 = vcmp.lt.s32.totalorder %v5720, %v6216
        %vm6457 = vcmp.lt.s32.totalorder %v5721, %v6216
        %vm6458 = vcmp.lt.s32.totalorder %v5701, %v6217
        %vm6459 = vcmp.lt.s32.totalorder %v5702, %v6217
        %vm6460 = vcmp.lt.s32.totalorder %v5703, %v6217
        %vm6461 = vcmp.lt.s32.totalorder %v5704, %v6217
        %vm6462 = vcmp.lt.s32.totalorder %v5705, %v6217
        %vm6463 = vcmp.lt.s32.totalorder %v5706, %v6217
        %vm6464 = vcmp.lt.s32.totalorder %v5707, %v6217
        %vm6465 = vcmp.lt.s32.totalorder %v5708, %v6217
        %vm6466 = vcmp.lt.s32.totalorder %v5709, %v6217
        %vm6467 = vcmp.lt.s32.totalorder %v5710, %v6217
        %vm6468 = vcmp.lt.s32.totalorder %v5711, %v6217
        %vm6469 = vcmp.lt.s32.totalorder %v5712, %v6217
        %vm6470 = vcmp.lt.s32.totalorder %v5713, %v6217
        %vm6471 = vcmp.lt.s32.totalorder %v5714, %v6217
        %vm6472 = vcmp.lt.s32.totalorder %v5715, %v6217
        %vm6473 = vcmp.lt.s32.totalorder %v5716, %v6217
        %vm6474 = vcmp.lt.s32.totalorder %v5717, %v6217
        %vm6475 = vcmp.lt.s32.totalorder %v5718, %v6217
        %vm6476 = vcmp.lt.s32.totalorder %v5719, %v6217
        %vm6477 = vcmp.lt.s32.totalorder %v5720, %v6217
        %vm6478 = vcmp.lt.s32.totalorder %v5721, %v6217
        %vm6479 = vcmp.lt.s32.totalorder %v5701, %v6218
        %vm6480 = vcmp.lt.s32.totalorder %v5702, %v6218
        %vm6481 = vcmp.lt.s32.totalorder %v5703, %v6218
        %vm6482 = vcmp.lt.s32.totalorder %v5704, %v6218
        %vm6483 = vcmp.lt.s32.totalorder %v5705, %v6218
        %vm6484 = vcmp.lt.s32.totalorder %v5706, %v6218
        %vm6485 = vcmp.lt.s32.totalorder %v5707, %v6218
        %vm6486 = vcmp.lt.s32.totalorder %v5708, %v6218
        %vm6487 = vcmp.lt.s32.totalorder %v5709, %v6218
        %vm6488 = vcmp.lt.s32.totalorder %v5710, %v6218
        %vm6489 = vcmp.lt.s32.totalorder %v5711, %v6218
        %vm6490 = vcmp.lt.s32.totalorder %v5712, %v6218
        %vm6491 = vcmp.lt.s32.totalorder %v5713, %v6218
        %vm6492 = vcmp.lt.s32.totalorder %v5714, %v6218
        %vm6493 = vcmp.lt.s32.totalorder %v5715, %v6218
        %vm6494 = vcmp.lt.s32.totalorder %v5716, %v6218
        %vm6495 = vcmp.lt.s32.totalorder %v5717, %v6218
        %vm6496 = vcmp.lt.s32.totalorder %v5718, %v6218
        %vm6497 = vcmp.lt.s32.totalorder %v5719, %v6218
        %vm6498 = vcmp.lt.s32.totalorder %v5720, %v6218
        %vm6499 = vcmp.lt.s32.totalorder %v5721, %v6218
        %vm6500 = vcmp.lt.s32.totalorder %v5701, %v6219
        %vm6501 = vcmp.lt.s32.totalorder %v5702, %v6219
        %vm6502 = vcmp.lt.s32.totalorder %v5703, %v6219
        %vm6503 = vcmp.lt.s32.totalorder %v5704, %v6219
        %vm6504 = vcmp.lt.s32.totalorder %v5705, %v6219
        %vm6505 = vcmp.lt.s32.totalorder %v5706, %v6219
        %vm6506 = vcmp.lt.s32.totalorder %v5707, %v6219
        %vm6507 = vcmp.lt.s32.totalorder %v5708, %v6219
        %vm6508 = vcmp.lt.s32.totalorder %v5709, %v6219
        %vm6509 = vcmp.lt.s32.totalorder %v5710, %v6219
        %vm6510 = vcmp.lt.s32.totalorder %v5711, %v6219
        %vm6511 = vcmp.lt.s32.totalorder %v5712, %v6219
        %vm6512 = vcmp.lt.s32.totalorder %v5713, %v6219
        %vm6513 = vcmp.lt.s32.totalorder %v5714, %v6219
        %vm6514 = vcmp.lt.s32.totalorder %v5715, %v6219
        %vm6515 = vcmp.lt.s32.totalorder %v5716, %v6219
        %vm6516 = vcmp.lt.s32.totalorder %v5717, %v6219
        %vm6517 = vcmp.lt.s32.totalorder %v5718, %v6219
        %vm6518 = vcmp.lt.s32.totalorder %v5719, %v6219
        %vm6519 = vcmp.lt.s32.totalorder %v5720, %v6219
        %vm6520 = vcmp.lt.s32.totalorder %v5721, %v6219
        %vm6521 = vcmp.lt.s32.totalorder %v5701, %v6220
        %vm6522 = vcmp.lt.s32.totalorder %v5702, %v6220
        %vm6523 = vcmp.lt.s32.totalorder %v5703, %v6220
        %vm6524 = vcmp.lt.s32.totalorder %v5704, %v6220
        %vm6525 = vcmp.lt.s32.totalorder %v5705, %v6220
        %vm6526 = vcmp.lt.s32.totalorder %v5706, %v6220
        %vm6527 = vcmp.lt.s32.totalorder %v5707, %v6220
        %vm6528 = vcmp.lt.s32.totalorder %v5708, %v6220
        %vm6529 = vcmp.lt.s32.totalorder %v5709, %v6220
        %vm6530 = vcmp.lt.s32.totalorder %v5710, %v6220
        %vm6531 = vcmp.lt.s32.totalorder %v5711, %v6220
        %vm6532 = vcmp.lt.s32.totalorder %v5712, %v6220
        %vm6533 = vcmp.lt.s32.totalorder %v5713, %v6220
        %vm6534 = vcmp.lt.s32.totalorder %v5714, %v6220
        %vm6535 = vcmp.lt.s32.totalorder %v5715, %v6220
        %vm6536 = vcmp.lt.s32.totalorder %v5716, %v6220
        %vm6537 = vcmp.lt.s32.totalorder %v5717, %v6220
        %vm6538 = vcmp.lt.s32.totalorder %v5718, %v6220
        %vm6539 = vcmp.lt.s32.totalorder %v5719, %v6220
        %vm6540 = vcmp.lt.s32.totalorder %v5720, %v6220
        %vm6541 = vcmp.lt.s32.totalorder %v5721, %v6220
        %vm6542 = vcmp.lt.s32.totalorder %v5701, %v6221
        %vm6543 = vcmp.lt.s32.totalorder %v5702, %v6221
        %vm6544 = vcmp.lt.s32.totalorder %v5703, %v6221
        %vm6545 = vcmp.lt.s32.totalorder %v5704, %v6221
        %vm6546 = vcmp.lt.s32.totalorder %v5705, %v6221
        %vm6547 = vcmp.lt.s32.totalorder %v5706, %v6221
        %vm6548 = vcmp.lt.s32.totalorder %v5707, %v6221
        %vm6549 = vcmp.lt.s32.totalorder %v5708, %v6221
        %vm6550 = vcmp.lt.s32.totalorder %v5709, %v6221
        %vm6551 = vcmp.lt.s32.totalorder %v5710, %v6221
        %vm6552 = vcmp.lt.s32.totalorder %v5711, %v6221
        %vm6553 = vcmp.lt.s32.totalorder %v5712, %v6221
        %vm6554 = vcmp.lt.s32.totalorder %v5713, %v6221
        %vm6555 = vcmp.lt.s32.totalorder %v5714, %v6221
        %vm6556 = vcmp.lt.s32.totalorder %v5715, %v6221
        %vm6557 = vcmp.lt.s32.totalorder %v5716, %v6221
        %vm6558 = vcmp.lt.s32.totalorder %v5717, %v6221
        %vm6559 = vcmp.lt.s32.totalorder %v5718, %v6221
        %vm6560 = vcmp.lt.s32.totalorder %v5719, %v6221
        %vm6561 = vcmp.lt.s32.totalorder %v5720, %v6221
        %vm6562 = vcmp.lt.s32.totalorder %v5721, %v6221
        %vm6563 = vcmp.lt.s32.totalorder %v5701, %v6222
        %vm6564 = vcmp.lt.s32.totalorder %v5702, %v6222
        %vm6565 = vcmp.lt.s32.totalorder %v5703, %v6222
        %vm6566 = vcmp.lt.s32.totalorder %v5704, %v6222
        %vm6567 = vcmp.lt.s32.totalorder %v5705, %v6222
        %vm6568 = vcmp.lt.s32.totalorder %v5706, %v6222
        %vm6569 = vcmp.lt.s32.totalorder %v5707, %v6222
        %vm6570 = vcmp.lt.s32.totalorder %v5708, %v6222
        %vm6571 = vcmp.lt.s32.totalorder %v5709, %v6222
        %vm6572 = vcmp.lt.s32.totalorder %v5710, %v6222
        %vm6573 = vcmp.lt.s32.totalorder %v5711, %v6222
        %vm6574 = vcmp.lt.s32.totalorder %v5712, %v6222
        %vm6575 = vcmp.lt.s32.totalorder %v5713, %v6222
        %vm6576 = vcmp.lt.s32.totalorder %v5714, %v6222
        %vm6577 = vcmp.lt.s32.totalorder %v5715, %v6222
        %vm6578 = vcmp.lt.s32.totalorder %v5716, %v6222
        %vm6579 = vcmp.lt.s32.totalorder %v5717, %v6222
        %vm6580 = vcmp.lt.s32.totalorder %v5718, %v6222
        %vm6581 = vcmp.lt.s32.totalorder %v5719, %v6222
        %vm6582 = vcmp.lt.s32.totalorder %v5720, %v6222
        %vm6583 = vcmp.lt.s32.totalorder %v5721, %v6222
        %vm6584 = vcmp.lt.s32.totalorder %v5701, %v6223
        %vm6585 = vcmp.lt.s32.totalorder %v5702, %v6223
        %vm6586 = vcmp.lt.s32.totalorder %v5703, %v6223
        %vm6587 = vcmp.lt.s32.totalorder %v5704, %v6223
        %vm6588 = vcmp.lt.s32.totalorder %v5705, %v6223
        %vm6589 = vcmp.lt.s32.totalorder %v5706, %v6223
        %vm6590 = vcmp.lt.s32.totalorder %v5707, %v6223
        %vm6591 = vcmp.lt.s32.totalorder %v5708, %v6223
        %vm6592 = vcmp.lt.s32.totalorder %v5709, %v6223
        %vm6593 = vcmp.lt.s32.totalorder %v5710, %v6223
        %vm6594 = vcmp.lt.s32.totalorder %v5711, %v6223
        %vm6595 = vcmp.lt.s32.totalorder %v5712, %v6223
        %vm6596 = vcmp.lt.s32.totalorder %v5713, %v6223
        %vm6597 = vcmp.lt.s32.totalorder %v5714, %v6223
        %vm6598 = vcmp.lt.s32.totalorder %v5715, %v6223
        %vm6599 = vcmp.lt.s32.totalorder %v5716, %v6223
        %vm6600 = vcmp.lt.s32.totalorder %v5717, %v6223
        %vm6601 = vcmp.lt.s32.totalorder %v5718, %v6223
        %vm6602 = vcmp.lt.s32.totalorder %v5719, %v6223
        %vm6603 = vcmp.lt.s32.totalorder %v5720, %v6223
        %vm6604 = vcmp.lt.s32.totalorder %v5721, %v6223
        %vm6605 = vcmp.lt.s32.totalorder %v5701, %v6224
        %vm6606 = vcmp.lt.s32.totalorder %v5702, %v6224
        %vm6607 = vcmp.lt.s32.totalorder %v5703, %v6224
        %vm6608 = vcmp.lt.s32.totalorder %v5704, %v6224
        %vm6609 = vcmp.lt.s32.totalorder %v5705, %v6224
        %vm6610 = vcmp.lt.s32.totalorder %v5706, %v6224
        %vm6611 = vcmp.lt.s32.totalorder %v5707, %v6224
        %vm6612 = vcmp.lt.s32.totalorder %v5708, %v6224
        %vm6613 = vcmp.lt.s32.totalorder %v5709, %v6224
        %vm6614 = vcmp.lt.s32.totalorder %v5710, %v6224
        %vm6615 = vcmp.lt.s32.totalorder %v5711, %v6224
        %vm6616 = vcmp.lt.s32.totalorder %v5712, %v6224
        %vm6617 = vcmp.lt.s32.totalorder %v5713, %v6224
        %vm6618 = vcmp.lt.s32.totalorder %v5714, %v6224
        %vm6619 = vcmp.lt.s32.totalorder %v5715, %v6224
        %vm6620 = vcmp.lt.s32.totalorder %v5716, %v6224
        %vm6621 = vcmp.lt.s32.totalorder %v5717, %v6224
        %vm6622 = vcmp.lt.s32.totalorder %v5718, %v6224
        %vm6623 = vcmp.lt.s32.totalorder %v5719, %v6224
        %vm6624 = vcmp.lt.s32.totalorder %v5720, %v6224
        %vm6625 = vcmp.lt.s32.totalorder %v5721, %v6224
        %vm6626 = vcmp.lt.s32.totalorder %v5701, %v6225
        %vm6627 = vcmp.lt.s32.totalorder %v5702, %v6225
        %vm6628 = vcmp.lt.s32.totalorder %v5703, %v6225
        %vm6629 = vcmp.lt.s32.totalorder %v5704, %v6225
        %vm6630 = vcmp.lt.s32.totalorder %v5705, %v6225
        %vm6631 = vcmp.lt.s32.totalorder %v5706, %v6225
        %vm6632 = vcmp.lt.s32.totalorder %v5707, %v6225
        %vm6633 = vcmp.lt.s32.totalorder %v5708, %v6225
        %vm6634 = vcmp.lt.s32.totalorder %v5709, %v6225
        %vm6635 = vcmp.lt.s32.totalorder %v5710, %v6225
        %vm6636 = vcmp.lt.s32.totalorder %v5711, %v6225
        %vm6637 = vcmp.lt.s32.totalorder %v5712, %v6225
        %vm6638 = vcmp.lt.s32.totalorder %v5713, %v6225
        %vm6639 = vcmp.lt.s32.totalorder %v5714, %v6225
        %vm6640 = vcmp.lt.s32.totalorder %v5715, %v6225
        %vm6641 = vcmp.lt.s32.totalorder %v5716, %v6225
        %vm6642 = vcmp.lt.s32.totalorder %v5717, %v6225
        %vm6643 = vcmp.lt.s32.totalorder %v5718, %v6225
        %vm6644 = vcmp.lt.s32.totalorder %v5719, %v6225
        %vm6645 = vcmp.lt.s32.totalorder %v5720, %v6225
        %vm6646 = vcmp.lt.s32.totalorder %v5721, %v6225
        %vm6647 = vcmp.lt.s32.totalorder %v5701, %v6226
        %vm6648 = vcmp.lt.s32.totalorder %v5702, %v6226
        %vm6649 = vcmp.lt.s32.totalorder %v5703, %v6226
        %vm6650 = vcmp.lt.s32.totalorder %v5704, %v6226
        %vm6651 = vcmp.lt.s32.totalorder %v5705, %v6226
        %vm6652 = vcmp.lt.s32.totalorder %v5706, %v6226
        %vm6653 = vcmp.lt.s32.totalorder %v5707, %v6226
        %vm6654 = vcmp.lt.s32.totalorder %v5708, %v6226
        %vm6655 = vcmp.lt.s32.totalorder %v5709, %v6226
        %vm6656 = vcmp.lt.s32.totalorder %v5710, %v6226
        %vm6657 = vcmp.lt.s32.totalorder %v5711, %v6226
        %vm6658 = vcmp.lt.s32.totalorder %v5712, %v6226
        %vm6659 = vcmp.lt.s32.totalorder %v5713, %v6226
        %vm6660 = vcmp.lt.s32.totalorder %v5714, %v6226
        %vm6661 = vcmp.lt.s32.totalorder %v5715, %v6226
        %vm6662 = vcmp.lt.s32.totalorder %v5716, %v6226
        %vm6663 = vcmp.lt.s32.totalorder %v5717, %v6226
        %vm6664 = vcmp.lt.s32.totalorder %v5718, %v6226
        %vm6665 = vcmp.lt.s32.totalorder %v5719, %v6226
        %vm6666 = vcmp.lt.s32.totalorder %v5720, %v6226
        %vm6667 = vcmp.lt.s32.totalorder %v5721, %v6226
        %vm6668 = vmand %vm5765, %vm6227
        %vm6669 = vmand %vm5766, %vm6228
        %vm6670 = vmand %vm5767, %vm6229
        %vm6671 = vmand %vm5768, %vm6230
        %vm6672 = vmand %vm5769, %vm6231
        %vm6673 = vmand %vm5770, %vm6232
        %vm6674 = vmand %vm5771, %vm6233
        %vm6675 = vmand %vm5772, %vm6234
        %vm6676 = vmand %vm5773, %vm6235
        %vm6677 = vmand %vm5774, %vm6236
        %vm6678 = vmand %vm5775, %vm6237
        %vm6679 = vmand %vm5776, %vm6238
        %vm6680 = vmand %vm5777, %vm6239
        %vm6681 = vmand %vm5778, %vm6240
        %vm6682 = vmand %vm5779, %vm6241
        %vm6683 = vmand %vm5780, %vm6242
        %vm6684 = vmand %vm5781, %vm6243
        %vm6685 = vmand %vm5782, %vm6244
        %vm6686 = vmand %vm5783, %vm6245
        %vm6687 = vmand %vm5784, %vm6246
        %vm6688 = vmand %vm5785, %vm6247
        %vm6689 = vmand %vm5786, %vm6248
        %vm6690 = vmand %vm5787, %vm6249
        %vm6691 = vmand %vm5788, %vm6250
        %vm6692 = vmand %vm5789, %vm6251
        %vm6693 = vmand %vm5790, %vm6252
        %vm6694 = vmand %vm5791, %vm6253
        %vm6695 = vmand %vm5792, %vm6254
        %vm6696 = vmand %vm5793, %vm6255
        %vm6697 = vmand %vm5794, %vm6256
        %vm6698 = vmand %vm5795, %vm6257
        %vm6699 = vmand %vm5796, %vm6258
        %vm6700 = vmand %vm5797, %vm6259
        %vm6701 = vmand %vm5798, %vm6260
        %vm6702 = vmand %vm5799, %vm6261
        %vm6703 = vmand %vm5800, %vm6262
        %vm6704 = vmand %vm5801, %vm6263
        %vm6705 = vmand %vm5802, %vm6264
        %vm6706 = vmand %vm5803, %vm6265
        %vm6707 = vmand %vm5804, %vm6266
        %vm6708 = vmand %vm5805, %vm6267
        %vm6709 = vmand %vm5806, %vm6268
        %vm6710 = vmand %vm5807, %vm6269
        %vm6711 = vmand %vm5808, %vm6270
        %vm6712 = vmand %vm5809, %vm6271
        %vm6713 = vmand %vm5810, %vm6272
        %vm6714 = vmand %vm5811, %vm6273
        %vm6715 = vmand %vm5812, %vm6274
        %vm6716 = vmand %vm5813, %vm6275
        %vm6717 = vmand %vm5814, %vm6276
        %vm6718 = vmand %vm5815, %vm6277
        %vm6719 = vmand %vm5816, %vm6278
        %vm6720 = vmand %vm5817, %vm6279
        %vm6721 = vmand %vm5818, %vm6280
        %vm6722 = vmand %vm5819, %vm6281
        %vm6723 = vmand %vm5820, %vm6282
        %vm6724 = vmand %vm5821, %vm6283
        %vm6725 = vmand %vm5822, %vm6284
        %vm6726 = vmand %vm5823, %vm6285
        %vm6727 = vmand %vm5824, %vm6286
        %vm6728 = vmand %vm5825, %vm6287
        %vm6729 = vmand %vm5826, %vm6288
        %vm6730 = vmand %vm5827, %vm6289
        %vm6731 = vmand %vm5828, %vm6290
        %vm6732 = vmand %vm5829, %vm6291
        %vm6733 = vmand %vm5830, %vm6292
        %vm6734 = vmand %vm5831, %vm6293
        %vm6735 = vmand %vm5832, %vm6294
        %vm6736 = vmand %vm5833, %vm6295
        %vm6737 = vmand %vm5834, %vm6296
        %vm6738 = vmand %vm5835, %vm6297
        %vm6739 = vmand %vm5836, %vm6298
        %vm6740 = vmand %vm5837, %vm6299
        %vm6741 = vmand %vm5838, %vm6300
        %vm6742 = vmand %vm5839, %vm6301
        %vm6743 = vmand %vm5840, %vm6302
        %vm6744 = vmand %vm5841, %vm6303
        %vm6745 = vmand %vm5842, %vm6304
        %vm6746 = vmand %vm5843, %vm6305
        %vm6747 = vmand %vm5844, %vm6306
        %vm6748 = vmand %vm5845, %vm6307
        %vm6749 = vmand %vm5846, %vm6308
        %vm6750 = vmand %vm5847, %vm6309
        %vm6751 = vmand %vm5848, %vm6310
        %vm6752 = vmand %vm5849, %vm6311
        %vm6753 = vmand %vm5850, %vm6312
        %vm6754 = vmand %vm5851, %vm6313
        %vm6755 = vmand %vm5852, %vm6314
        %vm6756 = vmand %vm5853, %vm6315
        %vm6757 = vmand %vm5854, %vm6316
        %vm6758 = vmand %vm5855, %vm6317
        %vm6759 = vmand %vm5856, %vm6318
        %vm6760 = vmand %vm5857, %vm6319
        %vm6761 = vmand %vm5858, %vm6320
        %vm6762 = vmand %vm5859, %vm6321
        %vm6763 = vmand %vm5860, %vm6322
        %vm6764 = vmand %vm5861, %vm6323
        %vm6765 = vmand %vm5862, %vm6324
        %vm6766 = vmand %vm5863, %vm6325
        %vm6767 = vmand %vm5864, %vm6326
        %vm6768 = vmand %vm5865, %vm6327
        %vm6769 = vmand %vm5866, %vm6328
        %vm6770 = vmand %vm5867, %vm6329
        %vm6771 = vmand %vm5868, %vm6330
        %vm6772 = vmand %vm5869, %vm6331
        %vm6773 = vmand %vm5870, %vm6332
        %vm6774 = vmand %vm5871, %vm6333
        %vm6775 = vmand %vm5872, %vm6334
        %vm6776 = vmand %vm5873, %vm6335
        %vm6777 = vmand %vm5874, %vm6336
        %vm6778 = vmand %vm5875, %vm6337
        %vm6779 = vmand %vm5876, %vm6338
        %vm6780 = vmand %vm5877, %vm6339
        %vm6781 = vmand %vm5878, %vm6340
        %vm6782 = vmand %vm5879, %vm6341
        %vm6783 = vmand %vm5880, %vm6342
        %vm6784 = vmand %vm5881, %vm6343
        %vm6785 = vmand %vm5882, %vm6344
        %vm6786 = vmand %vm5883, %vm6345
        %vm6787 = vmand %vm5884, %vm6346
        %vm6788 = vmand %vm5885, %vm6347
        %vm6789 = vmand %vm5886, %vm6348
        %vm6790 = vmand %vm5887, %vm6349
        %vm6791 = vmand %vm5888, %vm6350
        %vm6792 = vmand %vm5889, %vm6351
        %vm6793 = vmand %vm5890, %vm6352
        %vm6794 = vmand %vm5891, %vm6353
        %vm6795 = vmand %vm5892, %vm6354
        %vm6796 = vmand %vm5893, %vm6355
        %vm6797 = vmand %vm5894, %vm6356
        %vm6798 = vmand %vm5895, %vm6357
        %vm6799 = vmand %vm5896, %vm6358
        %vm6800 = vmand %vm5897, %vm6359
        %vm6801 = vmand %vm5898, %vm6360
        %vm6802 = vmand %vm5899, %vm6361
        %vm6803 = vmand %vm5900, %vm6362
        %vm6804 = vmand %vm5901, %vm6363
        %vm6805 = vmand %vm5902, %vm6364
        %vm6806 = vmand %vm5903, %vm6365
        %vm6807 = vmand %vm5904, %vm6366
        %vm6808 = vmand %vm5905, %vm6367
        %vm6809 = vmand %vm5906, %vm6368
        %vm6810 = vmand %vm5907, %vm6369
        %vm6811 = vmand %vm5908, %vm6370
        %vm6812 = vmand %vm5909, %vm6371
        %vm6813 = vmand %vm5910, %vm6372
        %vm6814 = vmand %vm5911, %vm6373
        %vm6815 = vmand %vm5912, %vm6374
        %vm6816 = vmand %vm5913, %vm6375
        %vm6817 = vmand %vm5914, %vm6376
        %vm6818 = vmand %vm5915, %vm6377
        %vm6819 = vmand %vm5916, %vm6378
        %vm6820 = vmand %vm5917, %vm6379
        %vm6821 = vmand %vm5918, %vm6380
        %vm6822 = vmand %vm5919, %vm6381
        %vm6823 = vmand %vm5920, %vm6382
        %vm6824 = vmand %vm5921, %vm6383
        %vm6825 = vmand %vm5922, %vm6384
        %vm6826 = vmand %vm5923, %vm6385
        %vm6827 = vmand %vm5924, %vm6386
        %vm6828 = vmand %vm5925, %vm6387
        %vm6829 = vmand %vm5926, %vm6388
        %vm6830 = vmand %vm5927, %vm6389
        %vm6831 = vmand %vm5928, %vm6390
        %vm6832 = vmand %vm5929, %vm6391
        %vm6833 = vmand %vm5930, %vm6392
        %vm6834 = vmand %vm5931, %vm6393
        %vm6835 = vmand %vm5932, %vm6394
        %vm6836 = vmand %vm5933, %vm6395
        %vm6837 = vmand %vm5934, %vm6396
        %vm6838 = vmand %vm5935, %vm6397
        %vm6839 = vmand %vm5936, %vm6398
        %vm6840 = vmand %vm5937, %vm6399
        %vm6841 = vmand %vm5938, %vm6400
        %vm6842 = vmand %vm5939, %vm6401
        %vm6843 = vmand %vm5940, %vm6402
        %vm6844 = vmand %vm5941, %vm6403
        %vm6845 = vmand %vm5942, %vm6404
        %vm6846 = vmand %vm5943, %vm6405
        %vm6847 = vmand %vm5944, %vm6406
        %vm6848 = vmand %vm5945, %vm6407
        %vm6849 = vmand %vm5946, %vm6408
        %vm6850 = vmand %vm5947, %vm6409
        %vm6851 = vmand %vm5948, %vm6410
        %vm6852 = vmand %vm5949, %vm6411
        %vm6853 = vmand %vm5950, %vm6412
        %vm6854 = vmand %vm5951, %vm6413
        %vm6855 = vmand %vm5952, %vm6414
        %vm6856 = vmand %vm5953, %vm6415
        %vm6857 = vmand %vm5954, %vm6416
        %vm6858 = vmand %vm5955, %vm6417
        %vm6859 = vmand %vm5956, %vm6418
        %vm6860 = vmand %vm5957, %vm6419
        %vm6861 = vmand %vm5958, %vm6420
        %vm6862 = vmand %vm5959, %vm6421
        %vm6863 = vmand %vm5960, %vm6422
        %vm6864 = vmand %vm5961, %vm6423
        %vm6865 = vmand %vm5962, %vm6424
        %vm6866 = vmand %vm5963, %vm6425
        %vm6867 = vmand %vm5964, %vm6426
        %vm6868 = vmand %vm5965, %vm6427
        %vm6869 = vmand %vm5966, %vm6428
        %vm6870 = vmand %vm5967, %vm6429
        %vm6871 = vmand %vm5968, %vm6430
        %vm6872 = vmand %vm5969, %vm6431
        %vm6873 = vmand %vm5970, %vm6432
        %vm6874 = vmand %vm5971, %vm6433
        %vm6875 = vmand %vm5972, %vm6434
        %vm6876 = vmand %vm5973, %vm6435
        %vm6877 = vmand %vm5974, %vm6436
        %vm6878 = vmand %vm5975, %vm6437
        %vm6879 = vmand %vm5976, %vm6438
        %vm6880 = vmand %vm5977, %vm6439
        %vm6881 = vmand %vm5978, %vm6440
        %vm6882 = vmand %vm5979, %vm6441
        %vm6883 = vmand %vm5980, %vm6442
        %vm6884 = vmand %vm5981, %vm6443
        %vm6885 = vmand %vm5982, %vm6444
        %vm6886 = vmand %vm5983, %vm6445
        %vm6887 = vmand %vm5984, %vm6446
        %vm6888 = vmand %vm5985, %vm6447
        %vm6889 = vmand %vm5986, %vm6448
        %vm6890 = vmand %vm5987, %vm6449
        %vm6891 = vmand %vm5988, %vm6450
        %vm6892 = vmand %vm5989, %vm6451
        %vm6893 = vmand %vm5990, %vm6452
        %vm6894 = vmand %vm5991, %vm6453
        %vm6895 = vmand %vm5992, %vm6454
        %vm6896 = vmand %vm5993, %vm6455
        %vm6897 = vmand %vm5994, %vm6456
        %vm6898 = vmand %vm5995, %vm6457
        %vm6899 = vmand %vm5996, %vm6458
        %vm6900 = vmand %vm5997, %vm6459
        %vm6901 = vmand %vm5998, %vm6460
        %vm6902 = vmand %vm5999, %vm6461
        %vm6903 = vmand %vm6000, %vm6462
        %vm6904 = vmand %vm6001, %vm6463
        %vm6905 = vmand %vm6002, %vm6464
        %vm6906 = vmand %vm6003, %vm6465
        %vm6907 = vmand %vm6004, %vm6466
        %vm6908 = vmand %vm6005, %vm6467
        %vm6909 = vmand %vm6006, %vm6468
        %vm6910 = vmand %vm6007, %vm6469
        %vm6911 = vmand %vm6008, %vm6470
        %vm6912 = vmand %vm6009, %vm6471
        %vm6913 = vmand %vm6010, %vm6472
        %vm6914 = vmand %vm6011, %vm6473
        %vm6915 = vmand %vm6012, %vm6474
        %vm6916 = vmand %vm6013, %vm6475
        %vm6917 = vmand %vm6014, %vm6476
        %vm6918 = vmand %vm6015, %vm6477
        %vm6919 = vmand %vm6016, %vm6478
        %vm6920 = vmand %vm6017, %vm6479
        %vm6921 = vmand %vm6018, %vm6480
        %vm6922 = vmand %vm6019, %vm6481
        %vm6923 = vmand %vm6020, %vm6482
        %vm6924 = vmand %vm6021, %vm6483
        %vm6925 = vmand %vm6022, %vm6484
        %vm6926 = vmand %vm6023, %vm6485
        %vm6927 = vmand %vm6024, %vm6486
        %vm6928 = vmand %vm6025, %vm6487
        %vm6929 = vmand %vm6026, %vm6488
        %vm6930 = vmand %vm6027, %vm6489
        %vm6931 = vmand %vm6028, %vm6490
        %vm6932 = vmand %vm6029, %vm6491
        %vm6933 = vmand %vm6030, %vm6492
        %vm6934 = vmand %vm6031, %vm6493
        %vm6935 = vmand %vm6032, %vm6494
        %vm6936 = vmand %vm6033, %vm6495
        %vm6937 = vmand %vm6034, %vm6496
        %vm6938 = vmand %vm6035, %vm6497
        %vm6939 = vmand %vm6036, %vm6498
        %vm6940 = vmand %vm6037, %vm6499
        %vm6941 = vmand %vm6038, %vm6500
        %vm6942 = vmand %vm6039, %vm6501
        %vm6943 = vmand %vm6040, %vm6502
        %vm6944 = vmand %vm6041, %vm6503
        %vm6945 = vmand %vm6042, %vm6504
        %vm6946 = vmand %vm6043, %vm6505
        %vm6947 = vmand %vm6044, %vm6506
        %vm6948 = vmand %vm6045, %vm6507
        %vm6949 = vmand %vm6046, %vm6508
        %vm6950 = vmand %vm6047, %vm6509
        %vm6951 = vmand %vm6048, %vm6510
        %vm6952 = vmand %vm6049, %vm6511
        %vm6953 = vmand %vm6050, %vm6512
        %vm6954 = vmand %vm6051, %vm6513
        %vm6955 = vmand %vm6052, %vm6514
        %vm6956 = vmand %vm6053, %vm6515
        %vm6957 = vmand %vm6054, %vm6516
        %vm6958 = vmand %vm6055, %vm6517
        %vm6959 = vmand %vm6056, %vm6518
        %vm6960 = vmand %vm6057, %vm6519
        %vm6961 = vmand %vm6058, %vm6520
        %vm6962 = vmand %vm6059, %vm6521
        %vm6963 = vmand %vm6060, %vm6522
        %vm6964 = vmand %vm6061, %vm6523
        %vm6965 = vmand %vm6062, %vm6524
        %vm6966 = vmand %vm6063, %vm6525
        %vm6967 = vmand %vm6064, %vm6526
        %vm6968 = vmand %vm6065, %vm6527
        %vm6969 = vmand %vm6066, %vm6528
        %vm6970 = vmand %vm6067, %vm6529
        %vm6971 = vmand %vm6068, %vm6530
        %vm6972 = vmand %vm6069, %vm6531
        %vm6973 = vmand %vm6070, %vm6532
        %vm6974 = vmand %vm6071, %vm6533
        %vm6975 = vmand %vm6072, %vm6534
        %vm6976 = vmand %vm6073, %vm6535
        %vm6977 = vmand %vm6074, %vm6536
        %vm6978 = vmand %vm6075, %vm6537
        %vm6979 = vmand %vm6076, %vm6538
        %vm6980 = vmand %vm6077, %vm6539
        %vm6981 = vmand %vm6078, %vm6540
        %vm6982 = vmand %vm6079, %vm6541
        %vm6983 = vmand %vm6080, %vm6542
        %vm6984 = vmand %vm6081, %vm6543
        %vm6985 = vmand %vm6082, %vm6544
        %vm6986 = vmand %vm6083, %vm6545
        %vm6987 = vmand %vm6084, %vm6546
        %vm6988 = vmand %vm6085, %vm6547
        %vm6989 = vmand %vm6086, %vm6548
        %vm6990 = vmand %vm6087, %vm6549
        %vm6991 = vmand %vm6088, %vm6550
        %vm6992 = vmand %vm6089, %vm6551
        %vm6993 = vmand %vm6090, %vm6552
        %vm6994 = vmand %vm6091, %vm6553
        %vm6995 = vmand %vm6092, %vm6554
        %vm6996 = vmand %vm6093, %vm6555
        %vm6997 = vmand %vm6094, %vm6556
        %vm6998 = vmand %vm6095, %vm6557
        %vm6999 = vmand %vm6096, %vm6558
        %vm7000 = vmand %vm6097, %vm6559
        %vm7001 = vmand %vm6098, %vm6560
        %vm7002 = vmand %vm6099, %vm6561
        %vm7003 = vmand %vm6100, %vm6562
        %vm7004 = vmand %vm6101, %vm6563
        %vm7005 = vmand %vm6102, %vm6564
        %vm7006 = vmand %vm6103, %vm6565
        %vm7007 = vmand %vm6104, %vm6566
        %vm7008 = vmand %vm6105, %vm6567
        %vm7009 = vmand %vm6106, %vm6568
        %vm7010 = vmand %vm6107, %vm6569
        %vm7011 = vmand %vm6108, %vm6570
        %vm7012 = vmand %vm6109, %vm6571
        %vm7013 = vmand %vm6110, %vm6572
        %vm7014 = vmand %vm6111, %vm6573
        %vm7015 = vmand %vm6112, %vm6574
        %vm7016 = vmand %vm6113, %vm6575
        %vm7017 = vmand %vm6114, %vm6576
        %vm7018 = vmand %vm6115, %vm6577
        %vm7019 = vmand %vm6116, %vm6578
        %vm7020 = vmand %vm6117, %vm6579
        %vm7021 = vmand %vm6118, %vm6580
        %vm7022 = vmand %vm6119, %vm6581
        %vm7023 = vmand %vm6120, %vm6582
        %vm7024 = vmand %vm6121, %vm6583
        %vm7025 = vmand %vm6122, %vm6584
        %vm7026 = vmand %vm6123, %vm6585
        %vm7027 = vmand %vm6124, %vm6586
        %vm7028 = vmand %vm6125, %vm6587
        %vm7029 = vmand %vm6126, %vm6588
        %vm7030 = vmand %vm6127, %vm6589
        %vm7031 = vmand %vm6128, %vm6590
        %vm7032 = vmand %vm6129, %vm6591
        %vm7033 = vmand %vm6130, %vm6592
        %vm7034 = vmand %vm6131, %vm6593
        %vm7035 = vmand %vm6132, %vm6594
        %vm7036 = vmand %vm6133, %vm6595
        %vm7037 = vmand %vm6134, %vm6596
        %vm7038 = vmand %vm6135, %vm6597
        %vm7039 = vmand %vm6136, %vm6598
        %vm7040 = vmand %vm6137, %vm6599
        %vm7041 = vmand %vm6138, %vm6600
        %vm7042 = vmand %vm6139, %vm6601
        %vm7043 = vmand %vm6140, %vm6602
        %vm7044 = vmand %vm6141, %vm6603
        %vm7045 = vmand %vm6142, %vm6604
        %vm7046 = vmand %vm6143, %vm6605
        %vm7047 = vmand %vm6144, %vm6606
        %vm7048 = vmand %vm6145, %vm6607
        %vm7049 = vmand %vm6146, %vm6608
        %vm7050 = vmand %vm6147, %vm6609
        %vm7051 = vmand %vm6148, %vm6610
        %vm7052 = vmand %vm6149, %vm6611
        %vm7053 = vmand %vm6150, %vm6612
        %vm7054 = vmand %vm6151, %vm6613
        %vm7055 = vmand %vm6152, %vm6614
        %vm7056 = vmand %vm6153, %vm6615
        %vm7057 = vmand %vm6154, %vm6616
        %vm7058 = vmand %vm6155, %vm6617
        %vm7059 = vmand %vm6156, %vm6618
        %vm7060 = vmand %vm6157, %vm6619
        %vm7061 = vmand %vm6158, %vm6620
        %vm7062 = vmand %vm6159, %vm6621
        %vm7063 = vmand %vm6160, %vm6622
        %vm7064 = vmand %vm6161, %vm6623
        %vm7065 = vmand %vm6162, %vm6624
        %vm7066 = vmand %vm6163, %vm6625
        %vm7067 = vmand %vm6164, %vm6626
        %vm7068 = vmand %vm6165, %vm6627
        %vm7069 = vmand %vm6166, %vm6628
        %vm7070 = vmand %vm6167, %vm6629
        %vm7071 = vmand %vm6168, %vm6630
        %vm7072 = vmand %vm6169, %vm6631
        %vm7073 = vmand %vm6170, %vm6632
        %vm7074 = vmand %vm6171, %vm6633
        %vm7075 = vmand %vm6172, %vm6634
        %vm7076 = vmand %vm6173, %vm6635
        %vm7077 = vmand %vm6174, %vm6636
        %vm7078 = vmand %vm6175, %vm6637
        %vm7079 = vmand %vm6176, %vm6638
        %vm7080 = vmand %vm6177, %vm6639
        %vm7081 = vmand %vm6178, %vm6640
        %vm7082 = vmand %vm6179, %vm6641
        %vm7083 = vmand %vm6180, %vm6642
        %vm7084 = vmand %vm6181, %vm6643
        %vm7085 = vmand %vm6182, %vm6644
        %vm7086 = vmand %vm6183, %vm6645
        %vm7087 = vmand %vm6184, %vm6646
        %vm7088 = vmand %vm6185, %vm6647
        %vm7089 = vmand %vm6186, %vm6648
        %vm7090 = vmand %vm6187, %vm6649
        %vm7091 = vmand %vm6188, %vm6650
        %vm7092 = vmand %vm6189, %vm6651
        %vm7093 = vmand %vm6190, %vm6652
        %vm7094 = vmand %vm6191, %vm6653
        %vm7095 = vmand %vm6192, %vm6654
        %vm7096 = vmand %vm6193, %vm6655
        %vm7097 = vmand %vm6194, %vm6656
        %vm7098 = vmand %vm6195, %vm6657
        %vm7099 = vmand %vm6196, %vm6658
        %vm7100 = vmand %vm6197, %vm6659
        %vm7101 = vmand %vm6198, %vm6660
        %vm7102 = vmand %vm6199, %vm6661
        %vm7103 = vmand %vm6200, %vm6662
        %vm7104 = vmand %vm6201, %vm6663
        %vm7105 = vmand %vm6202, %vm6664
        %vm7106 = vmand %vm6203, %vm6665
        %vm7107 = vmand %vm6204, %vm6666
        %vm7108 = vmand %vm6205, %vm6667
        %v7109 = vsel %vm6668, %v3687, 0.0
        %v7110 = vsel %vm6669, %v3689, 0.0
        %v7111 = vsel %vm6670, %v3878, 0.0
        %v7112 = vsel %vm6671, %v3880, 0.0
        %v7113 = vsel %vm6672, %v4069, 0.0
        %v7114 = vsel %vm6673, %v4071, 0.0
        %v7115 = vsel %vm6674, %v4260, 0.0
        %v7116 = vsel %vm6675, %v4262, 0.0
        %v7117 = vsel %vm6676, %v4451, 0.0
        %v7118 = vsel %vm6677, %v4453, 0.0
        %v7119 = vsel %vm6678, %v4642, 0.0
        %v7120 = vsel %vm6679, %v4644, 0.0
        %v7121 = vsel %vm6680, %v4833, 0.0
        %v7122 = vsel %vm6681, %v4835, 0.0
        %v7123 = vsel %vm6682, %v5024, 0.0
        %v7124 = vsel %vm6683, %v5026, 0.0
        %v7125 = vsel %vm6684, %v5215, 0.0
        %v7126 = vsel %vm6685, %v5217, 0.0
        %v7127 = vsel %vm6686, %v5406, 0.0
        %v7128 = vsel %vm6687, %v5408, 0.0
        %v7129 = vsel %vm6688, %v5597, 0.0
        %v7130 = vsel %vm6689, %v3693, 0.0
        %v7131 = vsel %vm6690, %v3695, 0.0
        %v7132 = vsel %vm6691, %v3884, 0.0
        %v7133 = vsel %vm6692, %v3886, 0.0
        %v7134 = vsel %vm6693, %v4075, 0.0
        %v7135 = vsel %vm6694, %v4077, 0.0
        %v7136 = vsel %vm6695, %v4266, 0.0
        %v7137 = vsel %vm6696, %v4268, 0.0
        %v7138 = vsel %vm6697, %v4457, 0.0
        %v7139 = vsel %vm6698, %v4459, 0.0
        %v7140 = vsel %vm6699, %v4648, 0.0
        %v7141 = vsel %vm6700, %v4650, 0.0
        %v7142 = vsel %vm6701, %v4839, 0.0
        %v7143 = vsel %vm6702, %v4841, 0.0
        %v7144 = vsel %vm6703, %v5030, 0.0
        %v7145 = vsel %vm6704, %v5032, 0.0
        %v7146 = vsel %vm6705, %v5221, 0.0
        %v7147 = vsel %vm6706, %v5223, 0.0
        %v7148 = vsel %vm6707, %v5412, 0.0
        %v7149 = vsel %vm6708, %v5414, 0.0
        %v7150 = vsel %vm6709, %v5602, 0.0
        %v7151 = vsel %vm6710, %v3699, 0.0
        %v7152 = vsel %vm6711, %v3701, 0.0
        %v7153 = vsel %vm6712, %v3890, 0.0
        %v7154 = vsel %vm6713, %v3892, 0.0
        %v7155 = vsel %vm6714, %v4081, 0.0
        %v7156 = vsel %vm6715, %v4083, 0.0
        %v7157 = vsel %vm6716, %v4272, 0.0
        %v7158 = vsel %vm6717, %v4274, 0.0
        %v7159 = vsel %vm6718, %v4463, 0.0
        %v7160 = vsel %vm6719, %v4465, 0.0
        %v7161 = vsel %vm6720, %v4654, 0.0
        %v7162 = vsel %vm6721, %v4656, 0.0
        %v7163 = vsel %vm6722, %v4845, 0.0
        %v7164 = vsel %vm6723, %v4847, 0.0
        %v7165 = vsel %vm6724, %v5036, 0.0
        %v7166 = vsel %vm6725, %v5038, 0.0
        %v7167 = vsel %vm6726, %v5227, 0.0
        %v7168 = vsel %vm6727, %v5229, 0.0
        %v7169 = vsel %vm6728, %v5418, 0.0
        %v7170 = vsel %vm6729, %v5420, 0.0
        %v7171 = vsel %vm6730, %v5607, 0.0
        %v7172 = vsel %vm6731, %v3705, 0.0
        %v7173 = vsel %vm6732, %v3707, 0.0
        %v7174 = vsel %vm6733, %v3896, 0.0
        %v7175 = vsel %vm6734, %v3898, 0.0
        %v7176 = vsel %vm6735, %v4087, 0.0
        %v7177 = vsel %vm6736, %v4089, 0.0
        %v7178 = vsel %vm6737, %v4278, 0.0
        %v7179 = vsel %vm6738, %v4280, 0.0
        %v7180 = vsel %vm6739, %v4469, 0.0
        %v7181 = vsel %vm6740, %v4471, 0.0
        %v7182 = vsel %vm6741, %v4660, 0.0
        %v7183 = vsel %vm6742, %v4662, 0.0
        %v7184 = vsel %vm6743, %v4851, 0.0
        %v7185 = vsel %vm6744, %v4853, 0.0
        %v7186 = vsel %vm6745, %v5042, 0.0
        %v7187 = vsel %vm6746, %v5044, 0.0
        %v7188 = vsel %vm6747, %v5233, 0.0
        %v7189 = vsel %vm6748, %v5235, 0.0
        %v7190 = vsel %vm6749, %v5424, 0.0
        %v7191 = vsel %vm6750, %v5426, 0.0
        %v7192 = vsel %vm6751, %v5612, 0.0
        %v7193 = vsel %vm6752, %v3711, 0.0
        %v7194 = vsel %vm6753, %v3713, 0.0
        %v7195 = vsel %vm6754, %v3902, 0.0
        %v7196 = vsel %vm6755, %v3904, 0.0
        %v7197 = vsel %vm6756, %v4093, 0.0
        %v7198 = vsel %vm6757, %v4095, 0.0
        %v7199 = vsel %vm6758, %v4284, 0.0
        %v7200 = vsel %vm6759, %v4286, 0.0
        %v7201 = vsel %vm6760, %v4475, 0.0
        %v7202 = vsel %vm6761, %v4477, 0.0
        %v7203 = vsel %vm6762, %v4666, 0.0
        %v7204 = vsel %vm6763, %v4668, 0.0
        %v7205 = vsel %vm6764, %v4857, 0.0
        %v7206 = vsel %vm6765, %v4859, 0.0
        %v7207 = vsel %vm6766, %v5048, 0.0
        %v7208 = vsel %vm6767, %v5050, 0.0
        %v7209 = vsel %vm6768, %v5239, 0.0
        %v7210 = vsel %vm6769, %v5241, 0.0
        %v7211 = vsel %vm6770, %v5430, 0.0
        %v7212 = vsel %vm6771, %v5432, 0.0
        %v7213 = vsel %vm6772, %v5617, 0.0
        %v7214 = vsel %vm6773, %v3717, 0.0
        %v7215 = vsel %vm6774, %v3719, 0.0
        %v7216 = vsel %vm6775, %v3908, 0.0
        %v7217 = vsel %vm6776, %v3910, 0.0
        %v7218 = vsel %vm6777, %v4099, 0.0
        %v7219 = vsel %vm6778, %v4101, 0.0
        %v7220 = vsel %vm6779, %v4290, 0.0
        %v7221 = vsel %vm6780, %v4292, 0.0
        %v7222 = vsel %vm6781, %v4481, 0.0
        %v7223 = vsel %vm6782, %v4483, 0.0
        %v7224 = vsel %vm6783, %v4672, 0.0
        %v7225 = vsel %vm6784, %v4674, 0.0
        %v7226 = vsel %vm6785, %v4863, 0.0
        %v7227 = vsel %vm6786, %v4865, 0.0
        %v7228 = vsel %vm6787, %v5054, 0.0
        %v7229 = vsel %vm6788, %v5056, 0.0
        %v7230 = vsel %vm6789, %v5245, 0.0
        %v7231 = vsel %vm6790, %v5247, 0.0
        %v7232 = vsel %vm6791, %v5436, 0.0
        %v7233 = vsel %vm6792, %v5438, 0.0
        %v7234 = vsel %vm6793, %v5622, 0.0
        %v7235 = vsel %vm6794, %v3723, 0.0
        %v7236 = vsel %vm6795, %v3725, 0.0
        %v7237 = vsel %vm6796, %v3914, 0.0
        %v7238 = vsel %vm6797, %v3916, 0.0
        %v7239 = vsel %vm6798, %v4105, 0.0
        %v7240 = vsel %vm6799, %v4107, 0.0
        %v7241 = vsel %vm6800, %v4296, 0.0
        %v7242 = vsel %vm6801, %v4298, 0.0
        %v7243 = vsel %vm6802, %v4487, 0.0
        %v7244 = vsel %vm6803, %v4489, 0.0
        %v7245 = vsel %vm6804, %v4678, 0.0
        %v7246 = vsel %vm6805, %v4680, 0.0
        %v7247 = vsel %vm6806, %v4869, 0.0
        %v7248 = vsel %vm6807, %v4871, 0.0
        %v7249 = vsel %vm6808, %v5060, 0.0
        %v7250 = vsel %vm6809, %v5062, 0.0
        %v7251 = vsel %vm6810, %v5251, 0.0
        %v7252 = vsel %vm6811, %v5253, 0.0
        %v7253 = vsel %vm6812, %v5442, 0.0
        %v7254 = vsel %vm6813, %v5444, 0.0
        %v7255 = vsel %vm6814, %v5627, 0.0
        %v7256 = vsel %vm6815, %v3729, 0.0
        %v7257 = vsel %vm6816, %v3731, 0.0
        %v7258 = vsel %vm6817, %v3920, 0.0
        %v7259 = vsel %vm6818, %v3922, 0.0
        %v7260 = vsel %vm6819, %v4111, 0.0
        %v7261 = vsel %vm6820, %v4113, 0.0
        %v7262 = vsel %vm6821, %v4302, 0.0
        %v7263 = vsel %vm6822, %v4304, 0.0
        %v7264 = vsel %vm6823, %v4493, 0.0
        %v7265 = vsel %vm6824, %v4495, 0.0
        %v7266 = vsel %vm6825, %v4684, 0.0
        %v7267 = vsel %vm6826, %v4686, 0.0
        %v7268 = vsel %vm6827, %v4875, 0.0
        %v7269 = vsel %vm6828, %v4877, 0.0
        %v7270 = vsel %vm6829, %v5066, 0.0
        %v7271 = vsel %vm6830, %v5068, 0.0
        %v7272 = vsel %vm6831, %v5257, 0.0
        %v7273 = vsel %vm6832, %v5259, 0.0
        %v7274 = vsel %vm6833, %v5448, 0.0
        %v7275 = vsel %vm6834, %v5450, 0.0
        %v7276 = vsel %vm6835, %v5632, 0.0
        %v7277 = vsel %vm6836, %v3735, 0.0
        %v7278 = vsel %vm6837, %v3737, 0.0
        %v7279 = vsel %vm6838, %v3926, 0.0
        %v7280 = vsel %vm6839, %v3928, 0.0
        %v7281 = vsel %vm6840, %v4117, 0.0
        %v7282 = vsel %vm6841, %v4119, 0.0
        %v7283 = vsel %vm6842, %v4308, 0.0
        %v7284 = vsel %vm6843, %v4310, 0.0
        %v7285 = vsel %vm6844, %v4499, 0.0
        %v7286 = vsel %vm6845, %v4501, 0.0
        %v7287 = vsel %vm6846, %v4690, 0.0
        %v7288 = vsel %vm6847, %v4692, 0.0
        %v7289 = vsel %vm6848, %v4881, 0.0
        %v7290 = vsel %vm6849, %v4883, 0.0
        %v7291 = vsel %vm6850, %v5072, 0.0
        %v7292 = vsel %vm6851, %v5074, 0.0
        %v7293 = vsel %vm6852, %v5263, 0.0
        %v7294 = vsel %vm6853, %v5265, 0.0
        %v7295 = vsel %vm6854, %v5454, 0.0
        %v7296 = vsel %vm6855, %v5456, 0.0
        %v7297 = vsel %vm6856, %v5637, 0.0
        %v7298 = vsel %vm6857, %v3741, 0.0
        %v7299 = vsel %vm6858, %v3743, 0.0
        %v7300 = vsel %vm6859, %v3932, 0.0
        %v7301 = vsel %vm6860, %v3934, 0.0
        %v7302 = vsel %vm6861, %v4123, 0.0
        %v7303 = vsel %vm6862, %v4125, 0.0
        %v7304 = vsel %vm6863, %v4314, 0.0
        %v7305 = vsel %vm6864, %v4316, 0.0
        %v7306 = vsel %vm6865, %v4505, 0.0
        %v7307 = vsel %vm6866, %v4507, 0.0
        %v7308 = vsel %vm6867, %v4696, 0.0
        %v7309 = vsel %vm6868, %v4698, 0.0
        %v7310 = vsel %vm6869, %v4887, 0.0
        %v7311 = vsel %vm6870, %v4889, 0.0
        %v7312 = vsel %vm6871, %v5078, 0.0
        %v7313 = vsel %vm6872, %v5080, 0.0
        %v7314 = vsel %vm6873, %v5269, 0.0
        %v7315 = vsel %vm6874, %v5271, 0.0
        %v7316 = vsel %vm6875, %v5460, 0.0
        %v7317 = vsel %vm6876, %v5462, 0.0
        %v7318 = vsel %vm6877, %v5642, 0.0
        %v7319 = vsel %vm6878, %v3747, 0.0
        %v7320 = vsel %vm6879, %v3749, 0.0
        %v7321 = vsel %vm6880, %v3938, 0.0
        %v7322 = vsel %vm6881, %v3940, 0.0
        %v7323 = vsel %vm6882, %v4129, 0.0
        %v7324 = vsel %vm6883, %v4131, 0.0
        %v7325 = vsel %vm6884, %v4320, 0.0
        %v7326 = vsel %vm6885, %v4322, 0.0
        %v7327 = vsel %vm6886, %v4511, 0.0
        %v7328 = vsel %vm6887, %v4513, 0.0
        %v7329 = vsel %vm6888, %v4702, 0.0
        %v7330 = vsel %vm6889, %v4704, 0.0
        %v7331 = vsel %vm6890, %v4893, 0.0
        %v7332 = vsel %vm6891, %v4895, 0.0
        %v7333 = vsel %vm6892, %v5084, 0.0
        %v7334 = vsel %vm6893, %v5086, 0.0
        %v7335 = vsel %vm6894, %v5275, 0.0
        %v7336 = vsel %vm6895, %v5277, 0.0
        %v7337 = vsel %vm6896, %v5466, 0.0
        %v7338 = vsel %vm6897, %v5468, 0.0
        %v7339 = vsel %vm6898, %v5647, 0.0
        %v7340 = vsel %vm6899, %v3753, 0.0
        %v7341 = vsel %vm6900, %v3755, 0.0
        %v7342 = vsel %vm6901, %v3944, 0.0
        %v7343 = vsel %vm6902, %v3946, 0.0
        %v7344 = vsel %vm6903, %v4135, 0.0
        %v7345 = vsel %vm6904, %v4137, 0.0
        %v7346 = vsel %vm6905, %v4326, 0.0
        %v7347 = vsel %vm6906, %v4328, 0.0
        %v7348 = vsel %vm6907, %v4517, 0.0
        %v7349 = vsel %vm6908, %v4519, 0.0
        %v7350 = vsel %vm6909, %v4708, 0.0
        %v7351 = vsel %vm6910, %v4710, 0.0
        %v7352 = vsel %vm6911, %v4899, 0.0
        %v7353 = vsel %vm6912, %v4901, 0.0
        %v7354 = vsel %vm6913, %v5090, 0.0
        %v7355 = vsel %vm6914, %v5092, 0.0
        %v7356 = vsel %vm6915, %v5281, 0.0
        %v7357 = vsel %vm6916, %v5283, 0.0
        %v7358 = vsel %vm6917, %v5472, 0.0
        %v7359 = vsel %vm6918, %v5474, 0.0
        %v7360 = vsel %vm6919, %v5652, 0.0
        %v7361 = vsel %vm6920, %v3759, 0.0
        %v7362 = vsel %vm6921, %v3761, 0.0
        %v7363 = vsel %vm6922, %v3950, 0.0
        %v7364 = vsel %vm6923, %v3952, 0.0
        %v7365 = vsel %vm6924, %v4141, 0.0
        %v7366 = vsel %vm6925, %v4143, 0.0
        %v7367 = vsel %vm6926, %v4332, 0.0
        %v7368 = vsel %vm6927, %v4334, 0.0
        %v7369 = vsel %vm6928, %v4523, 0.0
        %v7370 = vsel %vm6929, %v4525, 0.0
        %v7371 = vsel %vm6930, %v4714, 0.0
        %v7372 = vsel %vm6931, %v4716, 0.0
        %v7373 = vsel %vm6932, %v4905, 0.0
        %v7374 = vsel %vm6933, %v4907, 0.0
        %v7375 = vsel %vm6934, %v5096, 0.0
        %v7376 = vsel %vm6935, %v5098, 0.0
        %v7377 = vsel %vm6936, %v5287, 0.0
        %v7378 = vsel %vm6937, %v5289, 0.0
        %v7379 = vsel %vm6938, %v5478, 0.0
        %v7380 = vsel %vm6939, %v5480, 0.0
        %v7381 = vsel %vm6940, %v5657, 0.0
        %v7382 = vsel %vm6941, %v3765, 0.0
        %v7383 = vsel %vm6942, %v3767, 0.0
        %v7384 = vsel %vm6943, %v3956, 0.0
        %v7385 = vsel %vm6944, %v3958, 0.0
        %v7386 = vsel %vm6945, %v4147, 0.0
        %v7387 = vsel %vm6946, %v4149, 0.0
        %v7388 = vsel %vm6947, %v4338, 0.0
        %v7389 = vsel %vm6948, %v4340, 0.0
        %v7390 = vsel %vm6949, %v4529, 0.0
        %v7391 = vsel %vm6950, %v4531, 0.0
        %v7392 = vsel %vm6951, %v4720, 0.0
        %v7393 = vsel %vm6952, %v4722, 0.0
        %v7394 = vsel %vm6953, %v4911, 0.0
        %v7395 = vsel %vm6954, %v4913, 0.0
        %v7396 = vsel %vm6955, %v5102, 0.0
        %v7397 = vsel %vm6956, %v5104, 0.0
        %v7398 = vsel %vm6957, %v5293, 0.0
        %v7399 = vsel %vm6958, %v5295, 0.0
        %v7400 = vsel %vm6959, %v5484, 0.0
        %v7401 = vsel %vm6960, %v5486, 0.0
        %v7402 = vsel %vm6961, %v5662, 0.0
        %v7403 = vsel %vm6962, %v3771, 0.0
        %v7404 = vsel %vm6963, %v3773, 0.0
        %v7405 = vsel %vm6964, %v3962, 0.0
        %v7406 = vsel %vm6965, %v3964, 0.0
        %v7407 = vsel %vm6966, %v4153, 0.0
        %v7408 = vsel %vm6967, %v4155, 0.0
        %v7409 = vsel %vm6968, %v4344, 0.0
        %v7410 = vsel %vm6969, %v4346, 0.0
        %v7411 = vsel %vm6970, %v4535, 0.0
        %v7412 = vsel %vm6971, %v4537, 0.0
        %v7413 = vsel %vm6972, %v4726, 0.0
        %v7414 = vsel %vm6973, %v4728, 0.0
        %v7415 = vsel %vm6974, %v4917, 0.0
        %v7416 = vsel %vm6975, %v4919, 0.0
        %v7417 = vsel %vm6976, %v5108, 0.0
        %v7418 = vsel %vm6977, %v5110, 0.0
        %v7419 = vsel %vm6978, %v5299, 0.0
        %v7420 = vsel %vm6979, %v5301, 0.0
        %v7421 = vsel %vm6980, %v5490, 0.0
        %v7422 = vsel %vm6981, %v5492, 0.0
        %v7423 = vsel %vm6982, %v5667, 0.0
        %v7424 = vsel %vm6983, %v3777, 0.0
        %v7425 = vsel %vm6984, %v3779, 0.0
        %v7426 = vsel %vm6985, %v3968, 0.0
        %v7427 = vsel %vm6986, %v3970, 0.0
        %v7428 = vsel %vm6987, %v4159, 0.0
        %v7429 = vsel %vm6988, %v4161, 0.0
        %v7430 = vsel %vm6989, %v4350, 0.0
        %v7431 = vsel %vm6990, %v4352, 0.0
        %v7432 = vsel %vm6991, %v4541, 0.0
        %v7433 = vsel %vm6992, %v4543, 0.0
        %v7434 = vsel %vm6993, %v4732, 0.0
        %v7435 = vsel %vm6994, %v4734, 0.0
        %v7436 = vsel %vm6995, %v4923, 0.0
        %v7437 = vsel %vm6996, %v4925, 0.0
        %v7438 = vsel %vm6997, %v5114, 0.0
        %v7439 = vsel %vm6998, %v5116, 0.0
        %v7440 = vsel %vm6999, %v5305, 0.0
        %v7441 = vsel %vm7000, %v5307, 0.0
        %v7442 = vsel %vm7001, %v5496, 0.0
        %v7443 = vsel %vm7002, %v5498, 0.0
        %v7444 = vsel %vm7003, %v5672, 0.0
        %v7445 = vsel %vm7004, %v3783, 0.0
        %v7446 = vsel %vm7005, %v3785, 0.0
        %v7447 = vsel %vm7006, %v3974, 0.0
        %v7448 = vsel %vm7007, %v3976, 0.0
        %v7449 = vsel %vm7008, %v4165, 0.0
        %v7450 = vsel %vm7009, %v4167, 0.0
        %v7451 = vsel %vm7010, %v4356, 0.0
        %v7452 = vsel %vm7011, %v4358, 0.0
        %v7453 = vsel %vm7012, %v4547, 0.0
        %v7454 = vsel %vm7013, %v4549, 0.0
        %v7455 = vsel %vm7014, %v4738, 0.0
        %v7456 = vsel %vm7015, %v4740, 0.0
        %v7457 = vsel %vm7016, %v4929, 0.0
        %v7458 = vsel %vm7017, %v4931, 0.0
        %v7459 = vsel %vm7018, %v5120, 0.0
        %v7460 = vsel %vm7019, %v5122, 0.0
        %v7461 = vsel %vm7020, %v5311, 0.0
        %v7462 = vsel %vm7021, %v5313, 0.0
        %v7463 = vsel %vm7022, %v5502, 0.0
        %v7464 = vsel %vm7023, %v5504, 0.0
        %v7465 = vsel %vm7024, %v5677, 0.0
        %v7466 = vsel %vm7025, %v3789, 0.0
        %v7467 = vsel %vm7026, %v3791, 0.0
        %v7468 = vsel %vm7027, %v3980, 0.0
        %v7469 = vsel %vm7028, %v3982, 0.0
        %v7470 = vsel %vm7029, %v4171, 0.0
        %v7471 = vsel %vm7030, %v4173, 0.0
        %v7472 = vsel %vm7031, %v4362, 0.0
        %v7473 = vsel %vm7032, %v4364, 0.0
        %v7474 = vsel %vm7033, %v4553, 0.0
        %v7475 = vsel %vm7034, %v4555, 0.0
        %v7476 = vsel %vm7035, %v4744, 0.0
        %v7477 = vsel %vm7036, %v4746, 0.0
        %v7478 = vsel %vm7037, %v4935, 0.0
        %v7479 = vsel %vm7038, %v4937, 0.0
        %v7480 = vsel %vm7039, %v5126, 0.0
        %v7481 = vsel %vm7040, %v5128, 0.0
        %v7482 = vsel %vm7041, %v5317, 0.0
        %v7483 = vsel %vm7042, %v5319, 0.0
        %v7484 = vsel %vm7043, %v5508, 0.0
        %v7485 = vsel %vm7044, %v5510, 0.0
        %v7486 = vsel %vm7045, %v5682, 0.0
        %v7487 = vsel %vm7046, %v3795, 0.0
        %v7488 = vsel %vm7047, %v3797, 0.0
        %v7489 = vsel %vm7048, %v3986, 0.0
        %v7490 = vsel %vm7049, %v3988, 0.0
        %v7491 = vsel %vm7050, %v4177, 0.0
        %v7492 = vsel %vm7051, %v4179, 0.0
        %v7493 = vsel %vm7052, %v4368, 0.0
        %v7494 = vsel %vm7053, %v4370, 0.0
        %v7495 = vsel %vm7054, %v4559, 0.0
        %v7496 = vsel %vm7055, %v4561, 0.0
        %v7497 = vsel %vm7056, %v4750, 0.0
        %v7498 = vsel %vm7057, %v4752, 0.0
        %v7499 = vsel %vm7058, %v4941, 0.0
        %v7500 = vsel %vm7059, %v4943, 0.0
        %v7501 = vsel %vm7060, %v5132, 0.0
        %v7502 = vsel %vm7061, %v5134, 0.0
        %v7503 = vsel %vm7062, %v5323, 0.0
        %v7504 = vsel %vm7063, %v5325, 0.0
        %v7505 = vsel %vm7064, %v5514, 0.0
        %v7506 = vsel %vm7065, %v5516, 0.0
        %v7507 = vsel %vm7066, %v5687, 0.0
        %v7508 = vsel %vm7067, %v3801, 0.0
        %v7509 = vsel %vm7068, %v3803, 0.0
        %v7510 = vsel %vm7069, %v3992, 0.0
        %v7511 = vsel %vm7070, %v3994, 0.0
        %v7512 = vsel %vm7071, %v4183, 0.0
        %v7513 = vsel %vm7072, %v4185, 0.0
        %v7514 = vsel %vm7073, %v4374, 0.0
        %v7515 = vsel %vm7074, %v4376, 0.0
        %v7516 = vsel %vm7075, %v4565, 0.0
        %v7517 = vsel %vm7076, %v4567, 0.0
        %v7518 = vsel %vm7077, %v4756, 0.0
        %v7519 = vsel %vm7078, %v4758, 0.0
        %v7520 = vsel %vm7079, %v4947, 0.0
        %v7521 = vsel %vm7080, %v4949, 0.0
        %v7522 = vsel %vm7081, %v5138, 0.0
        %v7523 = vsel %vm7082, %v5140, 0.0
        %v7524 = vsel %vm7083, %v5329, 0.0
        %v7525 = vsel %vm7084, %v5331, 0.0
        %v7526 = vsel %vm7085, %v5520, 0.0
        %v7527 = vsel %vm7086, %v5522, 0.0
        %v7528 = vsel %vm7087, %v5692, 0.0
        %v7529 = vsel %vm7088, %v3807, 0.0
        %v7530 = vsel %vm7089, %v3809, 0.0
        %v7531 = vsel %vm7090, %v3998, 0.0
        %v7532 = vsel %vm7091, %v4000, 0.0
        %v7533 = vsel %vm7092, %v4189, 0.0
        %v7534 = vsel %vm7093, %v4191, 0.0
        %v7535 = vsel %vm7094, %v4380, 0.0
        %v7536 = vsel %vm7095, %v4382, 0.0
        %v7537 = vsel %vm7096, %v4571, 0.0
        %v7538 = vsel %vm7097, %v4573, 0.0
        %v7539 = vsel %vm7098, %v4762, 0.0
        %v7540 = vsel %vm7099, %v4764, 0.0
        %v7541 = vsel %vm7100, %v4953, 0.0
        %v7542 = vsel %vm7101, %v4955, 0.0
        %v7543 = vsel %vm7102, %v5144, 0.0
        %v7544 = vsel %vm7103, %v5146, 0.0
        %v7545 = vsel %vm7104, %v5335, 0.0
        %v7546 = vsel %vm7105, %v5337, 0.0
        %v7547 = vsel %vm7106, %v5526, 0.0
        %v7548 = vsel %vm7107, %v5528, 0.0
        %v7549 = vsel %vm7108, %v5697, 0.0
        %v7550 = vadd.f32 %v7109, %v7130
        %v7551 = vadd.f32 %v7550, %v7151
        %v7552 = vadd.f32 %v7551, %v7172
        %v7553 = vadd.f32 %v7552, %v7193
        %v7554 = vadd.f32 %v7553, %v7214
        %v7555 = vadd.f32 %v7554, %v7235
        %v7556 = vadd.f32 %v7555, %v7256
        %v7557 = vadd.f32 %v7556, %v7277
        %v7558 = vadd.f32 %v7557, %v7298
        %v7559 = vadd.f32 %v7558, %v7319
        %v7560 = vadd.f32 %v7559, %v7340
        %v7561 = vadd.f32 %v7560, %v7361
        %v7562 = vadd.f32 %v7561, %v7382
        %v7563 = vadd.f32 %v7562, %v7403
        %v7564 = vadd.f32 %v7563, %v7424
        %v7565 = vadd.f32 %v7564, %v7445
        %v7566 = vadd.f32 %v7565, %v7466
        %v7567 = vadd.f32 %v7566, %v7487
        %v7568 = vadd.f32 %v7567, %v7508
        %v7569 = vsel %vm2766, %v7529, 0.0
        %v7570 = vadd.f32 %v7568, %v7569
        %v7571 = vrot.slane %v7570, 4
        %v7572 = vadd.f32 %v7570, %v7571
        %v7573 = vrot.slane %v7572, 2
        %v7574 = vadd.f32 %v7572, %v7573
        %v7575 = vrot.slane %v7574, 1
        %v7576 = vadd.f32 %v7574, %v7575
        %v7577 = vadd.f32 %v7110, %v7131
        %v7578 = vadd.f32 %v7577, %v7152
        %v7579 = vadd.f32 %v7578, %v7173
        %v7580 = vadd.f32 %v7579, %v7194
        %v7581 = vadd.f32 %v7580, %v7215
        %v7582 = vadd.f32 %v7581, %v7236
        %v7583 = vadd.f32 %v7582, %v7257
        %v7584 = vadd.f32 %v7583, %v7278
        %v7585 = vadd.f32 %v7584, %v7299
        %v7586 = vadd.f32 %v7585, %v7320
        %v7587 = vadd.f32 %v7586, %v7341
        %v7588 = vadd.f32 %v7587, %v7362
        %v7589 = vadd.f32 %v7588, %v7383
        %v7590 = vadd.f32 %v7589, %v7404
        %v7591 = vadd.f32 %v7590, %v7425
        %v7592 = vadd.f32 %v7591, %v7446
        %v7593 = vadd.f32 %v7592, %v7467
        %v7594 = vadd.f32 %v7593, %v7488
        %v7595 = vadd.f32 %v7594, %v7509
        %v7596 = vsel %vm2766, %v7530, 0.0
        %v7597 = vadd.f32 %v7595, %v7596
        %v7598 = vrot.slane %v7597, 4
        %v7599 = vadd.f32 %v7597, %v7598
        %v7600 = vrot.slane %v7599, 2
        %v7601 = vadd.f32 %v7599, %v7600
        %v7602 = vrot.slane %v7601, 1
        %v7603 = vadd.f32 %v7601, %v7602
        %v7604 = vadd.f32 %v7111, %v7132
        %v7605 = vadd.f32 %v7604, %v7153
        %v7606 = vadd.f32 %v7605, %v7174
        %v7607 = vadd.f32 %v7606, %v7195
        %v7608 = vadd.f32 %v7607, %v7216
        %v7609 = vadd.f32 %v7608, %v7237
        %v7610 = vadd.f32 %v7609, %v7258
        %v7611 = vadd.f32 %v7610, %v7279
        %v7612 = vadd.f32 %v7611, %v7300
        %v7613 = vadd.f32 %v7612, %v7321
        %v7614 = vadd.f32 %v7613, %v7342
        %v7615 = vadd.f32 %v7614, %v7363
        %v7616 = vadd.f32 %v7615, %v7384
        %v7617 = vadd.f32 %v7616, %v7405
        %v7618 = vadd.f32 %v7617, %v7426
        %v7619 = vadd.f32 %v7618, %v7447
        %v7620 = vadd.f32 %v7619, %v7468
        %v7621 = vadd.f32 %v7620, %v7489
        %v7622 = vadd.f32 %v7621, %v7510
        %v7623 = vsel %vm2766, %v7531, 0.0
        %v7624 = vadd.f32 %v7622, %v7623
        %v7625 = vrot.slane %v7624, 4
        %v7626 = vadd.f32 %v7624, %v7625
        %v7627 = vrot.slane %v7626, 2
        %v7628 = vadd.f32 %v7626, %v7627
        %v7629 = vrot.slane %v7628, 1
        %v7630 = vadd.f32 %v7628, %v7629
        %v7631 = vadd.f32 %v7112, %v7133
        %v7632 = vadd.f32 %v7631, %v7154
        %v7633 = vadd.f32 %v7632, %v7175
        %v7634 = vadd.f32 %v7633, %v7196
        %v7635 = vadd.f32 %v7634, %v7217
        %v7636 = vadd.f32 %v7635, %v7238
        %v7637 = vadd.f32 %v7636, %v7259
        %v7638 = vadd.f32 %v7637, %v7280
        %v7639 = vadd.f32 %v7638, %v7301
        %v7640 = vadd.f32 %v7639, %v7322
        %v7641 = vadd.f32 %v7640, %v7343
        %v7642 = vadd.f32 %v7641, %v7364
        %v7643 = vadd.f32 %v7642, %v7385
        %v7644 = vadd.f32 %v7643, %v7406
        %v7645 = vadd.f32 %v7644, %v7427
        %v7646 = vadd.f32 %v7645, %v7448
        %v7647 = vadd.f32 %v7646, %v7469
        %v7648 = vadd.f32 %v7647, %v7490
        %v7649 = vadd.f32 %v7648, %v7511
        %v7650 = vsel %vm2766, %v7532, 0.0
        %v7651 = vadd.f32 %v7649, %v7650
        %v7652 = vrot.slane %v7651, 4
        %v7653 = vadd.f32 %v7651, %v7652
        %v7654 = vrot.slane %v7653, 2
        %v7655 = vadd.f32 %v7653, %v7654
        %v7656 = vrot.slane %v7655, 1
        %v7657 = vadd.f32 %v7655, %v7656
        %v7658 = vadd.f32 %v7113, %v7134
        %v7659 = vadd.f32 %v7658, %v7155
        %v7660 = vadd.f32 %v7659, %v7176
        %v7661 = vadd.f32 %v7660, %v7197
        %v7662 = vadd.f32 %v7661, %v7218
        %v7663 = vadd.f32 %v7662, %v7239
        %v7664 = vadd.f32 %v7663, %v7260
        %v7665 = vadd.f32 %v7664, %v7281
        %v7666 = vadd.f32 %v7665, %v7302
        %v7667 = vadd.f32 %v7666, %v7323
        %v7668 = vadd.f32 %v7667, %v7344
        %v7669 = vadd.f32 %v7668, %v7365
        %v7670 = vadd.f32 %v7669, %v7386
        %v7671 = vadd.f32 %v7670, %v7407
        %v7672 = vadd.f32 %v7671, %v7428
        %v7673 = vadd.f32 %v7672, %v7449
        %v7674 = vadd.f32 %v7673, %v7470
        %v7675 = vadd.f32 %v7674, %v7491
        %v7676 = vadd.f32 %v7675, %v7512
        %v7677 = vsel %vm2766, %v7533, 0.0
        %v7678 = vadd.f32 %v7676, %v7677
        %v7679 = vrot.slane %v7678, 4
        %v7680 = vadd.f32 %v7678, %v7679
        %v7681 = vrot.slane %v7680, 2
        %v7682 = vadd.f32 %v7680, %v7681
        %v7683 = vrot.slane %v7682, 1
        %v7684 = vadd.f32 %v7682, %v7683
        %v7685 = vadd.f32 %v7114, %v7135
        %v7686 = vadd.f32 %v7685, %v7156
        %v7687 = vadd.f32 %v7686, %v7177
        %v7688 = vadd.f32 %v7687, %v7198
        %v7689 = vadd.f32 %v7688, %v7219
        %v7690 = vadd.f32 %v7689, %v7240
        %v7691 = vadd.f32 %v7690, %v7261
        %v7692 = vadd.f32 %v7691, %v7282
        %v7693 = vadd.f32 %v7692, %v7303
        %v7694 = vadd.f32 %v7693, %v7324
        %v7695 = vadd.f32 %v7694, %v7345
        %v7696 = vadd.f32 %v7695, %v7366
        %v7697 = vadd.f32 %v7696, %v7387
        %v7698 = vadd.f32 %v7697, %v7408
        %v7699 = vadd.f32 %v7698, %v7429
        %v7700 = vadd.f32 %v7699, %v7450
        %v7701 = vadd.f32 %v7700, %v7471
        %v7702 = vadd.f32 %v7701, %v7492
        %v7703 = vadd.f32 %v7702, %v7513
        %v7704 = vsel %vm2766, %v7534, 0.0
        %v7705 = vadd.f32 %v7703, %v7704
        %v7706 = vrot.slane %v7705, 4
        %v7707 = vadd.f32 %v7705, %v7706
        %v7708 = vrot.slane %v7707, 2
        %v7709 = vadd.f32 %v7707, %v7708
        %v7710 = vrot.slane %v7709, 1
        %v7711 = vadd.f32 %v7709, %v7710
        %v7712 = vadd.f32 %v7115, %v7136
        %v7713 = vadd.f32 %v7712, %v7157
        %v7714 = vadd.f32 %v7713, %v7178
        %v7715 = vadd.f32 %v7714, %v7199
        %v7716 = vadd.f32 %v7715, %v7220
        %v7717 = vadd.f32 %v7716, %v7241
        %v7718 = vadd.f32 %v7717, %v7262
        %v7719 = vadd.f32 %v7718, %v7283
        %v7720 = vadd.f32 %v7719, %v7304
        %v7721 = vadd.f32 %v7720, %v7325
        %v7722 = vadd.f32 %v7721, %v7346
        %v7723 = vadd.f32 %v7722, %v7367
        %v7724 = vadd.f32 %v7723, %v7388
        %v7725 = vadd.f32 %v7724, %v7409
        %v7726 = vadd.f32 %v7725, %v7430
        %v7727 = vadd.f32 %v7726, %v7451
        %v7728 = vadd.f32 %v7727, %v7472
        %v7729 = vadd.f32 %v7728, %v7493
        %v7730 = vadd.f32 %v7729, %v7514
        %v7731 = vsel %vm2766, %v7535, 0.0
        %v7732 = vadd.f32 %v7730, %v7731
        %v7733 = vrot.slane %v7732, 4
        %v7734 = vadd.f32 %v7732, %v7733
        %v7735 = vrot.slane %v7734, 2
        %v7736 = vadd.f32 %v7734, %v7735
        %v7737 = vrot.slane %v7736, 1
        %v7738 = vadd.f32 %v7736, %v7737
        %v7739 = vadd.f32 %v7116, %v7137
        %v7740 = vadd.f32 %v7739, %v7158
        %v7741 = vadd.f32 %v7740, %v7179
        %v7742 = vadd.f32 %v7741, %v7200
        %v7743 = vadd.f32 %v7742, %v7221
        %v7744 = vadd.f32 %v7743, %v7242
        %v7745 = vadd.f32 %v7744, %v7263
        %v7746 = vadd.f32 %v7745, %v7284
        %v7747 = vadd.f32 %v7746, %v7305
        %v7748 = vadd.f32 %v7747, %v7326
        %v7749 = vadd.f32 %v7748, %v7347
        %v7750 = vadd.f32 %v7749, %v7368
        %v7751 = vadd.f32 %v7750, %v7389
        %v7752 = vadd.f32 %v7751, %v7410
        %v7753 = vadd.f32 %v7752, %v7431
        %v7754 = vadd.f32 %v7753, %v7452
        %v7755 = vadd.f32 %v7754, %v7473
        %v7756 = vadd.f32 %v7755, %v7494
        %v7757 = vadd.f32 %v7756, %v7515
        %v7758 = vsel %vm2766, %v7536, 0.0
        %v7759 = vadd.f32 %v7757, %v7758
        %v7760 = vrot.slane %v7759, 4
        %v7761 = vadd.f32 %v7759, %v7760
        %v7762 = vrot.slane %v7761, 2
        %v7763 = vadd.f32 %v7761, %v7762
        %v7764 = vrot.slane %v7763, 1
        %v7765 = vadd.f32 %v7763, %v7764
        %v7766 = vadd.f32 %v7117, %v7138
        %v7767 = vadd.f32 %v7766, %v7159
        %v7768 = vadd.f32 %v7767, %v7180
        %v7769 = vadd.f32 %v7768, %v7201
        %v7770 = vadd.f32 %v7769, %v7222
        %v7771 = vadd.f32 %v7770, %v7243
        %v7772 = vadd.f32 %v7771, %v7264
        %v7773 = vadd.f32 %v7772, %v7285
        %v7774 = vadd.f32 %v7773, %v7306
        %v7775 = vadd.f32 %v7774, %v7327
        %v7776 = vadd.f32 %v7775, %v7348
        %v7777 = vadd.f32 %v7776, %v7369
        %v7778 = vadd.f32 %v7777, %v7390
        %v7779 = vadd.f32 %v7778, %v7411
        %v7780 = vadd.f32 %v7779, %v7432
        %v7781 = vadd.f32 %v7780, %v7453
        %v7782 = vadd.f32 %v7781, %v7474
        %v7783 = vadd.f32 %v7782, %v7495
        %v7784 = vadd.f32 %v7783, %v7516
        %v7785 = vsel %vm2766, %v7537, 0.0
        %v7786 = vadd.f32 %v7784, %v7785
        %v7787 = vrot.slane %v7786, 4
        %v7788 = vadd.f32 %v7786, %v7787
        %v7789 = vrot.slane %v7788, 2
        %v7790 = vadd.f32 %v7788, %v7789
        %v7791 = vrot.slane %v7790, 1
        %v7792 = vadd.f32 %v7790, %v7791
        %v7793 = vadd.f32 %v7118, %v7139
        %v7794 = vadd.f32 %v7793, %v7160
        %v7795 = vadd.f32 %v7794, %v7181
        %v7796 = vadd.f32 %v7795, %v7202
        %v7797 = vadd.f32 %v7796, %v7223
        %v7798 = vadd.f32 %v7797, %v7244
        %v7799 = vadd.f32 %v7798, %v7265
        %v7800 = vadd.f32 %v7799, %v7286
        %v7801 = vadd.f32 %v7800, %v7307
        %v7802 = vadd.f32 %v7801, %v7328
        %v7803 = vadd.f32 %v7802, %v7349
        %v7804 = vadd.f32 %v7803, %v7370
        %v7805 = vadd.f32 %v7804, %v7391
        %v7806 = vadd.f32 %v7805, %v7412
        %v7807 = vadd.f32 %v7806, %v7433
        %v7808 = vadd.f32 %v7807, %v7454
        %v7809 = vadd.f32 %v7808, %v7475
        %v7810 = vadd.f32 %v7809, %v7496
        %v7811 = vadd.f32 %v7810, %v7517
        %v7812 = vsel %vm2766, %v7538, 0.0
        %v7813 = vadd.f32 %v7811, %v7812
        %v7814 = vrot.slane %v7813, 4
        %v7815 = vadd.f32 %v7813, %v7814
        %v7816 = vrot.slane %v7815, 2
        %v7817 = vadd.f32 %v7815, %v7816
        %v7818 = vrot.slane %v7817, 1
        %v7819 = vadd.f32 %v7817, %v7818
        %v7820 = vadd.f32 %v7119, %v7140
        %v7821 = vadd.f32 %v7820, %v7161
        %v7822 = vadd.f32 %v7821, %v7182
        %v7823 = vadd.f32 %v7822, %v7203
        %v7824 = vadd.f32 %v7823, %v7224
        %v7825 = vadd.f32 %v7824, %v7245
        %v7826 = vadd.f32 %v7825, %v7266
        %v7827 = vadd.f32 %v7826, %v7287
        %v7828 = vadd.f32 %v7827, %v7308
        %v7829 = vadd.f32 %v7828, %v7329
        %v7830 = vadd.f32 %v7829, %v7350
        %v7831 = vadd.f32 %v7830, %v7371
        %v7832 = vadd.f32 %v7831, %v7392
        %v7833 = vadd.f32 %v7832, %v7413
        %v7834 = vadd.f32 %v7833, %v7434
        %v7835 = vadd.f32 %v7834, %v7455
        %v7836 = vadd.f32 %v7835, %v7476
        %v7837 = vadd.f32 %v7836, %v7497
        %v7838 = vadd.f32 %v7837, %v7518
        %v7839 = vsel %vm2766, %v7539, 0.0
        %v7840 = vadd.f32 %v7838, %v7839
        %v7841 = vrot.slane %v7840, 4
        %v7842 = vadd.f32 %v7840, %v7841
        %v7843 = vrot.slane %v7842, 2
        %v7844 = vadd.f32 %v7842, %v7843
        %v7845 = vrot.slane %v7844, 1
        %v7846 = vadd.f32 %v7844, %v7845
        %v7847 = vadd.f32 %v7120, %v7141
        %v7848 = vadd.f32 %v7847, %v7162
        %v7849 = vadd.f32 %v7848, %v7183
        %v7850 = vadd.f32 %v7849, %v7204
        %v7851 = vadd.f32 %v7850, %v7225
        %v7852 = vadd.f32 %v7851, %v7246
        %v7853 = vadd.f32 %v7852, %v7267
        %v7854 = vadd.f32 %v7853, %v7288
        %v7855 = vadd.f32 %v7854, %v7309
        %v7856 = vadd.f32 %v7855, %v7330
        %v7857 = vadd.f32 %v7856, %v7351
        %v7858 = vadd.f32 %v7857, %v7372
        %v7859 = vadd.f32 %v7858, %v7393
        %v7860 = vadd.f32 %v7859, %v7414
        %v7861 = vadd.f32 %v7860, %v7435
        %v7862 = vadd.f32 %v7861, %v7456
        %v7863 = vadd.f32 %v7862, %v7477
        %v7864 = vadd.f32 %v7863, %v7498
        %v7865 = vadd.f32 %v7864, %v7519
        %v7866 = vsel %vm2766, %v7540, 0.0
        %v7867 = vadd.f32 %v7865, %v7866
        %v7868 = vrot.slane %v7867, 4
        %v7869 = vadd.f32 %v7867, %v7868
        %v7870 = vrot.slane %v7869, 2
        %v7871 = vadd.f32 %v7869, %v7870
        %v7872 = vrot.slane %v7871, 1
        %v7873 = vadd.f32 %v7871, %v7872
        %v7874 = vadd.f32 %v7121, %v7142
        %v7875 = vadd.f32 %v7874, %v7163
        %v7876 = vadd.f32 %v7875, %v7184
        %v7877 = vadd.f32 %v7876, %v7205
        %v7878 = vadd.f32 %v7877, %v7226
        %v7879 = vadd.f32 %v7878, %v7247
        %v7880 = vadd.f32 %v7879, %v7268
        %v7881 = vadd.f32 %v7880, %v7289
        %v7882 = vadd.f32 %v7881, %v7310
        %v7883 = vadd.f32 %v7882, %v7331
        %v7884 = vadd.f32 %v7883, %v7352
        %v7885 = vadd.f32 %v7884, %v7373
        %v7886 = vadd.f32 %v7885, %v7394
        %v7887 = vadd.f32 %v7886, %v7415
        %v7888 = vadd.f32 %v7887, %v7436
        %v7889 = vadd.f32 %v7888, %v7457
        %v7890 = vadd.f32 %v7889, %v7478
        %v7891 = vadd.f32 %v7890, %v7499
        %v7892 = vadd.f32 %v7891, %v7520
        %v7893 = vsel %vm2766, %v7541, 0.0
        %v7894 = vadd.f32 %v7892, %v7893
        %v7895 = vrot.slane %v7894, 4
        %v7896 = vadd.f32 %v7894, %v7895
        %v7897 = vrot.slane %v7896, 2
        %v7898 = vadd.f32 %v7896, %v7897
        %v7899 = vrot.slane %v7898, 1
        %v7900 = vadd.f32 %v7898, %v7899
        %v7901 = vadd.f32 %v7122, %v7143
        %v7902 = vadd.f32 %v7901, %v7164
        %v7903 = vadd.f32 %v7902, %v7185
        %v7904 = vadd.f32 %v7903, %v7206
        %v7905 = vadd.f32 %v7904, %v7227
        %v7906 = vadd.f32 %v7905, %v7248
        %v7907 = vadd.f32 %v7906, %v7269
        %v7908 = vadd.f32 %v7907, %v7290
        %v7909 = vadd.f32 %v7908, %v7311
        %v7910 = vadd.f32 %v7909, %v7332
        %v7911 = vadd.f32 %v7910, %v7353
        %v7912 = vadd.f32 %v7911, %v7374
        %v7913 = vadd.f32 %v7912, %v7395
        %v7914 = vadd.f32 %v7913, %v7416
        %v7915 = vadd.f32 %v7914, %v7437
        %v7916 = vadd.f32 %v7915, %v7458
        %v7917 = vadd.f32 %v7916, %v7479
        %v7918 = vadd.f32 %v7917, %v7500
        %v7919 = vadd.f32 %v7918, %v7521
        %v7920 = vsel %vm2766, %v7542, 0.0
        %v7921 = vadd.f32 %v7919, %v7920
        %v7922 = vrot.slane %v7921, 4
        %v7923 = vadd.f32 %v7921, %v7922
        %v7924 = vrot.slane %v7923, 2
        %v7925 = vadd.f32 %v7923, %v7924
        %v7926 = vrot.slane %v7925, 1
        %v7927 = vadd.f32 %v7925, %v7926
        %v7928 = vadd.f32 %v7123, %v7144
        %v7929 = vadd.f32 %v7928, %v7165
        %v7930 = vadd.f32 %v7929, %v7186
        %v7931 = vadd.f32 %v7930, %v7207
        %v7932 = vadd.f32 %v7931, %v7228
        %v7933 = vadd.f32 %v7932, %v7249
        %v7934 = vadd.f32 %v7933, %v7270
        %v7935 = vadd.f32 %v7934, %v7291
        %v7936 = vadd.f32 %v7935, %v7312
        %v7937 = vadd.f32 %v7936, %v7333
        %v7938 = vadd.f32 %v7937, %v7354
        %v7939 = vadd.f32 %v7938, %v7375
        %v7940 = vadd.f32 %v7939, %v7396
        %v7941 = vadd.f32 %v7940, %v7417
        %v7942 = vadd.f32 %v7941, %v7438
        %v7943 = vadd.f32 %v7942, %v7459
        %v7944 = vadd.f32 %v7943, %v7480
        %v7945 = vadd.f32 %v7944, %v7501
        %v7946 = vadd.f32 %v7945, %v7522
        %v7947 = vsel %vm2766, %v7543, 0.0
        %v7948 = vadd.f32 %v7946, %v7947
        %v7949 = vrot.slane %v7948, 4
        %v7950 = vadd.f32 %v7948, %v7949
        %v7951 = vrot.slane %v7950, 2
        %v7952 = vadd.f32 %v7950, %v7951
        %v7953 = vrot.slane %v7952, 1
        %v7954 = vadd.f32 %v7952, %v7953
        %v7955 = vadd.f32 %v7124, %v7145
        %v7956 = vadd.f32 %v7955, %v7166
        %v7957 = vadd.f32 %v7956, %v7187
        %v7958 = vadd.f32 %v7957, %v7208
        %v7959 = vadd.f32 %v7958, %v7229
        %v7960 = vadd.f32 %v7959, %v7250
        %v7961 = vadd.f32 %v7960, %v7271
        %v7962 = vadd.f32 %v7961, %v7292
        %v7963 = vadd.f32 %v7962, %v7313
        %v7964 = vadd.f32 %v7963, %v7334
        %v7965 = vadd.f32 %v7964, %v7355
        %v7966 = vadd.f32 %v7965, %v7376
        %v7967 = vadd.f32 %v7966, %v7397
        %v7968 = vadd.f32 %v7967, %v7418
        %v7969 = vadd.f32 %v7968, %v7439
        %v7970 = vadd.f32 %v7969, %v7460
        %v7971 = vadd.f32 %v7970, %v7481
        %v7972 = vadd.f32 %v7971, %v7502
        %v7973 = vadd.f32 %v7972, %v7523
        %v7974 = vsel %vm2766, %v7544, 0.0
        %v7975 = vadd.f32 %v7973, %v7974
        %v7976 = vrot.slane %v7975, 4
        %v7977 = vadd.f32 %v7975, %v7976
        %v7978 = vrot.slane %v7977, 2
        %v7979 = vadd.f32 %v7977, %v7978
        %v7980 = vrot.slane %v7979, 1
        %v7981 = vadd.f32 %v7979, %v7980
        %v7982 = vadd.f32 %v7125, %v7146
        %v7983 = vadd.f32 %v7982, %v7167
        %v7984 = vadd.f32 %v7983, %v7188
        %v7985 = vadd.f32 %v7984, %v7209
        %v7986 = vadd.f32 %v7985, %v7230
        %v7987 = vadd.f32 %v7986, %v7251
        %v7988 = vadd.f32 %v7987, %v7272
        %v7989 = vadd.f32 %v7988, %v7293
        %v7990 = vadd.f32 %v7989, %v7314
        %v7991 = vadd.f32 %v7990, %v7335
        %v7992 = vadd.f32 %v7991, %v7356
        %v7993 = vadd.f32 %v7992, %v7377
        %v7994 = vadd.f32 %v7993, %v7398
        %v7995 = vadd.f32 %v7994, %v7419
        %v7996 = vadd.f32 %v7995, %v7440
        %v7997 = vadd.f32 %v7996, %v7461
        %v7998 = vadd.f32 %v7997, %v7482
        %v7999 = vadd.f32 %v7998, %v7503
        %v8000 = vadd.f32 %v7999, %v7524
        %v8001 = vsel %vm2766, %v7545, 0.0
        %v8002 = vadd.f32 %v8000, %v8001
        %v8003 = vrot.slane %v8002, 4
        %v8004 = vadd.f32 %v8002, %v8003
        %v8005 = vrot.slane %v8004, 2
        %v8006 = vadd.f32 %v8004, %v8005
        %v8007 = vrot.slane %v8006, 1
        %v8008 = vadd.f32 %v8006, %v8007
        %v8009 = vadd.f32 %v7126, %v7147
        %v8010 = vadd.f32 %v8009, %v7168
        %v8011 = vadd.f32 %v8010, %v7189
        %v8012 = vadd.f32 %v8011, %v7210
        %v8013 = vadd.f32 %v8012, %v7231
        %v8014 = vadd.f32 %v8013, %v7252
        %v8015 = vadd.f32 %v8014, %v7273
        %v8016 = vadd.f32 %v8015, %v7294
        %v8017 = vadd.f32 %v8016, %v7315
        %v8018 = vadd.f32 %v8017, %v7336
        %v8019 = vadd.f32 %v8018, %v7357
        %v8020 = vadd.f32 %v8019, %v7378
        %v8021 = vadd.f32 %v8020, %v7399
        %v8022 = vadd.f32 %v8021, %v7420
        %v8023 = vadd.f32 %v8022, %v7441
        %v8024 = vadd.f32 %v8023, %v7462
        %v8025 = vadd.f32 %v8024, %v7483
        %v8026 = vadd.f32 %v8025, %v7504
        %v8027 = vadd.f32 %v8026, %v7525
        %v8028 = vsel %vm2766, %v7546, 0.0
        %v8029 = vadd.f32 %v8027, %v8028
        %v8030 = vrot.slane %v8029, 4
        %v8031 = vadd.f32 %v8029, %v8030
        %v8032 = vrot.slane %v8031, 2
        %v8033 = vadd.f32 %v8031, %v8032
        %v8034 = vrot.slane %v8033, 1
        %v8035 = vadd.f32 %v8033, %v8034
        %v8036 = vadd.f32 %v7127, %v7148
        %v8037 = vadd.f32 %v8036, %v7169
        %v8038 = vadd.f32 %v8037, %v7190
        %v8039 = vadd.f32 %v8038, %v7211
        %v8040 = vadd.f32 %v8039, %v7232
        %v8041 = vadd.f32 %v8040, %v7253
        %v8042 = vadd.f32 %v8041, %v7274
        %v8043 = vadd.f32 %v8042, %v7295
        %v8044 = vadd.f32 %v8043, %v7316
        %v8045 = vadd.f32 %v8044, %v7337
        %v8046 = vadd.f32 %v8045, %v7358
        %v8047 = vadd.f32 %v8046, %v7379
        %v8048 = vadd.f32 %v8047, %v7400
        %v8049 = vadd.f32 %v8048, %v7421
        %v8050 = vadd.f32 %v8049, %v7442
        %v8051 = vadd.f32 %v8050, %v7463
        %v8052 = vadd.f32 %v8051, %v7484
        %v8053 = vadd.f32 %v8052, %v7505
        %v8054 = vadd.f32 %v8053, %v7526
        %v8055 = vsel %vm2766, %v7547, 0.0
        %v8056 = vadd.f32 %v8054, %v8055
        %v8057 = vrot.slane %v8056, 4
        %v8058 = vadd.f32 %v8056, %v8057
        %v8059 = vrot.slane %v8058, 2
        %v8060 = vadd.f32 %v8058, %v8059
        %v8061 = vrot.slane %v8060, 1
        %v8062 = vadd.f32 %v8060, %v8061
        %v8063 = vadd.f32 %v7128, %v7149
        %v8064 = vadd.f32 %v8063, %v7170
        %v8065 = vadd.f32 %v8064, %v7191
        %v8066 = vadd.f32 %v8065, %v7212
        %v8067 = vadd.f32 %v8066, %v7233
        %v8068 = vadd.f32 %v8067, %v7254
        %v8069 = vadd.f32 %v8068, %v7275
        %v8070 = vadd.f32 %v8069, %v7296
        %v8071 = vadd.f32 %v8070, %v7317
        %v8072 = vadd.f32 %v8071, %v7338
        %v8073 = vadd.f32 %v8072, %v7359
        %v8074 = vadd.f32 %v8073, %v7380
        %v8075 = vadd.f32 %v8074, %v7401
        %v8076 = vadd.f32 %v8075, %v7422
        %v8077 = vadd.f32 %v8076, %v7443
        %v8078 = vadd.f32 %v8077, %v7464
        %v8079 = vadd.f32 %v8078, %v7485
        %v8080 = vadd.f32 %v8079, %v7506
        %v8081 = vadd.f32 %v8080, %v7527
        %v8082 = vsel %vm2766, %v7548, 0.0
        %v8083 = vadd.f32 %v8081, %v8082
        %v8084 = vrot.slane %v8083, 4
        %v8085 = vadd.f32 %v8083, %v8084
        %v8086 = vrot.slane %v8085, 2
        %v8087 = vadd.f32 %v8085, %v8086
        %v8088 = vrot.slane %v8087, 1
        %v8089 = vadd.f32 %v8087, %v8088
        %v8090 = vsel %vm561, %v7129, 0.0
        %v8091 = vsel %vm561, %v7150, 0.0
        %v8092 = vadd.f32 %v8090, %v8091
        %v8093 = vsel %vm561, %v7171, 0.0
        %v8094 = vadd.f32 %v8092, %v8093
        %v8095 = vsel %vm561, %v7192, 0.0
        %v8096 = vadd.f32 %v8094, %v8095
        %v8097 = vsel %vm561, %v7213, 0.0
        %v8098 = vadd.f32 %v8096, %v8097
        %v8099 = vsel %vm561, %v7234, 0.0
        %v8100 = vadd.f32 %v8098, %v8099
        %v8101 = vsel %vm561, %v7255, 0.0
        %v8102 = vadd.f32 %v8100, %v8101
        %v8103 = vsel %vm561, %v7276, 0.0
        %v8104 = vadd.f32 %v8102, %v8103
        %v8105 = vsel %vm561, %v7297, 0.0
        %v8106 = vadd.f32 %v8104, %v8105
        %v8107 = vsel %vm561, %v7318, 0.0
        %v8108 = vadd.f32 %v8106, %v8107
        %v8109 = vsel %vm561, %v7339, 0.0
        %v8110 = vadd.f32 %v8108, %v8109
        %v8111 = vsel %vm561, %v7360, 0.0
        %v8112 = vadd.f32 %v8110, %v8111
        %v8113 = vsel %vm561, %v7381, 0.0
        %v8114 = vadd.f32 %v8112, %v8113
        %v8115 = vsel %vm561, %v7402, 0.0
        %v8116 = vadd.f32 %v8114, %v8115
        %v8117 = vsel %vm561, %v7423, 0.0
        %v8118 = vadd.f32 %v8116, %v8117
        %v8119 = vsel %vm561, %v7444, 0.0
        %v8120 = vadd.f32 %v8118, %v8119
        %v8121 = vsel %vm561, %v7465, 0.0
        %v8122 = vadd.f32 %v8120, %v8121
        %v8123 = vsel %vm561, %v7486, 0.0
        %v8124 = vadd.f32 %v8122, %v8123
        %v8125 = vsel %vm561, %v7507, 0.0
        %v8126 = vadd.f32 %v8124, %v8125
        %v8127 = vsel %vm561, %v7528, 0.0
        %v8128 = vadd.f32 %v8126, %v8127
        %v8129 = vsel %vm862, %v7549, 0.0
        %v8130 = vadd.f32 %v8128, %v8129
        %v8131 = vrot.slane %v8130, 4
        %v8132 = vadd.f32 %v8130, %v8131
        %v8133 = vrot.slane %v8132, 2
        %v8134 = vadd.f32 %v8132, %v8133
        %v8135 = vrot.slane %v8134, 1
        %v8136 = vadd.f32 %v8134, %v8135
        %v8158 = vcombine.low %v7576, %v7603
        %v8159 = vcombine.low %v7630, %v7657
        %v8160 = vcombine.low %v7684, %v7711
        %v8161 = vcombine.low %v7738, %v7765
        %v8163 = vunpack.c.l.s4 1966171168
        %v8164 = vunpack.c.0.s8 %v8163
        %v8165 = vlaneseq
        %v8166 = vshrl.u32 %v8165, 7
        %v8167 = vsub.s32 %v8164, %v8166
        %v8168 = vrot.slane %v8158, %v8167
        %v8170 = vunpack.c.l.s4 1966171168
        %v8171 = vunpack.c.0.s8 %v8170
        %v8172 = vlaneseq
        %v8173 = vshrl.u32 %v8172, 7
        %v8174 = vsub.s32 %v8171, %v8173
        %v8175 = vrot.slane %v8159, %v8174
        %v8177 = vunpack.c.l.s4 1966171168
        %v8178 = vunpack.c.0.s8 %v8177
        %v8179 = vlaneseq
        %v8180 = vshrl.u32 %v8179, 7
        %v8181 = vsub.s32 %v8178, %v8180
        %v8182 = vrot.slane %v8160, %v8181
        %v8184 = vunpack.c.l.s4 1966171168
        %v8185 = vunpack.c.0.s8 %v8184
        %v8186 = vlaneseq
        %v8187 = vshrl.u32 %v8186, 7
        %v8188 = vsub.s32 %v8185, %v8187
        %v8189 = vrot.slane %v8161, %v8188
        %v8190 = vcombine.low %v8168, %v8175
        %v8191 = vcombine.low %v8182, %v8189
        %v8193 = vunpack.c.l.s4 1966171168
        %v8194 = vunpack.c.0.s8 %v8193
        %v8195 = vlaneseq
        %v8196 = vshrl.u32 %v8195, 7
        %v8197 = vsub.s32 %v8194, %v8196
        %v8198 = vrot.slane %v8190, %v8197
        %v8200 = vunpack.c.l.s4 1966171168
        %v8201 = vunpack.c.0.s8 %v8200
        %v8202 = vlaneseq
        %v8203 = vshrl.u32 %v8202, 7
        %v8204 = vsub.s32 %v8201, %v8203
        %v8205 = vrot.slane %v8191, %v8204
        %v8206 = vcombine.low %v8198, %v8205
        %v8207 = vcombine.low %v7792, %v7819
        %v8208 = vcombine.low %v7846, %v7873
        %v8209 = vcombine.low %v7900, %v7927
        %v8210 = vcombine.low %v7954, %v7981
        %v8212 = vunpack.c.l.s4 1966171168
        %v8213 = vunpack.c.0.s8 %v8212
        %v8214 = vlaneseq
        %v8215 = vshrl.u32 %v8214, 7
        %v8216 = vsub.s32 %v8213, %v8215
        %v8217 = vrot.slane %v8207, %v8216
        %v8219 = vunpack.c.l.s4 1966171168
        %v8220 = vunpack.c.0.s8 %v8219
        %v8221 = vlaneseq
        %v8222 = vshrl.u32 %v8221, 7
        %v8223 = vsub.s32 %v8220, %v8222
        %v8224 = vrot.slane %v8208, %v8223
        %v8226 = vunpack.c.l.s4 1966171168
        %v8227 = vunpack.c.0.s8 %v8226
        %v8228 = vlaneseq
        %v8229 = vshrl.u32 %v8228, 7
        %v8230 = vsub.s32 %v8227, %v8229
        %v8231 = vrot.slane %v8209, %v8230
        %v8233 = vunpack.c.l.s4 1966171168
        %v8234 = vunpack.c.0.s8 %v8233
        %v8235 = vlaneseq
        %v8236 = vshrl.u32 %v8235, 7
        %v8237 = vsub.s32 %v8234, %v8236
        %v8238 = vrot.slane %v8210, %v8237
        %v8239 = vcombine.low %v8217, %v8224
        %v8240 = vcombine.low %v8231, %v8238
        %v8242 = vunpack.c.l.s4 1966171168
        %v8243 = vunpack.c.0.s8 %v8242
        %v8244 = vlaneseq
        %v8245 = vshrl.u32 %v8244, 7
        %v8246 = vsub.s32 %v8243, %v8245
        %v8247 = vrot.slane %v8239, %v8246
        %v8249 = vunpack.c.l.s4 1966171168
        %v8250 = vunpack.c.0.s8 %v8249
        %v8251 = vlaneseq
        %v8252 = vshrl.u32 %v8251, 7
        %v8253 = vsub.s32 %v8250, %v8252
        %v8254 = vrot.slane %v8240, %v8253
        %v8255 = vcombine.low %v8247, %v8254
        %v8256 = vcombine.low %v8008, %v8035
        %v8257 = vcombine.low %v8062, %v8089
        %v8259 = vunpack.c.l.s4 1966171168
        %v8260 = vunpack.c.0.s8 %v8259
        %v8261 = vlaneseq
        %v8262 = vshrl.u32 %v8261, 7
        %v8263 = vsub.s32 %v8260, %v8262
        %v8264 = vrot.slane %v8256, %v8263
        %v8266 = vunpack.c.l.s4 1966171168
        %v8267 = vunpack.c.0.s8 %v8266
        %v8268 = vlaneseq
        %v8269 = vshrl.u32 %v8268, 7
        %v8270 = vsub.s32 %v8267, %v8269
        %v8271 = vrot.slane %v8257, %v8270
        %v8273 = vunpack.c.l.s4 1966171168
        %v8274 = vunpack.c.0.s8 %v8273
        %v8275 = vlaneseq
        %v8276 = vshrl.u32 %v8275, 7
        %v8277 = vsub.s32 %v8274, %v8276
        %v8278 = vrot.slane %v8136, %v8277
        %v8279 = vcombine.low %v8264, %v8271
        %v8281 = vunpack.c.l.s4 1966171168
        %v8282 = vunpack.c.0.s8 %v8281
        %v8283 = vlaneseq
        %v8284 = vshrl.u32 %v8283, 7
        %v8285 = vsub.s32 %v8282, %v8284
        %v8286 = vrot.slane %v8279, %v8285
        %v8288 = vunpack.c.l.s4 1966171168
        %v8289 = vunpack.c.0.s8 %v8288
        %v8290 = vlaneseq
        %v8291 = vshrl.u32 %v8290, 7
        %v8292 = vsub.s32 %v8289, %v8291
        %v8293 = vrot.slane %v8278, %v8292
        %v8294 = vcombine.low %v8286, %v8293
        %8298 = vst [vmem:[#allocation2] sm:$0xff] %v8206
        %8299 = vst [vmem:[#allocation2 + $0x8] sm:$0xff] %v8255
        %v8300 = vlaneseq
        %vm8301 = vcmp.ge.s32.totalorder %v8300, 0
        %vm8302 = vcmp.lt.s32.totalorder %v8300, 528
        %vm8303 = vmand %vm8301, %vm8302
        %8304 = vst.msk [vmem:[#allocation2 + $0x10] sm:$0x1f] %vm8303, %v8294
      $region60: #{skip_att.1} parent=55 // pred_fallthru
        _
      %v8305 = vld [vmem:[%s379] sm:$0xff]
      %v8306 = vld [vmem:[%s379 + $0x8] sm:$0xff]
      %v8307 = vld [vmem:[%s379 + $0x10] sm:$0xff]
      %v8308 = vld [vmem:[%s379 + $0x18] sm:$0xff]
      %v8309 = vld [vmem:[%s379 + $0x20] sm:$0xff]
      %v8310 = vld [vmem:[%s379 + $0x28] sm:$0xff]
      %v8311 = vld [vmem:[%s379 + $0x30] sm:$0xff]
      %v8312 = vld [vmem:[%s379 + $0x38] sm:$0xff]
      %v8313 = vld [vmem:[%s379 + $0x40] sm:$0xff]
      %v8314 = vld [vmem:[%s379 + $0x48] sm:$0xff]
      %v8315 = vld [vmem:[%s379 + $0x50] sm:$0xff]
      %v8316 = vld [vmem:[%s379 + $0x58] sm:$0xff]
      %v8317 = vld [vmem:[%s379 + $0x60] sm:$0xff]
      %v8318 = vld [vmem:[%s379 + $0x68] sm:$0xff]
      %v8319 = vld [vmem:[%s379 + $0x70] sm:$0xff]
      %v8320 = vld [vmem:[%s379 + $0x78] sm:$0xff]
      %v8321 = vld [vmem:[%s379 + $0x80] sm:$0xff]
      %v8322 = vld [vmem:[%s379 + $0x88] sm:$0xff]
      %v8323 = vld [vmem:[%s379 + $0x90] sm:$0xff]
      %v8324 = vld [vmem:[%s379 + $0x98] sm:$0xff]
      %v8325 = vld [vmem:[%s379 + $0xa0] sm:$0xff]
      %v8326 = vld [vmem:[#allocation2] sm:$0xff]
      %v8327 = vld [vmem:[#allocation2 + $0x8] sm:$0xff]
      %v8328 = vld [vmem:[#allocation2 + $0x10] sm:$0x1f]
      %v8332 = vlaneseq
      %v8333 = vshrl.u32 %v8332, 7
      %v8334 = vsub.s32 0, %v8333
      %v8335 = vrot.slane %v8326, %v8334
      %v8336 = vlaneseq
      %v8337 = vshrl.u32 %v8336, 7
      %v8338 = vsub.s32 1, %v8337
      %v8339 = vrot.slane %v8326, %v8338
      %v8340 = vlaneseq
      %v8341 = vshrl.u32 %v8340, 7
      %v8342 = vsub.s32 2, %v8341
      %v8343 = vrot.slane %v8326, %v8342
      %v8344 = vlaneseq
      %v8345 = vshrl.u32 %v8344, 7
      %v8346 = vsub.s32 3, %v8345
      %v8347 = vrot.slane %v8326, %v8346
      %v8348 = vlaneseq
      %v8349 = vshrl.u32 %v8348, 7
      %v8350 = vsub.s32 4, %v8349
      %v8351 = vrot.slane %v8326, %v8350
      %v8352 = vlaneseq
      %v8353 = vshrl.u32 %v8352, 7
      %v8354 = vsub.s32 5, %v8353
      %v8355 = vrot.slane %v8326, %v8354
      %v8356 = vlaneseq
      %v8357 = vshrl.u32 %v8356, 7
      %v8358 = vsub.s32 6, %v8357
      %v8359 = vrot.slane %v8326, %v8358
      %v8360 = vlaneseq
      %v8361 = vshrl.u32 %v8360, 7
      %v8362 = vsub.s32 7, %v8361
      %v8363 = vrot.slane %v8326, %v8362
      %v8364 = vlaneseq
      %v8365 = vshrl.u32 %v8364, 7
      %v8366 = vsub.s32 0, %v8365
      %v8367 = vrot.slane %v8327, %v8366
      %v8368 = vlaneseq
      %v8369 = vshrl.u32 %v8368, 7
      %v8370 = vsub.s32 1, %v8369
      %v8371 = vrot.slane %v8327, %v8370
      %v8372 = vlaneseq
      %v8373 = vshrl.u32 %v8372, 7
      %v8374 = vsub.s32 2, %v8373
      %v8375 = vrot.slane %v8327, %v8374
      %v8376 = vlaneseq
      %v8377 = vshrl.u32 %v8376, 7
      %v8378 = vsub.s32 3, %v8377
      %v8379 = vrot.slane %v8327, %v8378
      %v8380 = vlaneseq
      %v8381 = vshrl.u32 %v8380, 7
      %v8382 = vsub.s32 4, %v8381
      %v8383 = vrot.slane %v8327, %v8382
      %v8384 = vlaneseq
      %v8385 = vshrl.u32 %v8384, 7
      %v8386 = vsub.s32 5, %v8385
      %v8387 = vrot.slane %v8327, %v8386
      %v8388 = vlaneseq
      %v8389 = vshrl.u32 %v8388, 7
      %v8390 = vsub.s32 6, %v8389
      %v8391 = vrot.slane %v8327, %v8390
      %v8392 = vlaneseq
      %v8393 = vshrl.u32 %v8392, 7
      %v8394 = vsub.s32 7, %v8393
      %v8395 = vrot.slane %v8327, %v8394
      %v8396 = vlaneseq
      %v8397 = vshrl.u32 %v8396, 7
      %v8398 = vsub.s32 0, %v8397
      %v8399 = vrot.slane %v8328, %v8398
      %v8400 = vlaneseq
      %v8401 = vshrl.u32 %v8400, 7
      %v8402 = vsub.s32 1, %v8401
      %v8403 = vrot.slane %v8328, %v8402
      %v8404 = vlaneseq
      %v8405 = vshrl.u32 %v8404, 7
      %v8406 = vsub.s32 2, %v8405
      %v8407 = vrot.slane %v8328, %v8406
      %v8408 = vlaneseq
      %v8409 = vshrl.u32 %v8408, 7
      %v8410 = vsub.s32 3, %v8409
      %v8411 = vrot.slane %v8328, %v8410
      %v8412 = vlaneseq
      %v8413 = vshrl.u32 %v8412, 7
      %v8414 = vsub.s32 4, %v8413
      %v8415 = vrot.slane %v8328, %v8414
      %v8437 = vmul.f32 %v8305, %v8335
      %v8438 = vmul.f32 %v8306, %v8339
      %v8439 = vmul.f32 %v8307, %v8343
      %v8440 = vmul.f32 %v8308, %v8347
      %v8441 = vmul.f32 %v8309, %v8351
      %v8442 = vmul.f32 %v8310, %v8355
      %v8443 = vmul.f32 %v8311, %v8359
      %v8444 = vmul.f32 %v8312, %v8363
      %v8445 = vmul.f32 %v8313, %v8367
      %v8446 = vmul.f32 %v8314, %v8371
      %v8447 = vmul.f32 %v8315, %v8375
      %v8448 = vmul.f32 %v8316, %v8379
      %v8449 = vmul.f32 %v8317, %v8383
      %v8450 = vmul.f32 %v8318, %v8387
      %v8451 = vmul.f32 %v8319, %v8391
      %v8452 = vmul.f32 %v8320, %v8395
      %v8453 = vmul.f32 %v8321, %v8399
      %v8454 = vmul.f32 %v8322, %v8403
      %v8455 = vmul.f32 %v8323, %v8407
      %v8456 = vmul.f32 %v8324, %v8411
      %v8457 = vmul.f32 %v8325, %v8415
      %8458 = vst [vmem:[%s388] sm:$0xff] %v8437
      %8459 = vst [vmem:[%s388 + $0x8] sm:$0xff] %v8438
      %8460 = vst [vmem:[%s388 + $0x10] sm:$0xff] %v8439
      %8461 = vst [vmem:[%s388 + $0x18] sm:$0xff] %v8440
      %8462 = vst [vmem:[%s388 + $0x20] sm:$0xff] %v8441
      %8463 = vst [vmem:[%s388 + $0x28] sm:$0xff] %v8442
      %8464 = vst [vmem:[%s388 + $0x30] sm:$0xff] %v8443
      %8465 = vst [vmem:[%s388 + $0x38] sm:$0xff] %v8444
      %8466 = vst [vmem:[%s388 + $0x40] sm:$0xff] %v8445
      %8467 = vst [vmem:[%s388 + $0x48] sm:$0xff] %v8446
      %8468 = vst [vmem:[%s388 + $0x50] sm:$0xff] %v8447
      %8469 = vst [vmem:[%s388 + $0x58] sm:$0xff] %v8448
      %8470 = vst [vmem:[%s388 + $0x60] sm:$0xff] %v8449
      %8471 = vst [vmem:[%s388 + $0x68] sm:$0xff] %v8450
      %8472 = vst [vmem:[%s388 + $0x70] sm:$0xff] %v8451
      %8473 = vst [vmem:[%s388 + $0x78] sm:$0xff] %v8452
      %8474 = vst [vmem:[%s388 + $0x80] sm:$0xff] %v8453
      %8475 = vst [vmem:[%s388 + $0x88] sm:$0xff] %v8454
      %8476 = vst [vmem:[%s388 + $0x90] sm:$0xff] %v8455
      %8477 = vst [vmem:[%s388 + $0x98] sm:$0xff] %v8456
      %vm8478 = vcmask 130048
      %8479 = vst.msk [vmem:[%s388 + $0xa0] sm:$0xff] %vm8478, %v8457
      %p8480 = scmp.lt.s32.totalorder %s24, 1
      %s8481 = scalar_select %p8480, %s24, 1
      %p8482 = scmp.lt.s32.totalorder %s25, 1
      %s8483 = scalar_select %p8482, %s25, 1
      %s8484 = smul.addr %s8483, 21
      %s8485 = smul.addr %s8481, 42
      %s8486 = sadd.s32 %s8484, %s8485
      %s8487 = smul.addr %s8486, 8
      %s8488 = scalar_lea.vmem %s9, %s8487
      // Predicated region
      $region61: #{skip_att.1} parent=55 // pred_check
        %p8489 = pneg %p253
      $region62: #{skip_att.1} parent=55 // pred_check_branch
        %8491 = sbr.rel (%p8489) target = $region64
      $region63: #{skip_att.1} parent=55 // pred_region
        _
      $region64: #{skip_att.1} parent=55 // pred_fallthru
        _
    $region56: #{skip_att.1} parent=5 // pred_fallthru
      _
    %p8492 = scmp.le.s32.totalorder 2, %s15
    // Predicated region
    $region65: #{skip_att.1} parent=5 // pred_check
      %p8493 = pneg %p8492
    $region66: #{skip_att.1} parent=5 // pred_check_branch
      %8495 = sbr.rel (%p8493) target = $region68
    $region67: #{skip_att.1} parent=5 // pred_region
      %s8496 = ssub.s32 %s15, 2
      // Predicated region
      $region69: #{skip_att.1} parent=67 // pred_check
        %p8497 = pneg %p259
      $region70: #{skip_att.1} parent=67 // pred_check_branch
        %8499 = sbr.rel (%p8497) target = $region72
      $region71: #{skip_att.1} parent=67 // pred_region
        %p8500 = scmp.lt.s32.totalorder %s26, 1
        %s8501 = scalar_select %p8500, %s26, 1
        %p8502 = scmp.lt.s32.totalorder %s27, 1
        %s8503 = scalar_select %p8502, %s27, 1
        %s8504 = smul.addr %s8503, 21
        %s8505 = smul.addr %s8501, 42
        %s8506 = sadd.s32 %s8504, %s8505
        %s8507 = smul.addr %s8506, 8
        %s8508 = scalar_lea.vmem %s9, %s8507
      $region72: #{skip_att.1} parent=67 // pred_fallthru
        _
    $region68: #{skip_att.1} parent=5 // pred_fallthru
      _
  $region6: #{skip_att.1} parent=0 // loop_footer
    %s19 = sadd.s32 1, %s15
  $region7: #{skip_att.1} parent=0 // loop_footer_branch
    %14 = sbr.rel target = $region3
  $region8: #{skip_att.1} parent=0 // loop_exit
    _

</llo_original>
